<compile_context>
chip_gen: v7x
topology: tpu7x:2x2x1
jax: 0.10.0
libtpu: 0.0.40
codegen_flags: <defaults>
</compile_context>

<pallas_src>
import functools
import math

import jax
import jax.numpy as jnp
from jax.experimental import pallas as pl
from jax.experimental.pallas import tpu as pltpu


_SCALE_CLAMP = math.log(1000.0 / 16.0)  # detectron2 Box2BoxTransform default


# ------------------------------ Pallas kernel -------------------------------

def _fused_rpn_kernel(x_ref, wb_ref, bb_ref, wr_ref, br_ref, wh_ref, bh_ref,
                      anc_ref, mask_ref, scores_ref, boxes_ref, p2_ref, *,
                      H, W, A, img_h, img_w):
    """One image: backbone 3x3 conv -> RPN 3x3 conv -> fused heads -> decode.

    Feature maps are flat (rows, channels) matrices with row r = i*(W+2)+j
    over a padded, (W+2)-wide image, so every 3x3-conv tap is a contiguous
    row slice feeding one MXU matmul.  Columns j in {W, W+1} are garbage and
    are masked out before contaminating the next stage.
    """
    Wp = W + 2
    nvirt = H * Wp
    mask = mask_ref[...]                                    # (nvirt, 1) f32

    def conv3x3(src_ref, w_ref):
        # src_ref: (nflat, Cin) f32 ref, w_ref: (9, Cin, Cout) bf16 ref
        acc = None
        for t in range(9):
            off = (t // 3) * Wp + (t % 3)
            lhs = src_ref[off:off + nvirt, :].astype(jnp.bfloat16)
            d = jnp.dot(lhs, w_ref[t], preferred_element_type=jnp.float32)
            acc = d if acc is None else acc + d
        return acc                                          # (nvirt, Cout) f32

    # backbone 3x3 conv (+ folded pixel normalization) + ReLU
    feat = jnp.maximum(conv3x3(x_ref, wb_ref) + bb_ref[...], 0.0)

    # scatter into the padded flat layout expected by the next conv; the
    # garbage columns land exactly on the padding columns -> masked to zero.
    p2_ref[...] = jnp.zeros_like(p2_ref)
    p2_ref[Wp + 1:Wp + 1 + nvirt, :] = feat * mask

    # RPN head 3x3 conv + ReLU (input stays resident in VMEM)
    t_feat = jnp.maximum(conv3x3(p2_ref, wr_ref) + br_ref[...], 0.0)

    # fused 1x1 heads: columns = [obj(A) | dx(A) | dy(A) | dw(A) | dh(A)]
    head = jnp.dot(t_feat.astype(jnp.bfloat16), wh_ref[...],
                   preferred_element_type=jnp.float32) + bh_ref[...]
    obj = head[:, 0:A]
    ddx = head[:, A:2 * A]
    ddy = head[:, 2 * A:3 * A]
    ddw = jnp.minimum(head[:, 3 * A:4 * A], _SCALE_CLAMP)
    ddh = jnp.minimum(head[:, 4 * A:5 * A], _SCALE_CLAMP)

    # decode anchors + deltas (Box2BoxTransform.apply_deltas + clip-to-image)
    ax1, ay1, ax2, ay2 = anc_ref[0], anc_ref[1], anc_ref[2], anc_ref[3]
    wa = ax2 - ax1
    ha = ay2 - ay1
    cxa = ax1 + 0.5 * wa
    cya = ay1 + 0.5 * ha
    pcx = ddx * wa + cxa
    pcy = ddy * ha + cya
    pw = jnp.exp(ddw) * wa
    ph = jnp.exp(ddh) * ha
    boxes_ref[0] = jnp.clip(pcx - 0.5 * pw, 0.0, img_w)
    boxes_ref[1] = jnp.clip(pcy - 0.5 * ph, 0.0, img_h)
    boxes_ref[2] = jnp.clip(pcx + 0.5 * pw, 0.0, img_w)
    boxes_ref[3] = jnp.clip(pcy + 0.5 * ph, 0.0, img_h)

    # garbage virtual columns can never win the top-k
    scores_ref[...] = jnp.where(mask > 0.0, obj, -1e30)


# ------------------------------- glue (JAX) ---------------------------------

@functools.partial(jax.jit, static_argnames=("pre_nms_topk", "anchor_sizes"))
def _proposal_arrays(batched_images, params, pre_nms_topk, anchor_sizes):
    B, C, H, W = batched_images.shape
    hidden = params["backbone_b"].shape[0]
    A = params["rpn_obj_b"].shape[0]
    assert len(anchor_sizes) == A
    Wp = W + 2
    nvirt = H * Wp
    # 1 top pad row + H rows + 2 bottom pad rows: the 2nd bottom row only
    # keeps the last (garbage) tap slice in bounds; never used for valid rows.
    nflat = (H + 3) * Wp

    mean = params["pixel_mean"].astype(jnp.float32)
    std = params["pixel_std"].astype(jnp.float32)
    inv_std = 1.0 / std

    # ---- fold (x - mean) / std into the backbone conv (exact) ----
    wb = params["backbone_w"]                                    # (hid, C, 3, 3)
    wb_scaled = wb * inv_std.reshape(1, C, 1, 1)
    bb_fold = params["backbone_b"] - jnp.einsum("ocyx,c->o", wb, mean * inv_std)
    wb_k = jnp.transpose(wb_scaled, (2, 3, 1, 0)).reshape(
        9, C, hidden).astype(jnp.bfloat16)
    bb_k = bb_fold.reshape(1, hidden).astype(jnp.float32)

    wr_k = jnp.transpose(params["rpn_conv_w"], (2, 3, 1, 0)).reshape(
        9, hidden, hidden).astype(jnp.bfloat16)
    br_k = params["rpn_conv_b"].reshape(1, hidden).astype(jnp.float32)

    # ---- fuse objectness + anchor-delta 1x1 convs into one matmul ----
    w_obj = params["rpn_obj_w"].reshape(A, hidden).T             # (hid, A)
    w_del = params["rpn_delta_w"].reshape(A, 4, hidden)          # anchor-major
    wh_k = jnp.concatenate(
        [w_obj] + [w_del[:, i, :].T for i in range(4)],
        axis=1).astype(jnp.bfloat16)                             # (hid, 5A)
    b_del = params["rpn_delta_b"].reshape(A, 4)
    bh_k = jnp.concatenate(
        [params["rpn_obj_b"]] + [b_del[:, i] for i in range(4)],
        axis=0).reshape(1, 5 * A).astype(jnp.float32)

    # ---- NCHW -> NHWC once, pad with pixel_mean, flatten to (rows, C) ----
    x_nhwc = jnp.transpose(batched_images, (0, 2, 3, 1)).astype(jnp.float32)
    x_pad = jnp.zeros((B, H + 3, Wp, C), jnp.float32) + mean
    x_pad = x_pad.at[:, 1:H + 1, 1:W + 1, :].set(x_nhwc)
    x_flat = x_pad.reshape(B, nflat, C)

    # ---- anchors in the virtual-width layout + validity mask ----
    ys, xs = jnp.meshgrid(jnp.arange(H, dtype=jnp.float32),
                          jnp.arange(Wp, dtype=jnp.float32), indexing="ij")
    cx = xs.reshape(-1)
    cy = ys.reshape(-1)
    half = jnp.asarray(anchor_sizes, jnp.float32) / 2.0          # (A,)
    ax1 = cx[:, None] - half[None, :]
    ay1 = cy[:, None] - half[None, :]
    ax2 = cx[:, None] + half[None, :]
    ay2 = cy[:, None] + half[None, :]
    anchors_k = jnp.stack([ax1, ay1, ax2, ay2], axis=0)          # (4, nvirt, A)

    r = jnp.arange(nvirt)
    mask_k = ((r % Wp) < W).astype(jnp.float32).reshape(nvirt, 1)

    kernel = functools.partial(_fused_rpn_kernel, H=H, W=W, A=A,
                               img_h=float(H), img_w=float(W))

    scores, boxes_raw = pl.pallas_call(
        kernel,
        out_shape=(
            jax.ShapeDtypeStruct((B, nvirt, A), jnp.float32),
            jax.ShapeDtypeStruct((B, 4, nvirt, A), jnp.float32),
        ),
        grid=(B,),
        in_specs=[
            pl.BlockSpec((None, nflat, C), lambda b: (b, 0, 0)),
            pl.BlockSpec((9, C, hidden), lambda b: (0, 0, 0)),
            pl.BlockSpec((1, hidden), lambda b: (0, 0)),
            pl.BlockSpec((9, hidden, hidden), lambda b: (0, 0, 0)),
            pl.BlockSpec((1, hidden), lambda b: (0, 0)),
            pl.BlockSpec((hidden, 5 * A), lambda b: (0, 0)),
            pl.BlockSpec((1, 5 * A), lambda b: (0, 0)),
            pl.BlockSpec((4, nvirt, A), lambda b: (0, 0, 0)),
            pl.BlockSpec((nvirt, 1), lambda b: (0, 0)),
        ],
        out_specs=(
            pl.BlockSpec((None, nvirt, A), lambda b: (b, 0, 0)),
            pl.BlockSpec((None, 4, nvirt, A), lambda b: (b, 0, 0, 0)),
        ),
        scratch_shapes=[pltpu.VMEM((nflat, hidden), jnp.float32)],
        compiler_params=pltpu.CompilerParams(
            dimension_semantics=("parallel",)),
    )(x_flat, wb_k, bb_k, wr_k, br_k, wh_k, bh_k, anchors_k, mask_k)

    # garbage columns carry -1e30 scores, so top-k only sees real positions.
    objectness = scores.reshape(B, nvirt * A)
    boxes = jnp.transpose(boxes_raw, (0, 2, 3, 1)).reshape(B, nvirt * A, 4)

    k = min(int(pre_nms_topk), H * W * A)
    top_logits, top_idx = jax.lax.top_k(objectness, k)
    top_boxes = jnp.take_along_axis(boxes, top_idx[:, :, None], axis=1)
    return top_boxes, top_logits


def proposal_network_forward(batched_images, params, pre_nms_topk=50,
                             anchor_sizes=(8.0, 16.0, 32.0)):
    """Inference forward of ProposalNetwork for already-batched, equal-size
    NCHW images.  Returns list[dict] with key "proposals" holding
    "proposal_boxes" and "objectness_logits" per image."""
    # TODO(synk): NMS + Instances/ImageList bookkeeping from the RPN proposal
    # generator / detector_postprocess has no clean Pallas equivalent; only
    # pre-NMS top-k selection is implemented (in XLA glue).
    top_boxes, top_logits = _proposal_arrays(
        batched_images, params,
        pre_nms_topk=int(pre_nms_topk), anchor_sizes=tuple(anchor_sizes))
    return [
        {"proposals": {"proposal_boxes": top_boxes[b],
                       "objectness_logits": top_logits[b]}}
        for b in range(top_boxes.shape[0])
    ]


def init_params(key, in_ch=3, hidden=32, num_anchors=3):
    ks = jax.random.split(key, 4)

    def conv_w(k, cout, cin, ksz):
        return 0.01 * jax.random.normal(k, (cout, cin, ksz, ksz), jnp.float32)

    return {
        # synthetic single-conv "backbone" (stride 1, one feature level)
        "backbone_w": conv_w(ks[0], hidden, in_ch, 3),
        "backbone_b": jnp.zeros((hidden,), jnp.float32),
        # RPN head (StandardRPNHead: 3x3 conv + 1x1 objectness + 1x1 deltas)
        "rpn_conv_w": conv_w(ks[1], hidden, hidden, 3),
        "rpn_conv_b": jnp.zeros((hidden,), jnp.float32),
        "rpn_obj_w": conv_w(ks[2], num_anchors, hidden, 1),
        "rpn_obj_b": jnp.zeros((num_anchors,), jnp.float32),
        "rpn_delta_w": conv_w(ks[3], num_anchors * 4, hidden, 1),
        "rpn_delta_b": jnp.zeros((num_anchors * 4,), jnp.float32),
        # detectron2 default BGR pixel mean/std
        "pixel_mean": jnp.array([103.53, 116.28, 123.675], jnp.float32),
        "pixel_std": jnp.array([57.375, 57.12, 58.395], jnp.float32),
    }


if __name__ == "__main__":
    key = jax.random.PRNGKey(0)
    k_img, k_par = jax.random.split(key)

    B, C, H, W = 2, 3, 16, 16
    images = jax.random.uniform(k_img, (B, C, H, W), jnp.float32, 0.0, 255.0)
    params = init_params(k_par, in_ch=C, hidden=32, num_anchors=3)

    results = proposal_network_forward(images, params)
    for r in results:
        jax.block_until_ready(r["proposals"]["proposal_boxes"])
        jax.block_until_ready(r["proposals"]["objectness_logits"])
    print("KERNEL_OK")
</pallas_src>

<mosaic_0001>
module attributes {stable_mosaic.version = 11 : i64} {
  func.func @_fused_rpn_kernel(%arg0: i32, %arg1: memref<1x342x3xf32, #tpu.memory_space<vmem>>, %arg2: memref<9x3x32xbf16, #tpu.memory_space<vmem>>, %arg3: memref<1x32xf32, #tpu.memory_space<vmem>>, %arg4: memref<9x32x32xbf16, #tpu.memory_space<vmem>>, %arg5: memref<1x32xf32, #tpu.memory_space<vmem>>, %arg6: memref<32x15xbf16, #tpu.memory_space<vmem>>, %arg7: memref<1x15xf32, #tpu.memory_space<vmem>>, %arg8: memref<4x288x3xf32, #tpu.memory_space<vmem>>, %arg9: memref<288x1xf32, #tpu.memory_space<vmem>>, %arg10: memref<1x288x3xf32, #tpu.memory_space<vmem>>, %arg11: memref<1x4x288x3xf32, #tpu.memory_space<vmem>>, %arg12: memref<342x32xf32, #tpu.memory_space<vmem>>) attributes {dimension_semantics = [#tpu.dimension_semantics<parallel>], iteration_bounds = array<i64: 2>, scalar_prefetch = 0 : i64, scratch_operands = 1 : i64, tpu.core_type = #tpu.core_type<tc>, window_params = [{transform_indices = @transform_0, window_bounds = array<i64: 1, 342, 3>}, {pipeline_mode = #tpu.pipeline_mode<synchronous>, transform_indices = @transform_1, window_bounds = array<i64: 9, 3, 32>}, {pipeline_mode = #tpu.pipeline_mode<synchronous>, transform_indices = @transform_2, window_bounds = array<i64: 1, 32>}, {pipeline_mode = #tpu.pipeline_mode<synchronous>, transform_indices = @transform_3, window_bounds = array<i64: 9, 32, 32>}, {pipeline_mode = #tpu.pipeline_mode<synchronous>, transform_indices = @transform_4, window_bounds = array<i64: 1, 32>}, {pipeline_mode = #tpu.pipeline_mode<synchronous>, transform_indices = @transform_5, window_bounds = array<i64: 32, 15>}, {pipeline_mode = #tpu.pipeline_mode<synchronous>, transform_indices = @transform_6, window_bounds = array<i64: 1, 15>}, {pipeline_mode = #tpu.pipeline_mode<synchronous>, transform_indices = @transform_7, window_bounds = array<i64: 4, 288, 3>}, {pipeline_mode = #tpu.pipeline_mode<synchronous>, transform_indices = @transform_8, window_bounds = array<i64: 288, 1>}, {transform_indices = @transform_9, window_bounds = array<i64: 1, 288, 3>}, {transform_indices = @transform_10, window_bounds = array<i64: 1, 4, 288, 3>}]} {
    %c0 = arith.constant 0 : index
    %c0_0 = arith.constant 0 : index
    %0 = vector.load %arg9[%c0, %c0_0] : memref<288x1xf32, #tpu.memory_space<vmem>>, vector<288x1xf32>
    %c0_1 = arith.constant 0 : index
    %c0_2 = arith.constant 0 : index
    %c0_3 = arith.constant 0 : index
    %1 = vector.load %arg1[%c0_1, %c0_2, %c0_3] : memref<1x342x3xf32, #tpu.memory_space<vmem>>, vector<1x288x3xf32>
    %2 = vector.shape_cast %1 : vector<1x288x3xf32> to vector<288x3xf32>
    %3 = arith.truncf %2 : vector<288x3xf32> to vector<288x3xbf16>
    %c0_4 = arith.constant 0 : index
    %c0_5 = arith.constant 0 : index
    %c0_6 = arith.constant 0 : index
    %4 = vector.load %arg2[%c0_4, %c0_5, %c0_6] : memref<9x3x32xbf16, #tpu.memory_space<vmem>>, vector<1x3x32xbf16>
    %5 = vector.shape_cast %4 : vector<1x3x32xbf16> to vector<3x32xbf16>
    %cst = arith.constant dense<0.000000e+00> : vector<288x32xf32>
    %6 = tpu.matmul %3, %5, %cst {dimension_numbers = #tpu.dot_dimension_numbers<[1], [0], [0], [1], [0, 0, 1, 1], [], []>} : vector<288x3xbf16>, vector<3x32xbf16>, vector<288x32xf32> -> vector<288x32xf32>
    %c0_7 = arith.constant 0 : index
    %c1 = arith.constant 1 : index
    %c0_8 = arith.constant 0 : index
    %7 = vector.load %arg1[%c0_7, %c1, %c0_8] : memref<1x342x3xf32, #tpu.memory_space<vmem>>, vector<1x288x3xf32>
    %8 = vector.shape_cast %7 : vector<1x288x3xf32> to vector<288x3xf32>
    %9 = arith.truncf %8 : vector<288x3xf32> to vector<288x3xbf16>
    %c1_9 = arith.constant 1 : index
    %c0_10 = arith.constant 0 : index
    %c0_11 = arith.constant 0 : index
    %10 = vector.load %arg2[%c1_9, %c0_10, %c0_11] : memref<9x3x32xbf16, #tpu.memory_space<vmem>>, vector<1x3x32xbf16>
    %11 = vector.shape_cast %10 : vector<1x3x32xbf16> to vector<3x32xbf16>
    %cst_12 = arith.constant dense<0.000000e+00> : vector<288x32xf32>
    %12 = tpu.matmul %9, %11, %cst_12 {dimension_numbers = #tpu.dot_dimension_numbers<[1], [0], [0], [1], [0, 0, 1, 1], [], []>} : vector<288x3xbf16>, vector<3x32xbf16>, vector<288x32xf32> -> vector<288x32xf32>
    %13 = arith.addf %6, %12 : vector<288x32xf32>
    %c0_13 = arith.constant 0 : index
    %c2 = arith.constant 2 : index
    %c0_14 = arith.constant 0 : index
    %14 = vector.load %arg1[%c0_13, %c2, %c0_14] : memref<1x342x3xf32, #tpu.memory_space<vmem>>, vector<1x288x3xf32>
    %15 = vector.shape_cast %14 : vector<1x288x3xf32> to vector<288x3xf32>
    %16 = arith.truncf %15 : vector<288x3xf32> to vector<288x3xbf16>
    %c2_15 = arith.constant 2 : index
    %c0_16 = arith.constant 0 : index
    %c0_17 = arith.constant 0 : index
    %17 = vector.load %arg2[%c2_15, %c0_16, %c0_17] : memref<9x3x32xbf16, #tpu.memory_space<vmem>>, vector<1x3x32xbf16>
    %18 = vector.shape_cast %17 : vector<1x3x32xbf16> to vector<3x32xbf16>
    %cst_18 = arith.constant dense<0.000000e+00> : vector<288x32xf32>
    %19 = tpu.matmul %16, %18, %cst_18 {dimension_numbers = #tpu.dot_dimension_numbers<[1], [0], [0], [1], [0, 0, 1, 1], [], []>} : vector<288x3xbf16>, vector<3x32xbf16>, vector<288x32xf32> -> vector<288x32xf32>
    %20 = arith.addf %13, %19 : vector<288x32xf32>
    %c0_19 = arith.constant 0 : index
    %c18 = arith.constant 18 : index
    %c0_20 = arith.constant 0 : index
    %21 = vector.load %arg1[%c0_19, %c18, %c0_20] : memref<1x342x3xf32, #tpu.memory_space<vmem>>, vector<1x288x3xf32>
    %22 = vector.shape_cast %21 : vector<1x288x3xf32> to vector<288x3xf32>
    %23 = arith.truncf %22 : vector<288x3xf32> to vector<288x3xbf16>
    %c3 = arith.constant 3 : index
    %c0_21 = arith.constant 0 : index
    %c0_22 = arith.constant 0 : index
    %24 = vector.load %arg2[%c3, %c0_21, %c0_22] : memref<9x3x32xbf16, #tpu.memory_space<vmem>>, vector<1x3x32xbf16>
    %25 = vector.shape_cast %24 : vector<1x3x32xbf16> to vector<3x32xbf16>
    %cst_23 = arith.constant dense<0.000000e+00> : vector<288x32xf32>
    %26 = tpu.matmul %23, %25, %cst_23 {dimension_numbers = #tpu.dot_dimension_numbers<[1], [0], [0], [1], [0, 0, 1, 1], [], []>} : vector<288x3xbf16>, vector<3x32xbf16>, vector<288x32xf32> -> vector<288x32xf32>
    %27 = arith.addf %20, %26 : vector<288x32xf32>
    %c0_24 = arith.constant 0 : index
    %c19 = arith.constant 19 : index
    %c0_25 = arith.constant 0 : index
    %28 = vector.load %arg1[%c0_24, %c19, %c0_25] : memref<1x342x3xf32, #tpu.memory_space<vmem>>, vector<1x288x3xf32>
    %29 = vector.shape_cast %28 : vector<1x288x3xf32> to vector<288x3xf32>
    %30 = arith.truncf %29 : vector<288x3xf32> to vector<288x3xbf16>
    %c4 = arith.constant 4 : index
    %c0_26 = arith.constant 0 : index
    %c0_27 = arith.constant 0 : index
    %31 = vector.load %arg2[%c4, %c0_26, %c0_27] : memref<9x3x32xbf16, #tpu.memory_space<vmem>>, vector<1x3x32xbf16>
    %32 = vector.shape_cast %31 : vector<1x3x32xbf16> to vector<3x32xbf16>
    %cst_28 = arith.constant dense<0.000000e+00> : vector<288x32xf32>
    %33 = tpu.matmul %30, %32, %cst_28 {dimension_numbers = #tpu.dot_dimension_numbers<[1], [0], [0], [1], [0, 0, 1, 1], [], []>} : vector<288x3xbf16>, vector<3x32xbf16>, vector<288x32xf32> -> vector<288x32xf32>
    %34 = arith.addf %27, %33 : vector<288x32xf32>
    %c0_29 = arith.constant 0 : index
    %c20 = arith.constant 20 : index
    %c0_30 = arith.constant 0 : index
    %35 = vector.load %arg1[%c0_29, %c20, %c0_30] : memref<1x342x3xf32, #tpu.memory_space<vmem>>, vector<1x288x3xf32>
    %36 = vector.shape_cast %35 : vector<1x288x3xf32> to vector<288x3xf32>
    %37 = arith.truncf %36 : vector<288x3xf32> to vector<288x3xbf16>
    %c5 = arith.constant 5 : index
    %c0_31 = arith.constant 0 : index
    %c0_32 = arith.constant 0 : index
    %38 = vector.load %arg2[%c5, %c0_31, %c0_32] : memref<9x3x32xbf16, #tpu.memory_space<vmem>>, vector<1x3x32xbf16>
    %39 = vector.shape_cast %38 : vector<1x3x32xbf16> to vector<3x32xbf16>
    %cst_33 = arith.constant dense<0.000000e+00> : vector<288x32xf32>
    %40 = tpu.matmul %37, %39, %cst_33 {dimension_numbers = #tpu.dot_dimension_numbers<[1], [0], [0], [1], [0, 0, 1, 1], [], []>} : vector<288x3xbf16>, vector<3x32xbf16>, vector<288x32xf32> -> vector<288x32xf32>
    %41 = arith.addf %34, %40 : vector<288x32xf32>
    %c0_34 = arith.constant 0 : index
    %c36 = arith.constant 36 : index
    %c0_35 = arith.constant 0 : index
    %42 = vector.load %arg1[%c0_34, %c36, %c0_35] : memref<1x342x3xf32, #tpu.memory_space<vmem>>, vector<1x288x3xf32>
    %43 = vector.shape_cast %42 : vector<1x288x3xf32> to vector<288x3xf32>
    %44 = arith.truncf %43 : vector<288x3xf32> to vector<288x3xbf16>
    %c6 = arith.constant 6 : index
    %c0_36 = arith.constant 0 : index
    %c0_37 = arith.constant 0 : index
    %45 = vector.load %arg2[%c6, %c0_36, %c0_37] : memref<9x3x32xbf16, #tpu.memory_space<vmem>>, vector<1x3x32xbf16>
    %46 = vector.shape_cast %45 : vector<1x3x32xbf16> to vector<3x32xbf16>
    %cst_38 = arith.constant dense<0.000000e+00> : vector<288x32xf32>
    %47 = tpu.matmul %44, %46, %cst_38 {dimension_numbers = #tpu.dot_dimension_numbers<[1], [0], [0], [1], [0, 0, 1, 1], [], []>} : vector<288x3xbf16>, vector<3x32xbf16>, vector<288x32xf32> -> vector<288x32xf32>
    %48 = arith.addf %41, %47 : vector<288x32xf32>
    %c0_39 = arith.constant 0 : index
    %c37 = arith.constant 37 : index
    %c0_40 = arith.constant 0 : index
    %49 = vector.load %arg1[%c0_39, %c37, %c0_40] : memref<1x342x3xf32, #tpu.memory_space<vmem>>, vector<1x288x3xf32>
    %50 = vector.shape_cast %49 : vector<1x288x3xf32> to vector<288x3xf32>
    %51 = arith.truncf %50 : vector<288x3xf32> to vector<288x3xbf16>
    %c7 = arith.constant 7 : index
    %c0_41 = arith.constant 0 : index
    %c0_42 = arith.constant 0 : index
    %52 = vector.load %arg2[%c7, %c0_41, %c0_42] : memref<9x3x32xbf16, #tpu.memory_space<vmem>>, vector<1x3x32xbf16>
    %53 = vector.shape_cast %52 : vector<1x3x32xbf16> to vector<3x32xbf16>
    %cst_43 = arith.constant dense<0.000000e+00> : vector<288x32xf32>
    %54 = tpu.matmul %51, %53, %cst_43 {dimension_numbers = #tpu.dot_dimension_numbers<[1], [0], [0], [1], [0, 0, 1, 1], [], []>} : vector<288x3xbf16>, vector<3x32xbf16>, vector<288x32xf32> -> vector<288x32xf32>
    %55 = arith.addf %48, %54 : vector<288x32xf32>
    %c0_44 = arith.constant 0 : index
    %c38 = arith.constant 38 : index
    %c0_45 = arith.constant 0 : index
    %56 = vector.load %arg1[%c0_44, %c38, %c0_45] : memref<1x342x3xf32, #tpu.memory_space<vmem>>, vector<1x288x3xf32>
    %57 = vector.shape_cast %56 : vector<1x288x3xf32> to vector<288x3xf32>
    %58 = arith.truncf %57 : vector<288x3xf32> to vector<288x3xbf16>
    %c8 = arith.constant 8 : index
    %c0_46 = arith.constant 0 : index
    %c0_47 = arith.constant 0 : index
    %59 = vector.load %arg2[%c8, %c0_46, %c0_47] : memref<9x3x32xbf16, #tpu.memory_space<vmem>>, vector<1x3x32xbf16>
    %60 = vector.shape_cast %59 : vector<1x3x32xbf16> to vector<3x32xbf16>
    %cst_48 = arith.constant dense<0.000000e+00> : vector<288x32xf32>
    %61 = tpu.matmul %58, %60, %cst_48 {dimension_numbers = #tpu.dot_dimension_numbers<[1], [0], [0], [1], [0, 0, 1, 1], [], []>} : vector<288x3xbf16>, vector<3x32xbf16>, vector<288x32xf32> -> vector<288x32xf32>
    %62 = arith.addf %55, %61 : vector<288x32xf32>
    %c0_49 = arith.constant 0 : index
    %c0_50 = arith.constant 0 : index
    %63 = vector.load %arg3[%c0_49, %c0_50] : memref<1x32xf32, #tpu.memory_space<vmem>>, vector<1x32xf32>
    %64 = vector.broadcast %63 : vector<1x32xf32> to vector<288x32xf32>
    %65 = arith.addf %62, %64 : vector<288x32xf32>
    %cst_51 = arith.constant 0.000000e+00 : f32
    %66 = vector.broadcast %cst_51 : f32 to vector<288x32xf32>
    %67 = arith.maximumf %65, %66 : vector<288x32xf32>
    %cst_52 = arith.constant 0.000000e+00 : f32
    %68 = vector.broadcast %cst_52 : f32 to vector<342x32xf32>
    %c0_53 = arith.constant 0 : index
    %c0_54 = arith.constant 0 : index
    %69 = vector.load %arg12[%c0_53, %c0_54] : memref<342x32xf32, #tpu.memory_space<vmem>>, vector<342x32xf32>
    tpu.vector_store %arg12[%c0_53, %c0_54], %68 {strides = array<i32>} : memref<342x32xf32, #tpu.memory_space<vmem>>, vector<342x32xf32>,
    %70 = vector.broadcast %0 : vector<288x1xf32> to vector<288x32xf32>
    %71 = arith.mulf %67, %70 : vector<288x32xf32>
    %c19_55 = arith.constant 19 : index
    %c0_56 = arith.constant 0 : index
    %72 = vector.load %arg12[%c19_55, %c0_56] : memref<342x32xf32, #tpu.memory_space<vmem>>, vector<288x32xf32>
    tpu.vector_store %arg12[%c19_55, %c0_56], %71 {strides = array<i32>} : memref<342x32xf32, #tpu.memory_space<vmem>>, vector<288x32xf32>,
    %c0_57 = arith.constant 0 : index
    %c0_58 = arith.constant 0 : index
    %73 = vector.load %arg12[%c0_57, %c0_58] : memref<342x32xf32, #tpu.memory_space<vmem>>, vector<288x32xf32>
    %74 = arith.truncf %73 : vector<288x32xf32> to vector<288x32xbf16>
    %c0_59 = arith.constant 0 : index
    %c0_60 = arith.constant 0 : index
    %c0_61 = arith.constant 0 : index
    %75 = vector.load %arg4[%c0_59, %c0_60, %c0_61] : memref<9x32x32xbf16, #tpu.memory_space<vmem>>, vector<1x32x32xbf16>
    %76 = vector.shape_cast %75 : vector<1x32x32xbf16> to vector<32x32xbf16>
    %cst_62 = arith.constant dense<0.000000e+00> : vector<288x32xf32>
    %77 = tpu.matmul %74, %76, %cst_62 {dimension_numbers = #tpu.dot_dimension_numbers<[1], [0], [0], [1], [0, 0, 1, 1], [], []>} : vector<288x32xbf16>, vector<32x32xbf16>, vector<288x32xf32> -> vector<288x32xf32>
    %c1_63 = arith.constant 1 : index
    %c0_64 = arith.constant 0 : index
    %78 = vector.load %arg12[%c1_63, %c0_64] : memref<342x32xf32, #tpu.memory_space<vmem>>, vector<288x32xf32>
    %79 = arith.truncf %78 : vector<288x32xf32> to vector<288x32xbf16>
    %c1_65 = arith.constant 1 : index
    %c0_66 = arith.constant 0 : index
    %c0_67 = arith.constant 0 : index
    %80 = vector.load %arg4[%c1_65, %c0_66, %c0_67] : memref<9x32x32xbf16, #tpu.memory_space<vmem>>, vector<1x32x32xbf16>
    %81 = vector.shape_cast %80 : vector<1x32x32xbf16> to vector<32x32xbf16>
    %cst_68 = arith.constant dense<0.000000e+00> : vector<288x32xf32>
    %82 = tpu.matmul %79, %81, %cst_68 {dimension_numbers = #tpu.dot_dimension_numbers<[1], [0], [0], [1], [0, 0, 1, 1], [], []>} : vector<288x32xbf16>, vector<32x32xbf16>, vector<288x32xf32> -> vector<288x32xf32>
    %83 = arith.addf %77, %82 : vector<288x32xf32>
    %c2_69 = arith.constant 2 : index
    %c0_70 = arith.constant 0 : index
    %84 = vector.load %arg12[%c2_69, %c0_70] : memref<342x32xf32, #tpu.memory_space<vmem>>, vector<288x32xf32>
    %85 = arith.truncf %84 : vector<288x32xf32> to vector<288x32xbf16>
    %c2_71 = arith.constant 2 : index
    %c0_72 = arith.constant 0 : index
    %c0_73 = arith.constant 0 : index
    %86 = vector.load %arg4[%c2_71, %c0_72, %c0_73] : memref<9x32x32xbf16, #tpu.memory_space<vmem>>, vector<1x32x32xbf16>
    %87 = vector.shape_cast %86 : vector<1x32x32xbf16> to vector<32x32xbf16>
    %cst_74 = arith.constant dense<0.000000e+00> : vector<288x32xf32>
    %88 = tpu.matmul %85, %87, %cst_74 {dimension_numbers = #tpu.dot_dimension_numbers<[1], [0], [0], [1], [0, 0, 1, 1], [], []>} : vector<288x32xbf16>, vector<32x32xbf16>, vector<288x32xf32> -> vector<288x32xf32>
    %89 = arith.addf %83, %88 : vector<288x32xf32>
    %c18_75 = arith.constant 18 : index
    %c0_76 = arith.constant 0 : index
    %90 = vector.load %arg12[%c18_75, %c0_76] : memref<342x32xf32, #tpu.memory_space<vmem>>, vector<288x32xf32>
    %91 = arith.truncf %90 : vector<288x32xf32> to vector<288x32xbf16>
    %c3_77 = arith.constant 3 : index
    %c0_78 = arith.constant 0 : index
    %c0_79 = arith.constant 0 : index
    %92 = vector.load %arg4[%c3_77, %c0_78, %c0_79] : memref<9x32x32xbf16, #tpu.memory_space<vmem>>, vector<1x32x32xbf16>
    %93 = vector.shape_cast %92 : vector<1x32x32xbf16> to vector<32x32xbf16>
    %cst_80 = arith.constant dense<0.000000e+00> : vector<288x32xf32>
    %94 = tpu.matmul %91, %93, %cst_80 {dimension_numbers = #tpu.dot_dimension_numbers<[1], [0], [0], [1], [0, 0, 1, 1], [], []>} : vector<288x32xbf16>, vector<32x32xbf16>, vector<288x32xf32> -> vector<288x32xf32>
    %95 = arith.addf %89, %94 : vector<288x32xf32>
    %c19_81 = arith.constant 19 : index
    %c0_82 = arith.constant 0 : index
    %96 = vector.load %arg12[%c19_81, %c0_82] : memref<342x32xf32, #tpu.memory_space<vmem>>, vector<288x32xf32>
    %97 = arith.truncf %96 : vector<288x32xf32> to vector<288x32xbf16>
    %c4_83 = arith.constant 4 : index
    %c0_84 = arith.constant 0 : index
    %c0_85 = arith.constant 0 : index
    %98 = vector.load %arg4[%c4_83, %c0_84, %c0_85] : memref<9x32x32xbf16, #tpu.memory_space<vmem>>, vector<1x32x32xbf16>
    %99 = vector.shape_cast %98 : vector<1x32x32xbf16> to vector<32x32xbf16>
    %cst_86 = arith.constant dense<0.000000e+00> : vector<288x32xf32>
    %100 = tpu.matmul %97, %99, %cst_86 {dimension_numbers = #tpu.dot_dimension_numbers<[1], [0], [0], [1], [0, 0, 1, 1], [], []>} : vector<288x32xbf16>, vector<32x32xbf16>, vector<288x32xf32> -> vector<288x32xf32>
    %101 = arith.addf %95, %100 : vector<288x32xf32>
    %c20_87 = arith.constant 20 : index
    %c0_88 = arith.constant 0 : index
    %102 = vector.load %arg12[%c20_87, %c0_88] : memref<342x32xf32, #tpu.memory_space<vmem>>, vector<288x32xf32>
    %103 = arith.truncf %102 : vector<288x32xf32> to vector<288x32xbf16>
    %c5_89 = arith.constant 5 : index
    %c0_90 = arith.constant 0 : index
    %c0_91 = arith.constant 0 : index
    %104 = vector.load %arg4[%c5_89, %c0_90, %c0_91] : memref<9x32x32xbf16, #tpu.memory_space<vmem>>, vector<1x32x32xbf16>
    %105 = vector.shape_cast %104 : vector<1x32x32xbf16> to vector<32x32xbf16>
    %cst_92 = arith.constant dense<0.000000e+00> : vector<288x32xf32>
    %106 = tpu.matmul %103, %105, %cst_92 {dimension_numbers = #tpu.dot_dimension_numbers<[1], [0], [0], [1], [0, 0, 1, 1], [], []>} : vector<288x32xbf16>, vector<32x32xbf16>, vector<288x32xf32> -> vector<288x32xf32>
    %107 = arith.addf %101, %106 : vector<288x32xf32>
    %c36_93 = arith.constant 36 : index
    %c0_94 = arith.constant 0 : index
    %108 = vector.load %arg12[%c36_93, %c0_94] : memref<342x32xf32, #tpu.memory_space<vmem>>, vector<288x32xf32>
    %109 = arith.truncf %108 : vector<288x32xf32> to vector<288x32xbf16>
    %c6_95 = arith.constant 6 : index
    %c0_96 = arith.constant 0 : index
    %c0_97 = arith.constant 0 : index
    %110 = vector.load %arg4[%c6_95, %c0_96, %c0_97] : memref<9x32x32xbf16, #tpu.memory_space<vmem>>, vector<1x32x32xbf16>
    %111 = vector.shape_cast %110 : vector<1x32x32xbf16> to vector<32x32xbf16>
    %cst_98 = arith.constant dense<0.000000e+00> : vector<288x32xf32>
    %112 = tpu.matmul %109, %111, %cst_98 {dimension_numbers = #tpu.dot_dimension_numbers<[1], [0], [0], [1], [0, 0, 1, 1], [], []>} : vector<288x32xbf16>, vector<32x32xbf16>, vector<288x32xf32> -> vector<288x32xf32>
    %113 = arith.addf %107, %112 : vector<288x32xf32>
    %c37_99 = arith.constant 37 : index
    %c0_100 = arith.constant 0 : index
    %114 = vector.load %arg12[%c37_99, %c0_100] : memref<342x32xf32, #tpu.memory_space<vmem>>, vector<288x32xf32>
    %115 = arith.truncf %114 : vector<288x32xf32> to vector<288x32xbf16>
    %c7_101 = arith.constant 7 : index
    %c0_102 = arith.constant 0 : index
    %c0_103 = arith.constant 0 : index
    %116 = vector.load %arg4[%c7_101, %c0_102, %c0_103] : memref<9x32x32xbf16, #tpu.memory_space<vmem>>, vector<1x32x32xbf16>
    %117 = vector.shape_cast %116 : vector<1x32x32xbf16> to vector<32x32xbf16>
    %cst_104 = arith.constant dense<0.000000e+00> : vector<288x32xf32>
    %118 = tpu.matmul %115, %117, %cst_104 {dimension_numbers = #tpu.dot_dimension_numbers<[1], [0], [0], [1], [0, 0, 1, 1], [], []>} : vector<288x32xbf16>, vector<32x32xbf16>, vector<288x32xf32> -> vector<288x32xf32>
    %119 = arith.addf %113, %118 : vector<288x32xf32>
    %c38_105 = arith.constant 38 : index
    %c0_106 = arith.constant 0 : index
    %120 = vector.load %arg12[%c38_105, %c0_106] : memref<342x32xf32, #tpu.memory_space<vmem>>, vector<288x32xf32>
    %121 = arith.truncf %120 : vector<288x32xf32> to vector<288x32xbf16>
    %c8_107 = arith.constant 8 : index
    %c0_108 = arith.constant 0 : index
    %c0_109 = arith.constant 0 : index
    %122 = vector.load %arg4[%c8_107, %c0_108, %c0_109] : memref<9x32x32xbf16, #tpu.memory_space<vmem>>, vector<1x32x32xbf16>
    %123 = vector.shape_cast %122 : vector<1x32x32xbf16> to vector<32x32xbf16>
    %cst_110 = arith.constant dense<0.000000e+00> : vector<288x32xf32>
    %124 = tpu.matmul %121, %123, %cst_110 {dimension_numbers = #tpu.dot_dimension_numbers<[1], [0], [0], [1], [0, 0, 1, 1], [], []>} : vector<288x32xbf16>, vector<32x32xbf16>, vector<288x32xf32> -> vector<288x32xf32>
    %125 = arith.addf %119, %124 : vector<288x32xf32>
    %c0_111 = arith.constant 0 : index
    %c0_112 = arith.constant 0 : index
    %126 = vector.load %arg5[%c0_111, %c0_112] : memref<1x32xf32, #tpu.memory_space<vmem>>, vector<1x32xf32>
    %127 = vector.broadcast %126 : vector<1x32xf32> to vector<288x32xf32>
    %128 = arith.addf %125, %127 : vector<288x32xf32>
    %cst_113 = arith.constant 0.000000e+00 : f32
    %129 = vector.broadcast %cst_113 : f32 to vector<288x32xf32>
    %130 = arith.maximumf %128, %129 : vector<288x32xf32>
    %131 = arith.truncf %130 : vector<288x32xf32> to vector<288x32xbf16>
    %c0_114 = arith.constant 0 : index
    %c0_115 = arith.constant 0 : index
    %132 = vector.load %arg6[%c0_114, %c0_115] : memref<32x15xbf16, #tpu.memory_space<vmem>>, vector<32x15xbf16>
    %cst_116 = arith.constant dense<0.000000e+00> : vector<288x15xf32>
    %133 = tpu.matmul %131, %132, %cst_116 {dimension_numbers = #tpu.dot_dimension_numbers<[1], [0], [0], [1], [0, 0, 1, 1], [], []>} : vector<288x32xbf16>, vector<32x15xbf16>, vector<288x15xf32> -> vector<288x15xf32>
    %c0_117 = arith.constant 0 : index
    %c0_118 = arith.constant 0 : index
    %134 = vector.load %arg7[%c0_117, %c0_118] : memref<1x15xf32, #tpu.memory_space<vmem>>, vector<1x15xf32>
    %135 = vector.broadcast %134 : vector<1x15xf32> to vector<288x15xf32>
    %136 = arith.addf %133, %135 : vector<288x15xf32>
    %137 = vector.extract_strided_slice %136 {offsets = [0, 0], sizes = [288, 3], strides = [1, 1]} : vector<288x15xf32> to vector<288x3xf32>
    %138 = vector.extract_strided_slice %136 {offsets = [0, 3], sizes = [288, 3], strides = [1, 1]} : vector<288x15xf32> to vector<288x3xf32>
    %139 = vector.extract_strided_slice %136 {offsets = [0, 6], sizes = [288, 3], strides = [1, 1]} : vector<288x15xf32> to vector<288x3xf32>
    %140 = vector.extract_strided_slice %136 {offsets = [0, 9], sizes = [288, 3], strides = [1, 1]} : vector<288x15xf32> to vector<288x3xf32>
    %cst_119 = arith.constant 4.13516665 : f32
    %141 = vector.broadcast %cst_119 : f32 to vector<288x3xf32>
    %142 = arith.minimumf %140, %141 : vector<288x3xf32>
    %143 = vector.extract_strided_slice %136 {offsets = [0, 12], sizes = [288, 3], strides = [1, 1]} : vector<288x15xf32> to vector<288x3xf32>
    %cst_120 = arith.constant 4.13516665 : f32
    %144 = vector.broadcast %cst_120 : f32 to vector<288x3xf32>
    %145 = arith.minimumf %143, %144 : vector<288x3xf32>
    %c0_121 = arith.constant 0 : index
    %c0_122 = arith.constant 0 : index
    %c0_123 = arith.constant 0 : index
    %146 = vector.load %arg8[%c0_121, %c0_122, %c0_123] : memref<4x288x3xf32, #tpu.memory_space<vmem>>, vector<1x288x3xf32>
    %147 = vector.shape_cast %146 : vector<1x288x3xf32> to vector<288x3xf32>
    %c1_124 = arith.constant 1 : index
    %c0_125 = arith.constant 0 : index
    %c0_126 = arith.constant 0 : index
    %148 = vector.load %arg8[%c1_124, %c0_125, %c0_126] : memref<4x288x3xf32, #tpu.memory_space<vmem>>, vector<1x288x3xf32>
    %149 = vector.shape_cast %148 : vector<1x288x3xf32> to vector<288x3xf32>
    %c2_127 = arith.constant 2 : index
    %c0_128 = arith.constant 0 : index
    %c0_129 = arith.constant 0 : index
    %150 = vector.load %arg8[%c2_127, %c0_128, %c0_129] : memref<4x288x3xf32, #tpu.memory_space<vmem>>, vector<1x288x3xf32>
    %151 = vector.shape_cast %150 : vector<1x288x3xf32> to vector<288x3xf32>
    %c3_130 = arith.constant 3 : index
    %c0_131 = arith.constant 0 : index
    %c0_132 = arith.constant 0 : index
    %152 = vector.load %arg8[%c3_130, %c0_131, %c0_132] : memref<4x288x3xf32, #tpu.memory_space<vmem>>, vector<1x288x3xf32>
    %153 = vector.shape_cast %152 : vector<1x288x3xf32> to vector<288x3xf32>
    %154 = arith.subf %151, %147 : vector<288x3xf32>
    %155 = arith.subf %153, %149 : vector<288x3xf32>
    %cst_133 = arith.constant 5.000000e-01 : f32
    %156 = vector.broadcast %cst_133 : f32 to vector<288x3xf32>
    %157 = arith.mulf %156, %154 : vector<288x3xf32>
    %158 = arith.addf %147, %157 : vector<288x3xf32>
    %cst_134 = arith.constant 5.000000e-01 : f32
    %159 = vector.broadcast %cst_134 : f32 to vector<288x3xf32>
    %160 = arith.mulf %159, %155 : vector<288x3xf32>
    %161 = arith.addf %149, %160 : vector<288x3xf32>
    %162 = arith.mulf %138, %154 : vector<288x3xf32>
    %163 = arith.addf %162, %158 : vector<288x3xf32>
    %164 = arith.mulf %139, %155 : vector<288x3xf32>
    %165 = arith.addf %164, %161 : vector<288x3xf32>
    %166 = math.exp %142 : vector<288x3xf32>
    %167 = arith.mulf %166, %154 : vector<288x3xf32>
    %168 = math.exp %145 : vector<288x3xf32>
    %169 = arith.mulf %168, %155 : vector<288x3xf32>
    %cst_135 = arith.constant 5.000000e-01 : f32
    %170 = vector.broadcast %cst_135 : f32 to vector<288x3xf32>
    %171 = arith.mulf %170, %167 : vector<288x3xf32>
    %172 = arith.subf %163, %171 : vector<288x3xf32>
    %cst_136 = arith.constant 0.000000e+00 : f32
    %cst_137 = arith.constant 1.600000e+01 : f32
    %173 = vector.broadcast %cst_136 : f32 to vector<288x3xf32>
    %174 = arith.maximumf %173, %172 : vector<288x3xf32>
    %175 = vector.broadcast %cst_137 : f32 to vector<288x3xf32>
    %176 = arith.minimumf %175, %174 : vector<288x3xf32>
    %c0_138 = arith.constant 0 : index
    %c0_139 = arith.constant 0 : index
    %c0_140 = arith.constant 0 : index
    %c0_141 = arith.constant 0 : index
    %177 = vector.load %arg11[%c0_138, %c0_139, %c0_140, %c0_141] : memref<1x4x288x3xf32, #tpu.memory_space<vmem>>, vector<1x1x288x3xf32>
    %178 = vector.shape_cast %177 : vector<1x1x288x3xf32> to vector<288x3xf32>
    %179 = vector.shape_cast %176 : vector<288x3xf32> to vector<1x1x288x3xf32>
    tpu.vector_store %arg11[%c0_138, %c0_139, %c0_140, %c0_141], %179 {strides = array<i32>} : memref<1x4x288x3xf32, #tpu.memory_space<vmem>>, vector<1x1x288x3xf32>,
    %cst_142 = arith.constant 5.000000e-01 : f32
    %180 = vector.broadcast %cst_142 : f32 to vector<288x3xf32>
    %181 = arith.mulf %180, %169 : vector<288x3xf32>
    %182 = arith.subf %165, %181 : vector<288x3xf32>
    %cst_143 = arith.constant 0.000000e+00 : f32
    %cst_144 = arith.constant 1.600000e+01 : f32
    %183 = vector.broadcast %cst_143 : f32 to vector<288x3xf32>
    %184 = arith.maximumf %183, %182 : vector<288x3xf32>
    %185 = vector.broadcast %cst_144 : f32 to vector<288x3xf32>
    %186 = arith.minimumf %185, %184 : vector<288x3xf32>
    %c0_145 = arith.constant 0 : index
    %c1_146 = arith.constant 1 : index
    %c0_147 = arith.constant 0 : index
    %c0_148 = arith.constant 0 : index
    %187 = vector.load %arg11[%c0_145, %c1_146, %c0_147, %c0_148] : memref<1x4x288x3xf32, #tpu.memory_space<vmem>>, vector<1x1x288x3xf32>
    %188 = vector.shape_cast %187 : vector<1x1x288x3xf32> to vector<288x3xf32>
    %189 = vector.shape_cast %186 : vector<288x3xf32> to vector<1x1x288x3xf32>
    tpu.vector_store %arg11[%c0_145, %c1_146, %c0_147, %c0_148], %189 {strides = array<i32>} : memref<1x4x288x3xf32, #tpu.memory_space<vmem>>, vector<1x1x288x3xf32>,
    %cst_149 = arith.constant 5.000000e-01 : f32
    %190 = vector.broadcast %cst_149 : f32 to vector<288x3xf32>
    %191 = arith.mulf %190, %167 : vector<288x3xf32>
    %192 = arith.addf %163, %191 : vector<288x3xf32>
    %cst_150 = arith.constant 0.000000e+00 : f32
    %cst_151 = arith.constant 1.600000e+01 : f32
    %193 = vector.broadcast %cst_150 : f32 to vector<288x3xf32>
    %194 = arith.maximumf %193, %192 : vector<288x3xf32>
    %195 = vector.broadcast %cst_151 : f32 to vector<288x3xf32>
    %196 = arith.minimumf %195, %194 : vector<288x3xf32>
    %c0_152 = arith.constant 0 : index
    %c2_153 = arith.constant 2 : index
    %c0_154 = arith.constant 0 : index
    %c0_155 = arith.constant 0 : index
    %197 = vector.load %arg11[%c0_152, %c2_153, %c0_154, %c0_155] : memref<1x4x288x3xf32, #tpu.memory_space<vmem>>, vector<1x1x288x3xf32>
    %198 = vector.shape_cast %197 : vector<1x1x288x3xf32> to vector<288x3xf32>
    %199 = vector.shape_cast %196 : vector<288x3xf32> to vector<1x1x288x3xf32>
    tpu.vector_store %arg11[%c0_152, %c2_153, %c0_154, %c0_155], %199 {strides = array<i32>} : memref<1x4x288x3xf32, #tpu.memory_space<vmem>>, vector<1x1x288x3xf32>,
    %cst_156 = arith.constant 5.000000e-01 : f32
    %200 = vector.broadcast %cst_156 : f32 to vector<288x3xf32>
    %201 = arith.mulf %200, %169 : vector<288x3xf32>
    %202 = arith.addf %165, %201 : vector<288x3xf32>
    %cst_157 = arith.constant 0.000000e+00 : f32
    %cst_158 = arith.constant 1.600000e+01 : f32
    %203 = vector.broadcast %cst_157 : f32 to vector<288x3xf32>
    %204 = arith.maximumf %203, %202 : vector<288x3xf32>
    %205 = vector.broadcast %cst_158 : f32 to vector<288x3xf32>
    %206 = arith.minimumf %205, %204 : vector<288x3xf32>
    %c0_159 = arith.constant 0 : index
    %c3_160 = arith.constant 3 : index
    %c0_161 = arith.constant 0 : index
    %c0_162 = arith.constant 0 : index
    %207 = vector.load %arg11[%c0_159, %c3_160, %c0_161, %c0_162] : memref<1x4x288x3xf32, #tpu.memory_space<vmem>>, vector<1x1x288x3xf32>
    %208 = vector.shape_cast %207 : vector<1x1x288x3xf32> to vector<288x3xf32>
    %209 = vector.shape_cast %206 : vector<288x3xf32> to vector<1x1x288x3xf32>
    tpu.vector_store %arg11[%c0_159, %c3_160, %c0_161, %c0_162], %209 {strides = array<i32>} : memref<1x4x288x3xf32, #tpu.memory_space<vmem>>, vector<1x1x288x3xf32>,
    %cst_163 = arith.constant 0.000000e+00 : f32
    %210 = vector.broadcast %cst_163 : f32 to vector<288x1xf32>
    %211 = arith.cmpf ogt, %0, %210 : vector<288x1xf32>
    %cst_164 = arith.constant -1.000000e+30 : f32
    %212 = vector.shape_cast %211 : vector<288x1xi1> to vector<288x1xi1>
    %213 = vector.broadcast %212 : vector<288x1xi1> to vector<288x3xi1>
    %214 = vector.broadcast %cst_164 : f32 to vector<288x3xf32>
    %215 = arith.select %213, %137, %214 : vector<288x3xi1>, vector<288x3xf32>
    %c0_165 = arith.constant 0 : index
    %c0_166 = arith.constant 0 : index
    %c0_167 = arith.constant 0 : index
    %216 = vector.load %arg10[%c0_165, %c0_166, %c0_167] : memref<1x288x3xf32, #tpu.memory_space<vmem>>, vector<1x288x3xf32>
    %217 = vector.shape_cast %216 : vector<1x288x3xf32> to vector<288x3xf32>
    %218 = vector.shape_cast %215 : vector<288x3xf32> to vector<1x288x3xf32>
    tpu.vector_store %arg10[%c0_165, %c0_166, %c0_167], %218 {strides = array<i32>} : memref<1x288x3xf32, #tpu.memory_space<vmem>>, vector<1x288x3xf32>,
    return
  }
  func.func @transform_0(%arg0: i32) -> (i32, i32, i32) {
    %c0_i32 = arith.constant 0 : i32
    %c0_i32_0 = arith.constant 0 : i32
    %c0_i32_1 = arith.constant 0 : i32
    return %arg0, %c0_i32, %c0_i32_0 : i32, i32, i32
  }
  func.func @transform_1(%arg0: i32) -> (i32, i32, i32) {
    %c0_i32 = arith.constant 0 : i32
    %c0_i32_0 = arith.constant 0 : i32
    %c0_i32_1 = arith.constant 0 : i32
    %c0_i32_2 = arith.constant 0 : i32
    return %c0_i32, %c0_i32_0, %c0_i32_1 : i32, i32, i32
  }
  func.func @transform_2(%arg0: i32) -> (i32, i32) {
    %c0_i32 = arith.constant 0 : i32
    %c0_i32_0 = arith.constant 0 : i32
    %c0_i32_1 = arith.constant 0 : i32
    return %c0_i32, %c0_i32_0 : i32, i32
  }
  func.func @transform_3(%arg0: i32) -> (i32, i32, i32) {
    %c0_i32 = arith.constant 0 : i32
    %c0_i32_0 = arith.constant 0 : i32
    %c0_i32_1 = arith.constant 0 : i32
    %c0_i32_2 = arith.constant 0 : i32
    return %c0_i32, %c0_i32_0, %c0_i32_1 : i32, i32, i32
  }
  func.func @transform_4(%arg0: i32) -> (i32, i32) {
    %c0_i32 = arith.constant 0 : i32
    %c0_i32_0 = arith.constant 0 : i32
    %c0_i32_1 = arith.constant 0 : i32
    return %c0_i32, %c0_i32_0 : i32, i32
  }
  func.func @transform_5(%arg0: i32) -> (i32, i32) {
    %c0_i32 = arith.constant 0 : i32
    %c0_i32_0 = arith.constant 0 : i32
    %c0_i32_1 = arith.constant 0 : i32
    return %c0_i32, %c0_i32_0 : i32, i32
  }
  func.func @transform_6(%arg0: i32) -> (i32, i32) {
    %c0_i32 = arith.constant 0 : i32
    %c0_i32_0 = arith.constant 0 : i32
    %c0_i32_1 = arith.constant 0 : i32
    return %c0_i32, %c0_i32_0 : i32, i32
  }
  func.func @transform_7(%arg0: i32) -> (i32, i32, i32) {
    %c0_i32 = arith.constant 0 : i32
    %c0_i32_0 = arith.constant 0 : i32
    %c0_i32_1 = arith.constant 0 : i32
    %c0_i32_2 = arith.constant 0 : i32
    return %c0_i32, %c0_i32_0, %c0_i32_1 : i32, i32, i32
  }
  func.func @transform_8(%arg0: i32) -> (i32, i32) {
    %c0_i32 = arith.constant 0 : i32
    %c0_i32_0 = arith.constant 0 : i32
    %c0_i32_1 = arith.constant 0 : i32
    return %c0_i32, %c0_i32_0 : i32, i32
  }
  func.func @transform_9(%arg0: i32) -> (i32, i32, i32) {
    %c0_i32 = arith.constant 0 : i32
    %c0_i32_0 = arith.constant 0 : i32
    %c0_i32_1 = arith.constant 0 : i32
    return %arg0, %c0_i32, %c0_i32_0 : i32, i32, i32
  }
  func.func @transform_10(%arg0: i32) -> (i32, i32, i32, i32) {
    %c0_i32 = arith.constant 0 : i32
    %c0_i32_0 = arith.constant 0 : i32
    %c0_i32_1 = arith.constant 0 : i32
    %c0_i32_2 = arith.constant 0 : i32
    return %arg0, %c0_i32, %c0_i32_0, %c0_i32_1 : i32, i32, i32, i32
  }
}

</mosaic_0001>

<llo_original>
// kernel: _proposal_arrays.1
$region0: #{_proposal_arrays.1}
  #allocation0 [shape = 'u32[]', space=smem, size = 0x4, offset = 0x4, fixed_abs, tag = 'smem constant byte address 0x4 - core index']
  #allocation1 [shape = 'u32[144,128]{1,0:T(1,128)}', space=vmem, size = 0x12000, scoped, tag = 'internal scratch']
  #allocation2 [shape = 'f32[342,32]{1,0:T(8,128)}', space=vmem, size = 0x2b000, scoped, tag = 'scratch operand']
  %s0 = inlined_call_operand.vmem [shape: f32[2,342,3], index: 0, kind: input, shape index: {}]
  %s1 = inlined_call_operand.vmem [shape: bf16[9,3,32], index: 1, kind: input, shape index: {}]
  %s2 = inlined_call_operand.vmem [shape: f32[1,32], index: 2, kind: input, shape index: {}]
  %s3 = inlined_call_operand.vmem [shape: bf16[9,32,32], index: 3, kind: input, shape index: {}]
  %s4 = inlined_call_operand.vmem [shape: f32[1,32], index: 4, kind: input, shape index: {}]
  %s5 = inlined_call_operand.vmem [shape: bf16[32,15], index: 5, kind: input, shape index: {}]
  %s6 = inlined_call_operand.vmem [shape: f32[1,15], index: 6, kind: input, shape index: {}]
  %s7 = inlined_call_operand.vmem [shape: f32[4,288,3], index: 7, kind: input, shape index: {}]
  %s8 = inlined_call_operand.vmem [shape: f32[288,1], index: 8, kind: input, shape index: {}]
  %s9 = inlined_call_operand.vmem [shape: f32[2,288,3], index: 9, kind: output, shape index: {0}]
  %s10 = inlined_call_operand.vmem [shape: f32[2,4,288,3], index: 10, kind: output, shape index: {1}]
  %11 = xla_tuple %s9, %s10
  %s12 = sld [smem:[#allocation0]]
  $region77: #{_proposal_arrays.1} parent=0
    _
  %s14 = ssub.s32 1, %s12
  %s15 = scalar_select 0, %s14, %s12
  loop: start=0, step=1, limit=4
  $region2: #{_proposal_arrays.1} parent=0 // loop_pre_header
    _
  $region3: #{_proposal_arrays.1} parent=0 // loop_header
    %s17 = sphi 0, %s21
    %p18 = scmp.ge.s32.totalorder %s17, 4
    %s27 = sphi 0, %s29
    %s30 = sphi 0, %s27
    %s31 = sphi 0, %s30
    %s47 = sphi 0, %s31
    %s51 = sphi 0, %s51
    %s53 = sphi 0, %s51
    %s54 = sphi 0, %s53
    %s68 = sphi 0, %s54
    %s72 = sphi 0, %s72
    %s74 = sphi 0, %s72
    %s75 = sphi 0, %s74
    %s89 = sphi 0, %s75
    %s93 = sphi 0, %s93
    %s95 = sphi 0, %s93
    %s96 = sphi 0, %s95
    %s110 = sphi 0, %s96
    %s114 = sphi 0, %s114
    %s116 = sphi 0, %s114
    %s117 = sphi 0, %s116
    %s131 = sphi 0, %s117
    %s135 = sphi 0, %s135
    %s137 = sphi 0, %s135
    %s138 = sphi 0, %s137
    %s152 = sphi 0, %s138
    %s156 = sphi 0, %s156
    %s158 = sphi 0, %s156
    %s159 = sphi 0, %s158
    %s173 = sphi 0, %s159
    %s177 = sphi 0, %s177
    %s179 = sphi 0, %s177
    %s180 = sphi 0, %s179
    %s194 = sphi 0, %s180
    %s198 = sphi 0, %s198
    %s200 = sphi 0, %s198
    %s201 = sphi 0, %s200
    %s215 = sphi 0, %s201
    %s221 = sphi 0, %s223
    %s224 = sphi 0, %s221
    %s225 = sphi 0, %s224
    %s241 = sphi 0, %s225
    %s247 = sphi 0, %s249
    %s250 = sphi 0, %s247
    %s251 = sphi 0, %s250
    %s267 = sphi 0, %s251
  $region4: #{_proposal_arrays.1} parent=0 // loop_header_branch
    %20 = sbr.rel (%p18) target = $region8
  $region5: #{_proposal_arrays.1} parent=0 // loop_body
    %s22 = ssub.s32 %s17, 1
    %s23 = ssub.s32 %s17, 2
    %s24 = sadd.s32 %s17, 1
    %s25 = ssub.s32 %s17, %s24
    %p26 = scmp.eq.s32.totalorder %s25, 0
    %s28 = sadd.s32 %s27, 1
    %s29 = scalar_select %p26, %s27, %s28
    %p32 = pneg %p26
    %p33 = scmp.eq.s32.totalorder %s17, 1
    %p34 = por %p32, %p33
    %p35 = scmp.ne.s32.totalorder %s27, %s30
    %p36 = scmp.eq.s32.totalorder %s17, 0
    %p37 = por %p35, %p36
    %p38 = scmp.ne.s32.totalorder %s27, %s30
    %p39 = scmp.eq.s32.totalorder %s22, 1
    %p40 = por %p38, %p39
    %p41 = scmp.ne.s32.totalorder %s30, %s31
    %p42 = scmp.eq.s32.totalorder %s22, 0
    %p43 = por %p41, %p42
    %p44 = scmp.ne.s32.totalorder %s30, %s31
    %p45 = scmp.eq.s32.totalorder %s23, 1
    %p46 = por %p44, %p45
    %p48 = scmp.ne.s32.totalorder %s31, %s47
    %p49 = scmp.eq.s32.totalorder %s23, 0
    %p50 = por %p48, %p49
    %s52 = sadd.s32 %s51, 1
    %p55 = scmp.eq.s32.totalorder %s17, 1
    %p56 = scmp.ne.s32.totalorder %s51, %s53
    %p57 = scmp.eq.s32.totalorder %s17, 0
    %p58 = por %p56, %p57
    %p59 = scmp.ne.s32.totalorder %s51, %s53
    %p60 = scmp.eq.s32.totalorder %s22, 1
    %p61 = por %p59, %p60
    %p62 = scmp.ne.s32.totalorder %s53, %s54
    %p63 = scmp.eq.s32.totalorder %s22, 0
    %p64 = por %p62, %p63
    %p65 = scmp.ne.s32.totalorder %s53, %s54
    %p66 = scmp.eq.s32.totalorder %s23, 1
    %p67 = por %p65, %p66
    %p69 = scmp.ne.s32.totalorder %s54, %s68
    %p70 = scmp.eq.s32.totalorder %s23, 0
    %p71 = por %p69, %p70
    %s73 = sadd.s32 %s72, 1
    %p76 = scmp.eq.s32.totalorder %s17, 1
    %p77 = scmp.ne.s32.totalorder %s72, %s74
    %p78 = scmp.eq.s32.totalorder %s17, 0
    %p79 = por %p77, %p78
    %p80 = scmp.ne.s32.totalorder %s72, %s74
    %p81 = scmp.eq.s32.totalorder %s22, 1
    %p82 = por %p80, %p81
    %p83 = scmp.ne.s32.totalorder %s74, %s75
    %p84 = scmp.eq.s32.totalorder %s22, 0
    %p85 = por %p83, %p84
    %p86 = scmp.ne.s32.totalorder %s74, %s75
    %p87 = scmp.eq.s32.totalorder %s23, 1
    %p88 = por %p86, %p87
    %p90 = scmp.ne.s32.totalorder %s75, %s89
    %p91 = scmp.eq.s32.totalorder %s23, 0
    %p92 = por %p90, %p91
    %s94 = sadd.s32 %s93, 1
    %p97 = scmp.eq.s32.totalorder %s17, 1
    %p98 = scmp.ne.s32.totalorder %s93, %s95
    %p99 = scmp.eq.s32.totalorder %s17, 0
    %p100 = por %p98, %p99
    %p101 = scmp.ne.s32.totalorder %s93, %s95
    %p102 = scmp.eq.s32.totalorder %s22, 1
    %p103 = por %p101, %p102
    %p104 = scmp.ne.s32.totalorder %s95, %s96
    %p105 = scmp.eq.s32.totalorder %s22, 0
    %p106 = por %p104, %p105
    %p107 = scmp.ne.s32.totalorder %s95, %s96
    %p108 = scmp.eq.s32.totalorder %s23, 1
    %p109 = por %p107, %p108
    %p111 = scmp.ne.s32.totalorder %s96, %s110
    %p112 = scmp.eq.s32.totalorder %s23, 0
    %p113 = por %p111, %p112
    %s115 = sadd.s32 %s114, 1
    %p118 = scmp.eq.s32.totalorder %s17, 1
    %p119 = scmp.ne.s32.totalorder %s114, %s116
    %p120 = scmp.eq.s32.totalorder %s17, 0
    %p121 = por %p119, %p120
    %p122 = scmp.ne.s32.totalorder %s114, %s116
    %p123 = scmp.eq.s32.totalorder %s22, 1
    %p124 = por %p122, %p123
    %p125 = scmp.ne.s32.totalorder %s116, %s117
    %p126 = scmp.eq.s32.totalorder %s22, 0
    %p127 = por %p125, %p126
    %p128 = scmp.ne.s32.totalorder %s116, %s117
    %p129 = scmp.eq.s32.totalorder %s23, 1
    %p130 = por %p128, %p129
    %p132 = scmp.ne.s32.totalorder %s117, %s131
    %p133 = scmp.eq.s32.totalorder %s23, 0
    %p134 = por %p132, %p133
    %s136 = sadd.s32 %s135, 1
    %p139 = scmp.eq.s32.totalorder %s17, 1
    %p140 = scmp.ne.s32.totalorder %s135, %s137
    %p141 = scmp.eq.s32.totalorder %s17, 0
    %p142 = por %p140, %p141
    %p143 = scmp.ne.s32.totalorder %s135, %s137
    %p144 = scmp.eq.s32.totalorder %s22, 1
    %p145 = por %p143, %p144
    %p146 = scmp.ne.s32.totalorder %s137, %s138
    %p147 = scmp.eq.s32.totalorder %s22, 0
    %p148 = por %p146, %p147
    %p149 = scmp.ne.s32.totalorder %s137, %s138
    %p150 = scmp.eq.s32.totalorder %s23, 1
    %p151 = por %p149, %p150
    %p153 = scmp.ne.s32.totalorder %s138, %s152
    %p154 = scmp.eq.s32.totalorder %s23, 0
    %p155 = por %p153, %p154
    %s157 = sadd.s32 %s156, 1
    %p160 = scmp.eq.s32.totalorder %s17, 1
    %p161 = scmp.ne.s32.totalorder %s156, %s158
    %p162 = scmp.eq.s32.totalorder %s17, 0
    %p163 = por %p161, %p162
    %p164 = scmp.ne.s32.totalorder %s156, %s158
    %p165 = scmp.eq.s32.totalorder %s22, 1
    %p166 = por %p164, %p165
    %p167 = scmp.ne.s32.totalorder %s158, %s159
    %p168 = scmp.eq.s32.totalorder %s22, 0
    %p169 = por %p167, %p168
    %p170 = scmp.ne.s32.totalorder %s158, %s159
    %p171 = scmp.eq.s32.totalorder %s23, 1
    %p172 = por %p170, %p171
    %p174 = scmp.ne.s32.totalorder %s159, %s173
    %p175 = scmp.eq.s32.totalorder %s23, 0
    %p176 = por %p174, %p175
    %s178 = sadd.s32 %s177, 1
    %p181 = scmp.eq.s32.totalorder %s17, 1
    %p182 = scmp.ne.s32.totalorder %s177, %s179
    %p183 = scmp.eq.s32.totalorder %s17, 0
    %p184 = por %p182, %p183
    %p185 = scmp.ne.s32.totalorder %s177, %s179
    %p186 = scmp.eq.s32.totalorder %s22, 1
    %p187 = por %p185, %p186
    %p188 = scmp.ne.s32.totalorder %s179, %s180
    %p189 = scmp.eq.s32.totalorder %s22, 0
    %p190 = por %p188, %p189
    %p191 = scmp.ne.s32.totalorder %s179, %s180
    %p192 = scmp.eq.s32.totalorder %s23, 1
    %p193 = por %p191, %p192
    %p195 = scmp.ne.s32.totalorder %s180, %s194
    %p196 = scmp.eq.s32.totalorder %s23, 0
    %p197 = por %p195, %p196
    %s199 = sadd.s32 %s198, 1
    %p202 = scmp.eq.s32.totalorder %s17, 1
    %p203 = scmp.ne.s32.totalorder %s198, %s200
    %p204 = scmp.eq.s32.totalorder %s17, 0
    %p205 = por %p203, %p204
    %p206 = scmp.ne.s32.totalorder %s198, %s200
    %p207 = scmp.eq.s32.totalorder %s22, 1
    %p208 = por %p206, %p207
    %p209 = scmp.ne.s32.totalorder %s200, %s201
    %p210 = scmp.eq.s32.totalorder %s22, 0
    %p211 = por %p209, %p210
    %p212 = scmp.ne.s32.totalorder %s200, %s201
    %p213 = scmp.eq.s32.totalorder %s23, 1
    %p214 = por %p212, %p213
    %p216 = scmp.ne.s32.totalorder %s201, %s215
    %p217 = scmp.eq.s32.totalorder %s23, 0
    %p218 = por %p216, %p217
    %s219 = ssub.s32 %s17, %s24
    %p220 = scmp.eq.s32.totalorder %s219, 0
    %s222 = sadd.s32 %s221, 1
    %s223 = scalar_select %p220, %s221, %s222
    %p226 = pneg %p220
    %p227 = scmp.eq.s32.totalorder %s17, 1
    %p228 = por %p226, %p227
    %p229 = scmp.ne.s32.totalorder %s221, %s224
    %p230 = scmp.eq.s32.totalorder %s17, 0
    %p231 = por %p229, %p230
    %p232 = scmp.ne.s32.totalorder %s221, %s224
    %p233 = scmp.eq.s32.totalorder %s22, 1
    %p234 = por %p232, %p233
    %p235 = scmp.ne.s32.totalorder %s224, %s225
    %p236 = scmp.eq.s32.totalorder %s22, 0
    %p237 = por %p235, %p236
    %p238 = scmp.ne.s32.totalorder %s224, %s225
    %p239 = scmp.eq.s32.totalorder %s23, 1
    %p240 = por %p238, %p239
    %p242 = scmp.ne.s32.totalorder %s225, %s241
    %p243 = scmp.eq.s32.totalorder %s23, 0
    %p244 = por %p242, %p243
    %s245 = ssub.s32 %s17, %s24
    %p246 = scmp.eq.s32.totalorder %s245, 0
    %s248 = sadd.s32 %s247, 1
    %s249 = scalar_select %p246, %s247, %s248
    %p252 = pneg %p246
    %p253 = scmp.eq.s32.totalorder %s17, 1
    %p254 = por %p252, %p253
    %p255 = scmp.ne.s32.totalorder %s247, %s250
    %p256 = scmp.eq.s32.totalorder %s17, 0
    %p257 = por %p255, %p256
    %p258 = scmp.ne.s32.totalorder %s247, %s250
    %p259 = scmp.eq.s32.totalorder %s22, 1
    %p260 = por %p258, %p259
    %p261 = scmp.ne.s32.totalorder %s250, %s251
    %p262 = scmp.eq.s32.totalorder %s22, 0
    %p263 = por %p261, %p262
    %p264 = scmp.ne.s32.totalorder %s250, %s251
    %p265 = scmp.eq.s32.totalorder %s23, 1
    %p266 = por %p264, %p265
    %p268 = scmp.ne.s32.totalorder %s251, %s267
    %p269 = scmp.eq.s32.totalorder %s23, 0
    %p270 = por %p268, %p269
    %p271 = scmp.le.s32.totalorder 1, %s17
    %p272 = scmp.lt.s32.totalorder %s17, 3
    %p273 = pnand %p271, %p272
    %p274 = pneg %p273
    // Predicated region
    $region9: #{_proposal_arrays.1} parent=5 // pred_check
      _
    $region10: #{_proposal_arrays.1} parent=5 // pred_check_branch
      %276 = sbr.rel (%p273) target = $region12
    $region11: #{_proposal_arrays.1} parent=5 // pred_region
      %s277 = ssub.s32 %s17, 1
      // Predicated region
      $region13: #{_proposal_arrays.1} parent=11 // pred_check
        %p278 = pneg %p64
      $region14: #{_proposal_arrays.1} parent=11 // pred_check_branch
        %280 = sbr.rel (%p278) target = $region16
      $region15: #{_proposal_arrays.1} parent=11 // pred_region
        _
      $region16: #{_proposal_arrays.1} parent=11 // pred_fallthru
        _
      // Predicated region
      $region17: #{_proposal_arrays.1} parent=11 // pred_check
        %p281 = pneg %p85
      $region18: #{_proposal_arrays.1} parent=11 // pred_check_branch
        %283 = sbr.rel (%p281) target = $region20
      $region19: #{_proposal_arrays.1} parent=11 // pred_region
        _
      $region20: #{_proposal_arrays.1} parent=11 // pred_fallthru
        _
      // Predicated region
      $region21: #{_proposal_arrays.1} parent=11 // pred_check
        %p284 = pneg %p106
      $region22: #{_proposal_arrays.1} parent=11 // pred_check_branch
        %286 = sbr.rel (%p284) target = $region24
      $region23: #{_proposal_arrays.1} parent=11 // pred_region
        _
      $region24: #{_proposal_arrays.1} parent=11 // pred_fallthru
        _
      // Predicated region
      $region25: #{_proposal_arrays.1} parent=11 // pred_check
        %p287 = pneg %p127
      $region26: #{_proposal_arrays.1} parent=11 // pred_check_branch
        %289 = sbr.rel (%p287) target = $region28
      $region27: #{_proposal_arrays.1} parent=11 // pred_region
        _
      $region28: #{_proposal_arrays.1} parent=11 // pred_fallthru
        _
      // Predicated region
      $region29: #{_proposal_arrays.1} parent=11 // pred_check
        %p290 = pneg %p148
      $region30: #{_proposal_arrays.1} parent=11 // pred_check_branch
        %292 = sbr.rel (%p290) target = $region32
      $region31: #{_proposal_arrays.1} parent=11 // pred_region
        _
      $region32: #{_proposal_arrays.1} parent=11 // pred_fallthru
        _
      // Predicated region
      $region33: #{_proposal_arrays.1} parent=11 // pred_check
        %p293 = pneg %p169
      $region34: #{_proposal_arrays.1} parent=11 // pred_check_branch
        %295 = sbr.rel (%p293) target = $region36
      $region35: #{_proposal_arrays.1} parent=11 // pred_region
        _
      $region36: #{_proposal_arrays.1} parent=11 // pred_fallthru
        _
      // Predicated region
      $region37: #{_proposal_arrays.1} parent=11 // pred_check
        %p296 = pneg %p190
      $region38: #{_proposal_arrays.1} parent=11 // pred_check_branch
        %298 = sbr.rel (%p296) target = $region40
      $region39: #{_proposal_arrays.1} parent=11 // pred_region
        _
      $region40: #{_proposal_arrays.1} parent=11 // pred_fallthru
        _
      // Predicated region
      $region41: #{_proposal_arrays.1} parent=11 // pred_check
        %p299 = pneg %p211
      $region42: #{_proposal_arrays.1} parent=11 // pred_check_branch
        %301 = sbr.rel (%p299) target = $region44
      $region43: #{_proposal_arrays.1} parent=11 // pred_region
        _
      $region44: #{_proposal_arrays.1} parent=11 // pred_fallthru
        _
    $region12: #{_proposal_arrays.1} parent=5 // pred_fallthru
      _
    %p302 = scmp.lt.s32.totalorder %s17, 2
    // Predicated region
    $region45: #{_proposal_arrays.1} parent=5 // pred_check
      %p303 = pneg %p302
    $region46: #{_proposal_arrays.1} parent=5 // pred_check_branch
      %305 = sbr.rel (%p303) target = $region48
    $region47: #{_proposal_arrays.1} parent=5 // pred_region
      // Predicated region
      $region49: #{_proposal_arrays.1} parent=47 // pred_check
        %p306 = pneg %p37
      $region50: #{_proposal_arrays.1} parent=47 // pred_check_branch
        %308 = sbr.rel (%p306) target = $region52
      $region51: #{_proposal_arrays.1} parent=47 // pred_region
        %p309 = scmp.lt.s32.totalorder %s17, 1
        %s310 = scalar_select %p309, %s17, 1
        %s311 = smul.addr %s310, 43
        %s312 = smul.addr %s311, 8
        %s313 = scalar_lea.vmem %s0, %s312
      $region52: #{_proposal_arrays.1} parent=47 // pred_fallthru
        _
    $region48: #{_proposal_arrays.1} parent=5 // pred_fallthru
      _
    %p314 = scmp.le.s32.totalorder 1, %s17
    %p315 = scmp.lt.s32.totalorder %s17, 3
    %p316 = pnand %p314, %p315
    %p317 = pneg %p316
    // Predicated region
    $region53: #{_proposal_arrays.1} parent=5 // pred_check
      _
    $region54: #{_proposal_arrays.1} parent=5 // pred_check_branch
      %319 = sbr.rel (%p316) target = $region56
    $region55: #{_proposal_arrays.1} parent=5 // pred_region
      %s320 = ssub.s32 %s17, 1
      %p321 = scmp.lt.s32.totalorder %s22, 1
      %s322 = scalar_select %p321, %s22, 1
      %s323 = smul.addr %s322, 43
      %s324 = smul.addr %s323, 8
      %s325 = scalar_lea.vmem %s0, %s324
      %p326 = pneg %p43
      %p327 = pneg %p40
      %p328 = pneg %p64
      %p329 = pneg %p61
      %p330 = pneg %p85
      %p331 = pneg %p82
      %p332 = pneg %p106
      %p333 = pneg %p103
      %p334 = pneg %p127
      %p335 = pneg %p124
      %p336 = pneg %p148
      %p337 = pneg %p145
      %p338 = pneg %p169
      %p339 = pneg %p166
      %p340 = pneg %p190
      %p341 = pneg %p187
      %p342 = pneg %p211
      %p343 = pneg %p208
      %p344 = pneg %p237
      %p345 = pneg %p234
      %p346 = scmp.lt.s32.totalorder %s22, 1
      %s347 = scalar_select %p346, %s22, 1
      %s348 = smul.addr %s347, 36
      %s349 = smul.addr %s348, 8
      %s350 = scalar_lea.vmem %s9, %s349
      %p351 = pneg %p263
      %p352 = pneg %p260
      %p353 = scmp.lt.s32.totalorder %s22, 1
      %s354 = scalar_select %p353, %s22, 1
      %s355 = smul.addr %s354, 144
      %s356 = smul.addr %s355, 8
      %s357 = scalar_lea.vmem %s10, %s356
      %p358 = scmp.lt.s32.totalorder %s22, 1
      %s359 = scalar_select %p358, %s22, 1
      %s360 = smul.addr %s359, 43
      %s361 = smul.addr %s360, 8
      %s362 = scalar_lea.vmem %s0, %s361
      %p363 = scmp.lt.s32.totalorder %s22, 1
      %s364 = scalar_select %p363, %s22, 1
      %s365 = smul.addr %s364, 36
      %s366 = smul.addr %s365, 8
      %s367 = scalar_lea.vmem %s9, %s366
      %p368 = scmp.lt.s32.totalorder %s22, 1
      %s369 = scalar_select %p368, %s22, 1
      %s370 = smul.addr %s369, 144
      %s371 = smul.addr %s370, 8
      %s372 = scalar_lea.vmem %s10, %s371
      %v374 = vld [vmem:[%s8] sm:$0xff]
      %v375 = vld [vmem:[%s8 + $0x8] sm:$0xff]
      %v376 = vld [vmem:[%s8 + $0x10] sm:$0xff]
      %v377 = vld [vmem:[%s8 + $0x18] sm:$0xff]
      %v378 = vld [vmem:[%s8 + $0x20] sm:$0xff]
      %v379 = vld [vmem:[%s8 + $0x28] sm:$0xff]
      %v380 = vld [vmem:[%s8 + $0x30] sm:$0xff]
      %v381 = vld [vmem:[%s8 + $0x38] sm:$0xff]
      %v382 = vld [vmem:[%s8 + $0x40] sm:$0xff]
      %v383 = vld [vmem:[%s8 + $0x48] sm:$0xff]
      %v384 = vld [vmem:[%s8 + $0x50] sm:$0xff]
      %v385 = vld [vmem:[%s8 + $0x58] sm:$0xff]
      %v386 = vld [vmem:[%s8 + $0x60] sm:$0xff]
      %v387 = vld [vmem:[%s8 + $0x68] sm:$0xff]
      %v388 = vld [vmem:[%s8 + $0x70] sm:$0xff]
      %v389 = vld [vmem:[%s8 + $0x78] sm:$0xff]
      %v390 = vld [vmem:[%s8 + $0x80] sm:$0xff]
      %v391 = vld [vmem:[%s8 + $0x88] sm:$0xff]
      %v392 = vld [vmem:[%s8 + $0x90] sm:$0xff]
      %v393 = vld [vmem:[%s8 + $0x98] sm:$0xff]
      %v394 = vld [vmem:[%s8 + $0xa0] sm:$0xff]
      %v395 = vld [vmem:[%s8 + $0xa8] sm:$0xff]
      %v396 = vld [vmem:[%s8 + $0xb0] sm:$0xff]
      %v397 = vld [vmem:[%s8 + $0xb8] sm:$0xff]
      %v398 = vld [vmem:[%s8 + $0xc0] sm:$0xff]
      %v399 = vld [vmem:[%s8 + $0xc8] sm:$0xff]
      %v400 = vld [vmem:[%s8 + $0xd0] sm:$0xff]
      %v401 = vld [vmem:[%s8 + $0xd8] sm:$0xff]
      %v402 = vld [vmem:[%s8 + $0xe0] sm:$0xff]
      %v403 = vld [vmem:[%s8 + $0xe8] sm:$0xff]
      %v404 = vld [vmem:[%s8 + $0xf0] sm:$0xff]
      %v405 = vld [vmem:[%s8 + $0xf8] sm:$0xff]
      %v406 = vld [vmem:[%s8 + $0x100] sm:$0xff]
      %v407 = vld [vmem:[%s8 + $0x108] sm:$0xff]
      %v408 = vld [vmem:[%s8 + $0x110] sm:$0xff]
      %v409 = vld [vmem:[%s8 + $0x118] sm:$0xff]
      %v410 = vld [vmem:[%s362] sm:$0xff]
      %v411 = vld [vmem:[%s362 + $0x8] sm:$0xff]
      %v412 = vld [vmem:[%s362 + $0x10] sm:$0xff]
      %v413 = vld [vmem:[%s362 + $0x18] sm:$0xff]
      %v414 = vld [vmem:[%s362 + $0x20] sm:$0xff]
      %v415 = vld [vmem:[%s362 + $0x28] sm:$0xff]
      %v416 = vld [vmem:[%s362 + $0x30] sm:$0xff]
      %v417 = vld [vmem:[%s362 + $0x38] sm:$0xff]
      %v418 = vld [vmem:[%s362 + $0x40] sm:$0xff]
      %v419 = vld [vmem:[%s362 + $0x48] sm:$0xff]
      %v420 = vld [vmem:[%s362 + $0x50] sm:$0xff]
      %v421 = vld [vmem:[%s362 + $0x58] sm:$0xff]
      %v422 = vld [vmem:[%s362 + $0x60] sm:$0xff]
      %v423 = vld [vmem:[%s362 + $0x68] sm:$0xff]
      %v424 = vld [vmem:[%s362 + $0x70] sm:$0xff]
      %v425 = vld [vmem:[%s362 + $0x78] sm:$0xff]
      %v426 = vld [vmem:[%s362 + $0x80] sm:$0xff]
      %v427 = vld [vmem:[%s362 + $0x88] sm:$0xff]
      %v428 = vld [vmem:[%s362 + $0x90] sm:$0xff]
      %v429 = vld [vmem:[%s362 + $0x98] sm:$0xff]
      %v430 = vld [vmem:[%s362 + $0xa0] sm:$0xff]
      %v431 = vld [vmem:[%s362 + $0xa8] sm:$0xff]
      %v432 = vld [vmem:[%s362 + $0xb0] sm:$0xff]
      %v433 = vld [vmem:[%s362 + $0xb8] sm:$0xff]
      %v434 = vld [vmem:[%s362 + $0xc0] sm:$0xff]
      %v435 = vld [vmem:[%s362 + $0xc8] sm:$0xff]
      %v436 = vld [vmem:[%s362 + $0xd0] sm:$0xff]
      %v437 = vld [vmem:[%s362 + $0xd8] sm:$0xff]
      %v438 = vld [vmem:[%s362 + $0xe0] sm:$0xff]
      %v439 = vld [vmem:[%s362 + $0xe8] sm:$0xff]
      %v440 = vld [vmem:[%s362 + $0xf0] sm:$0xff]
      %v441 = vld [vmem:[%s362 + $0xf8] sm:$0xff]
      %v442 = vld [vmem:[%s362 + $0x100] sm:$0xff]
      %v443 = vld [vmem:[%s362 + $0x108] sm:$0xff]
      %v444 = vld [vmem:[%s362 + $0x110] sm:$0xff]
      %v445 = vld [vmem:[%s362 + $0x118] sm:$0xff]
      %v446 = vpack.c.bf16 %v411, %v410
      %v447 = vpack.c.bf16 %v413, %v412
      %v448 = vpack.c.bf16 %v415, %v414
      %v449 = vpack.c.bf16 %v417, %v416
      %v450 = vpack.c.bf16 %v419, %v418
      %v451 = vpack.c.bf16 %v421, %v420
      %v452 = vpack.c.bf16 %v423, %v422
      %v453 = vpack.c.bf16 %v425, %v424
      %v454 = vpack.c.bf16 %v427, %v426
      %v455 = vpack.c.bf16 %v429, %v428
      %v456 = vpack.c.bf16 %v431, %v430
      %v457 = vpack.c.bf16 %v433, %v432
      %v458 = vpack.c.bf16 %v435, %v434
      %v459 = vpack.c.bf16 %v437, %v436
      %v460 = vpack.c.bf16 %v439, %v438
      %v461 = vpack.c.bf16 %v441, %v440
      %v462 = vpack.c.bf16 %v443, %v442
      %v463 = vpack.c.bf16 %v445, %v444
      %v464 = vld [vmem:[%s1] sm:$0x3]
      %v465 = vld [vmem:[%s362 + $0x1] sm:$0xff]
      %v466 = vld [vmem:[%s362 + $0x9] sm:$0xff]
      %v467 = vld [vmem:[%s362 + $0x11] sm:$0xff]
      %v468 = vld [vmem:[%s362 + $0x19] sm:$0xff]
      %v469 = vld [vmem:[%s362 + $0x21] sm:$0xff]
      %v470 = vld [vmem:[%s362 + $0x29] sm:$0xff]
      %v471 = vld [vmem:[%s362 + $0x31] sm:$0xff]
      %v472 = vld [vmem:[%s362 + $0x39] sm:$0xff]
      %v473 = vld [vmem:[%s362 + $0x41] sm:$0xff]
      %v474 = vld [vmem:[%s362 + $0x49] sm:$0xff]
      %v475 = vld [vmem:[%s362 + $0x51] sm:$0xff]
      %v476 = vld [vmem:[%s362 + $0x59] sm:$0xff]
      %v477 = vld [vmem:[%s362 + $0x61] sm:$0xff]
      %v478 = vld [vmem:[%s362 + $0x69] sm:$0xff]
      %v479 = vld [vmem:[%s362 + $0x71] sm:$0xff]
      %v480 = vld [vmem:[%s362 + $0x79] sm:$0xff]
      %v481 = vld [vmem:[%s362 + $0x81] sm:$0xff]
      %v482 = vld [vmem:[%s362 + $0x89] sm:$0xff]
      %v483 = vld [vmem:[%s362 + $0x91] sm:$0xff]
      %v484 = vld [vmem:[%s362 + $0x99] sm:$0xff]
      %v485 = vld [vmem:[%s362 + $0xa1] sm:$0xff]
      %v486 = vld [vmem:[%s362 + $0xa9] sm:$0xff]
      %v487 = vld [vmem:[%s362 + $0xb1] sm:$0xff]
      %v488 = vld [vmem:[%s362 + $0xb9] sm:$0xff]
      %v489 = vld [vmem:[%s362 + $0xc1] sm:$0xff]
      %v490 = vld [vmem:[%s362 + $0xc9] sm:$0xff]
      %v491 = vld [vmem:[%s362 + $0xd1] sm:$0xff]
      %v492 = vld [vmem:[%s362 + $0xd9] sm:$0xff]
      %v493 = vld [vmem:[%s362 + $0xe1] sm:$0xff]
      %v494 = vld [vmem:[%s362 + $0xe9] sm:$0xff]
      %v495 = vld [vmem:[%s362 + $0xf1] sm:$0xff]
      %v496 = vld [vmem:[%s362 + $0xf9] sm:$0xff]
      %v497 = vld [vmem:[%s362 + $0x101] sm:$0xff]
      %v498 = vld [vmem:[%s362 + $0x109] sm:$0xff]
      %v499 = vld [vmem:[%s362 + $0x111] sm:$0xff]
      %v500 = vld [vmem:[%s362 + $0x119] sm:$0xff]
      %v501 = vpack.c.bf16 %v466, %v465
      %v502 = vpack.c.bf16 %v468, %v467
      %v503 = vpack.c.bf16 %v470, %v469
      %v504 = vpack.c.bf16 %v472, %v471
      %v505 = vpack.c.bf16 %v474, %v473
      %v506 = vpack.c.bf16 %v476, %v475
      %v507 = vpack.c.bf16 %v478, %v477
      %v508 = vpack.c.bf16 %v480, %v479
      %v509 = vpack.c.bf16 %v482, %v481
      %v510 = vpack.c.bf16 %v484, %v483
      %v511 = vpack.c.bf16 %v486, %v485
      %v512 = vpack.c.bf16 %v488, %v487
      %v513 = vpack.c.bf16 %v490, %v489
      %v514 = vpack.c.bf16 %v492, %v491
      %v515 = vpack.c.bf16 %v494, %v493
      %v516 = vpack.c.bf16 %v496, %v495
      %v517 = vpack.c.bf16 %v498, %v497
      %v518 = vpack.c.bf16 %v500, %v499
      %s519 = scalar_lea.vmem %s1, 2
      %v520 = vld [vmem:[%s519] sm:$0x3]
      %vm521 = vcmask 23552
      %v523 = vsel %vm521, %v501, 0
      %v526 = vsel %vm521, %v502, 0
      %v529 = vsel %vm521, %v503, 0
      %v532 = vsel %vm521, %v504, 0
      %v535 = vsel %vm521, %v505, 0
      %v538 = vsel %vm521, %v506, 0
      %v541 = vsel %vm521, %v507, 0
      %v544 = vsel %vm521, %v508, 0
      %v547 = vsel %vm521, %v509, 0
      %v550 = vsel %vm521, %v510, 0
      %v553 = vsel %vm521, %v511, 0
      %v556 = vsel %vm521, %v512, 0
      %v559 = vsel %vm521, %v513, 0
      %v562 = vsel %vm521, %v514, 0
      %v565 = vsel %vm521, %v515, 0
      %v568 = vsel %vm521, %v516, 0
      %v571 = vsel %vm521, %v517, 0
      %v574 = vsel %vm521, %v518, 0
      %vm576 = vcmask 1040384
      %vm577 = vcmask 1041408
      %v578 = vsel %vm576, 4294967295, 65535
      %v579 = vsel %vm577, %v578, 0
      %v581 = vand.u32 %v520, %v579
      %583 = vmatprep.subr.bf16.mxu0 0
      %584 = vmatpush1.bf16.msra.mxu0 %v581
      %585 = vmatprep.subr.bf16.mxu0 0
      %586 = vmatpush1.bf16.msra.mxu0 0
      %587 = vmatprep.subr.bf16.mxu0 0
      %588 = vmatpush1.bf16.msra.mxu0 0
      %589 = vmatprep.subr.bf16.mxu0 0
      %590 = vmatpush1.bf16.msra.mxu0 0
      %591 = vmatprep.subr.bf16.mxu0 0
      %592 = vmatpush1.bf16.msra.mxu0 0
      %593 = vmatprep.subr.bf16.mxu0 0
      %594 = vmatpush1.bf16.msra.mxu0 0
      %595 = vmatprep.subr.bf16.mxu0 0
      %596 = vmatpush1.bf16.msra.mxu0 0
      %597 = vmatprep.subr.bf16.mxu0 0
      %598 = vmatpush1.bf16.msra.mxu0 0
      %599 = vmatprep.subr.bf16.mxu0 0
      %600 = vmatpush1.bf16.msra.mxu0 0
      %601 = vmatprep.subr.bf16.mxu0 0
      %602 = vmatpush1.bf16.msra.mxu0 0
      %603 = vmatprep.subr.bf16.mxu0 0
      %604 = vmatpush1.bf16.msra.mxu0 0
      %605 = vmatprep.subr.bf16.mxu0 0
      %606 = vmatpush1.bf16.msra.mxu0 0
      %607 = vmatprep.subr.bf16.mxu0 0
      %608 = vmatpush1.bf16.msra.mxu0 0
      %609 = vmatprep.subr.bf16.mxu0 0
      %610 = vmatpush1.bf16.msra.mxu0 0
      %611 = vmatprep.subr.bf16.mxu0 0
      %612 = vmatpush1.bf16.msra.mxu0 0
      %613 = vmatprep.subr.bf16.mxu0 0
      %614 = vmatpush1.bf16.msra.mxu0 0
      %615 = vmatprep.mubr.bf16.mxu0 0
      %616 = vmatmul.mubr.bf16.gmra.mrb[0].mxu0 %v523
      %v617 = vpop.f32.mrb[0].mxu0
      %v618 = vadd.f32 0.0, %v617
      %v619 = vpop.f32.mrb[0].mxu0
      %v620 = vpop.f32.mrb[0].mxu0
      %v621 = vadd.f32 0.0, %v620
      %v622 = vpop.f32.mrb[0].mxu0
      %623 = vmatprep.mubr.bf16.mxu0 0
      %624 = vmatmul.mubr.bf16.gmra.mrb[0].mxu0 %v526
      %v625 = vpop.f32.mrb[0].mxu0
      %v626 = vadd.f32 0.0, %v625
      %v627 = vpop.f32.mrb[0].mxu0
      %v628 = vpop.f32.mrb[0].mxu0
      %v629 = vadd.f32 0.0, %v628
      %v630 = vpop.f32.mrb[0].mxu0
      %631 = vmatprep.mubr.bf16.mxu0 0
      %632 = vmatmul.mubr.bf16.gmra.mrb[0].mxu0 %v529
      %v633 = vpop.f32.mrb[0].mxu0
      %v634 = vadd.f32 0.0, %v633
      %v635 = vpop.f32.mrb[0].mxu0
      %v636 = vpop.f32.mrb[0].mxu0
      %v637 = vadd.f32 0.0, %v636
      %v638 = vpop.f32.mrb[0].mxu0
      %639 = vmatprep.mubr.bf16.mxu0 0
      %640 = vmatmul.mubr.bf16.gmra.mrb[0].mxu0 %v532
      %v641 = vpop.f32.mrb[0].mxu0
      %v642 = vadd.f32 0.0, %v641
      %v643 = vpop.f32.mrb[0].mxu0
      %v644 = vpop.f32.mrb[0].mxu0
      %v645 = vadd.f32 0.0, %v644
      %v646 = vpop.f32.mrb[0].mxu0
      %647 = vmatprep.mubr.bf16.mxu0 0
      %648 = vmatmul.mubr.bf16.gmra.mrb[0].mxu0 %v535
      %v649 = vpop.f32.mrb[0].mxu0
      %v650 = vadd.f32 0.0, %v649
      %v651 = vpop.f32.mrb[0].mxu0
      %v652 = vpop.f32.mrb[0].mxu0
      %v653 = vadd.f32 0.0, %v652
      %v654 = vpop.f32.mrb[0].mxu0
      %655 = vmatprep.mubr.bf16.mxu0 0
      %656 = vmatmul.mubr.bf16.gmra.mrb[0].mxu0 %v538
      %v657 = vpop.f32.mrb[0].mxu0
      %v658 = vadd.f32 0.0, %v657
      %v659 = vpop.f32.mrb[0].mxu0
      %v660 = vpop.f32.mrb[0].mxu0
      %v661 = vadd.f32 0.0, %v660
      %v662 = vpop.f32.mrb[0].mxu0
      %663 = vmatprep.mubr.bf16.mxu0 0
      %664 = vmatmul.mubr.bf16.gmra.mrb[0].mxu0 %v541
      %v665 = vpop.f32.mrb[0].mxu0
      %v666 = vadd.f32 0.0, %v665
      %v667 = vpop.f32.mrb[0].mxu0
      %v668 = vpop.f32.mrb[0].mxu0
      %v669 = vadd.f32 0.0, %v668
      %v670 = vpop.f32.mrb[0].mxu0
      %671 = vmatprep.mubr.bf16.mxu0 0
      %672 = vmatmul.mubr.bf16.gmra.mrb[0].mxu0 %v544
      %v673 = vpop.f32.mrb[0].mxu0
      %v674 = vadd.f32 0.0, %v673
      %v675 = vpop.f32.mrb[0].mxu0
      %v676 = vpop.f32.mrb[0].mxu0
      %v677 = vadd.f32 0.0, %v676
      %v678 = vpop.f32.mrb[0].mxu0
      %679 = vmatprep.mubr.bf16.mxu0 0
      %680 = vmatmul.mubr.bf16.gmra.mrb[0].mxu0 %v547
      %v681 = vpop.f32.mrb[0].mxu0
      %v682 = vadd.f32 0.0, %v681
      %v683 = vpop.f32.mrb[0].mxu0
      %v684 = vpop.f32.mrb[0].mxu0
      %v685 = vadd.f32 0.0, %v684
      %v686 = vpop.f32.mrb[0].mxu0
      %687 = vmatprep.mubr.bf16.mxu0 0
      %688 = vmatmul.mubr.bf16.gmra.mrb[0].mxu0 %v550
      %v689 = vpop.f32.mrb[0].mxu0
      %v690 = vadd.f32 0.0, %v689
      %v691 = vpop.f32.mrb[0].mxu0
      %v692 = vpop.f32.mrb[0].mxu0
      %v693 = vadd.f32 0.0, %v692
      %v694 = vpop.f32.mrb[0].mxu0
      %695 = vmatprep.mubr.bf16.mxu0 0
      %696 = vmatmul.mubr.bf16.gmra.mrb[0].mxu0 %v553
      %v697 = vpop.f32.mrb[0].mxu0
      %v698 = vadd.f32 0.0, %v697
      %v699 = vpop.f32.mrb[0].mxu0
      %v700 = vpop.f32.mrb[0].mxu0
      %v701 = vadd.f32 0.0, %v700
      %v702 = vpop.f32.mrb[0].mxu0
      %703 = vmatprep.mubr.bf16.mxu0 0
      %704 = vmatmul.mubr.bf16.gmra.mrb[0].mxu0 %v556
      %v705 = vpop.f32.mrb[0].mxu0
      %v706 = vadd.f32 0.0, %v705
      %v707 = vpop.f32.mrb[0].mxu0
      %v708 = vpop.f32.mrb[0].mxu0
      %v709 = vadd.f32 0.0, %v708
      %v710 = vpop.f32.mrb[0].mxu0
      %711 = vmatprep.mubr.bf16.mxu0 0
      %712 = vmatmul.mubr.bf16.gmra.mrb[0].mxu0 %v559
      %v713 = vpop.f32.mrb[0].mxu0
      %v714 = vadd.f32 0.0, %v713
      %v715 = vpop.f32.mrb[0].mxu0
      %v716 = vpop.f32.mrb[0].mxu0
      %v717 = vadd.f32 0.0, %v716
      %v718 = vpop.f32.mrb[0].mxu0
      %719 = vmatprep.mubr.bf16.mxu0 0
      %720 = vmatmul.mubr.bf16.gmra.mrb[0].mxu0 %v562
      %v721 = vpop.f32.mrb[0].mxu0
      %v722 = vadd.f32 0.0, %v721
      %v723 = vpop.f32.mrb[0].mxu0
      %v724 = vpop.f32.mrb[0].mxu0
      %v725 = vadd.f32 0.0, %v724
      %v726 = vpop.f32.mrb[0].mxu0
      %727 = vmatprep.mubr.bf16.mxu0 0
      %728 = vmatmul.mubr.bf16.gmra.mrb[0].mxu0 %v565
      %v729 = vpop.f32.mrb[0].mxu0
      %v730 = vadd.f32 0.0, %v729
      %v731 = vpop.f32.mrb[0].mxu0
      %v732 = vpop.f32.mrb[0].mxu0
      %v733 = vadd.f32 0.0, %v732
      %v734 = vpop.f32.mrb[0].mxu0
      %735 = vmatprep.mubr.bf16.mxu0 0
      %736 = vmatmul.mubr.bf16.gmra.mrb[0].mxu0 %v568
      %v737 = vpop.f32.mrb[0].mxu0
      %v738 = vadd.f32 0.0, %v737
      %v739 = vpop.f32.mrb[0].mxu0
      %v740 = vpop.f32.mrb[0].mxu0
      %v741 = vadd.f32 0.0, %v740
      %v742 = vpop.f32.mrb[0].mxu0
      %743 = vmatprep.mubr.bf16.mxu0 0
      %744 = vmatmul.mubr.bf16.gmra.mrb[0].mxu0 %v571
      %v745 = vpop.f32.mrb[0].mxu0
      %v746 = vadd.f32 0.0, %v745
      %v747 = vpop.f32.mrb[0].mxu0
      %v748 = vpop.f32.mrb[0].mxu0
      %v749 = vadd.f32 0.0, %v748
      %v750 = vpop.f32.mrb[0].mxu0
      %751 = vmatprep.mubr.bf16.mxu0 0
      %752 = vmatmul.mubr.bf16.gmra.mrb[0].mxu0 %v574
      %v753 = vpop.f32.mrb[0].mxu0
      %v754 = vadd.f32 0.0, %v753
      %v755 = vpop.f32.mrb[0].mxu0
      %v756 = vpop.f32.mrb[0].mxu0
      %v757 = vadd.f32 0.0, %v756
      %v758 = vpop.f32.mrb[0].mxu0
      %759 = vdwg.mxu0
      %v761 = vsel %vm521, %v446, 0
      %v764 = vsel %vm521, %v447, 0
      %v767 = vsel %vm521, %v448, 0
      %v770 = vsel %vm521, %v449, 0
      %v773 = vsel %vm521, %v450, 0
      %v776 = vsel %vm521, %v451, 0
      %v779 = vsel %vm521, %v452, 0
      %v782 = vsel %vm521, %v453, 0
      %v785 = vsel %vm521, %v454, 0
      %v788 = vsel %vm521, %v455, 0
      %v791 = vsel %vm521, %v456, 0
      %v794 = vsel %vm521, %v457, 0
      %v797 = vsel %vm521, %v458, 0
      %v800 = vsel %vm521, %v459, 0
      %v803 = vsel %vm521, %v460, 0
      %v806 = vsel %vm521, %v461, 0
      %v809 = vsel %vm521, %v462, 0
      %v812 = vsel %vm521, %v463, 0
      %v815 = vand.u32 %v464, %v579
      %817 = vmatprep.subr.bf16.mxu0 0
      %818 = vmatpush1.bf16.msra.mxu0 %v815
      %819 = vmatprep.subr.bf16.mxu0 0
      %820 = vmatpush1.bf16.msra.mxu0 0
      %821 = vmatprep.subr.bf16.mxu0 0
      %822 = vmatpush1.bf16.msra.mxu0 0
      %823 = vmatprep.subr.bf16.mxu0 0
      %824 = vmatpush1.bf16.msra.mxu0 0
      %825 = vmatprep.subr.bf16.mxu0 0
      %826 = vmatpush1.bf16.msra.mxu0 0
      %827 = vmatprep.subr.bf16.mxu0 0
      %828 = vmatpush1.bf16.msra.mxu0 0
      %829 = vmatprep.subr.bf16.mxu0 0
      %830 = vmatpush1.bf16.msra.mxu0 0
      %831 = vmatprep.subr.bf16.mxu0 0
      %832 = vmatpush1.bf16.msra.mxu0 0
      %833 = vmatprep.subr.bf16.mxu0 0
      %834 = vmatpush1.bf16.msra.mxu0 0
      %835 = vmatprep.subr.bf16.mxu0 0
      %836 = vmatpush1.bf16.msra.mxu0 0
      %837 = vmatprep.subr.bf16.mxu0 0
      %838 = vmatpush1.bf16.msra.mxu0 0
      %839 = vmatprep.subr.bf16.mxu0 0
      %840 = vmatpush1.bf16.msra.mxu0 0
      %841 = vmatprep.subr.bf16.mxu0 0
      %842 = vmatpush1.bf16.msra.mxu0 0
      %843 = vmatprep.subr.bf16.mxu0 0
      %844 = vmatpush1.bf16.msra.mxu0 0
      %845 = vmatprep.subr.bf16.mxu0 0
      %846 = vmatpush1.bf16.msra.mxu0 0
      %847 = vmatprep.subr.bf16.mxu0 0
      %848 = vmatpush1.bf16.msra.mxu0 0
      %849 = vmatprep.mubr.bf16.mxu0 0
      %850 = vmatmul.mubr.bf16.gmra.mrb[0].mxu0 %v761
      %v851 = vpop.f32.mrb[0].mxu0
      %v852 = vadd.f32 %v618, %v851
      %v853 = vpop.f32.mrb[0].mxu0
      %v854 = vpop.f32.mrb[0].mxu0
      %v855 = vadd.f32 %v621, %v854
      %v856 = vpop.f32.mrb[0].mxu0
      %857 = vmatprep.mubr.bf16.mxu0 0
      %858 = vmatmul.mubr.bf16.gmra.mrb[0].mxu0 %v764
      %v859 = vpop.f32.mrb[0].mxu0
      %v860 = vadd.f32 %v626, %v859
      %v861 = vpop.f32.mrb[0].mxu0
      %v862 = vpop.f32.mrb[0].mxu0
      %v863 = vadd.f32 %v629, %v862
      %v864 = vpop.f32.mrb[0].mxu0
      %865 = vmatprep.mubr.bf16.mxu0 0
      %866 = vmatmul.mubr.bf16.gmra.mrb[0].mxu0 %v767
      %v867 = vpop.f32.mrb[0].mxu0
      %v868 = vadd.f32 %v634, %v867
      %v869 = vpop.f32.mrb[0].mxu0
      %v870 = vpop.f32.mrb[0].mxu0
      %v871 = vadd.f32 %v637, %v870
      %v872 = vpop.f32.mrb[0].mxu0
      %873 = vmatprep.mubr.bf16.mxu0 0
      %874 = vmatmul.mubr.bf16.gmra.mrb[0].mxu0 %v770
      %v875 = vpop.f32.mrb[0].mxu0
      %v876 = vadd.f32 %v642, %v875
      %v877 = vpop.f32.mrb[0].mxu0
      %v878 = vpop.f32.mrb[0].mxu0
      %v879 = vadd.f32 %v645, %v878
      %v880 = vpop.f32.mrb[0].mxu0
      %881 = vmatprep.mubr.bf16.mxu0 0
      %882 = vmatmul.mubr.bf16.gmra.mrb[0].mxu0 %v773
      %v883 = vpop.f32.mrb[0].mxu0
      %v884 = vadd.f32 %v650, %v883
      %v885 = vpop.f32.mrb[0].mxu0
      %v886 = vpop.f32.mrb[0].mxu0
      %v887 = vadd.f32 %v653, %v886
      %v888 = vpop.f32.mrb[0].mxu0
      %889 = vmatprep.mubr.bf16.mxu0 0
      %890 = vmatmul.mubr.bf16.gmra.mrb[0].mxu0 %v776
      %v891 = vpop.f32.mrb[0].mxu0
      %v892 = vadd.f32 %v658, %v891
      %v893 = vpop.f32.mrb[0].mxu0
      %v894 = vpop.f32.mrb[0].mxu0
      %v895 = vadd.f32 %v661, %v894
      %v896 = vpop.f32.mrb[0].mxu0
      %897 = vmatprep.mubr.bf16.mxu0 0
      %898 = vmatmul.mubr.bf16.gmra.mrb[0].mxu0 %v779
      %v899 = vpop.f32.mrb[0].mxu0
      %v900 = vadd.f32 %v666, %v899
      %v901 = vpop.f32.mrb[0].mxu0
      %v902 = vpop.f32.mrb[0].mxu0
      %v903 = vadd.f32 %v669, %v902
      %v904 = vpop.f32.mrb[0].mxu0
      %905 = vmatprep.mubr.bf16.mxu0 0
      %906 = vmatmul.mubr.bf16.gmra.mrb[0].mxu0 %v782
      %v907 = vpop.f32.mrb[0].mxu0
      %v908 = vadd.f32 %v674, %v907
      %v909 = vpop.f32.mrb[0].mxu0
      %v910 = vpop.f32.mrb[0].mxu0
      %v911 = vadd.f32 %v677, %v910
      %v912 = vpop.f32.mrb[0].mxu0
      %913 = vmatprep.mubr.bf16.mxu0 0
      %914 = vmatmul.mubr.bf16.gmra.mrb[0].mxu0 %v785
      %v915 = vpop.f32.mrb[0].mxu0
      %v916 = vadd.f32 %v682, %v915
      %v917 = vpop.f32.mrb[0].mxu0
      %v918 = vpop.f32.mrb[0].mxu0
      %v919 = vadd.f32 %v685, %v918
      %v920 = vpop.f32.mrb[0].mxu0
      %921 = vmatprep.mubr.bf16.mxu0 0
      %922 = vmatmul.mubr.bf16.gmra.mrb[0].mxu0 %v788
      %v923 = vpop.f32.mrb[0].mxu0
      %v924 = vadd.f32 %v690, %v923
      %v925 = vpop.f32.mrb[0].mxu0
      %v926 = vpop.f32.mrb[0].mxu0
      %v927 = vadd.f32 %v693, %v926
      %v928 = vpop.f32.mrb[0].mxu0
      %929 = vmatprep.mubr.bf16.mxu0 0
      %930 = vmatmul.mubr.bf16.gmra.mrb[0].mxu0 %v791
      %v931 = vpop.f32.mrb[0].mxu0
      %v932 = vadd.f32 %v698, %v931
      %v933 = vpop.f32.mrb[0].mxu0
      %v934 = vpop.f32.mrb[0].mxu0
      %v935 = vadd.f32 %v701, %v934
      %v936 = vpop.f32.mrb[0].mxu0
      %937 = vmatprep.mubr.bf16.mxu0 0
      %938 = vmatmul.mubr.bf16.gmra.mrb[0].mxu0 %v794
      %v939 = vpop.f32.mrb[0].mxu0
      %v940 = vadd.f32 %v706, %v939
      %v941 = vpop.f32.mrb[0].mxu0
      %v942 = vpop.f32.mrb[0].mxu0
      %v943 = vadd.f32 %v709, %v942
      %v944 = vpop.f32.mrb[0].mxu0
      %945 = vmatprep.mubr.bf16.mxu0 0
      %946 = vmatmul.mubr.bf16.gmra.mrb[0].mxu0 %v797
      %v947 = vpop.f32.mrb[0].mxu0
      %v948 = vadd.f32 %v714, %v947
      %v949 = vpop.f32.mrb[0].mxu0
      %v950 = vpop.f32.mrb[0].mxu0
      %v951 = vadd.f32 %v717, %v950
      %v952 = vpop.f32.mrb[0].mxu0
      %953 = vmatprep.mubr.bf16.mxu0 0
      %954 = vmatmul.mubr.bf16.gmra.mrb[0].mxu0 %v800
      %v955 = vpop.f32.mrb[0].mxu0
      %v956 = vadd.f32 %v722, %v955
      %v957 = vpop.f32.mrb[0].mxu0
      %v958 = vpop.f32.mrb[0].mxu0
      %v959 = vadd.f32 %v725, %v958
      %v960 = vpop.f32.mrb[0].mxu0
      %961 = vmatprep.mubr.bf16.mxu0 0
      %962 = vmatmul.mubr.bf16.gmra.mrb[0].mxu0 %v803
      %v963 = vpop.f32.mrb[0].mxu0
      %v964 = vadd.f32 %v730, %v963
      %v965 = vpop.f32.mrb[0].mxu0
      %v966 = vpop.f32.mrb[0].mxu0
      %v967 = vadd.f32 %v733, %v966
      %v968 = vpop.f32.mrb[0].mxu0
      %969 = vmatprep.mubr.bf16.mxu0 0
      %970 = vmatmul.mubr.bf16.gmra.mrb[0].mxu0 %v806
      %v971 = vpop.f32.mrb[0].mxu0
      %v972 = vadd.f32 %v738, %v971
      %v973 = vpop.f32.mrb[0].mxu0
      %v974 = vpop.f32.mrb[0].mxu0
      %v975 = vadd.f32 %v741, %v974
      %v976 = vpop.f32.mrb[0].mxu0
      %977 = vmatprep.mubr.bf16.mxu0 0
      %978 = vmatmul.mubr.bf16.gmra.mrb[0].mxu0 %v809
      %v979 = vpop.f32.mrb[0].mxu0
      %v980 = vadd.f32 %v746, %v979
      %v981 = vpop.f32.mrb[0].mxu0
      %v982 = vpop.f32.mrb[0].mxu0
      %v983 = vadd.f32 %v749, %v982
      %v984 = vpop.f32.mrb[0].mxu0
      %985 = vmatprep.mubr.bf16.mxu0 0
      %986 = vmatmul.mubr.bf16.gmra.mrb[0].mxu0 %v812
      %v987 = vpop.f32.mrb[0].mxu0
      %v988 = vadd.f32 %v754, %v987
      %v989 = vpop.f32.mrb[0].mxu0
      %v990 = vpop.f32.mrb[0].mxu0
      %v991 = vadd.f32 %v757, %v990
      %v992 = vpop.f32.mrb[0].mxu0
      %993 = vdwg.mxu0
      %v994 = vld [vmem:[%s362 + $0x2] sm:$0xff]
      %v995 = vld [vmem:[%s362 + $0xa] sm:$0xff]
      %v996 = vld [vmem:[%s362 + $0x12] sm:$0xff]
      %v997 = vld [vmem:[%s362 + $0x1a] sm:$0xff]
      %v998 = vld [vmem:[%s362 + $0x22] sm:$0xff]
      %v999 = vld [vmem:[%s362 + $0x2a] sm:$0xff]
      %v1000 = vld [vmem:[%s362 + $0x32] sm:$0xff]
      %v1001 = vld [vmem:[%s362 + $0x3a] sm:$0xff]
      %v1002 = vld [vmem:[%s362 + $0x42] sm:$0xff]
      %v1003 = vld [vmem:[%s362 + $0x4a] sm:$0xff]
      %v1004 = vld [vmem:[%s362 + $0x52] sm:$0xff]
      %v1005 = vld [vmem:[%s362 + $0x5a] sm:$0xff]
      %v1006 = vld [vmem:[%s362 + $0x62] sm:$0xff]
      %v1007 = vld [vmem:[%s362 + $0x6a] sm:$0xff]
      %v1008 = vld [vmem:[%s362 + $0x72] sm:$0xff]
      %v1009 = vld [vmem:[%s362 + $0x7a] sm:$0xff]
      %v1010 = vld [vmem:[%s362 + $0x82] sm:$0xff]
      %v1011 = vld [vmem:[%s362 + $0x8a] sm:$0xff]
      %v1012 = vld [vmem:[%s362 + $0x92] sm:$0xff]
      %v1013 = vld [vmem:[%s362 + $0x9a] sm:$0xff]
      %v1014 = vld [vmem:[%s362 + $0xa2] sm:$0xff]
      %v1015 = vld [vmem:[%s362 + $0xaa] sm:$0xff]
      %v1016 = vld [vmem:[%s362 + $0xb2] sm:$0xff]
      %v1017 = vld [vmem:[%s362 + $0xba] sm:$0xff]
      %v1018 = vld [vmem:[%s362 + $0xc2] sm:$0xff]
      %v1019 = vld [vmem:[%s362 + $0xca] sm:$0xff]
      %v1020 = vld [vmem:[%s362 + $0xd2] sm:$0xff]
      %v1021 = vld [vmem:[%s362 + $0xda] sm:$0xff]
      %v1022 = vld [vmem:[%s362 + $0xe2] sm:$0xff]
      %v1023 = vld [vmem:[%s362 + $0xea] sm:$0xff]
      %v1024 = vld [vmem:[%s362 + $0xf2] sm:$0xff]
      %v1025 = vld [vmem:[%s362 + $0xfa] sm:$0xff]
      %v1026 = vld [vmem:[%s362 + $0x102] sm:$0xff]
      %v1027 = vld [vmem:[%s362 + $0x10a] sm:$0xff]
      %v1028 = vld [vmem:[%s362 + $0x112] sm:$0xff]
      %v1029 = vld [vmem:[%s362 + $0x11a] sm:$0xff]
      %v1030 = vpack.c.bf16 %v995, %v994
      %v1031 = vpack.c.bf16 %v997, %v996
      %v1032 = vpack.c.bf16 %v999, %v998
      %v1033 = vpack.c.bf16 %v1001, %v1000
      %v1034 = vpack.c.bf16 %v1003, %v1002
      %v1035 = vpack.c.bf16 %v1005, %v1004
      %v1036 = vpack.c.bf16 %v1007, %v1006
      %v1037 = vpack.c.bf16 %v1009, %v1008
      %v1038 = vpack.c.bf16 %v1011, %v1010
      %v1039 = vpack.c.bf16 %v1013, %v1012
      %v1040 = vpack.c.bf16 %v1015, %v1014
      %v1041 = vpack.c.bf16 %v1017, %v1016
      %v1042 = vpack.c.bf16 %v1019, %v1018
      %v1043 = vpack.c.bf16 %v1021, %v1020
      %v1044 = vpack.c.bf16 %v1023, %v1022
      %v1045 = vpack.c.bf16 %v1025, %v1024
      %v1046 = vpack.c.bf16 %v1027, %v1026
      %v1047 = vpack.c.bf16 %v1029, %v1028
      %s1048 = scalar_lea.vmem %s1, 4
      %v1049 = vld [vmem:[%s1048] sm:$0x3]
      %v1051 = vsel %vm521, %v1030, 0
      %v1054 = vsel %vm521, %v1031, 0
      %v1057 = vsel %vm521, %v1032, 0
      %v1060 = vsel %vm521, %v1033, 0
      %v1063 = vsel %vm521, %v1034, 0
      %v1066 = vsel %vm521, %v1035, 0
      %v1069 = vsel %vm521, %v1036, 0
      %v1072 = vsel %vm521, %v1037, 0
      %v1075 = vsel %vm521, %v1038, 0
      %v1078 = vsel %vm521, %v1039, 0
      %v1081 = vsel %vm521, %v1040, 0
      %v1084 = vsel %vm521, %v1041, 0
      %v1087 = vsel %vm521, %v1042, 0
      %v1090 = vsel %vm521, %v1043, 0
      %v1093 = vsel %vm521, %v1044, 0
      %v1096 = vsel %vm521, %v1045, 0
      %v1099 = vsel %vm521, %v1046, 0
      %v1102 = vsel %vm521, %v1047, 0
      %v1105 = vand.u32 %v1049, %v579
      %1107 = vmatprep.subr.bf16.mxu0 0
      %1108 = vmatpush1.bf16.msra.mxu0 %v1105
      %1109 = vmatprep.subr.bf16.mxu0 0
      %1110 = vmatpush1.bf16.msra.mxu0 0
      %1111 = vmatprep.subr.bf16.mxu0 0
      %1112 = vmatpush1.bf16.msra.mxu0 0
      %1113 = vmatprep.subr.bf16.mxu0 0
      %1114 = vmatpush1.bf16.msra.mxu0 0
      %1115 = vmatprep.subr.bf16.mxu0 0
      %1116 = vmatpush1.bf16.msra.mxu0 0
      %1117 = vmatprep.subr.bf16.mxu0 0
      %1118 = vmatpush1.bf16.msra.mxu0 0
      %1119 = vmatprep.subr.bf16.mxu0 0
      %1120 = vmatpush1.bf16.msra.mxu0 0
      %1121 = vmatprep.subr.bf16.mxu0 0
      %1122 = vmatpush1.bf16.msra.mxu0 0
      %1123 = vmatprep.subr.bf16.mxu0 0
      %1124 = vmatpush1.bf16.msra.mxu0 0
      %1125 = vmatprep.subr.bf16.mxu0 0
      %1126 = vmatpush1.bf16.msra.mxu0 0
      %1127 = vmatprep.subr.bf16.mxu0 0
      %1128 = vmatpush1.bf16.msra.mxu0 0
      %1129 = vmatprep.subr.bf16.mxu0 0
      %1130 = vmatpush1.bf16.msra.mxu0 0
      %1131 = vmatprep.subr.bf16.mxu0 0
      %1132 = vmatpush1.bf16.msra.mxu0 0
      %1133 = vmatprep.subr.bf16.mxu0 0
      %1134 = vmatpush1.bf16.msra.mxu0 0
      %1135 = vmatprep.subr.bf16.mxu0 0
      %1136 = vmatpush1.bf16.msra.mxu0 0
      %1137 = vmatprep.subr.bf16.mxu0 0
      %1138 = vmatpush1.bf16.msra.mxu0 0
      %1139 = vmatprep.mubr.bf16.mxu0 0
      %1140 = vmatmul.mubr.bf16.gmra.mrb[0].mxu0 %v1051
      %v1141 = vpop.f32.mrb[0].mxu0
      %v1142 = vadd.f32 0.0, %v1141
      %v1143 = vpop.f32.mrb[0].mxu0
      %v1144 = vpop.f32.mrb[0].mxu0
      %v1145 = vadd.f32 0.0, %v1144
      %v1146 = vpop.f32.mrb[0].mxu0
      %1147 = vmatprep.mubr.bf16.mxu0 0
      %1148 = vmatmul.mubr.bf16.gmra.mrb[0].mxu0 %v1054
      %v1149 = vpop.f32.mrb[0].mxu0
      %v1150 = vadd.f32 0.0, %v1149
      %v1151 = vpop.f32.mrb[0].mxu0
      %v1152 = vpop.f32.mrb[0].mxu0
      %v1153 = vadd.f32 0.0, %v1152
      %v1154 = vpop.f32.mrb[0].mxu0
      %1155 = vmatprep.mubr.bf16.mxu0 0
      %1156 = vmatmul.mubr.bf16.gmra.mrb[0].mxu0 %v1057
      %v1157 = vpop.f32.mrb[0].mxu0
      %v1158 = vadd.f32 0.0, %v1157
      %v1159 = vpop.f32.mrb[0].mxu0
      %v1160 = vpop.f32.mrb[0].mxu0
      %v1161 = vadd.f32 0.0, %v1160
      %v1162 = vpop.f32.mrb[0].mxu0
      %1163 = vmatprep.mubr.bf16.mxu0 0
      %1164 = vmatmul.mubr.bf16.gmra.mrb[0].mxu0 %v1060
      %v1165 = vpop.f32.mrb[0].mxu0
      %v1166 = vadd.f32 0.0, %v1165
      %v1167 = vpop.f32.mrb[0].mxu0
      %v1168 = vpop.f32.mrb[0].mxu0
      %v1169 = vadd.f32 0.0, %v1168
      %v1170 = vpop.f32.mrb[0].mxu0
      %1171 = vmatprep.mubr.bf16.mxu0 0
      %1172 = vmatmul.mubr.bf16.gmra.mrb[0].mxu0 %v1063
      %v1173 = vpop.f32.mrb[0].mxu0
      %v1174 = vadd.f32 0.0, %v1173
      %v1175 = vpop.f32.mrb[0].mxu0
      %v1176 = vpop.f32.mrb[0].mxu0
      %v1177 = vadd.f32 0.0, %v1176
      %v1178 = vpop.f32.mrb[0].mxu0
      %1179 = vmatprep.mubr.bf16.mxu0 0
      %1180 = vmatmul.mubr.bf16.gmra.mrb[0].mxu0 %v1066
      %v1181 = vpop.f32.mrb[0].mxu0
      %v1182 = vadd.f32 0.0, %v1181
      %v1183 = vpop.f32.mrb[0].mxu0
      %v1184 = vpop.f32.mrb[0].mxu0
      %v1185 = vadd.f32 0.0, %v1184
      %v1186 = vpop.f32.mrb[0].mxu0
      %1187 = vmatprep.mubr.bf16.mxu0 0
      %1188 = vmatmul.mubr.bf16.gmra.mrb[0].mxu0 %v1069
      %v1189 = vpop.f32.mrb[0].mxu0
      %v1190 = vadd.f32 0.0, %v1189
      %v1191 = vpop.f32.mrb[0].mxu0
      %v1192 = vpop.f32.mrb[0].mxu0
      %v1193 = vadd.f32 0.0, %v1192
      %v1194 = vpop.f32.mrb[0].mxu0
      %1195 = vmatprep.mubr.bf16.mxu0 0
      %1196 = vmatmul.mubr.bf16.gmra.mrb[0].mxu0 %v1072
      %v1197 = vpop.f32.mrb[0].mxu0
      %v1198 = vadd.f32 0.0, %v1197
      %v1199 = vpop.f32.mrb[0].mxu0
      %v1200 = vpop.f32.mrb[0].mxu0
      %v1201 = vadd.f32 0.0, %v1200
      %v1202 = vpop.f32.mrb[0].mxu0
      %1203 = vmatprep.mubr.bf16.mxu0 0
      %1204 = vmatmul.mubr.bf16.gmra.mrb[0].mxu0 %v1075
      %v1205 = vpop.f32.mrb[0].mxu0
      %v1206 = vadd.f32 0.0, %v1205
      %v1207 = vpop.f32.mrb[0].mxu0
      %v1208 = vpop.f32.mrb[0].mxu0
      %v1209 = vadd.f32 0.0, %v1208
      %v1210 = vpop.f32.mrb[0].mxu0
      %1211 = vmatprep.mubr.bf16.mxu0 0
      %1212 = vmatmul.mubr.bf16.gmra.mrb[0].mxu0 %v1078
      %v1213 = vpop.f32.mrb[0].mxu0
      %v1214 = vadd.f32 0.0, %v1213
      %v1215 = vpop.f32.mrb[0].mxu0
      %v1216 = vpop.f32.mrb[0].mxu0
      %v1217 = vadd.f32 0.0, %v1216
      %v1218 = vpop.f32.mrb[0].mxu0
      %1219 = vmatprep.mubr.bf16.mxu0 0
      %1220 = vmatmul.mubr.bf16.gmra.mrb[0].mxu0 %v1081
      %v1221 = vpop.f32.mrb[0].mxu0
      %v1222 = vadd.f32 0.0, %v1221
      %v1223 = vpop.f32.mrb[0].mxu0
      %v1224 = vpop.f32.mrb[0].mxu0
      %v1225 = vadd.f32 0.0, %v1224
      %v1226 = vpop.f32.mrb[0].mxu0
      %1227 = vmatprep.mubr.bf16.mxu0 0
      %1228 = vmatmul.mubr.bf16.gmra.mrb[0].mxu0 %v1084
      %v1229 = vpop.f32.mrb[0].mxu0
      %v1230 = vadd.f32 0.0, %v1229
      %v1231 = vpop.f32.mrb[0].mxu0
      %v1232 = vpop.f32.mrb[0].mxu0
      %v1233 = vadd.f32 0.0, %v1232
      %v1234 = vpop.f32.mrb[0].mxu0
      %1235 = vmatprep.mubr.bf16.mxu0 0
      %1236 = vmatmul.mubr.bf16.gmra.mrb[0].mxu0 %v1087
      %v1237 = vpop.f32.mrb[0].mxu0
      %v1238 = vadd.f32 0.0, %v1237
      %v1239 = vpop.f32.mrb[0].mxu0
      %v1240 = vpop.f32.mrb[0].mxu0
      %v1241 = vadd.f32 0.0, %v1240
      %v1242 = vpop.f32.mrb[0].mxu0
      %1243 = vmatprep.mubr.bf16.mxu0 0
      %1244 = vmatmul.mubr.bf16.gmra.mrb[0].mxu0 %v1090
      %v1245 = vpop.f32.mrb[0].mxu0
      %v1246 = vadd.f32 0.0, %v1245
      %v1247 = vpop.f32.mrb[0].mxu0
      %v1248 = vpop.f32.mrb[0].mxu0
      %v1249 = vadd.f32 0.0, %v1248
      %v1250 = vpop.f32.mrb[0].mxu0
      %1251 = vmatprep.mubr.bf16.mxu0 0
      %1252 = vmatmul.mubr.bf16.gmra.mrb[0].mxu0 %v1093
      %v1253 = vpop.f32.mrb[0].mxu0
      %v1254 = vadd.f32 0.0, %v1253
      %v1255 = vpop.f32.mrb[0].mxu0
      %v1256 = vpop.f32.mrb[0].mxu0
      %v1257 = vadd.f32 0.0, %v1256
      %v1258 = vpop.f32.mrb[0].mxu0
      %1259 = vmatprep.mubr.bf16.mxu0 0
      %1260 = vmatmul.mubr.bf16.gmra.mrb[0].mxu0 %v1096
      %v1261 = vpop.f32.mrb[0].mxu0
      %v1262 = vadd.f32 0.0, %v1261
      %v1263 = vpop.f32.mrb[0].mxu0
      %v1264 = vpop.f32.mrb[0].mxu0
      %v1265 = vadd.f32 0.0, %v1264
      %v1266 = vpop.f32.mrb[0].mxu0
      %1267 = vmatprep.mubr.bf16.mxu0 0
      %1268 = vmatmul.mubr.bf16.gmra.mrb[0].mxu0 %v1099
      %v1269 = vpop.f32.mrb[0].mxu0
      %v1270 = vadd.f32 0.0, %v1269
      %v1271 = vpop.f32.mrb[0].mxu0
      %v1272 = vpop.f32.mrb[0].mxu0
      %v1273 = vadd.f32 0.0, %v1272
      %v1274 = vpop.f32.mrb[0].mxu0
      %1275 = vmatprep.mubr.bf16.mxu0 0
      %1276 = vmatmul.mubr.bf16.gmra.mrb[0].mxu0 %v1102
      %v1277 = vpop.f32.mrb[0].mxu0
      %v1278 = vadd.f32 0.0, %v1277
      %v1279 = vpop.f32.mrb[0].mxu0
      %v1280 = vpop.f32.mrb[0].mxu0
      %v1281 = vadd.f32 0.0, %v1280
      %v1282 = vpop.f32.mrb[0].mxu0
      %1283 = vdwg.mxu0
      %v1284 = vadd.f32 %v852, %v1142
      %v1285 = vadd.f32 %v855, %v1145
      %v1286 = vadd.f32 %v860, %v1150
      %v1287 = vadd.f32 %v863, %v1153
      %v1288 = vadd.f32 %v868, %v1158
      %v1289 = vadd.f32 %v871, %v1161
      %v1290 = vadd.f32 %v876, %v1166
      %v1291 = vadd.f32 %v879, %v1169
      %v1292 = vadd.f32 %v884, %v1174
      %v1293 = vadd.f32 %v887, %v1177
      %v1294 = vadd.f32 %v892, %v1182
      %v1295 = vadd.f32 %v895, %v1185
      %v1296 = vadd.f32 %v900, %v1190
      %v1297 = vadd.f32 %v903, %v1193
      %v1298 = vadd.f32 %v908, %v1198
      %v1299 = vadd.f32 %v911, %v1201
      %v1300 = vadd.f32 %v916, %v1206
      %v1301 = vadd.f32 %v919, %v1209
      %v1302 = vadd.f32 %v924, %v1214
      %v1303 = vadd.f32 %v927, %v1217
      %v1304 = vadd.f32 %v932, %v1222
      %v1305 = vadd.f32 %v935, %v1225
      %v1306 = vadd.f32 %v940, %v1230
      %v1307 = vadd.f32 %v943, %v1233
      %v1308 = vadd.f32 %v948, %v1238
      %v1309 = vadd.f32 %v951, %v1241
      %v1310 = vadd.f32 %v956, %v1246
      %v1311 = vadd.f32 %v959, %v1249
      %v1312 = vadd.f32 %v964, %v1254
      %v1313 = vadd.f32 %v967, %v1257
      %v1314 = vadd.f32 %v972, %v1262
      %v1315 = vadd.f32 %v975, %v1265
      %v1316 = vadd.f32 %v980, %v1270
      %v1317 = vadd.f32 %v983, %v1273
      %v1318 = vadd.f32 %v988, %v1278
      %v1319 = vadd.f32 %v991, %v1281
      %v1320 = vld [vmem:[%s362 + $0x12] sm:$0xff]
      %v1321 = vld [vmem:[%s362 + $0x1a] sm:$0xff]
      %v1322 = vld [vmem:[%s362 + $0x22] sm:$0xff]
      %v1323 = vld [vmem:[%s362 + $0x2a] sm:$0xff]
      %v1324 = vld [vmem:[%s362 + $0x32] sm:$0xff]
      %v1325 = vld [vmem:[%s362 + $0x3a] sm:$0xff]
      %v1326 = vld [vmem:[%s362 + $0x42] sm:$0xff]
      %v1327 = vld [vmem:[%s362 + $0x4a] sm:$0xff]
      %v1328 = vld [vmem:[%s362 + $0x52] sm:$0xff]
      %v1329 = vld [vmem:[%s362 + $0x5a] sm:$0xff]
      %v1330 = vld [vmem:[%s362 + $0x62] sm:$0xff]
      %v1331 = vld [vmem:[%s362 + $0x6a] sm:$0xff]
      %v1332 = vld [vmem:[%s362 + $0x72] sm:$0xff]
      %v1333 = vld [vmem:[%s362 + $0x7a] sm:$0xff]
      %v1334 = vld [vmem:[%s362 + $0x82] sm:$0xff]
      %v1335 = vld [vmem:[%s362 + $0x8a] sm:$0xff]
      %v1336 = vld [vmem:[%s362 + $0x92] sm:$0xff]
      %v1337 = vld [vmem:[%s362 + $0x9a] sm:$0xff]
      %v1338 = vld [vmem:[%s362 + $0xa2] sm:$0xff]
      %v1339 = vld [vmem:[%s362 + $0xaa] sm:$0xff]
      %v1340 = vld [vmem:[%s362 + $0xb2] sm:$0xff]
      %v1341 = vld [vmem:[%s362 + $0xba] sm:$0xff]
      %v1342 = vld [vmem:[%s362 + $0xc2] sm:$0xff]
      %v1343 = vld [vmem:[%s362 + $0xca] sm:$0xff]
      %v1344 = vld [vmem:[%s362 + $0xd2] sm:$0xff]
      %v1345 = vld [vmem:[%s362 + $0xda] sm:$0xff]
      %v1346 = vld [vmem:[%s362 + $0xe2] sm:$0xff]
      %v1347 = vld [vmem:[%s362 + $0xea] sm:$0xff]
      %v1348 = vld [vmem:[%s362 + $0xf2] sm:$0xff]
      %v1349 = vld [vmem:[%s362 + $0xfa] sm:$0xff]
      %v1350 = vld [vmem:[%s362 + $0x102] sm:$0xff]
      %v1351 = vld [vmem:[%s362 + $0x10a] sm:$0xff]
      %v1352 = vld [vmem:[%s362 + $0x112] sm:$0xff]
      %v1353 = vld [vmem:[%s362 + $0x11a] sm:$0xff]
      %v1354 = vld [vmem:[%s362 + $0x122] sm:$0xff]
      %v1355 = vld [vmem:[%s362 + $0x12a] sm:$0xff]
      %v1356 = vpack.c.bf16 %v1321, %v1320
      %v1357 = vpack.c.bf16 %v1323, %v1322
      %v1358 = vpack.c.bf16 %v1325, %v1324
      %v1359 = vpack.c.bf16 %v1327, %v1326
      %v1360 = vpack.c.bf16 %v1329, %v1328
      %v1361 = vpack.c.bf16 %v1331, %v1330
      %v1362 = vpack.c.bf16 %v1333, %v1332
      %v1363 = vpack.c.bf16 %v1335, %v1334
      %v1364 = vpack.c.bf16 %v1337, %v1336
      %v1365 = vpack.c.bf16 %v1339, %v1338
      %v1366 = vpack.c.bf16 %v1341, %v1340
      %v1367 = vpack.c.bf16 %v1343, %v1342
      %v1368 = vpack.c.bf16 %v1345, %v1344
      %v1369 = vpack.c.bf16 %v1347, %v1346
      %v1370 = vpack.c.bf16 %v1349, %v1348
      %v1371 = vpack.c.bf16 %v1351, %v1350
      %v1372 = vpack.c.bf16 %v1353, %v1352
      %v1373 = vpack.c.bf16 %v1355, %v1354
      %s1374 = scalar_lea.vmem %s1, 6
      %v1375 = vld [vmem:[%s1374] sm:$0x3]
      %v1377 = vsel %vm521, %v1356, 0
      %v1380 = vsel %vm521, %v1357, 0
      %v1383 = vsel %vm521, %v1358, 0
      %v1386 = vsel %vm521, %v1359, 0
      %v1389 = vsel %vm521, %v1360, 0
      %v1392 = vsel %vm521, %v1361, 0
      %v1395 = vsel %vm521, %v1362, 0
      %v1398 = vsel %vm521, %v1363, 0
      %v1401 = vsel %vm521, %v1364, 0
      %v1404 = vsel %vm521, %v1365, 0
      %v1407 = vsel %vm521, %v1366, 0
      %v1410 = vsel %vm521, %v1367, 0
      %v1413 = vsel %vm521, %v1368, 0
      %v1416 = vsel %vm521, %v1369, 0
      %v1419 = vsel %vm521, %v1370, 0
      %v1422 = vsel %vm521, %v1371, 0
      %v1425 = vsel %vm521, %v1372, 0
      %v1428 = vsel %vm521, %v1373, 0
      %v1431 = vand.u32 %v1375, %v579
      %1433 = vmatprep.subr.bf16.mxu0 0
      %1434 = vmatpush1.bf16.msra.mxu0 %v1431
      %1435 = vmatprep.subr.bf16.mxu0 0
      %1436 = vmatpush1.bf16.msra.mxu0 0
      %1437 = vmatprep.subr.bf16.mxu0 0
      %1438 = vmatpush1.bf16.msra.mxu0 0
      %1439 = vmatprep.subr.bf16.mxu0 0
      %1440 = vmatpush1.bf16.msra.mxu0 0
      %1441 = vmatprep.subr.bf16.mxu0 0
      %1442 = vmatpush1.bf16.msra.mxu0 0
      %1443 = vmatprep.subr.bf16.mxu0 0
      %1444 = vmatpush1.bf16.msra.mxu0 0
      %1445 = vmatprep.subr.bf16.mxu0 0
      %1446 = vmatpush1.bf16.msra.mxu0 0
      %1447 = vmatprep.subr.bf16.mxu0 0
      %1448 = vmatpush1.bf16.msra.mxu0 0
      %1449 = vmatprep.subr.bf16.mxu0 0
      %1450 = vmatpush1.bf16.msra.mxu0 0
      %1451 = vmatprep.subr.bf16.mxu0 0
      %1452 = vmatpush1.bf16.msra.mxu0 0
      %1453 = vmatprep.subr.bf16.mxu0 0
      %1454 = vmatpush1.bf16.msra.mxu0 0
      %1455 = vmatprep.subr.bf16.mxu0 0
      %1456 = vmatpush1.bf16.msra.mxu0 0
      %1457 = vmatprep.subr.bf16.mxu0 0
      %1458 = vmatpush1.bf16.msra.mxu0 0
      %1459 = vmatprep.subr.bf16.mxu0 0
      %1460 = vmatpush1.bf16.msra.mxu0 0
      %1461 = vmatprep.subr.bf16.mxu0 0
      %1462 = vmatpush1.bf16.msra.mxu0 0
      %1463 = vmatprep.subr.bf16.mxu0 0
      %1464 = vmatpush1.bf16.msra.mxu0 0
      %1465 = vmatprep.mubr.bf16.mxu0 0
      %1466 = vmatmul.mubr.bf16.gmra.mrb[0].mxu0 %v1377
      %v1467 = vpop.f32.mrb[0].mxu0
      %v1468 = vadd.f32 0.0, %v1467
      %v1469 = vpop.f32.mrb[0].mxu0
      %v1470 = vpop.f32.mrb[0].mxu0
      %v1471 = vadd.f32 0.0, %v1470
      %v1472 = vpop.f32.mrb[0].mxu0
      %1473 = vmatprep.mubr.bf16.mxu0 0
      %1474 = vmatmul.mubr.bf16.gmra.mrb[0].mxu0 %v1380
      %v1475 = vpop.f32.mrb[0].mxu0
      %v1476 = vadd.f32 0.0, %v1475
      %v1477 = vpop.f32.mrb[0].mxu0
      %v1478 = vpop.f32.mrb[0].mxu0
      %v1479 = vadd.f32 0.0, %v1478
      %v1480 = vpop.f32.mrb[0].mxu0
      %1481 = vmatprep.mubr.bf16.mxu0 0
      %1482 = vmatmul.mubr.bf16.gmra.mrb[0].mxu0 %v1383
      %v1483 = vpop.f32.mrb[0].mxu0
      %v1484 = vadd.f32 0.0, %v1483
      %v1485 = vpop.f32.mrb[0].mxu0
      %v1486 = vpop.f32.mrb[0].mxu0
      %v1487 = vadd.f32 0.0, %v1486
      %v1488 = vpop.f32.mrb[0].mxu0
      %1489 = vmatprep.mubr.bf16.mxu0 0
      %1490 = vmatmul.mubr.bf16.gmra.mrb[0].mxu0 %v1386
      %v1491 = vpop.f32.mrb[0].mxu0
      %v1492 = vadd.f32 0.0, %v1491
      %v1493 = vpop.f32.mrb[0].mxu0
      %v1494 = vpop.f32.mrb[0].mxu0
      %v1495 = vadd.f32 0.0, %v1494
      %v1496 = vpop.f32.mrb[0].mxu0
      %1497 = vmatprep.mubr.bf16.mxu0 0
      %1498 = vmatmul.mubr.bf16.gmra.mrb[0].mxu0 %v1389
      %v1499 = vpop.f32.mrb[0].mxu0
      %v1500 = vadd.f32 0.0, %v1499
      %v1501 = vpop.f32.mrb[0].mxu0
      %v1502 = vpop.f32.mrb[0].mxu0
      %v1503 = vadd.f32 0.0, %v1502
      %v1504 = vpop.f32.mrb[0].mxu0
      %1505 = vmatprep.mubr.bf16.mxu0 0
      %1506 = vmatmul.mubr.bf16.gmra.mrb[0].mxu0 %v1392
      %v1507 = vpop.f32.mrb[0].mxu0
      %v1508 = vadd.f32 0.0, %v1507
      %v1509 = vpop.f32.mrb[0].mxu0
      %v1510 = vpop.f32.mrb[0].mxu0
      %v1511 = vadd.f32 0.0, %v1510
      %v1512 = vpop.f32.mrb[0].mxu0
      %1513 = vmatprep.mubr.bf16.mxu0 0
      %1514 = vmatmul.mubr.bf16.gmra.mrb[0].mxu0 %v1395
      %v1515 = vpop.f32.mrb[0].mxu0
      %v1516 = vadd.f32 0.0, %v1515
      %v1517 = vpop.f32.mrb[0].mxu0
      %v1518 = vpop.f32.mrb[0].mxu0
      %v1519 = vadd.f32 0.0, %v1518
      %v1520 = vpop.f32.mrb[0].mxu0
      %1521 = vmatprep.mubr.bf16.mxu0 0
      %1522 = vmatmul.mubr.bf16.gmra.mrb[0].mxu0 %v1398
      %v1523 = vpop.f32.mrb[0].mxu0
      %v1524 = vadd.f32 0.0, %v1523
      %v1525 = vpop.f32.mrb[0].mxu0
      %v1526 = vpop.f32.mrb[0].mxu0
      %v1527 = vadd.f32 0.0, %v1526
      %v1528 = vpop.f32.mrb[0].mxu0
      %1529 = vmatprep.mubr.bf16.mxu0 0
      %1530 = vmatmul.mubr.bf16.gmra.mrb[0].mxu0 %v1401
      %v1531 = vpop.f32.mrb[0].mxu0
      %v1532 = vadd.f32 0.0, %v1531
      %v1533 = vpop.f32.mrb[0].mxu0
      %v1534 = vpop.f32.mrb[0].mxu0
      %v1535 = vadd.f32 0.0, %v1534
      %v1536 = vpop.f32.mrb[0].mxu0
      %1537 = vmatprep.mubr.bf16.mxu0 0
      %1538 = vmatmul.mubr.bf16.gmra.mrb[0].mxu0 %v1404
      %v1539 = vpop.f32.mrb[0].mxu0
      %v1540 = vadd.f32 0.0, %v1539
      %v1541 = vpop.f32.mrb[0].mxu0
      %v1542 = vpop.f32.mrb[0].mxu0
      %v1543 = vadd.f32 0.0, %v1542
      %v1544 = vpop.f32.mrb[0].mxu0
      %1545 = vmatprep.mubr.bf16.mxu0 0
      %1546 = vmatmul.mubr.bf16.gmra.mrb[0].mxu0 %v1407
      %v1547 = vpop.f32.mrb[0].mxu0
      %v1548 = vadd.f32 0.0, %v1547
      %v1549 = vpop.f32.mrb[0].mxu0
      %v1550 = vpop.f32.mrb[0].mxu0
      %v1551 = vadd.f32 0.0, %v1550
      %v1552 = vpop.f32.mrb[0].mxu0
      %1553 = vmatprep.mubr.bf16.mxu0 0
      %1554 = vmatmul.mubr.bf16.gmra.mrb[0].mxu0 %v1410
      %v1555 = vpop.f32.mrb[0].mxu0
      %v1556 = vadd.f32 0.0, %v1555
      %v1557 = vpop.f32.mrb[0].mxu0
      %v1558 = vpop.f32.mrb[0].mxu0
      %v1559 = vadd.f32 0.0, %v1558
      %v1560 = vpop.f32.mrb[0].mxu0
      %1561 = vmatprep.mubr.bf16.mxu0 0
      %1562 = vmatmul.mubr.bf16.gmra.mrb[0].mxu0 %v1413
      %v1563 = vpop.f32.mrb[0].mxu0
      %v1564 = vadd.f32 0.0, %v1563
      %v1565 = vpop.f32.mrb[0].mxu0
      %v1566 = vpop.f32.mrb[0].mxu0
      %v1567 = vadd.f32 0.0, %v1566
      %v1568 = vpop.f32.mrb[0].mxu0
      %1569 = vmatprep.mubr.bf16.mxu0 0
      %1570 = vmatmul.mubr.bf16.gmra.mrb[0].mxu0 %v1416
      %v1571 = vpop.f32.mrb[0].mxu0
      %v1572 = vadd.f32 0.0, %v1571
      %v1573 = vpop.f32.mrb[0].mxu0
      %v1574 = vpop.f32.mrb[0].mxu0
      %v1575 = vadd.f32 0.0, %v1574
      %v1576 = vpop.f32.mrb[0].mxu0
      %1577 = vmatprep.mubr.bf16.mxu0 0
      %1578 = vmatmul.mubr.bf16.gmra.mrb[0].mxu0 %v1419
      %v1579 = vpop.f32.mrb[0].mxu0
      %v1580 = vadd.f32 0.0, %v1579
      %v1581 = vpop.f32.mrb[0].mxu0
      %v1582 = vpop.f32.mrb[0].mxu0
      %v1583 = vadd.f32 0.0, %v1582
      %v1584 = vpop.f32.mrb[0].mxu0
      %1585 = vmatprep.mubr.bf16.mxu0 0
      %1586 = vmatmul.mubr.bf16.gmra.mrb[0].mxu0 %v1422
      %v1587 = vpop.f32.mrb[0].mxu0
      %v1588 = vadd.f32 0.0, %v1587
      %v1589 = vpop.f32.mrb[0].mxu0
      %v1590 = vpop.f32.mrb[0].mxu0
      %v1591 = vadd.f32 0.0, %v1590
      %v1592 = vpop.f32.mrb[0].mxu0
      %1593 = vmatprep.mubr.bf16.mxu0 0
      %1594 = vmatmul.mubr.bf16.gmra.mrb[0].mxu0 %v1425
      %v1595 = vpop.f32.mrb[0].mxu0
      %v1596 = vadd.f32 0.0, %v1595
      %v1597 = vpop.f32.mrb[0].mxu0
      %v1598 = vpop.f32.mrb[0].mxu0
      %v1599 = vadd.f32 0.0, %v1598
      %v1600 = vpop.f32.mrb[0].mxu0
      %1601 = vmatprep.mubr.bf16.mxu0 0
      %1602 = vmatmul.mubr.bf16.gmra.mrb[0].mxu0 %v1428
      %v1603 = vpop.f32.mrb[0].mxu0
      %v1604 = vadd.f32 0.0, %v1603
      %v1605 = vpop.f32.mrb[0].mxu0
      %v1606 = vpop.f32.mrb[0].mxu0
      %v1607 = vadd.f32 0.0, %v1606
      %v1608 = vpop.f32.mrb[0].mxu0
      %1609 = vdwg.mxu0
      %v1610 = vadd.f32 %v1284, %v1468
      %v1611 = vadd.f32 %v1285, %v1471
      %v1612 = vadd.f32 %v1286, %v1476
      %v1613 = vadd.f32 %v1287, %v1479
      %v1614 = vadd.f32 %v1288, %v1484
      %v1615 = vadd.f32 %v1289, %v1487
      %v1616 = vadd.f32 %v1290, %v1492
      %v1617 = vadd.f32 %v1291, %v1495
      %v1618 = vadd.f32 %v1292, %v1500
      %v1619 = vadd.f32 %v1293, %v1503
      %v1620 = vadd.f32 %v1294, %v1508
      %v1621 = vadd.f32 %v1295, %v1511
      %v1622 = vadd.f32 %v1296, %v1516
      %v1623 = vadd.f32 %v1297, %v1519
      %v1624 = vadd.f32 %v1298, %v1524
      %v1625 = vadd.f32 %v1299, %v1527
      %v1626 = vadd.f32 %v1300, %v1532
      %v1627 = vadd.f32 %v1301, %v1535
      %v1628 = vadd.f32 %v1302, %v1540
      %v1629 = vadd.f32 %v1303, %v1543
      %v1630 = vadd.f32 %v1304, %v1548
      %v1631 = vadd.f32 %v1305, %v1551
      %v1632 = vadd.f32 %v1306, %v1556
      %v1633 = vadd.f32 %v1307, %v1559
      %v1634 = vadd.f32 %v1308, %v1564
      %v1635 = vadd.f32 %v1309, %v1567
      %v1636 = vadd.f32 %v1310, %v1572
      %v1637 = vadd.f32 %v1311, %v1575
      %v1638 = vadd.f32 %v1312, %v1580
      %v1639 = vadd.f32 %v1313, %v1583
      %v1640 = vadd.f32 %v1314, %v1588
      %v1641 = vadd.f32 %v1315, %v1591
      %v1642 = vadd.f32 %v1316, %v1596
      %v1643 = vadd.f32 %v1317, %v1599
      %v1644 = vadd.f32 %v1318, %v1604
      %v1645 = vadd.f32 %v1319, %v1607
      %v1646 = vld [vmem:[%s362 + $0x13] sm:$0xff]
      %v1647 = vld [vmem:[%s362 + $0x1b] sm:$0xff]
      %v1648 = vld [vmem:[%s362 + $0x23] sm:$0xff]
      %v1649 = vld [vmem:[%s362 + $0x2b] sm:$0xff]
      %v1650 = vld [vmem:[%s362 + $0x33] sm:$0xff]
      %v1651 = vld [vmem:[%s362 + $0x3b] sm:$0xff]
      %v1652 = vld [vmem:[%s362 + $0x43] sm:$0xff]
      %v1653 = vld [vmem:[%s362 + $0x4b] sm:$0xff]
      %v1654 = vld [vmem:[%s362 + $0x53] sm:$0xff]
      %v1655 = vld [vmem:[%s362 + $0x5b] sm:$0xff]
      %v1656 = vld [vmem:[%s362 + $0x63] sm:$0xff]
      %v1657 = vld [vmem:[%s362 + $0x6b] sm:$0xff]
      %v1658 = vld [vmem:[%s362 + $0x73] sm:$0xff]
      %v1659 = vld [vmem:[%s362 + $0x7b] sm:$0xff]
      %v1660 = vld [vmem:[%s362 + $0x83] sm:$0xff]
      %v1661 = vld [vmem:[%s362 + $0x8b] sm:$0xff]
      %v1662 = vld [vmem:[%s362 + $0x93] sm:$0xff]
      %v1663 = vld [vmem:[%s362 + $0x9b] sm:$0xff]
      %v1664 = vld [vmem:[%s362 + $0xa3] sm:$0xff]
      %v1665 = vld [vmem:[%s362 + $0xab] sm:$0xff]
      %v1666 = vld [vmem:[%s362 + $0xb3] sm:$0xff]
      %v1667 = vld [vmem:[%s362 + $0xbb] sm:$0xff]
      %v1668 = vld [vmem:[%s362 + $0xc3] sm:$0xff]
      %v1669 = vld [vmem:[%s362 + $0xcb] sm:$0xff]
      %v1670 = vld [vmem:[%s362 + $0xd3] sm:$0xff]
      %v1671 = vld [vmem:[%s362 + $0xdb] sm:$0xff]
      %v1672 = vld [vmem:[%s362 + $0xe3] sm:$0xff]
      %v1673 = vld [vmem:[%s362 + $0xeb] sm:$0xff]
      %v1674 = vld [vmem:[%s362 + $0xf3] sm:$0xff]
      %v1675 = vld [vmem:[%s362 + $0xfb] sm:$0xff]
      %v1676 = vld [vmem:[%s362 + $0x103] sm:$0xff]
      %v1677 = vld [vmem:[%s362 + $0x10b] sm:$0xff]
      %v1678 = vld [vmem:[%s362 + $0x113] sm:$0xff]
      %v1679 = vld [vmem:[%s362 + $0x11b] sm:$0xff]
      %v1680 = vld [vmem:[%s362 + $0x123] sm:$0xff]
      %v1681 = vld [vmem:[%s362 + $0x12b] sm:$0xff]
      %v1682 = vpack.c.bf16 %v1647, %v1646
      %v1683 = vpack.c.bf16 %v1649, %v1648
      %v1684 = vpack.c.bf16 %v1651, %v1650
      %v1685 = vpack.c.bf16 %v1653, %v1652
      %v1686 = vpack.c.bf16 %v1655, %v1654
      %v1687 = vpack.c.bf16 %v1657, %v1656
      %v1688 = vpack.c.bf16 %v1659, %v1658
      %v1689 = vpack.c.bf16 %v1661, %v1660
      %v1690 = vpack.c.bf16 %v1663, %v1662
      %v1691 = vpack.c.bf16 %v1665, %v1664
      %v1692 = vpack.c.bf16 %v1667, %v1666
      %v1693 = vpack.c.bf16 %v1669, %v1668
      %v1694 = vpack.c.bf16 %v1671, %v1670
      %v1695 = vpack.c.bf16 %v1673, %v1672
      %v1696 = vpack.c.bf16 %v1675, %v1674
      %v1697 = vpack.c.bf16 %v1677, %v1676
      %v1698 = vpack.c.bf16 %v1679, %v1678
      %v1699 = vpack.c.bf16 %v1681, %v1680
      %s1700 = scalar_lea.vmem %s1, 8
      %v1701 = vld [vmem:[%s1700] sm:$0x3]
      %v1703 = vsel %vm521, %v1682, 0
      %v1706 = vsel %vm521, %v1683, 0
      %v1709 = vsel %vm521, %v1684, 0
      %v1712 = vsel %vm521, %v1685, 0
      %v1715 = vsel %vm521, %v1686, 0
      %v1718 = vsel %vm521, %v1687, 0
      %v1721 = vsel %vm521, %v1688, 0
      %v1724 = vsel %vm521, %v1689, 0
      %v1727 = vsel %vm521, %v1690, 0
      %v1730 = vsel %vm521, %v1691, 0
      %v1733 = vsel %vm521, %v1692, 0
      %v1736 = vsel %vm521, %v1693, 0
      %v1739 = vsel %vm521, %v1694, 0
      %v1742 = vsel %vm521, %v1695, 0
      %v1745 = vsel %vm521, %v1696, 0
      %v1748 = vsel %vm521, %v1697, 0
      %v1751 = vsel %vm521, %v1698, 0
      %v1754 = vsel %vm521, %v1699, 0
      %v1757 = vand.u32 %v1701, %v579
      %1759 = vmatprep.subr.bf16.mxu0 0
      %1760 = vmatpush1.bf16.msra.mxu0 %v1757
      %1761 = vmatprep.subr.bf16.mxu0 0
      %1762 = vmatpush1.bf16.msra.mxu0 0
      %1763 = vmatprep.subr.bf16.mxu0 0
      %1764 = vmatpush1.bf16.msra.mxu0 0
      %1765 = vmatprep.subr.bf16.mxu0 0
      %1766 = vmatpush1.bf16.msra.mxu0 0
      %1767 = vmatprep.subr.bf16.mxu0 0
      %1768 = vmatpush1.bf16.msra.mxu0 0
      %1769 = vmatprep.subr.bf16.mxu0 0
      %1770 = vmatpush1.bf16.msra.mxu0 0
      %1771 = vmatprep.subr.bf16.mxu0 0
      %1772 = vmatpush1.bf16.msra.mxu0 0
      %1773 = vmatprep.subr.bf16.mxu0 0
      %1774 = vmatpush1.bf16.msra.mxu0 0
      %1775 = vmatprep.subr.bf16.mxu0 0
      %1776 = vmatpush1.bf16.msra.mxu0 0
      %1777 = vmatprep.subr.bf16.mxu0 0
      %1778 = vmatpush1.bf16.msra.mxu0 0
      %1779 = vmatprep.subr.bf16.mxu0 0
      %1780 = vmatpush1.bf16.msra.mxu0 0
      %1781 = vmatprep.subr.bf16.mxu0 0
      %1782 = vmatpush1.bf16.msra.mxu0 0
      %1783 = vmatprep.subr.bf16.mxu0 0
      %1784 = vmatpush1.bf16.msra.mxu0 0
      %1785 = vmatprep.subr.bf16.mxu0 0
      %1786 = vmatpush1.bf16.msra.mxu0 0
      %1787 = vmatprep.subr.bf16.mxu0 0
      %1788 = vmatpush1.bf16.msra.mxu0 0
      %1789 = vmatprep.subr.bf16.mxu0 0
      %1790 = vmatpush1.bf16.msra.mxu0 0
      %1791 = vmatprep.mubr.bf16.mxu0 0
      %1792 = vmatmul.mubr.bf16.gmra.mrb[0].mxu0 %v1703
      %v1793 = vpop.f32.mrb[0].mxu0
      %v1794 = vadd.f32 0.0, %v1793
      %v1795 = vpop.f32.mrb[0].mxu0
      %v1796 = vpop.f32.mrb[0].mxu0
      %v1797 = vadd.f32 0.0, %v1796
      %v1798 = vpop.f32.mrb[0].mxu0
      %1799 = vmatprep.mubr.bf16.mxu0 0
      %1800 = vmatmul.mubr.bf16.gmra.mrb[0].mxu0 %v1706
      %v1801 = vpop.f32.mrb[0].mxu0
      %v1802 = vadd.f32 0.0, %v1801
      %v1803 = vpop.f32.mrb[0].mxu0
      %v1804 = vpop.f32.mrb[0].mxu0
      %v1805 = vadd.f32 0.0, %v1804
      %v1806 = vpop.f32.mrb[0].mxu0
      %1807 = vmatprep.mubr.bf16.mxu0 0
      %1808 = vmatmul.mubr.bf16.gmra.mrb[0].mxu0 %v1709
      %v1809 = vpop.f32.mrb[0].mxu0
      %v1810 = vadd.f32 0.0, %v1809
      %v1811 = vpop.f32.mrb[0].mxu0
      %v1812 = vpop.f32.mrb[0].mxu0
      %v1813 = vadd.f32 0.0, %v1812
      %v1814 = vpop.f32.mrb[0].mxu0
      %1815 = vmatprep.mubr.bf16.mxu0 0
      %1816 = vmatmul.mubr.bf16.gmra.mrb[0].mxu0 %v1712
      %v1817 = vpop.f32.mrb[0].mxu0
      %v1818 = vadd.f32 0.0, %v1817
      %v1819 = vpop.f32.mrb[0].mxu0
      %v1820 = vpop.f32.mrb[0].mxu0
      %v1821 = vadd.f32 0.0, %v1820
      %v1822 = vpop.f32.mrb[0].mxu0
      %1823 = vmatprep.mubr.bf16.mxu0 0
      %1824 = vmatmul.mubr.bf16.gmra.mrb[0].mxu0 %v1715
      %v1825 = vpop.f32.mrb[0].mxu0
      %v1826 = vadd.f32 0.0, %v1825
      %v1827 = vpop.f32.mrb[0].mxu0
      %v1828 = vpop.f32.mrb[0].mxu0
      %v1829 = vadd.f32 0.0, %v1828
      %v1830 = vpop.f32.mrb[0].mxu0
      %1831 = vmatprep.mubr.bf16.mxu0 0
      %1832 = vmatmul.mubr.bf16.gmra.mrb[0].mxu0 %v1718
      %v1833 = vpop.f32.mrb[0].mxu0
      %v1834 = vadd.f32 0.0, %v1833
      %v1835 = vpop.f32.mrb[0].mxu0
      %v1836 = vpop.f32.mrb[0].mxu0
      %v1837 = vadd.f32 0.0, %v1836
      %v1838 = vpop.f32.mrb[0].mxu0
      %1839 = vmatprep.mubr.bf16.mxu0 0
      %1840 = vmatmul.mubr.bf16.gmra.mrb[0].mxu0 %v1721
      %v1841 = vpop.f32.mrb[0].mxu0
      %v1842 = vadd.f32 0.0, %v1841
      %v1843 = vpop.f32.mrb[0].mxu0
      %v1844 = vpop.f32.mrb[0].mxu0
      %v1845 = vadd.f32 0.0, %v1844
      %v1846 = vpop.f32.mrb[0].mxu0
      %1847 = vmatprep.mubr.bf16.mxu0 0
      %1848 = vmatmul.mubr.bf16.gmra.mrb[0].mxu0 %v1724
      %v1849 = vpop.f32.mrb[0].mxu0
      %v1850 = vadd.f32 0.0, %v1849
      %v1851 = vpop.f32.mrb[0].mxu0
      %v1852 = vpop.f32.mrb[0].mxu0
      %v1853 = vadd.f32 0.0, %v1852
      %v1854 = vpop.f32.mrb[0].mxu0
      %1855 = vmatprep.mubr.bf16.mxu0 0
      %1856 = vmatmul.mubr.bf16.gmra.mrb[0].mxu0 %v1727
      %v1857 = vpop.f32.mrb[0].mxu0
      %v1858 = vadd.f32 0.0, %v1857
      %v1859 = vpop.f32.mrb[0].mxu0
      %v1860 = vpop.f32.mrb[0].mxu0
      %v1861 = vadd.f32 0.0, %v1860
      %v1862 = vpop.f32.mrb[0].mxu0
      %1863 = vmatprep.mubr.bf16.mxu0 0
      %1864 = vmatmul.mubr.bf16.gmra.mrb[0].mxu0 %v1730
      %v1865 = vpop.f32.mrb[0].mxu0
      %v1866 = vadd.f32 0.0, %v1865
      %v1867 = vpop.f32.mrb[0].mxu0
      %v1868 = vpop.f32.mrb[0].mxu0
      %v1869 = vadd.f32 0.0, %v1868
      %v1870 = vpop.f32.mrb[0].mxu0
      %1871 = vmatprep.mubr.bf16.mxu0 0
      %1872 = vmatmul.mubr.bf16.gmra.mrb[0].mxu0 %v1733
      %v1873 = vpop.f32.mrb[0].mxu0
      %v1874 = vadd.f32 0.0, %v1873
      %v1875 = vpop.f32.mrb[0].mxu0
      %v1876 = vpop.f32.mrb[0].mxu0
      %v1877 = vadd.f32 0.0, %v1876
      %v1878 = vpop.f32.mrb[0].mxu0
      %1879 = vmatprep.mubr.bf16.mxu0 0
      %1880 = vmatmul.mubr.bf16.gmra.mrb[0].mxu0 %v1736
      %v1881 = vpop.f32.mrb[0].mxu0
      %v1882 = vadd.f32 0.0, %v1881
      %v1883 = vpop.f32.mrb[0].mxu0
      %v1884 = vpop.f32.mrb[0].mxu0
      %v1885 = vadd.f32 0.0, %v1884
      %v1886 = vpop.f32.mrb[0].mxu0
      %1887 = vmatprep.mubr.bf16.mxu0 0
      %1888 = vmatmul.mubr.bf16.gmra.mrb[0].mxu0 %v1739
      %v1889 = vpop.f32.mrb[0].mxu0
      %v1890 = vadd.f32 0.0, %v1889
      %v1891 = vpop.f32.mrb[0].mxu0
      %v1892 = vpop.f32.mrb[0].mxu0
      %v1893 = vadd.f32 0.0, %v1892
      %v1894 = vpop.f32.mrb[0].mxu0
      %1895 = vmatprep.mubr.bf16.mxu0 0
      %1896 = vmatmul.mubr.bf16.gmra.mrb[0].mxu0 %v1742
      %v1897 = vpop.f32.mrb[0].mxu0
      %v1898 = vadd.f32 0.0, %v1897
      %v1899 = vpop.f32.mrb[0].mxu0
      %v1900 = vpop.f32.mrb[0].mxu0
      %v1901 = vadd.f32 0.0, %v1900
      %v1902 = vpop.f32.mrb[0].mxu0
      %1903 = vmatprep.mubr.bf16.mxu0 0
      %1904 = vmatmul.mubr.bf16.gmra.mrb[0].mxu0 %v1745
      %v1905 = vpop.f32.mrb[0].mxu0
      %v1906 = vadd.f32 0.0, %v1905
      %v1907 = vpop.f32.mrb[0].mxu0
      %v1908 = vpop.f32.mrb[0].mxu0
      %v1909 = vadd.f32 0.0, %v1908
      %v1910 = vpop.f32.mrb[0].mxu0
      %1911 = vmatprep.mubr.bf16.mxu0 0
      %1912 = vmatmul.mubr.bf16.gmra.mrb[0].mxu0 %v1748
      %v1913 = vpop.f32.mrb[0].mxu0
      %v1914 = vadd.f32 0.0, %v1913
      %v1915 = vpop.f32.mrb[0].mxu0
      %v1916 = vpop.f32.mrb[0].mxu0
      %v1917 = vadd.f32 0.0, %v1916
      %v1918 = vpop.f32.mrb[0].mxu0
      %1919 = vmatprep.mubr.bf16.mxu0 0
      %1920 = vmatmul.mubr.bf16.gmra.mrb[0].mxu0 %v1751
      %v1921 = vpop.f32.mrb[0].mxu0
      %v1922 = vadd.f32 0.0, %v1921
      %v1923 = vpop.f32.mrb[0].mxu0
      %v1924 = vpop.f32.mrb[0].mxu0
      %v1925 = vadd.f32 0.0, %v1924
      %v1926 = vpop.f32.mrb[0].mxu0
      %1927 = vmatprep.mubr.bf16.mxu0 0
      %1928 = vmatmul.mubr.bf16.gmra.mrb[0].mxu0 %v1754
      %v1929 = vpop.f32.mrb[0].mxu0
      %v1930 = vadd.f32 0.0, %v1929
      %v1931 = vpop.f32.mrb[0].mxu0
      %v1932 = vpop.f32.mrb[0].mxu0
      %v1933 = vadd.f32 0.0, %v1932
      %v1934 = vpop.f32.mrb[0].mxu0
      %1935 = vdwg.mxu0
      %v1936 = vadd.f32 %v1610, %v1794
      %v1937 = vadd.f32 %v1611, %v1797
      %v1938 = vadd.f32 %v1612, %v1802
      %v1939 = vadd.f32 %v1613, %v1805
      %v1940 = vadd.f32 %v1614, %v1810
      %v1941 = vadd.f32 %v1615, %v1813
      %v1942 = vadd.f32 %v1616, %v1818
      %v1943 = vadd.f32 %v1617, %v1821
      %v1944 = vadd.f32 %v1618, %v1826
      %v1945 = vadd.f32 %v1619, %v1829
      %v1946 = vadd.f32 %v1620, %v1834
      %v1947 = vadd.f32 %v1621, %v1837
      %v1948 = vadd.f32 %v1622, %v1842
      %v1949 = vadd.f32 %v1623, %v1845
      %v1950 = vadd.f32 %v1624, %v1850
      %v1951 = vadd.f32 %v1625, %v1853
      %v1952 = vadd.f32 %v1626, %v1858
      %v1953 = vadd.f32 %v1627, %v1861
      %v1954 = vadd.f32 %v1628, %v1866
      %v1955 = vadd.f32 %v1629, %v1869
      %v1956 = vadd.f32 %v1630, %v1874
      %v1957 = vadd.f32 %v1631, %v1877
      %v1958 = vadd.f32 %v1632, %v1882
      %v1959 = vadd.f32 %v1633, %v1885
      %v1960 = vadd.f32 %v1634, %v1890
      %v1961 = vadd.f32 %v1635, %v1893
      %v1962 = vadd.f32 %v1636, %v1898
      %v1963 = vadd.f32 %v1637, %v1901
      %v1964 = vadd.f32 %v1638, %v1906
      %v1965 = vadd.f32 %v1639, %v1909
      %v1966 = vadd.f32 %v1640, %v1914
      %v1967 = vadd.f32 %v1641, %v1917
      %v1968 = vadd.f32 %v1642, %v1922
      %v1969 = vadd.f32 %v1643, %v1925
      %v1970 = vadd.f32 %v1644, %v1930
      %v1971 = vadd.f32 %v1645, %v1933
      %v1972 = vld [vmem:[%s362 + $0x14] sm:$0xff]
      %v1973 = vld [vmem:[%s362 + $0x1c] sm:$0xff]
      %v1974 = vld [vmem:[%s362 + $0x24] sm:$0xff]
      %v1975 = vld [vmem:[%s362 + $0x2c] sm:$0xff]
      %v1976 = vld [vmem:[%s362 + $0x34] sm:$0xff]
      %v1977 = vld [vmem:[%s362 + $0x3c] sm:$0xff]
      %v1978 = vld [vmem:[%s362 + $0x44] sm:$0xff]
      %v1979 = vld [vmem:[%s362 + $0x4c] sm:$0xff]
      %v1980 = vld [vmem:[%s362 + $0x54] sm:$0xff]
      %v1981 = vld [vmem:[%s362 + $0x5c] sm:$0xff]
      %v1982 = vld [vmem:[%s362 + $0x64] sm:$0xff]
      %v1983 = vld [vmem:[%s362 + $0x6c] sm:$0xff]
      %v1984 = vld [vmem:[%s362 + $0x74] sm:$0xff]
      %v1985 = vld [vmem:[%s362 + $0x7c] sm:$0xff]
      %v1986 = vld [vmem:[%s362 + $0x84] sm:$0xff]
      %v1987 = vld [vmem:[%s362 + $0x8c] sm:$0xff]
      %v1988 = vld [vmem:[%s362 + $0x94] sm:$0xff]
      %v1989 = vld [vmem:[%s362 + $0x9c] sm:$0xff]
      %v1990 = vld [vmem:[%s362 + $0xa4] sm:$0xff]
      %v1991 = vld [vmem:[%s362 + $0xac] sm:$0xff]
      %v1992 = vld [vmem:[%s362 + $0xb4] sm:$0xff]
      %v1993 = vld [vmem:[%s362 + $0xbc] sm:$0xff]
      %v1994 = vld [vmem:[%s362 + $0xc4] sm:$0xff]
      %v1995 = vld [vmem:[%s362 + $0xcc] sm:$0xff]
      %v1996 = vld [vmem:[%s362 + $0xd4] sm:$0xff]
      %v1997 = vld [vmem:[%s362 + $0xdc] sm:$0xff]
      %v1998 = vld [vmem:[%s362 + $0xe4] sm:$0xff]
      %v1999 = vld [vmem:[%s362 + $0xec] sm:$0xff]
      %v2000 = vld [vmem:[%s362 + $0xf4] sm:$0xff]
      %v2001 = vld [vmem:[%s362 + $0xfc] sm:$0xff]
      %v2002 = vld [vmem:[%s362 + $0x104] sm:$0xff]
      %v2003 = vld [vmem:[%s362 + $0x10c] sm:$0xff]
      %v2004 = vld [vmem:[%s362 + $0x114] sm:$0xff]
      %v2005 = vld [vmem:[%s362 + $0x11c] sm:$0xff]
      %v2006 = vld [vmem:[%s362 + $0x124] sm:$0xff]
      %v2007 = vld [vmem:[%s362 + $0x12c] sm:$0xff]
      %v2008 = vpack.c.bf16 %v1973, %v1972
      %v2009 = vpack.c.bf16 %v1975, %v1974
      %v2010 = vpack.c.bf16 %v1977, %v1976
      %v2011 = vpack.c.bf16 %v1979, %v1978
      %v2012 = vpack.c.bf16 %v1981, %v1980
      %v2013 = vpack.c.bf16 %v1983, %v1982
      %v2014 = vpack.c.bf16 %v1985, %v1984
      %v2015 = vpack.c.bf16 %v1987, %v1986
      %v2016 = vpack.c.bf16 %v1989, %v1988
      %v2017 = vpack.c.bf16 %v1991, %v1990
      %v2018 = vpack.c.bf16 %v1993, %v1992
      %v2019 = vpack.c.bf16 %v1995, %v1994
      %v2020 = vpack.c.bf16 %v1997, %v1996
      %v2021 = vpack.c.bf16 %v1999, %v1998
      %v2022 = vpack.c.bf16 %v2001, %v2000
      %v2023 = vpack.c.bf16 %v2003, %v2002
      %v2024 = vpack.c.bf16 %v2005, %v2004
      %v2025 = vpack.c.bf16 %v2007, %v2006
      %s2026 = scalar_lea.vmem %s1, 10
      %v2027 = vld [vmem:[%s2026] sm:$0x3]
      %v2029 = vsel %vm521, %v2008, 0
      %v2032 = vsel %vm521, %v2009, 0
      %v2035 = vsel %vm521, %v2010, 0
      %v2038 = vsel %vm521, %v2011, 0
      %v2041 = vsel %vm521, %v2012, 0
      %v2044 = vsel %vm521, %v2013, 0
      %v2047 = vsel %vm521, %v2014, 0
      %v2050 = vsel %vm521, %v2015, 0
      %v2053 = vsel %vm521, %v2016, 0
      %v2056 = vsel %vm521, %v2017, 0
      %v2059 = vsel %vm521, %v2018, 0
      %v2062 = vsel %vm521, %v2019, 0
      %v2065 = vsel %vm521, %v2020, 0
      %v2068 = vsel %vm521, %v2021, 0
      %v2071 = vsel %vm521, %v2022, 0
      %v2074 = vsel %vm521, %v2023, 0
      %v2077 = vsel %vm521, %v2024, 0
      %v2080 = vsel %vm521, %v2025, 0
      %v2083 = vand.u32 %v2027, %v579
      %2085 = vmatprep.subr.bf16.mxu0 0
      %2086 = vmatpush1.bf16.msra.mxu0 %v2083
      %2087 = vmatprep.subr.bf16.mxu0 0
      %2088 = vmatpush1.bf16.msra.mxu0 0
      %2089 = vmatprep.subr.bf16.mxu0 0
      %2090 = vmatpush1.bf16.msra.mxu0 0
      %2091 = vmatprep.subr.bf16.mxu0 0
      %2092 = vmatpush1.bf16.msra.mxu0 0
      %2093 = vmatprep.subr.bf16.mxu0 0
      %2094 = vmatpush1.bf16.msra.mxu0 0
      %2095 = vmatprep.subr.bf16.mxu0 0
      %2096 = vmatpush1.bf16.msra.mxu0 0
      %2097 = vmatprep.subr.bf16.mxu0 0
      %2098 = vmatpush1.bf16.msra.mxu0 0
      %2099 = vmatprep.subr.bf16.mxu0 0
      %2100 = vmatpush1.bf16.msra.mxu0 0
      %2101 = vmatprep.subr.bf16.mxu0 0
      %2102 = vmatpush1.bf16.msra.mxu0 0
      %2103 = vmatprep.subr.bf16.mxu0 0
      %2104 = vmatpush1.bf16.msra.mxu0 0
      %2105 = vmatprep.subr.bf16.mxu0 0
      %2106 = vmatpush1.bf16.msra.mxu0 0
      %2107 = vmatprep.subr.bf16.mxu0 0
      %2108 = vmatpush1.bf16.msra.mxu0 0
      %2109 = vmatprep.subr.bf16.mxu0 0
      %2110 = vmatpush1.bf16.msra.mxu0 0
      %2111 = vmatprep.subr.bf16.mxu0 0
      %2112 = vmatpush1.bf16.msra.mxu0 0
      %2113 = vmatprep.subr.bf16.mxu0 0
      %2114 = vmatpush1.bf16.msra.mxu0 0
      %2115 = vmatprep.subr.bf16.mxu0 0
      %2116 = vmatpush1.bf16.msra.mxu0 0
      %2117 = vmatprep.mubr.bf16.mxu0 0
      %2118 = vmatmul.mubr.bf16.gmra.mrb[0].mxu0 %v2029
      %v2119 = vpop.f32.mrb[0].mxu0
      %v2120 = vadd.f32 0.0, %v2119
      %v2121 = vpop.f32.mrb[0].mxu0
      %v2122 = vpop.f32.mrb[0].mxu0
      %v2123 = vadd.f32 0.0, %v2122
      %v2124 = vpop.f32.mrb[0].mxu0
      %2125 = vmatprep.mubr.bf16.mxu0 0
      %2126 = vmatmul.mubr.bf16.gmra.mrb[0].mxu0 %v2032
      %v2127 = vpop.f32.mrb[0].mxu0
      %v2128 = vadd.f32 0.0, %v2127
      %v2129 = vpop.f32.mrb[0].mxu0
      %v2130 = vpop.f32.mrb[0].mxu0
      %v2131 = vadd.f32 0.0, %v2130
      %v2132 = vpop.f32.mrb[0].mxu0
      %2133 = vmatprep.mubr.bf16.mxu0 0
      %2134 = vmatmul.mubr.bf16.gmra.mrb[0].mxu0 %v2035
      %v2135 = vpop.f32.mrb[0].mxu0
      %v2136 = vadd.f32 0.0, %v2135
      %v2137 = vpop.f32.mrb[0].mxu0
      %v2138 = vpop.f32.mrb[0].mxu0
      %v2139 = vadd.f32 0.0, %v2138
      %v2140 = vpop.f32.mrb[0].mxu0
      %2141 = vmatprep.mubr.bf16.mxu0 0
      %2142 = vmatmul.mubr.bf16.gmra.mrb[0].mxu0 %v2038
      %v2143 = vpop.f32.mrb[0].mxu0
      %v2144 = vadd.f32 0.0, %v2143
      %v2145 = vpop.f32.mrb[0].mxu0
      %v2146 = vpop.f32.mrb[0].mxu0
      %v2147 = vadd.f32 0.0, %v2146
      %v2148 = vpop.f32.mrb[0].mxu0
      %2149 = vmatprep.mubr.bf16.mxu0 0
      %2150 = vmatmul.mubr.bf16.gmra.mrb[0].mxu0 %v2041
      %v2151 = vpop.f32.mrb[0].mxu0
      %v2152 = vadd.f32 0.0, %v2151
      %v2153 = vpop.f32.mrb[0].mxu0
      %v2154 = vpop.f32.mrb[0].mxu0
      %v2155 = vadd.f32 0.0, %v2154
      %v2156 = vpop.f32.mrb[0].mxu0
      %2157 = vmatprep.mubr.bf16.mxu0 0
      %2158 = vmatmul.mubr.bf16.gmra.mrb[0].mxu0 %v2044
      %v2159 = vpop.f32.mrb[0].mxu0
      %v2160 = vadd.f32 0.0, %v2159
      %v2161 = vpop.f32.mrb[0].mxu0
      %v2162 = vpop.f32.mrb[0].mxu0
      %v2163 = vadd.f32 0.0, %v2162
      %v2164 = vpop.f32.mrb[0].mxu0
      %2165 = vmatprep.mubr.bf16.mxu0 0
      %2166 = vmatmul.mubr.bf16.gmra.mrb[0].mxu0 %v2047
      %v2167 = vpop.f32.mrb[0].mxu0
      %v2168 = vadd.f32 0.0, %v2167
      %v2169 = vpop.f32.mrb[0].mxu0
      %v2170 = vpop.f32.mrb[0].mxu0
      %v2171 = vadd.f32 0.0, %v2170
      %v2172 = vpop.f32.mrb[0].mxu0
      %2173 = vmatprep.mubr.bf16.mxu0 0
      %2174 = vmatmul.mubr.bf16.gmra.mrb[0].mxu0 %v2050
      %v2175 = vpop.f32.mrb[0].mxu0
      %v2176 = vadd.f32 0.0, %v2175
      %v2177 = vpop.f32.mrb[0].mxu0
      %v2178 = vpop.f32.mrb[0].mxu0
      %v2179 = vadd.f32 0.0, %v2178
      %v2180 = vpop.f32.mrb[0].mxu0
      %2181 = vmatprep.mubr.bf16.mxu0 0
      %2182 = vmatmul.mubr.bf16.gmra.mrb[0].mxu0 %v2053
      %v2183 = vpop.f32.mrb[0].mxu0
      %v2184 = vadd.f32 0.0, %v2183
      %v2185 = vpop.f32.mrb[0].mxu0
      %v2186 = vpop.f32.mrb[0].mxu0
      %v2187 = vadd.f32 0.0, %v2186
      %v2188 = vpop.f32.mrb[0].mxu0
      %2189 = vmatprep.mubr.bf16.mxu0 0
      %2190 = vmatmul.mubr.bf16.gmra.mrb[0].mxu0 %v2056
      %v2191 = vpop.f32.mrb[0].mxu0
      %v2192 = vadd.f32 0.0, %v2191
      %v2193 = vpop.f32.mrb[0].mxu0
      %v2194 = vpop.f32.mrb[0].mxu0
      %v2195 = vadd.f32 0.0, %v2194
      %v2196 = vpop.f32.mrb[0].mxu0
      %2197 = vmatprep.mubr.bf16.mxu0 0
      %2198 = vmatmul.mubr.bf16.gmra.mrb[0].mxu0 %v2059
      %v2199 = vpop.f32.mrb[0].mxu0
      %v2200 = vadd.f32 0.0, %v2199
      %v2201 = vpop.f32.mrb[0].mxu0
      %v2202 = vpop.f32.mrb[0].mxu0
      %v2203 = vadd.f32 0.0, %v2202
      %v2204 = vpop.f32.mrb[0].mxu0
      %2205 = vmatprep.mubr.bf16.mxu0 0
      %2206 = vmatmul.mubr.bf16.gmra.mrb[0].mxu0 %v2062
      %v2207 = vpop.f32.mrb[0].mxu0
      %v2208 = vadd.f32 0.0, %v2207
      %v2209 = vpop.f32.mrb[0].mxu0
      %v2210 = vpop.f32.mrb[0].mxu0
      %v2211 = vadd.f32 0.0, %v2210
      %v2212 = vpop.f32.mrb[0].mxu0
      %2213 = vmatprep.mubr.bf16.mxu0 0
      %2214 = vmatmul.mubr.bf16.gmra.mrb[0].mxu0 %v2065
      %v2215 = vpop.f32.mrb[0].mxu0
      %v2216 = vadd.f32 0.0, %v2215
      %v2217 = vpop.f32.mrb[0].mxu0
      %v2218 = vpop.f32.mrb[0].mxu0
      %v2219 = vadd.f32 0.0, %v2218
      %v2220 = vpop.f32.mrb[0].mxu0
      %2221 = vmatprep.mubr.bf16.mxu0 0
      %2222 = vmatmul.mubr.bf16.gmra.mrb[0].mxu0 %v2068
      %v2223 = vpop.f32.mrb[0].mxu0
      %v2224 = vadd.f32 0.0, %v2223
      %v2225 = vpop.f32.mrb[0].mxu0
      %v2226 = vpop.f32.mrb[0].mxu0
      %v2227 = vadd.f32 0.0, %v2226
      %v2228 = vpop.f32.mrb[0].mxu0
      %2229 = vmatprep.mubr.bf16.mxu0 0
      %2230 = vmatmul.mubr.bf16.gmra.mrb[0].mxu0 %v2071
      %v2231 = vpop.f32.mrb[0].mxu0
      %v2232 = vadd.f32 0.0, %v2231
      %v2233 = vpop.f32.mrb[0].mxu0
      %v2234 = vpop.f32.mrb[0].mxu0
      %v2235 = vadd.f32 0.0, %v2234
      %v2236 = vpop.f32.mrb[0].mxu0
      %2237 = vmatprep.mubr.bf16.mxu0 0
      %2238 = vmatmul.mubr.bf16.gmra.mrb[0].mxu0 %v2074
      %v2239 = vpop.f32.mrb[0].mxu0
      %v2240 = vadd.f32 0.0, %v2239
      %v2241 = vpop.f32.mrb[0].mxu0
      %v2242 = vpop.f32.mrb[0].mxu0
      %v2243 = vadd.f32 0.0, %v2242
      %v2244 = vpop.f32.mrb[0].mxu0
      %2245 = vmatprep.mubr.bf16.mxu0 0
      %2246 = vmatmul.mubr.bf16.gmra.mrb[0].mxu0 %v2077
      %v2247 = vpop.f32.mrb[0].mxu0
      %v2248 = vadd.f32 0.0, %v2247
      %v2249 = vpop.f32.mrb[0].mxu0
      %v2250 = vpop.f32.mrb[0].mxu0
      %v2251 = vadd.f32 0.0, %v2250
      %v2252 = vpop.f32.mrb[0].mxu0
      %2253 = vmatprep.mubr.bf16.mxu0 0
      %2254 = vmatmul.mubr.bf16.gmra.mrb[0].mxu0 %v2080
      %v2255 = vpop.f32.mrb[0].mxu0
      %v2256 = vadd.f32 0.0, %v2255
      %v2257 = vpop.f32.mrb[0].mxu0
      %v2258 = vpop.f32.mrb[0].mxu0
      %v2259 = vadd.f32 0.0, %v2258
      %v2260 = vpop.f32.mrb[0].mxu0
      %2261 = vdwg.mxu0
      %v2262 = vadd.f32 %v1936, %v2120
      %v2263 = vadd.f32 %v1937, %v2123
      %v2264 = vadd.f32 %v1938, %v2128
      %v2265 = vadd.f32 %v1939, %v2131
      %v2266 = vadd.f32 %v1940, %v2136
      %v2267 = vadd.f32 %v1941, %v2139
      %v2268 = vadd.f32 %v1942, %v2144
      %v2269 = vadd.f32 %v1943, %v2147
      %v2270 = vadd.f32 %v1944, %v2152
      %v2271 = vadd.f32 %v1945, %v2155
      %v2272 = vadd.f32 %v1946, %v2160
      %v2273 = vadd.f32 %v1947, %v2163
      %v2274 = vadd.f32 %v1948, %v2168
      %v2275 = vadd.f32 %v1949, %v2171
      %v2276 = vadd.f32 %v1950, %v2176
      %v2277 = vadd.f32 %v1951, %v2179
      %v2278 = vadd.f32 %v1952, %v2184
      %v2279 = vadd.f32 %v1953, %v2187
      %v2280 = vadd.f32 %v1954, %v2192
      %v2281 = vadd.f32 %v1955, %v2195
      %v2282 = vadd.f32 %v1956, %v2200
      %v2283 = vadd.f32 %v1957, %v2203
      %v2284 = vadd.f32 %v1958, %v2208
      %v2285 = vadd.f32 %v1959, %v2211
      %v2286 = vadd.f32 %v1960, %v2216
      %v2287 = vadd.f32 %v1961, %v2219
      %v2288 = vadd.f32 %v1962, %v2224
      %v2289 = vadd.f32 %v1963, %v2227
      %v2290 = vadd.f32 %v1964, %v2232
      %v2291 = vadd.f32 %v1965, %v2235
      %v2292 = vadd.f32 %v1966, %v2240
      %v2293 = vadd.f32 %v1967, %v2243
      %v2294 = vadd.f32 %v1968, %v2248
      %v2295 = vadd.f32 %v1969, %v2251
      %v2296 = vadd.f32 %v1970, %v2256
      %v2297 = vadd.f32 %v1971, %v2259
      %v2298 = vld [vmem:[%s362 + $0x24] sm:$0xff]
      %v2299 = vld [vmem:[%s362 + $0x2c] sm:$0xff]
      %v2300 = vld [vmem:[%s362 + $0x34] sm:$0xff]
      %v2301 = vld [vmem:[%s362 + $0x3c] sm:$0xff]
      %v2302 = vld [vmem:[%s362 + $0x44] sm:$0xff]
      %v2303 = vld [vmem:[%s362 + $0x4c] sm:$0xff]
      %v2304 = vld [vmem:[%s362 + $0x54] sm:$0xff]
      %v2305 = vld [vmem:[%s362 + $0x5c] sm:$0xff]
      %v2306 = vld [vmem:[%s362 + $0x64] sm:$0xff]
      %v2307 = vld [vmem:[%s362 + $0x6c] sm:$0xff]
      %v2308 = vld [vmem:[%s362 + $0x74] sm:$0xff]
      %v2309 = vld [vmem:[%s362 + $0x7c] sm:$0xff]
      %v2310 = vld [vmem:[%s362 + $0x84] sm:$0xff]
      %v2311 = vld [vmem:[%s362 + $0x8c] sm:$0xff]
      %v2312 = vld [vmem:[%s362 + $0x94] sm:$0xff]
      %v2313 = vld [vmem:[%s362 + $0x9c] sm:$0xff]
      %v2314 = vld [vmem:[%s362 + $0xa4] sm:$0xff]
      %v2315 = vld [vmem:[%s362 + $0xac] sm:$0xff]
      %v2316 = vld [vmem:[%s362 + $0xb4] sm:$0xff]
      %v2317 = vld [vmem:[%s362 + $0xbc] sm:$0xff]
      %v2318 = vld [vmem:[%s362 + $0xc4] sm:$0xff]
      %v2319 = vld [vmem:[%s362 + $0xcc] sm:$0xff]
      %v2320 = vld [vmem:[%s362 + $0xd4] sm:$0xff]
      %v2321 = vld [vmem:[%s362 + $0xdc] sm:$0xff]
      %v2322 = vld [vmem:[%s362 + $0xe4] sm:$0xff]
      %v2323 = vld [vmem:[%s362 + $0xec] sm:$0xff]
      %v2324 = vld [vmem:[%s362 + $0xf4] sm:$0xff]
      %v2325 = vld [vmem:[%s362 + $0xfc] sm:$0xff]
      %v2326 = vld [vmem:[%s362 + $0x104] sm:$0xff]
      %v2327 = vld [vmem:[%s362 + $0x10c] sm:$0xff]
      %v2328 = vld [vmem:[%s362 + $0x114] sm:$0xff]
      %v2329 = vld [vmem:[%s362 + $0x11c] sm:$0xff]
      %v2330 = vld [vmem:[%s362 + $0x124] sm:$0xff]
      %v2331 = vld [vmem:[%s362 + $0x12c] sm:$0xff]
      %v2332 = vld [vmem:[%s362 + $0x134] sm:$0xff]
      %v2333 = vld [vmem:[%s362 + $0x13c] sm:$0xff]
      %v2334 = vpack.c.bf16 %v2299, %v2298
      %v2335 = vpack.c.bf16 %v2301, %v2300
      %v2336 = vpack.c.bf16 %v2303, %v2302
      %v2337 = vpack.c.bf16 %v2305, %v2304
      %v2338 = vpack.c.bf16 %v2307, %v2306
      %v2339 = vpack.c.bf16 %v2309, %v2308
      %v2340 = vpack.c.bf16 %v2311, %v2310
      %v2341 = vpack.c.bf16 %v2313, %v2312
      %v2342 = vpack.c.bf16 %v2315, %v2314
      %v2343 = vpack.c.bf16 %v2317, %v2316
      %v2344 = vpack.c.bf16 %v2319, %v2318
      %v2345 = vpack.c.bf16 %v2321, %v2320
      %v2346 = vpack.c.bf16 %v2323, %v2322
      %v2347 = vpack.c.bf16 %v2325, %v2324
      %v2348 = vpack.c.bf16 %v2327, %v2326
      %v2349 = vpack.c.bf16 %v2329, %v2328
      %v2350 = vpack.c.bf16 %v2331, %v2330
      %v2351 = vpack.c.bf16 %v2333, %v2332
      %s2352 = scalar_lea.vmem %s1, 12
      %v2353 = vld [vmem:[%s2352] sm:$0x3]
      %v2355 = vsel %vm521, %v2334, 0
      %v2358 = vsel %vm521, %v2335, 0
      %v2361 = vsel %vm521, %v2336, 0
      %v2364 = vsel %vm521, %v2337, 0
      %v2367 = vsel %vm521, %v2338, 0
      %v2370 = vsel %vm521, %v2339, 0
      %v2373 = vsel %vm521, %v2340, 0
      %v2376 = vsel %vm521, %v2341, 0
      %v2379 = vsel %vm521, %v2342, 0
      %v2382 = vsel %vm521, %v2343, 0
      %v2385 = vsel %vm521, %v2344, 0
      %v2388 = vsel %vm521, %v2345, 0
      %v2391 = vsel %vm521, %v2346, 0
      %v2394 = vsel %vm521, %v2347, 0
      %v2397 = vsel %vm521, %v2348, 0
      %v2400 = vsel %vm521, %v2349, 0
      %v2403 = vsel %vm521, %v2350, 0
      %v2406 = vsel %vm521, %v2351, 0
      %v2409 = vand.u32 %v2353, %v579
      %2411 = vmatprep.subr.bf16.mxu0 0
      %2412 = vmatpush1.bf16.msra.mxu0 %v2409
      %2413 = vmatprep.subr.bf16.mxu0 0
      %2414 = vmatpush1.bf16.msra.mxu0 0
      %2415 = vmatprep.subr.bf16.mxu0 0
      %2416 = vmatpush1.bf16.msra.mxu0 0
      %2417 = vmatprep.subr.bf16.mxu0 0
      %2418 = vmatpush1.bf16.msra.mxu0 0
      %2419 = vmatprep.subr.bf16.mxu0 0
      %2420 = vmatpush1.bf16.msra.mxu0 0
      %2421 = vmatprep.subr.bf16.mxu0 0
      %2422 = vmatpush1.bf16.msra.mxu0 0
      %2423 = vmatprep.subr.bf16.mxu0 0
      %2424 = vmatpush1.bf16.msra.mxu0 0
      %2425 = vmatprep.subr.bf16.mxu0 0
      %2426 = vmatpush1.bf16.msra.mxu0 0
      %2427 = vmatprep.subr.bf16.mxu0 0
      %2428 = vmatpush1.bf16.msra.mxu0 0
      %2429 = vmatprep.subr.bf16.mxu0 0
      %2430 = vmatpush1.bf16.msra.mxu0 0
      %2431 = vmatprep.subr.bf16.mxu0 0
      %2432 = vmatpush1.bf16.msra.mxu0 0
      %2433 = vmatprep.subr.bf16.mxu0 0
      %2434 = vmatpush1.bf16.msra.mxu0 0
      %2435 = vmatprep.subr.bf16.mxu0 0
      %2436 = vmatpush1.bf16.msra.mxu0 0
      %2437 = vmatprep.subr.bf16.mxu0 0
      %2438 = vmatpush1.bf16.msra.mxu0 0
      %2439 = vmatprep.subr.bf16.mxu0 0
      %2440 = vmatpush1.bf16.msra.mxu0 0
      %2441 = vmatprep.subr.bf16.mxu0 0
      %2442 = vmatpush1.bf16.msra.mxu0 0
      %2443 = vmatprep.mubr.bf16.mxu0 0
      %2444 = vmatmul.mubr.bf16.gmra.mrb[0].mxu0 %v2355
      %v2445 = vpop.f32.mrb[0].mxu0
      %v2446 = vadd.f32 0.0, %v2445
      %v2447 = vpop.f32.mrb[0].mxu0
      %v2448 = vpop.f32.mrb[0].mxu0
      %v2449 = vadd.f32 0.0, %v2448
      %v2450 = vpop.f32.mrb[0].mxu0
      %2451 = vmatprep.mubr.bf16.mxu0 0
      %2452 = vmatmul.mubr.bf16.gmra.mrb[0].mxu0 %v2358
      %v2453 = vpop.f32.mrb[0].mxu0
      %v2454 = vadd.f32 0.0, %v2453
      %v2455 = vpop.f32.mrb[0].mxu0
      %v2456 = vpop.f32.mrb[0].mxu0
      %v2457 = vadd.f32 0.0, %v2456
      %v2458 = vpop.f32.mrb[0].mxu0
      %2459 = vmatprep.mubr.bf16.mxu0 0
      %2460 = vmatmul.mubr.bf16.gmra.mrb[0].mxu0 %v2361
      %v2461 = vpop.f32.mrb[0].mxu0
      %v2462 = vadd.f32 0.0, %v2461
      %v2463 = vpop.f32.mrb[0].mxu0
      %v2464 = vpop.f32.mrb[0].mxu0
      %v2465 = vadd.f32 0.0, %v2464
      %v2466 = vpop.f32.mrb[0].mxu0
      %2467 = vmatprep.mubr.bf16.mxu0 0
      %2468 = vmatmul.mubr.bf16.gmra.mrb[0].mxu0 %v2364
      %v2469 = vpop.f32.mrb[0].mxu0
      %v2470 = vadd.f32 0.0, %v2469
      %v2471 = vpop.f32.mrb[0].mxu0
      %v2472 = vpop.f32.mrb[0].mxu0
      %v2473 = vadd.f32 0.0, %v2472
      %v2474 = vpop.f32.mrb[0].mxu0
      %2475 = vmatprep.mubr.bf16.mxu0 0
      %2476 = vmatmul.mubr.bf16.gmra.mrb[0].mxu0 %v2367
      %v2477 = vpop.f32.mrb[0].mxu0
      %v2478 = vadd.f32 0.0, %v2477
      %v2479 = vpop.f32.mrb[0].mxu0
      %v2480 = vpop.f32.mrb[0].mxu0
      %v2481 = vadd.f32 0.0, %v2480
      %v2482 = vpop.f32.mrb[0].mxu0
      %2483 = vmatprep.mubr.bf16.mxu0 0
      %2484 = vmatmul.mubr.bf16.gmra.mrb[0].mxu0 %v2370
      %v2485 = vpop.f32.mrb[0].mxu0
      %v2486 = vadd.f32 0.0, %v2485
      %v2487 = vpop.f32.mrb[0].mxu0
      %v2488 = vpop.f32.mrb[0].mxu0
      %v2489 = vadd.f32 0.0, %v2488
      %v2490 = vpop.f32.mrb[0].mxu0
      %2491 = vmatprep.mubr.bf16.mxu0 0
      %2492 = vmatmul.mubr.bf16.gmra.mrb[0].mxu0 %v2373
      %v2493 = vpop.f32.mrb[0].mxu0
      %v2494 = vadd.f32 0.0, %v2493
      %v2495 = vpop.f32.mrb[0].mxu0
      %v2496 = vpop.f32.mrb[0].mxu0
      %v2497 = vadd.f32 0.0, %v2496
      %v2498 = vpop.f32.mrb[0].mxu0
      %2499 = vmatprep.mubr.bf16.mxu0 0
      %2500 = vmatmul.mubr.bf16.gmra.mrb[0].mxu0 %v2376
      %v2501 = vpop.f32.mrb[0].mxu0
      %v2502 = vadd.f32 0.0, %v2501
      %v2503 = vpop.f32.mrb[0].mxu0
      %v2504 = vpop.f32.mrb[0].mxu0
      %v2505 = vadd.f32 0.0, %v2504
      %v2506 = vpop.f32.mrb[0].mxu0
      %2507 = vmatprep.mubr.bf16.mxu0 0
      %2508 = vmatmul.mubr.bf16.gmra.mrb[0].mxu0 %v2379
      %v2509 = vpop.f32.mrb[0].mxu0
      %v2510 = vadd.f32 0.0, %v2509
      %v2511 = vpop.f32.mrb[0].mxu0
      %v2512 = vpop.f32.mrb[0].mxu0
      %v2513 = vadd.f32 0.0, %v2512
      %v2514 = vpop.f32.mrb[0].mxu0
      %2515 = vmatprep.mubr.bf16.mxu0 0
      %2516 = vmatmul.mubr.bf16.gmra.mrb[0].mxu0 %v2382
      %v2517 = vpop.f32.mrb[0].mxu0
      %v2518 = vadd.f32 0.0, %v2517
      %v2519 = vpop.f32.mrb[0].mxu0
      %v2520 = vpop.f32.mrb[0].mxu0
      %v2521 = vadd.f32 0.0, %v2520
      %v2522 = vpop.f32.mrb[0].mxu0
      %2523 = vmatprep.mubr.bf16.mxu0 0
      %2524 = vmatmul.mubr.bf16.gmra.mrb[0].mxu0 %v2385
      %v2525 = vpop.f32.mrb[0].mxu0
      %v2526 = vadd.f32 0.0, %v2525
      %v2527 = vpop.f32.mrb[0].mxu0
      %v2528 = vpop.f32.mrb[0].mxu0
      %v2529 = vadd.f32 0.0, %v2528
      %v2530 = vpop.f32.mrb[0].mxu0
      %2531 = vmatprep.mubr.bf16.mxu0 0
      %2532 = vmatmul.mubr.bf16.gmra.mrb[0].mxu0 %v2388
      %v2533 = vpop.f32.mrb[0].mxu0
      %v2534 = vadd.f32 0.0, %v2533
      %v2535 = vpop.f32.mrb[0].mxu0
      %v2536 = vpop.f32.mrb[0].mxu0
      %v2537 = vadd.f32 0.0, %v2536
      %v2538 = vpop.f32.mrb[0].mxu0
      %2539 = vmatprep.mubr.bf16.mxu0 0
      %2540 = vmatmul.mubr.bf16.gmra.mrb[0].mxu0 %v2391
      %v2541 = vpop.f32.mrb[0].mxu0
      %v2542 = vadd.f32 0.0, %v2541
      %v2543 = vpop.f32.mrb[0].mxu0
      %v2544 = vpop.f32.mrb[0].mxu0
      %v2545 = vadd.f32 0.0, %v2544
      %v2546 = vpop.f32.mrb[0].mxu0
      %2547 = vmatprep.mubr.bf16.mxu0 0
      %2548 = vmatmul.mubr.bf16.gmra.mrb[0].mxu0 %v2394
      %v2549 = vpop.f32.mrb[0].mxu0
      %v2550 = vadd.f32 0.0, %v2549
      %v2551 = vpop.f32.mrb[0].mxu0
      %v2552 = vpop.f32.mrb[0].mxu0
      %v2553 = vadd.f32 0.0, %v2552
      %v2554 = vpop.f32.mrb[0].mxu0
      %2555 = vmatprep.mubr.bf16.mxu0 0
      %2556 = vmatmul.mubr.bf16.gmra.mrb[0].mxu0 %v2397
      %v2557 = vpop.f32.mrb[0].mxu0
      %v2558 = vadd.f32 0.0, %v2557
      %v2559 = vpop.f32.mrb[0].mxu0
      %v2560 = vpop.f32.mrb[0].mxu0
      %v2561 = vadd.f32 0.0, %v2560
      %v2562 = vpop.f32.mrb[0].mxu0
      %2563 = vmatprep.mubr.bf16.mxu0 0
      %2564 = vmatmul.mubr.bf16.gmra.mrb[0].mxu0 %v2400
      %v2565 = vpop.f32.mrb[0].mxu0
      %v2566 = vadd.f32 0.0, %v2565
      %v2567 = vpop.f32.mrb[0].mxu0
      %v2568 = vpop.f32.mrb[0].mxu0
      %v2569 = vadd.f32 0.0, %v2568
      %v2570 = vpop.f32.mrb[0].mxu0
      %2571 = vmatprep.mubr.bf16.mxu0 0
      %2572 = vmatmul.mubr.bf16.gmra.mrb[0].mxu0 %v2403
      %v2573 = vpop.f32.mrb[0].mxu0
      %v2574 = vadd.f32 0.0, %v2573
      %v2575 = vpop.f32.mrb[0].mxu0
      %v2576 = vpop.f32.mrb[0].mxu0
      %v2577 = vadd.f32 0.0, %v2576
      %v2578 = vpop.f32.mrb[0].mxu0
      %2579 = vmatprep.mubr.bf16.mxu0 0
      %2580 = vmatmul.mubr.bf16.gmra.mrb[0].mxu0 %v2406
      %v2581 = vpop.f32.mrb[0].mxu0
      %v2582 = vadd.f32 0.0, %v2581
      %v2583 = vpop.f32.mrb[0].mxu0
      %v2584 = vpop.f32.mrb[0].mxu0
      %v2585 = vadd.f32 0.0, %v2584
      %v2586 = vpop.f32.mrb[0].mxu0
      %2587 = vdwg.mxu0
      %v2588 = vadd.f32 %v2262, %v2446
      %v2589 = vadd.f32 %v2263, %v2449
      %v2590 = vadd.f32 %v2264, %v2454
      %v2591 = vadd.f32 %v2265, %v2457
      %v2592 = vadd.f32 %v2266, %v2462
      %v2593 = vadd.f32 %v2267, %v2465
      %v2594 = vadd.f32 %v2268, %v2470
      %v2595 = vadd.f32 %v2269, %v2473
      %v2596 = vadd.f32 %v2270, %v2478
      %v2597 = vadd.f32 %v2271, %v2481
      %v2598 = vadd.f32 %v2272, %v2486
      %v2599 = vadd.f32 %v2273, %v2489
      %v2600 = vadd.f32 %v2274, %v2494
      %v2601 = vadd.f32 %v2275, %v2497
      %v2602 = vadd.f32 %v2276, %v2502
      %v2603 = vadd.f32 %v2277, %v2505
      %v2604 = vadd.f32 %v2278, %v2510
      %v2605 = vadd.f32 %v2279, %v2513
      %v2606 = vadd.f32 %v2280, %v2518
      %v2607 = vadd.f32 %v2281, %v2521
      %v2608 = vadd.f32 %v2282, %v2526
      %v2609 = vadd.f32 %v2283, %v2529
      %v2610 = vadd.f32 %v2284, %v2534
      %v2611 = vadd.f32 %v2285, %v2537
      %v2612 = vadd.f32 %v2286, %v2542
      %v2613 = vadd.f32 %v2287, %v2545
      %v2614 = vadd.f32 %v2288, %v2550
      %v2615 = vadd.f32 %v2289, %v2553
      %v2616 = vadd.f32 %v2290, %v2558
      %v2617 = vadd.f32 %v2291, %v2561
      %v2618 = vadd.f32 %v2292, %v2566
      %v2619 = vadd.f32 %v2293, %v2569
      %v2620 = vadd.f32 %v2294, %v2574
      %v2621 = vadd.f32 %v2295, %v2577
      %v2622 = vadd.f32 %v2296, %v2582
      %v2623 = vadd.f32 %v2297, %v2585
      %v2624 = vld [vmem:[%s362 + $0x25] sm:$0xff]
      %v2625 = vld [vmem:[%s362 + $0x2d] sm:$0xff]
      %v2626 = vld [vmem:[%s362 + $0x35] sm:$0xff]
      %v2627 = vld [vmem:[%s362 + $0x3d] sm:$0xff]
      %v2628 = vld [vmem:[%s362 + $0x45] sm:$0xff]
      %v2629 = vld [vmem:[%s362 + $0x4d] sm:$0xff]
      %v2630 = vld [vmem:[%s362 + $0x55] sm:$0xff]
      %v2631 = vld [vmem:[%s362 + $0x5d] sm:$0xff]
      %v2632 = vld [vmem:[%s362 + $0x65] sm:$0xff]
      %v2633 = vld [vmem:[%s362 + $0x6d] sm:$0xff]
      %v2634 = vld [vmem:[%s362 + $0x75] sm:$0xff]
      %v2635 = vld [vmem:[%s362 + $0x7d] sm:$0xff]
      %v2636 = vld [vmem:[%s362 + $0x85] sm:$0xff]
      %v2637 = vld [vmem:[%s362 + $0x8d] sm:$0xff]
      %v2638 = vld [vmem:[%s362 + $0x95] sm:$0xff]
      %v2639 = vld [vmem:[%s362 + $0x9d] sm:$0xff]
      %v2640 = vld [vmem:[%s362 + $0xa5] sm:$0xff]
      %v2641 = vld [vmem:[%s362 + $0xad] sm:$0xff]
      %v2642 = vld [vmem:[%s362 + $0xb5] sm:$0xff]
      %v2643 = vld [vmem:[%s362 + $0xbd] sm:$0xff]
      %v2644 = vld [vmem:[%s362 + $0xc5] sm:$0xff]
      %v2645 = vld [vmem:[%s362 + $0xcd] sm:$0xff]
      %v2646 = vld [vmem:[%s362 + $0xd5] sm:$0xff]
      %v2647 = vld [vmem:[%s362 + $0xdd] sm:$0xff]
      %v2648 = vld [vmem:[%s362 + $0xe5] sm:$0xff]
      %v2649 = vld [vmem:[%s362 + $0xed] sm:$0xff]
      %v2650 = vld [vmem:[%s362 + $0xf5] sm:$0xff]
      %v2651 = vld [vmem:[%s362 + $0xfd] sm:$0xff]
      %v2652 = vld [vmem:[%s362 + $0x105] sm:$0xff]
      %v2653 = vld [vmem:[%s362 + $0x10d] sm:$0xff]
      %v2654 = vld [vmem:[%s362 + $0x115] sm:$0xff]
      %v2655 = vld [vmem:[%s362 + $0x11d] sm:$0xff]
      %v2656 = vld [vmem:[%s362 + $0x125] sm:$0xff]
      %v2657 = vld [vmem:[%s362 + $0x12d] sm:$0xff]
      %v2658 = vld [vmem:[%s362 + $0x135] sm:$0xff]
      %v2659 = vld [vmem:[%s362 + $0x13d] sm:$0xff]
      %v2660 = vpack.c.bf16 %v2625, %v2624
      %v2661 = vpack.c.bf16 %v2627, %v2626
      %v2662 = vpack.c.bf16 %v2629, %v2628
      %v2663 = vpack.c.bf16 %v2631, %v2630
      %v2664 = vpack.c.bf16 %v2633, %v2632
      %v2665 = vpack.c.bf16 %v2635, %v2634
      %v2666 = vpack.c.bf16 %v2637, %v2636
      %v2667 = vpack.c.bf16 %v2639, %v2638
      %v2668 = vpack.c.bf16 %v2641, %v2640
      %v2669 = vpack.c.bf16 %v2643, %v2642
      %v2670 = vpack.c.bf16 %v2645, %v2644
      %v2671 = vpack.c.bf16 %v2647, %v2646
      %v2672 = vpack.c.bf16 %v2649, %v2648
      %v2673 = vpack.c.bf16 %v2651, %v2650
      %v2674 = vpack.c.bf16 %v2653, %v2652
      %v2675 = vpack.c.bf16 %v2655, %v2654
      %v2676 = vpack.c.bf16 %v2657, %v2656
      %v2677 = vpack.c.bf16 %v2659, %v2658
      %s2678 = scalar_lea.vmem %s1, 14
      %v2679 = vld [vmem:[%s2678] sm:$0x3]
      %v2681 = vsel %vm521, %v2660, 0
      %v2684 = vsel %vm521, %v2661, 0
      %v2687 = vsel %vm521, %v2662, 0
      %v2690 = vsel %vm521, %v2663, 0
      %v2693 = vsel %vm521, %v2664, 0
      %v2696 = vsel %vm521, %v2665, 0
      %v2699 = vsel %vm521, %v2666, 0
      %v2702 = vsel %vm521, %v2667, 0
      %v2705 = vsel %vm521, %v2668, 0
      %v2708 = vsel %vm521, %v2669, 0
      %v2711 = vsel %vm521, %v2670, 0
      %v2714 = vsel %vm521, %v2671, 0
      %v2717 = vsel %vm521, %v2672, 0
      %v2720 = vsel %vm521, %v2673, 0
      %v2723 = vsel %vm521, %v2674, 0
      %v2726 = vsel %vm521, %v2675, 0
      %v2729 = vsel %vm521, %v2676, 0
      %v2732 = vsel %vm521, %v2677, 0
      %v2735 = vand.u32 %v2679, %v579
      %2737 = vmatprep.subr.bf16.mxu0 0
      %2738 = vmatpush1.bf16.msra.mxu0 %v2735
      %2739 = vmatprep.subr.bf16.mxu0 0
      %2740 = vmatpush1.bf16.msra.mxu0 0
      %2741 = vmatprep.subr.bf16.mxu0 0
      %2742 = vmatpush1.bf16.msra.mxu0 0
      %2743 = vmatprep.subr.bf16.mxu0 0
      %2744 = vmatpush1.bf16.msra.mxu0 0
      %2745 = vmatprep.subr.bf16.mxu0 0
      %2746 = vmatpush1.bf16.msra.mxu0 0
      %2747 = vmatprep.subr.bf16.mxu0 0
      %2748 = vmatpush1.bf16.msra.mxu0 0
      %2749 = vmatprep.subr.bf16.mxu0 0
      %2750 = vmatpush1.bf16.msra.mxu0 0
      %2751 = vmatprep.subr.bf16.mxu0 0
      %2752 = vmatpush1.bf16.msra.mxu0 0
      %2753 = vmatprep.subr.bf16.mxu0 0
      %2754 = vmatpush1.bf16.msra.mxu0 0
      %2755 = vmatprep.subr.bf16.mxu0 0
      %2756 = vmatpush1.bf16.msra.mxu0 0
      %2757 = vmatprep.subr.bf16.mxu0 0
      %2758 = vmatpush1.bf16.msra.mxu0 0
      %2759 = vmatprep.subr.bf16.mxu0 0
      %2760 = vmatpush1.bf16.msra.mxu0 0
      %2761 = vmatprep.subr.bf16.mxu0 0
      %2762 = vmatpush1.bf16.msra.mxu0 0
      %2763 = vmatprep.subr.bf16.mxu0 0
      %2764 = vmatpush1.bf16.msra.mxu0 0
      %2765 = vmatprep.subr.bf16.mxu0 0
      %2766 = vmatpush1.bf16.msra.mxu0 0
      %2767 = vmatprep.subr.bf16.mxu0 0
      %2768 = vmatpush1.bf16.msra.mxu0 0
      %2769 = vmatprep.mubr.bf16.mxu0 0
      %2770 = vmatmul.mubr.bf16.gmra.mrb[0].mxu0 %v2681
      %v2771 = vpop.f32.mrb[0].mxu0
      %v2772 = vadd.f32 0.0, %v2771
      %v2773 = vpop.f32.mrb[0].mxu0
      %v2774 = vpop.f32.mrb[0].mxu0
      %v2775 = vadd.f32 0.0, %v2774
      %v2776 = vpop.f32.mrb[0].mxu0
      %2777 = vmatprep.mubr.bf16.mxu0 0
      %2778 = vmatmul.mubr.bf16.gmra.mrb[0].mxu0 %v2684
      %v2779 = vpop.f32.mrb[0].mxu0
      %v2780 = vadd.f32 0.0, %v2779
      %v2781 = vpop.f32.mrb[0].mxu0
      %v2782 = vpop.f32.mrb[0].mxu0
      %v2783 = vadd.f32 0.0, %v2782
      %v2784 = vpop.f32.mrb[0].mxu0
      %2785 = vmatprep.mubr.bf16.mxu0 0
      %2786 = vmatmul.mubr.bf16.gmra.mrb[0].mxu0 %v2687
      %v2787 = vpop.f32.mrb[0].mxu0
      %v2788 = vadd.f32 0.0, %v2787
      %v2789 = vpop.f32.mrb[0].mxu0
      %v2790 = vpop.f32.mrb[0].mxu0
      %v2791 = vadd.f32 0.0, %v2790
      %v2792 = vpop.f32.mrb[0].mxu0
      %2793 = vmatprep.mubr.bf16.mxu0 0
      %2794 = vmatmul.mubr.bf16.gmra.mrb[0].mxu0 %v2690
      %v2795 = vpop.f32.mrb[0].mxu0
      %v2796 = vadd.f32 0.0, %v2795
      %v2797 = vpop.f32.mrb[0].mxu0
      %v2798 = vpop.f32.mrb[0].mxu0
      %v2799 = vadd.f32 0.0, %v2798
      %v2800 = vpop.f32.mrb[0].mxu0
      %2801 = vmatprep.mubr.bf16.mxu0 0
      %2802 = vmatmul.mubr.bf16.gmra.mrb[0].mxu0 %v2693
      %v2803 = vpop.f32.mrb[0].mxu0
      %v2804 = vadd.f32 0.0, %v2803
      %v2805 = vpop.f32.mrb[0].mxu0
      %v2806 = vpop.f32.mrb[0].mxu0
      %v2807 = vadd.f32 0.0, %v2806
      %v2808 = vpop.f32.mrb[0].mxu0
      %2809 = vmatprep.mubr.bf16.mxu0 0
      %2810 = vmatmul.mubr.bf16.gmra.mrb[0].mxu0 %v2696
      %v2811 = vpop.f32.mrb[0].mxu0
      %v2812 = vadd.f32 0.0, %v2811
      %v2813 = vpop.f32.mrb[0].mxu0
      %v2814 = vpop.f32.mrb[0].mxu0
      %v2815 = vadd.f32 0.0, %v2814
      %v2816 = vpop.f32.mrb[0].mxu0
      %2817 = vmatprep.mubr.bf16.mxu0 0
      %2818 = vmatmul.mubr.bf16.gmra.mrb[0].mxu0 %v2699
      %v2819 = vpop.f32.mrb[0].mxu0
      %v2820 = vadd.f32 0.0, %v2819
      %v2821 = vpop.f32.mrb[0].mxu0
      %v2822 = vpop.f32.mrb[0].mxu0
      %v2823 = vadd.f32 0.0, %v2822
      %v2824 = vpop.f32.mrb[0].mxu0
      %2825 = vmatprep.mubr.bf16.mxu0 0
      %2826 = vmatmul.mubr.bf16.gmra.mrb[0].mxu0 %v2702
      %v2827 = vpop.f32.mrb[0].mxu0
      %v2828 = vadd.f32 0.0, %v2827
      %v2829 = vpop.f32.mrb[0].mxu0
      %v2830 = vpop.f32.mrb[0].mxu0
      %v2831 = vadd.f32 0.0, %v2830
      %v2832 = vpop.f32.mrb[0].mxu0
      %2833 = vmatprep.mubr.bf16.mxu0 0
      %2834 = vmatmul.mubr.bf16.gmra.mrb[0].mxu0 %v2705
      %v2835 = vpop.f32.mrb[0].mxu0
      %v2836 = vadd.f32 0.0, %v2835
      %v2837 = vpop.f32.mrb[0].mxu0
      %v2838 = vpop.f32.mrb[0].mxu0
      %v2839 = vadd.f32 0.0, %v2838
      %v2840 = vpop.f32.mrb[0].mxu0
      %2841 = vmatprep.mubr.bf16.mxu0 0
      %2842 = vmatmul.mubr.bf16.gmra.mrb[0].mxu0 %v2708
      %v2843 = vpop.f32.mrb[0].mxu0
      %v2844 = vadd.f32 0.0, %v2843
      %v2845 = vpop.f32.mrb[0].mxu0
      %v2846 = vpop.f32.mrb[0].mxu0
      %v2847 = vadd.f32 0.0, %v2846
      %v2848 = vpop.f32.mrb[0].mxu0
      %2849 = vmatprep.mubr.bf16.mxu0 0
      %2850 = vmatmul.mubr.bf16.gmra.mrb[0].mxu0 %v2711
      %v2851 = vpop.f32.mrb[0].mxu0
      %v2852 = vadd.f32 0.0, %v2851
      %v2853 = vpop.f32.mrb[0].mxu0
      %v2854 = vpop.f32.mrb[0].mxu0
      %v2855 = vadd.f32 0.0, %v2854
      %v2856 = vpop.f32.mrb[0].mxu0
      %2857 = vmatprep.mubr.bf16.mxu0 0
      %2858 = vmatmul.mubr.bf16.gmra.mrb[0].mxu0 %v2714
      %v2859 = vpop.f32.mrb[0].mxu0
      %v2860 = vadd.f32 0.0, %v2859
      %v2861 = vpop.f32.mrb[0].mxu0
      %v2862 = vpop.f32.mrb[0].mxu0
      %v2863 = vadd.f32 0.0, %v2862
      %v2864 = vpop.f32.mrb[0].mxu0
      %2865 = vmatprep.mubr.bf16.mxu0 0
      %2866 = vmatmul.mubr.bf16.gmra.mrb[0].mxu0 %v2717
      %v2867 = vpop.f32.mrb[0].mxu0
      %v2868 = vadd.f32 0.0, %v2867
      %v2869 = vpop.f32.mrb[0].mxu0
      %v2870 = vpop.f32.mrb[0].mxu0
      %v2871 = vadd.f32 0.0, %v2870
      %v2872 = vpop.f32.mrb[0].mxu0
      %2873 = vmatprep.mubr.bf16.mxu0 0
      %2874 = vmatmul.mubr.bf16.gmra.mrb[0].mxu0 %v2720
      %v2875 = vpop.f32.mrb[0].mxu0
      %v2876 = vadd.f32 0.0, %v2875
      %v2877 = vpop.f32.mrb[0].mxu0
      %v2878 = vpop.f32.mrb[0].mxu0
      %v2879 = vadd.f32 0.0, %v2878
      %v2880 = vpop.f32.mrb[0].mxu0
      %2881 = vmatprep.mubr.bf16.mxu0 0
      %2882 = vmatmul.mubr.bf16.gmra.mrb[0].mxu0 %v2723
      %v2883 = vpop.f32.mrb[0].mxu0
      %v2884 = vadd.f32 0.0, %v2883
      %v2885 = vpop.f32.mrb[0].mxu0
      %v2886 = vpop.f32.mrb[0].mxu0
      %v2887 = vadd.f32 0.0, %v2886
      %v2888 = vpop.f32.mrb[0].mxu0
      %2889 = vmatprep.mubr.bf16.mxu0 0
      %2890 = vmatmul.mubr.bf16.gmra.mrb[0].mxu0 %v2726
      %v2891 = vpop.f32.mrb[0].mxu0
      %v2892 = vadd.f32 0.0, %v2891
      %v2893 = vpop.f32.mrb[0].mxu0
      %v2894 = vpop.f32.mrb[0].mxu0
      %v2895 = vadd.f32 0.0, %v2894
      %v2896 = vpop.f32.mrb[0].mxu0
      %2897 = vmatprep.mubr.bf16.mxu0 0
      %2898 = vmatmul.mubr.bf16.gmra.mrb[0].mxu0 %v2729
      %v2899 = vpop.f32.mrb[0].mxu0
      %v2900 = vadd.f32 0.0, %v2899
      %v2901 = vpop.f32.mrb[0].mxu0
      %v2902 = vpop.f32.mrb[0].mxu0
      %v2903 = vadd.f32 0.0, %v2902
      %v2904 = vpop.f32.mrb[0].mxu0
      %2905 = vmatprep.mubr.bf16.mxu0 0
      %2906 = vmatmul.mubr.bf16.gmra.mrb[0].mxu0 %v2732
      %v2907 = vpop.f32.mrb[0].mxu0
      %v2908 = vadd.f32 0.0, %v2907
      %v2909 = vpop.f32.mrb[0].mxu0
      %v2910 = vpop.f32.mrb[0].mxu0
      %v2911 = vadd.f32 0.0, %v2910
      %v2912 = vpop.f32.mrb[0].mxu0
      %2913 = vdwg.mxu0
      %v2914 = vadd.f32 %v2588, %v2772
      %v2915 = vadd.f32 %v2589, %v2775
      %v2916 = vadd.f32 %v2590, %v2780
      %v2917 = vadd.f32 %v2591, %v2783
      %v2918 = vadd.f32 %v2592, %v2788
      %v2919 = vadd.f32 %v2593, %v2791
      %v2920 = vadd.f32 %v2594, %v2796
      %v2921 = vadd.f32 %v2595, %v2799
      %v2922 = vadd.f32 %v2596, %v2804
      %v2923 = vadd.f32 %v2597, %v2807
      %v2924 = vadd.f32 %v2598, %v2812
      %v2925 = vadd.f32 %v2599, %v2815
      %v2926 = vadd.f32 %v2600, %v2820
      %v2927 = vadd.f32 %v2601, %v2823
      %v2928 = vadd.f32 %v2602, %v2828
      %v2929 = vadd.f32 %v2603, %v2831
      %v2930 = vadd.f32 %v2604, %v2836
      %v2931 = vadd.f32 %v2605, %v2839
      %v2932 = vadd.f32 %v2606, %v2844
      %v2933 = vadd.f32 %v2607, %v2847
      %v2934 = vadd.f32 %v2608, %v2852
      %v2935 = vadd.f32 %v2609, %v2855
      %v2936 = vadd.f32 %v2610, %v2860
      %v2937 = vadd.f32 %v2611, %v2863
      %v2938 = vadd.f32 %v2612, %v2868
      %v2939 = vadd.f32 %v2613, %v2871
      %v2940 = vadd.f32 %v2614, %v2876
      %v2941 = vadd.f32 %v2615, %v2879
      %v2942 = vadd.f32 %v2616, %v2884
      %v2943 = vadd.f32 %v2617, %v2887
      %v2944 = vadd.f32 %v2618, %v2892
      %v2945 = vadd.f32 %v2619, %v2895
      %v2946 = vadd.f32 %v2620, %v2900
      %v2947 = vadd.f32 %v2621, %v2903
      %v2948 = vadd.f32 %v2622, %v2908
      %v2949 = vadd.f32 %v2623, %v2911
      %v2950 = vld [vmem:[%s362 + $0x26] sm:$0xff]
      %v2951 = vld [vmem:[%s362 + $0x2e] sm:$0xff]
      %v2952 = vld [vmem:[%s362 + $0x36] sm:$0xff]
      %v2953 = vld [vmem:[%s362 + $0x3e] sm:$0xff]
      %v2954 = vld [vmem:[%s362 + $0x46] sm:$0xff]
      %v2955 = vld [vmem:[%s362 + $0x4e] sm:$0xff]
      %v2956 = vld [vmem:[%s362 + $0x56] sm:$0xff]
      %v2957 = vld [vmem:[%s362 + $0x5e] sm:$0xff]
      %v2958 = vld [vmem:[%s362 + $0x66] sm:$0xff]
      %v2959 = vld [vmem:[%s362 + $0x6e] sm:$0xff]
      %v2960 = vld [vmem:[%s362 + $0x76] sm:$0xff]
      %v2961 = vld [vmem:[%s362 + $0x7e] sm:$0xff]
      %v2962 = vld [vmem:[%s362 + $0x86] sm:$0xff]
      %v2963 = vld [vmem:[%s362 + $0x8e] sm:$0xff]
      %v2964 = vld [vmem:[%s362 + $0x96] sm:$0xff]
      %v2965 = vld [vmem:[%s362 + $0x9e] sm:$0xff]
      %v2966 = vld [vmem:[%s362 + $0xa6] sm:$0xff]
      %v2967 = vld [vmem:[%s362 + $0xae] sm:$0xff]
      %v2968 = vld [vmem:[%s362 + $0xb6] sm:$0xff]
      %v2969 = vld [vmem:[%s362 + $0xbe] sm:$0xff]
      %v2970 = vld [vmem:[%s362 + $0xc6] sm:$0xff]
      %v2971 = vld [vmem:[%s362 + $0xce] sm:$0xff]
      %v2972 = vld [vmem:[%s362 + $0xd6] sm:$0xff]
      %v2973 = vld [vmem:[%s362 + $0xde] sm:$0xff]
      %v2974 = vld [vmem:[%s362 + $0xe6] sm:$0xff]
      %v2975 = vld [vmem:[%s362 + $0xee] sm:$0xff]
      %v2976 = vld [vmem:[%s362 + $0xf6] sm:$0xff]
      %v2977 = vld [vmem:[%s362 + $0xfe] sm:$0xff]
      %v2978 = vld [vmem:[%s362 + $0x106] sm:$0xff]
      %v2979 = vld [vmem:[%s362 + $0x10e] sm:$0xff]
      %v2980 = vld [vmem:[%s362 + $0x116] sm:$0xff]
      %v2981 = vld [vmem:[%s362 + $0x11e] sm:$0xff]
      %v2982 = vld [vmem:[%s362 + $0x126] sm:$0xff]
      %v2983 = vld [vmem:[%s362 + $0x12e] sm:$0xff]
      %v2984 = vld [vmem:[%s362 + $0x136] sm:$0xff]
      %v2985 = vld [vmem:[%s362 + $0x13e] sm:$0xff]
      %v2986 = vpack.c.bf16 %v2951, %v2950
      %v2987 = vpack.c.bf16 %v2953, %v2952
      %v2988 = vpack.c.bf16 %v2955, %v2954
      %v2989 = vpack.c.bf16 %v2957, %v2956
      %v2990 = vpack.c.bf16 %v2959, %v2958
      %v2991 = vpack.c.bf16 %v2961, %v2960
      %v2992 = vpack.c.bf16 %v2963, %v2962
      %v2993 = vpack.c.bf16 %v2965, %v2964
      %v2994 = vpack.c.bf16 %v2967, %v2966
      %v2995 = vpack.c.bf16 %v2969, %v2968
      %v2996 = vpack.c.bf16 %v2971, %v2970
      %v2997 = vpack.c.bf16 %v2973, %v2972
      %v2998 = vpack.c.bf16 %v2975, %v2974
      %v2999 = vpack.c.bf16 %v2977, %v2976
      %v3000 = vpack.c.bf16 %v2979, %v2978
      %v3001 = vpack.c.bf16 %v2981, %v2980
      %v3002 = vpack.c.bf16 %v2983, %v2982
      %v3003 = vpack.c.bf16 %v2985, %v2984
      %s3004 = scalar_lea.vmem %s1, 16
      %v3005 = vld [vmem:[%s3004] sm:$0x3]
      %v3007 = vsel %vm521, %v2986, 0
      %v3010 = vsel %vm521, %v2987, 0
      %v3013 = vsel %vm521, %v2988, 0
      %v3016 = vsel %vm521, %v2989, 0
      %v3019 = vsel %vm521, %v2990, 0
      %v3022 = vsel %vm521, %v2991, 0
      %v3025 = vsel %vm521, %v2992, 0
      %v3028 = vsel %vm521, %v2993, 0
      %v3031 = vsel %vm521, %v2994, 0
      %v3034 = vsel %vm521, %v2995, 0
      %v3037 = vsel %vm521, %v2996, 0
      %v3040 = vsel %vm521, %v2997, 0
      %v3043 = vsel %vm521, %v2998, 0
      %v3046 = vsel %vm521, %v2999, 0
      %v3049 = vsel %vm521, %v3000, 0
      %v3052 = vsel %vm521, %v3001, 0
      %v3055 = vsel %vm521, %v3002, 0
      %v3058 = vsel %vm521, %v3003, 0
      %v3061 = vand.u32 %v3005, %v579
      %3063 = vmatprep.subr.bf16.mxu0 0
      %3064 = vmatpush1.bf16.msra.mxu0 %v3061
      %3065 = vmatprep.subr.bf16.mxu0 0
      %3066 = vmatpush1.bf16.msra.mxu0 0
      %3067 = vmatprep.subr.bf16.mxu0 0
      %3068 = vmatpush1.bf16.msra.mxu0 0
      %3069 = vmatprep.subr.bf16.mxu0 0
      %3070 = vmatpush1.bf16.msra.mxu0 0
      %3071 = vmatprep.subr.bf16.mxu0 0
      %3072 = vmatpush1.bf16.msra.mxu0 0
      %3073 = vmatprep.subr.bf16.mxu0 0
      %3074 = vmatpush1.bf16.msra.mxu0 0
      %3075 = vmatprep.subr.bf16.mxu0 0
      %3076 = vmatpush1.bf16.msra.mxu0 0
      %3077 = vmatprep.subr.bf16.mxu0 0
      %3078 = vmatpush1.bf16.msra.mxu0 0
      %3079 = vmatprep.subr.bf16.mxu0 0
      %3080 = vmatpush1.bf16.msra.mxu0 0
      %3081 = vmatprep.subr.bf16.mxu0 0
      %3082 = vmatpush1.bf16.msra.mxu0 0
      %3083 = vmatprep.subr.bf16.mxu0 0
      %3084 = vmatpush1.bf16.msra.mxu0 0
      %3085 = vmatprep.subr.bf16.mxu0 0
      %3086 = vmatpush1.bf16.msra.mxu0 0
      %3087 = vmatprep.subr.bf16.mxu0 0
      %3088 = vmatpush1.bf16.msra.mxu0 0
      %3089 = vmatprep.subr.bf16.mxu0 0
      %3090 = vmatpush1.bf16.msra.mxu0 0
      %3091 = vmatprep.subr.bf16.mxu0 0
      %3092 = vmatpush1.bf16.msra.mxu0 0
      %3093 = vmatprep.subr.bf16.mxu0 0
      %3094 = vmatpush1.bf16.msra.mxu0 0
      %3095 = vmatprep.mubr.bf16.mxu0 0
      %3096 = vmatmul.mubr.bf16.gmra.mrb[0].mxu0 %v3007
      %v3097 = vpop.f32.mrb[0].mxu0
      %v3098 = vadd.f32 0.0, %v3097
      %v3099 = vpop.f32.mrb[0].mxu0
      %v3100 = vpop.f32.mrb[0].mxu0
      %v3101 = vadd.f32 0.0, %v3100
      %v3102 = vpop.f32.mrb[0].mxu0
      %3103 = vmatprep.mubr.bf16.mxu0 0
      %3104 = vmatmul.mubr.bf16.gmra.mrb[0].mxu0 %v3010
      %v3105 = vpop.f32.mrb[0].mxu0
      %v3106 = vadd.f32 0.0, %v3105
      %v3107 = vpop.f32.mrb[0].mxu0
      %v3108 = vpop.f32.mrb[0].mxu0
      %v3109 = vadd.f32 0.0, %v3108
      %v3110 = vpop.f32.mrb[0].mxu0
      %3111 = vmatprep.mubr.bf16.mxu0 0
      %3112 = vmatmul.mubr.bf16.gmra.mrb[0].mxu0 %v3013
      %v3113 = vpop.f32.mrb[0].mxu0
      %v3114 = vadd.f32 0.0, %v3113
      %v3115 = vpop.f32.mrb[0].mxu0
      %v3116 = vpop.f32.mrb[0].mxu0
      %v3117 = vadd.f32 0.0, %v3116
      %v3118 = vpop.f32.mrb[0].mxu0
      %3119 = vmatprep.mubr.bf16.mxu0 0
      %3120 = vmatmul.mubr.bf16.gmra.mrb[0].mxu0 %v3016
      %v3121 = vpop.f32.mrb[0].mxu0
      %v3122 = vadd.f32 0.0, %v3121
      %v3123 = vpop.f32.mrb[0].mxu0
      %v3124 = vpop.f32.mrb[0].mxu0
      %v3125 = vadd.f32 0.0, %v3124
      %v3126 = vpop.f32.mrb[0].mxu0
      %3127 = vmatprep.mubr.bf16.mxu0 0
      %3128 = vmatmul.mubr.bf16.gmra.mrb[0].mxu0 %v3019
      %v3129 = vpop.f32.mrb[0].mxu0
      %v3130 = vadd.f32 0.0, %v3129
      %v3131 = vpop.f32.mrb[0].mxu0
      %v3132 = vpop.f32.mrb[0].mxu0
      %v3133 = vadd.f32 0.0, %v3132
      %v3134 = vpop.f32.mrb[0].mxu0
      %3135 = vmatprep.mubr.bf16.mxu0 0
      %3136 = vmatmul.mubr.bf16.gmra.mrb[0].mxu0 %v3022
      %v3137 = vpop.f32.mrb[0].mxu0
      %v3138 = vadd.f32 0.0, %v3137
      %v3139 = vpop.f32.mrb[0].mxu0
      %v3140 = vpop.f32.mrb[0].mxu0
      %v3141 = vadd.f32 0.0, %v3140
      %v3142 = vpop.f32.mrb[0].mxu0
      %3143 = vmatprep.mubr.bf16.mxu0 0
      %3144 = vmatmul.mubr.bf16.gmra.mrb[0].mxu0 %v3025
      %v3145 = vpop.f32.mrb[0].mxu0
      %v3146 = vadd.f32 0.0, %v3145
      %v3147 = vpop.f32.mrb[0].mxu0
      %v3148 = vpop.f32.mrb[0].mxu0
      %v3149 = vadd.f32 0.0, %v3148
      %v3150 = vpop.f32.mrb[0].mxu0
      %3151 = vmatprep.mubr.bf16.mxu0 0
      %3152 = vmatmul.mubr.bf16.gmra.mrb[0].mxu0 %v3028
      %v3153 = vpop.f32.mrb[0].mxu0
      %v3154 = vadd.f32 0.0, %v3153
      %v3155 = vpop.f32.mrb[0].mxu0
      %v3156 = vpop.f32.mrb[0].mxu0
      %v3157 = vadd.f32 0.0, %v3156
      %v3158 = vpop.f32.mrb[0].mxu0
      %3159 = vmatprep.mubr.bf16.mxu0 0
      %3160 = vmatmul.mubr.bf16.gmra.mrb[0].mxu0 %v3031
      %v3161 = vpop.f32.mrb[0].mxu0
      %v3162 = vadd.f32 0.0, %v3161
      %v3163 = vpop.f32.mrb[0].mxu0
      %v3164 = vpop.f32.mrb[0].mxu0
      %v3165 = vadd.f32 0.0, %v3164
      %v3166 = vpop.f32.mrb[0].mxu0
      %3167 = vmatprep.mubr.bf16.mxu0 0
      %3168 = vmatmul.mubr.bf16.gmra.mrb[0].mxu0 %v3034
      %v3169 = vpop.f32.mrb[0].mxu0
      %v3170 = vadd.f32 0.0, %v3169
      %v3171 = vpop.f32.mrb[0].mxu0
      %v3172 = vpop.f32.mrb[0].mxu0
      %v3173 = vadd.f32 0.0, %v3172
      %v3174 = vpop.f32.mrb[0].mxu0
      %3175 = vmatprep.mubr.bf16.mxu0 0
      %3176 = vmatmul.mubr.bf16.gmra.mrb[0].mxu0 %v3037
      %v3177 = vpop.f32.mrb[0].mxu0
      %v3178 = vadd.f32 0.0, %v3177
      %v3179 = vpop.f32.mrb[0].mxu0
      %v3180 = vpop.f32.mrb[0].mxu0
      %v3181 = vadd.f32 0.0, %v3180
      %v3182 = vpop.f32.mrb[0].mxu0
      %3183 = vmatprep.mubr.bf16.mxu0 0
      %3184 = vmatmul.mubr.bf16.gmra.mrb[0].mxu0 %v3040
      %v3185 = vpop.f32.mrb[0].mxu0
      %v3186 = vadd.f32 0.0, %v3185
      %v3187 = vpop.f32.mrb[0].mxu0
      %v3188 = vpop.f32.mrb[0].mxu0
      %v3189 = vadd.f32 0.0, %v3188
      %v3190 = vpop.f32.mrb[0].mxu0
      %3191 = vmatprep.mubr.bf16.mxu0 0
      %3192 = vmatmul.mubr.bf16.gmra.mrb[0].mxu0 %v3043
      %v3193 = vpop.f32.mrb[0].mxu0
      %v3194 = vadd.f32 0.0, %v3193
      %v3195 = vpop.f32.mrb[0].mxu0
      %v3196 = vpop.f32.mrb[0].mxu0
      %v3197 = vadd.f32 0.0, %v3196
      %v3198 = vpop.f32.mrb[0].mxu0
      %3199 = vmatprep.mubr.bf16.mxu0 0
      %3200 = vmatmul.mubr.bf16.gmra.mrb[0].mxu0 %v3046
      %v3201 = vpop.f32.mrb[0].mxu0
      %v3202 = vadd.f32 0.0, %v3201
      %v3203 = vpop.f32.mrb[0].mxu0
      %v3204 = vpop.f32.mrb[0].mxu0
      %v3205 = vadd.f32 0.0, %v3204
      %v3206 = vpop.f32.mrb[0].mxu0
      %3207 = vmatprep.mubr.bf16.mxu0 0
      %3208 = vmatmul.mubr.bf16.gmra.mrb[0].mxu0 %v3049
      %v3209 = vpop.f32.mrb[0].mxu0
      %v3210 = vadd.f32 0.0, %v3209
      %v3211 = vpop.f32.mrb[0].mxu0
      %v3212 = vpop.f32.mrb[0].mxu0
      %v3213 = vadd.f32 0.0, %v3212
      %v3214 = vpop.f32.mrb[0].mxu0
      %3215 = vmatprep.mubr.bf16.mxu0 0
      %3216 = vmatmul.mubr.bf16.gmra.mrb[0].mxu0 %v3052
      %v3217 = vpop.f32.mrb[0].mxu0
      %v3218 = vadd.f32 0.0, %v3217
      %v3219 = vpop.f32.mrb[0].mxu0
      %v3220 = vpop.f32.mrb[0].mxu0
      %v3221 = vadd.f32 0.0, %v3220
      %v3222 = vpop.f32.mrb[0].mxu0
      %3223 = vmatprep.mubr.bf16.mxu0 0
      %3224 = vmatmul.mubr.bf16.gmra.mrb[0].mxu0 %v3055
      %v3225 = vpop.f32.mrb[0].mxu0
      %v3226 = vadd.f32 0.0, %v3225
      %v3227 = vpop.f32.mrb[0].mxu0
      %v3228 = vpop.f32.mrb[0].mxu0
      %v3229 = vadd.f32 0.0, %v3228
      %v3230 = vpop.f32.mrb[0].mxu0
      %3231 = vmatprep.mubr.bf16.mxu0 0
      %3232 = vmatmul.mubr.bf16.gmra.mrb[0].mxu0 %v3058
      %v3233 = vpop.f32.mrb[0].mxu0
      %v3234 = vadd.f32 0.0, %v3233
      %v3235 = vpop.f32.mrb[0].mxu0
      %v3236 = vpop.f32.mrb[0].mxu0
      %v3237 = vadd.f32 0.0, %v3236
      %v3238 = vpop.f32.mrb[0].mxu0
      %3239 = vdwg.mxu0
      %v3240 = vadd.f32 %v2914, %v3098
      %v3241 = vadd.f32 %v2915, %v3101
      %v3242 = vadd.f32 %v2916, %v3106
      %v3243 = vadd.f32 %v2917, %v3109
      %v3244 = vadd.f32 %v2918, %v3114
      %v3245 = vadd.f32 %v2919, %v3117
      %v3246 = vadd.f32 %v2920, %v3122
      %v3247 = vadd.f32 %v2921, %v3125
      %v3248 = vadd.f32 %v2922, %v3130
      %v3249 = vadd.f32 %v2923, %v3133
      %v3250 = vadd.f32 %v2924, %v3138
      %v3251 = vadd.f32 %v2925, %v3141
      %v3252 = vadd.f32 %v2926, %v3146
      %v3253 = vadd.f32 %v2927, %v3149
      %v3254 = vadd.f32 %v2928, %v3154
      %v3255 = vadd.f32 %v2929, %v3157
      %v3256 = vadd.f32 %v2930, %v3162
      %v3257 = vadd.f32 %v2931, %v3165
      %v3258 = vadd.f32 %v2932, %v3170
      %v3259 = vadd.f32 %v2933, %v3173
      %v3260 = vadd.f32 %v2934, %v3178
      %v3261 = vadd.f32 %v2935, %v3181
      %v3262 = vadd.f32 %v2936, %v3186
      %v3263 = vadd.f32 %v2937, %v3189
      %v3264 = vadd.f32 %v2938, %v3194
      %v3265 = vadd.f32 %v2939, %v3197
      %v3266 = vadd.f32 %v2940, %v3202
      %v3267 = vadd.f32 %v2941, %v3205
      %v3268 = vadd.f32 %v2942, %v3210
      %v3269 = vadd.f32 %v2943, %v3213
      %v3270 = vadd.f32 %v2944, %v3218
      %v3271 = vadd.f32 %v2945, %v3221
      %v3272 = vadd.f32 %v2946, %v3226
      %v3273 = vadd.f32 %v2947, %v3229
      %v3274 = vadd.f32 %v2948, %v3234
      %v3275 = vadd.f32 %v2949, %v3237
      %v3276 = vld [vmem:[%s2] sm:$0x1]
      %v3278 = vlaneseq
      %v3279 = vshrl.u32 %v3278, 7
      %v3280 = vsub.s32 0, %v3279
      %v3281 = vrot.slane %v3276, %v3280
      %v3283 = vadd.f32 %v3240, %v3281
      %v3284 = vadd.f32 %v3241, %v3281
      %v3285 = vadd.f32 %v3242, %v3281
      %v3286 = vadd.f32 %v3243, %v3281
      %v3287 = vadd.f32 %v3244, %v3281
      %v3288 = vadd.f32 %v3245, %v3281
      %v3289 = vadd.f32 %v3246, %v3281
      %v3290 = vadd.f32 %v3247, %v3281
      %v3291 = vadd.f32 %v3248, %v3281
      %v3292 = vadd.f32 %v3249, %v3281
      %v3293 = vadd.f32 %v3250, %v3281
      %v3294 = vadd.f32 %v3251, %v3281
      %v3295 = vadd.f32 %v3252, %v3281
      %v3296 = vadd.f32 %v3253, %v3281
      %v3297 = vadd.f32 %v3254, %v3281
      %v3298 = vadd.f32 %v3255, %v3281
      %v3299 = vadd.f32 %v3256, %v3281
      %v3300 = vadd.f32 %v3257, %v3281
      %v3301 = vadd.f32 %v3258, %v3281
      %v3302 = vadd.f32 %v3259, %v3281
      %v3303 = vadd.f32 %v3260, %v3281
      %v3304 = vadd.f32 %v3261, %v3281
      %v3305 = vadd.f32 %v3262, %v3281
      %v3306 = vadd.f32 %v3263, %v3281
      %v3307 = vadd.f32 %v3264, %v3281
      %v3308 = vadd.f32 %v3265, %v3281
      %v3309 = vadd.f32 %v3266, %v3281
      %v3310 = vadd.f32 %v3267, %v3281
      %v3311 = vadd.f32 %v3268, %v3281
      %v3312 = vadd.f32 %v3269, %v3281
      %v3313 = vadd.f32 %v3270, %v3281
      %v3314 = vadd.f32 %v3271, %v3281
      %v3315 = vadd.f32 %v3272, %v3281
      %v3316 = vadd.f32 %v3273, %v3281
      %v3317 = vadd.f32 %v3274, %v3281
      %v3318 = vadd.f32 %v3275, %v3281
      %v3319 = vmax.f32 %v3283, 0.0
      %v3320 = vmax.f32 %v3284, 0.0
      %v3321 = vmax.f32 %v3285, 0.0
      %v3322 = vmax.f32 %v3286, 0.0
      %v3323 = vmax.f32 %v3287, 0.0
      %v3324 = vmax.f32 %v3288, 0.0
      %v3325 = vmax.f32 %v3289, 0.0
      %v3326 = vmax.f32 %v3290, 0.0
      %v3327 = vmax.f32 %v3291, 0.0
      %v3328 = vmax.f32 %v3292, 0.0
      %v3329 = vmax.f32 %v3293, 0.0
      %v3330 = vmax.f32 %v3294, 0.0
      %v3331 = vmax.f32 %v3295, 0.0
      %v3332 = vmax.f32 %v3296, 0.0
      %v3333 = vmax.f32 %v3297, 0.0
      %v3334 = vmax.f32 %v3298, 0.0
      %v3335 = vmax.f32 %v3299, 0.0
      %v3336 = vmax.f32 %v3300, 0.0
      %v3337 = vmax.f32 %v3301, 0.0
      %v3338 = vmax.f32 %v3302, 0.0
      %v3339 = vmax.f32 %v3303, 0.0
      %v3340 = vmax.f32 %v3304, 0.0
      %v3341 = vmax.f32 %v3305, 0.0
      %v3342 = vmax.f32 %v3306, 0.0
      %v3343 = vmax.f32 %v3307, 0.0
      %v3344 = vmax.f32 %v3308, 0.0
      %v3345 = vmax.f32 %v3309, 0.0
      %v3346 = vmax.f32 %v3310, 0.0
      %v3347 = vmax.f32 %v3311, 0.0
      %v3348 = vmax.f32 %v3312, 0.0
      %v3349 = vmax.f32 %v3313, 0.0
      %v3350 = vmax.f32 %v3314, 0.0
      %v3351 = vmax.f32 %v3315, 0.0
      %v3352 = vmax.f32 %v3316, 0.0
      %v3353 = vmax.f32 %v3317, 0.0
      %v3354 = vmax.f32 %v3318, 0.0
      %vm3355 = vcmask 261120
      %3356 = vst.msk [vmem:[#allocation2] sm:$0xff] %vm3355, 0.0
      %3357 = vst.msk [vmem:[#allocation2 + $0x8] sm:$0xff] %vm3355, 0.0
      %3358 = vst.msk [vmem:[#allocation2 + $0x10] sm:$0xff] %vm3355, 0.0
      %3359 = vst.msk [vmem:[#allocation2 + $0x18] sm:$0xff] %vm3355, 0.0
      %3360 = vst.msk [vmem:[#allocation2 + $0x20] sm:$0xff] %vm3355, 0.0
      %3361 = vst.msk [vmem:[#allocation2 + $0x28] sm:$0xff] %vm3355, 0.0
      %3362 = vst.msk [vmem:[#allocation2 + $0x30] sm:$0xff] %vm3355, 0.0
      %3363 = vst.msk [vmem:[#allocation2 + $0x38] sm:$0xff] %vm3355, 0.0
      %3364 = vst.msk [vmem:[#allocation2 + $0x40] sm:$0xff] %vm3355, 0.0
      %3365 = vst.msk [vmem:[#allocation2 + $0x48] sm:$0xff] %vm3355, 0.0
      %3366 = vst.msk [vmem:[#allocation2 + $0x50] sm:$0xff] %vm3355, 0.0
      %3367 = vst.msk [vmem:[#allocation2 + $0x58] sm:$0xff] %vm3355, 0.0
      %3368 = vst.msk [vmem:[#allocation2 + $0x60] sm:$0xff] %vm3355, 0.0
      %3369 = vst.msk [vmem:[#allocation2 + $0x68] sm:$0xff] %vm3355, 0.0
      %3370 = vst.msk [vmem:[#allocation2 + $0x70] sm:$0xff] %vm3355, 0.0
      %3371 = vst.msk [vmem:[#allocation2 + $0x78] sm:$0xff] %vm3355, 0.0
      %3372 = vst.msk [vmem:[#allocation2 + $0x80] sm:$0xff] %vm3355, 0.0
      %3373 = vst.msk [vmem:[#allocation2 + $0x88] sm:$0xff] %vm3355, 0.0
      %3374 = vst.msk [vmem:[#allocation2 + $0x90] sm:$0xff] %vm3355, 0.0
      %3375 = vst.msk [vmem:[#allocation2 + $0x98] sm:$0xff] %vm3355, 0.0
      %3376 = vst.msk [vmem:[#allocation2 + $0xa0] sm:$0xff] %vm3355, 0.0
      %3377 = vst.msk [vmem:[#allocation2 + $0xa8] sm:$0xff] %vm3355, 0.0
      %3378 = vst.msk [vmem:[#allocation2 + $0xb0] sm:$0xff] %vm3355, 0.0
      %3379 = vst.msk [vmem:[#allocation2 + $0xb8] sm:$0xff] %vm3355, 0.0
      %3380 = vst.msk [vmem:[#allocation2 + $0xc0] sm:$0xff] %vm3355, 0.0
      %3381 = vst.msk [vmem:[#allocation2 + $0xc8] sm:$0xff] %vm3355, 0.0
      %3382 = vst.msk [vmem:[#allocation2 + $0xd0] sm:$0xff] %vm3355, 0.0
      %3383 = vst.msk [vmem:[#allocation2 + $0xd8] sm:$0xff] %vm3355, 0.0
      %3384 = vst.msk [vmem:[#allocation2 + $0xe0] sm:$0xff] %vm3355, 0.0
      %3385 = vst.msk [vmem:[#allocation2 + $0xe8] sm:$0xff] %vm3355, 0.0
      %3386 = vst.msk [vmem:[#allocation2 + $0xf0] sm:$0xff] %vm3355, 0.0
      %3387 = vst.msk [vmem:[#allocation2 + $0xf8] sm:$0xff] %vm3355, 0.0
      %3388 = vst.msk [vmem:[#allocation2 + $0x100] sm:$0xff] %vm3355, 0.0
      %3389 = vst.msk [vmem:[#allocation2 + $0x108] sm:$0xff] %vm3355, 0.0
      %3390 = vst.msk [vmem:[#allocation2 + $0x110] sm:$0xff] %vm3355, 0.0
      %3391 = vst.msk [vmem:[#allocation2 + $0x118] sm:$0xff] %vm3355, 0.0
      %3392 = vst.msk [vmem:[#allocation2 + $0x120] sm:$0xff] %vm3355, 0.0
      %3393 = vst.msk [vmem:[#allocation2 + $0x128] sm:$0xff] %vm3355, 0.0
      %3394 = vst.msk [vmem:[#allocation2 + $0x130] sm:$0xff] %vm3355, 0.0
      %3395 = vst.msk [vmem:[#allocation2 + $0x138] sm:$0xff] %vm3355, 0.0
      %3396 = vst.msk [vmem:[#allocation2 + $0x140] sm:$0xff] %vm3355, 0.0
      %3397 = vst.msk [vmem:[#allocation2 + $0x148] sm:$0xff] %vm3355, 0.0
      %vm3398 = vcmask 259072
      %3399 = vst.msk [vmem:[#allocation2 + $0x150] sm:$0x3f] %vm3398, 0.0
      %3401 = vset.pattern.permute.xlu0 0
      %3402 = vperm.xlu0 %3401, %v374
      %v3403 = vpop.permute.xlu0 %3402
      %3406 = vset.pattern.permute.xlu0 0
      %3407 = vperm.xlu0 %3406, %v375
      %v3408 = vpop.permute.xlu0 %3407
      %3411 = vset.pattern.permute.xlu0 0
      %3412 = vperm.xlu0 %3411, %v376
      %v3413 = vpop.permute.xlu0 %3412
      %3416 = vset.pattern.permute.xlu0 0
      %3417 = vperm.xlu0 %3416, %v377
      %v3418 = vpop.permute.xlu0 %3417
      %3421 = vset.pattern.permute.xlu0 0
      %3422 = vperm.xlu0 %3421, %v378
      %v3423 = vpop.permute.xlu0 %3422
      %3426 = vset.pattern.permute.xlu0 0
      %3427 = vperm.xlu0 %3426, %v379
      %v3428 = vpop.permute.xlu0 %3427
      %3431 = vset.pattern.permute.xlu0 0
      %3432 = vperm.xlu0 %3431, %v380
      %v3433 = vpop.permute.xlu0 %3432
      %3436 = vset.pattern.permute.xlu0 0
      %3437 = vperm.xlu0 %3436, %v381
      %v3438 = vpop.permute.xlu0 %3437
      %3441 = vset.pattern.permute.xlu0 0
      %3442 = vperm.xlu0 %3441, %v382
      %v3443 = vpop.permute.xlu0 %3442
      %3446 = vset.pattern.permute.xlu0 0
      %3447 = vperm.xlu0 %3446, %v383
      %v3448 = vpop.permute.xlu0 %3447
      %3451 = vset.pattern.permute.xlu0 0
      %3452 = vperm.xlu0 %3451, %v384
      %v3453 = vpop.permute.xlu0 %3452
      %3456 = vset.pattern.permute.xlu0 0
      %3457 = vperm.xlu0 %3456, %v385
      %v3458 = vpop.permute.xlu0 %3457
      %3461 = vset.pattern.permute.xlu0 0
      %3462 = vperm.xlu0 %3461, %v386
      %v3463 = vpop.permute.xlu0 %3462
      %3466 = vset.pattern.permute.xlu0 0
      %3467 = vperm.xlu0 %3466, %v387
      %v3468 = vpop.permute.xlu0 %3467
      %3471 = vset.pattern.permute.xlu0 0
      %3472 = vperm.xlu0 %3471, %v388
      %v3473 = vpop.permute.xlu0 %3472
      %3476 = vset.pattern.permute.xlu0 0
      %3477 = vperm.xlu0 %3476, %v389
      %v3478 = vpop.permute.xlu0 %3477
      %3481 = vset.pattern.permute.xlu0 0
      %3482 = vperm.xlu0 %3481, %v390
      %v3483 = vpop.permute.xlu0 %3482
      %3486 = vset.pattern.permute.xlu0 0
      %3487 = vperm.xlu0 %3486, %v391
      %v3488 = vpop.permute.xlu0 %3487
      %3491 = vset.pattern.permute.xlu0 0
      %3492 = vperm.xlu0 %3491, %v392
      %v3493 = vpop.permute.xlu0 %3492
      %3496 = vset.pattern.permute.xlu0 0
      %3497 = vperm.xlu0 %3496, %v393
      %v3498 = vpop.permute.xlu0 %3497
      %3501 = vset.pattern.permute.xlu0 0
      %3502 = vperm.xlu0 %3501, %v394
      %v3503 = vpop.permute.xlu0 %3502
      %3506 = vset.pattern.permute.xlu0 0
      %3507 = vperm.xlu0 %3506, %v395
      %v3508 = vpop.permute.xlu0 %3507
      %3511 = vset.pattern.permute.xlu0 0
      %3512 = vperm.xlu0 %3511, %v396
      %v3513 = vpop.permute.xlu0 %3512
      %3516 = vset.pattern.permute.xlu0 0
      %3517 = vperm.xlu0 %3516, %v397
      %v3518 = vpop.permute.xlu0 %3517
      %3521 = vset.pattern.permute.xlu0 0
      %3522 = vperm.xlu0 %3521, %v398
      %v3523 = vpop.permute.xlu0 %3522
      %3526 = vset.pattern.permute.xlu0 0
      %3527 = vperm.xlu0 %3526, %v399
      %v3528 = vpop.permute.xlu0 %3527
      %3531 = vset.pattern.permute.xlu0 0
      %3532 = vperm.xlu0 %3531, %v400
      %v3533 = vpop.permute.xlu0 %3532
      %3536 = vset.pattern.permute.xlu0 0
      %3537 = vperm.xlu0 %3536, %v401
      %v3538 = vpop.permute.xlu0 %3537
      %3541 = vset.pattern.permute.xlu0 0
      %3542 = vperm.xlu0 %3541, %v402
      %v3543 = vpop.permute.xlu0 %3542
      %3546 = vset.pattern.permute.xlu0 0
      %3547 = vperm.xlu0 %3546, %v403
      %v3548 = vpop.permute.xlu0 %3547
      %3551 = vset.pattern.permute.xlu0 0
      %3552 = vperm.xlu0 %3551, %v404
      %v3553 = vpop.permute.xlu0 %3552
      %3556 = vset.pattern.permute.xlu0 0
      %3557 = vperm.xlu0 %3556, %v405
      %v3558 = vpop.permute.xlu0 %3557
      %3561 = vset.pattern.permute.xlu0 0
      %3562 = vperm.xlu0 %3561, %v406
      %v3563 = vpop.permute.xlu0 %3562
      %3566 = vset.pattern.permute.xlu0 0
      %3567 = vperm.xlu0 %3566, %v407
      %v3568 = vpop.permute.xlu0 %3567
      %3571 = vset.pattern.permute.xlu0 0
      %3572 = vperm.xlu0 %3571, %v408
      %v3573 = vpop.permute.xlu0 %3572
      %3576 = vset.pattern.permute.xlu0 0
      %3577 = vperm.xlu0 %3576, %v409
      %v3578 = vpop.permute.xlu0 %3577
      %v3580 = vmul.f32 %v3319, %v3403
      %v3581 = vmul.f32 %v3320, %v3408
      %v3582 = vmul.f32 %v3321, %v3413
      %v3583 = vmul.f32 %v3322, %v3418
      %v3584 = vmul.f32 %v3323, %v3423
      %v3585 = vmul.f32 %v3324, %v3428
      %v3586 = vmul.f32 %v3325, %v3433
      %v3587 = vmul.f32 %v3326, %v3438
      %v3588 = vmul.f32 %v3327, %v3443
      %v3589 = vmul.f32 %v3328, %v3448
      %v3590 = vmul.f32 %v3329, %v3453
      %v3591 = vmul.f32 %v3330, %v3458
      %v3592 = vmul.f32 %v3331, %v3463
      %v3593 = vmul.f32 %v3332, %v3468
      %v3594 = vmul.f32 %v3333, %v3473
      %v3595 = vmul.f32 %v3334, %v3478
      %v3596 = vmul.f32 %v3335, %v3483
      %v3597 = vmul.f32 %v3336, %v3488
      %v3598 = vmul.f32 %v3337, %v3493
      %v3599 = vmul.f32 %v3338, %v3498
      %v3600 = vmul.f32 %v3339, %v3503
      %v3601 = vmul.f32 %v3340, %v3508
      %v3602 = vmul.f32 %v3341, %v3513
      %v3603 = vmul.f32 %v3342, %v3518
      %v3604 = vmul.f32 %v3343, %v3523
      %v3605 = vmul.f32 %v3344, %v3528
      %v3606 = vmul.f32 %v3345, %v3533
      %v3607 = vmul.f32 %v3346, %v3538
      %v3608 = vmul.f32 %v3347, %v3543
      %v3609 = vmul.f32 %v3348, %v3548
      %v3610 = vmul.f32 %v3349, %v3553
      %v3611 = vmul.f32 %v3350, %v3558
      %v3612 = vmul.f32 %v3351, %v3563
      %v3613 = vmul.f32 %v3352, %v3568
      %v3614 = vmul.f32 %v3353, %v3573
      %v3615 = vmul.f32 %v3354, %v3578
      %3616 = vst.msk [vmem:[#allocation2 + $0x13] sm:$0xff] %vm3355, %v3580
      %3617 = vst.msk [vmem:[#allocation2 + $0x1b] sm:$0xff] %vm3355, %v3581
      %3618 = vst.msk [vmem:[#allocation2 + $0x23] sm:$0xff] %vm3355, %v3582
      %3619 = vst.msk [vmem:[#allocation2 + $0x2b] sm:$0xff] %vm3355, %v3583
      %3620 = vst.msk [vmem:[#allocation2 + $0x33] sm:$0xff] %vm3355, %v3584
      %3621 = vst.msk [vmem:[#allocation2 + $0x3b] sm:$0xff] %vm3355, %v3585
      %3622 = vst.msk [vmem:[#allocation2 + $0x43] sm:$0xff] %vm3355, %v3586
      %3623 = vst.msk [vmem:[#allocation2 + $0x4b] sm:$0xff] %vm3355, %v3587
      %3624 = vst.msk [vmem:[#allocation2 + $0x53] sm:$0xff] %vm3355, %v3588
      %3625 = vst.msk [vmem:[#allocation2 + $0x5b] sm:$0xff] %vm3355, %v3589
      %3626 = vst.msk [vmem:[#allocation2 + $0x63] sm:$0xff] %vm3355, %v3590
      %3627 = vst.msk [vmem:[#allocation2 + $0x6b] sm:$0xff] %vm3355, %v3591
      %3628 = vst.msk [vmem:[#allocation2 + $0x73] sm:$0xff] %vm3355, %v3592
      %3629 = vst.msk [vmem:[#allocation2 + $0x7b] sm:$0xff] %vm3355, %v3593
      %3630 = vst.msk [vmem:[#allocation2 + $0x83] sm:$0xff] %vm3355, %v3594
      %3631 = vst.msk [vmem:[#allocation2 + $0x8b] sm:$0xff] %vm3355, %v3595
      %3632 = vst.msk [vmem:[#allocation2 + $0x93] sm:$0xff] %vm3355, %v3596
      %3633 = vst.msk [vmem:[#allocation2 + $0x9b] sm:$0xff] %vm3355, %v3597
      %3634 = vst.msk [vmem:[#allocation2 + $0xa3] sm:$0xff] %vm3355, %v3598
      %3635 = vst.msk [vmem:[#allocation2 + $0xab] sm:$0xff] %vm3355, %v3599
      %3636 = vst.msk [vmem:[#allocation2 + $0xb3] sm:$0xff] %vm3355, %v3600
      %3637 = vst.msk [vmem:[#allocation2 + $0xbb] sm:$0xff] %vm3355, %v3601
      %3638 = vst.msk [vmem:[#allocation2 + $0xc3] sm:$0xff] %vm3355, %v3602
      %3639 = vst.msk [vmem:[#allocation2 + $0xcb] sm:$0xff] %vm3355, %v3603
      %3640 = vst.msk [vmem:[#allocation2 + $0xd3] sm:$0xff] %vm3355, %v3604
      %3641 = vst.msk [vmem:[#allocation2 + $0xdb] sm:$0xff] %vm3355, %v3605
      %3642 = vst.msk [vmem:[#allocation2 + $0xe3] sm:$0xff] %vm3355, %v3606
      %3643 = vst.msk [vmem:[#allocation2 + $0xeb] sm:$0xff] %vm3355, %v3607
      %3644 = vst.msk [vmem:[#allocation2 + $0xf3] sm:$0xff] %vm3355, %v3608
      %3645 = vst.msk [vmem:[#allocation2 + $0xfb] sm:$0xff] %vm3355, %v3609
      %3646 = vst.msk [vmem:[#allocation2 + $0x103] sm:$0xff] %vm3355, %v3610
      %3647 = vst.msk [vmem:[#allocation2 + $0x10b] sm:$0xff] %vm3355, %v3611
      %3648 = vst.msk [vmem:[#allocation2 + $0x113] sm:$0xff] %vm3355, %v3612
      %3649 = vst.msk [vmem:[#allocation2 + $0x11b] sm:$0xff] %vm3355, %v3613
      %3650 = vst.msk [vmem:[#allocation2 + $0x123] sm:$0xff] %vm3355, %v3614
      %3651 = vst.msk [vmem:[#allocation2 + $0x12b] sm:$0xff] %vm3355, %v3615
      %v3652 = vld [vmem:[#allocation2] sm:$0xff]
      %v3653 = vld [vmem:[#allocation2 + $0x8] sm:$0xff]
      %v3654 = vld [vmem:[#allocation2 + $0x10] sm:$0xff]
      %v3655 = vld [vmem:[#allocation2 + $0x18] sm:$0xff]
      %v3656 = vld [vmem:[#allocation2 + $0x20] sm:$0xff]
      %v3657 = vld [vmem:[#allocation2 + $0x28] sm:$0xff]
      %v3658 = vld [vmem:[#allocation2 + $0x30] sm:$0xff]
      %v3659 = vld [vmem:[#allocation2 + $0x38] sm:$0xff]
      %v3660 = vld [vmem:[#allocation2 + $0x40] sm:$0xff]
      %v3661 = vld [vmem:[#allocation2 + $0x48] sm:$0xff]
      %v3662 = vld [vmem:[#allocation2 + $0x50] sm:$0xff]
      %v3663 = vld [vmem:[#allocation2 + $0x58] sm:$0xff]
      %v3664 = vld [vmem:[#allocation2 + $0x60] sm:$0xff]
      %v3665 = vld [vmem:[#allocation2 + $0x68] sm:$0xff]
      %v3666 = vld [vmem:[#allocation2 + $0x70] sm:$0xff]
      %v3667 = vld [vmem:[#allocation2 + $0x78] sm:$0xff]
      %v3668 = vld [vmem:[#allocation2 + $0x80] sm:$0xff]
      %v3669 = vld [vmem:[#allocation2 + $0x88] sm:$0xff]
      %v3670 = vld [vmem:[#allocation2 + $0x90] sm:$0xff]
      %v3671 = vld [vmem:[#allocation2 + $0x98] sm:$0xff]
      %v3672 = vld [vmem:[#allocation2 + $0xa0] sm:$0xff]
      %v3673 = vld [vmem:[#allocation2 + $0xa8] sm:$0xff]
      %v3674 = vld [vmem:[#allocation2 + $0xb0] sm:$0xff]
      %v3675 = vld [vmem:[#allocation2 + $0xb8] sm:$0xff]
      %v3676 = vld [vmem:[#allocation2 + $0xc0] sm:$0xff]
      %v3677 = vld [vmem:[#allocation2 + $0xc8] sm:$0xff]
      %v3678 = vld [vmem:[#allocation2 + $0xd0] sm:$0xff]
      %v3679 = vld [vmem:[#allocation2 + $0xd8] sm:$0xff]
      %v3680 = vld [vmem:[#allocation2 + $0xe0] sm:$0xff]
      %v3681 = vld [vmem:[#allocation2 + $0xe8] sm:$0xff]
      %v3682 = vld [vmem:[#allocation2 + $0xf0] sm:$0xff]
      %v3683 = vld [vmem:[#allocation2 + $0xf8] sm:$0xff]
      %v3684 = vld [vmem:[#allocation2 + $0x100] sm:$0xff]
      %v3685 = vld [vmem:[#allocation2 + $0x108] sm:$0xff]
      %v3686 = vld [vmem:[#allocation2 + $0x110] sm:$0xff]
      %v3687 = vld [vmem:[#allocation2 + $0x118] sm:$0xff]
      %v3688 = vpack.c.bf16 %v3653, %v3652
      %v3689 = vpack.c.bf16 %v3655, %v3654
      %v3690 = vpack.c.bf16 %v3657, %v3656
      %v3691 = vpack.c.bf16 %v3659, %v3658
      %v3692 = vpack.c.bf16 %v3661, %v3660
      %v3693 = vpack.c.bf16 %v3663, %v3662
      %v3694 = vpack.c.bf16 %v3665, %v3664
      %v3695 = vpack.c.bf16 %v3667, %v3666
      %v3696 = vpack.c.bf16 %v3669, %v3668
      %v3697 = vpack.c.bf16 %v3671, %v3670
      %v3698 = vpack.c.bf16 %v3673, %v3672
      %v3699 = vpack.c.bf16 %v3675, %v3674
      %v3700 = vpack.c.bf16 %v3677, %v3676
      %v3701 = vpack.c.bf16 %v3679, %v3678
      %v3702 = vpack.c.bf16 %v3681, %v3680
      %v3703 = vpack.c.bf16 %v3683, %v3682
      %v3704 = vpack.c.bf16 %v3685, %v3684
      %v3705 = vpack.c.bf16 %v3687, %v3686
      %v3706 = vld [vmem:[%s3] sm:$0xf]
      %v3707 = vld [vmem:[%s3 + $0x4] sm:$0xf]
      %v3708 = vld [vmem:[%s3 + $0x8] sm:$0xf]
      %v3709 = vld [vmem:[%s3 + $0xc] sm:$0xf]
      %v3710 = vld [vmem:[#allocation2 + $0x1] sm:$0xff]
      %v3711 = vld [vmem:[#allocation2 + $0x9] sm:$0xff]
      %v3712 = vld [vmem:[#allocation2 + $0x11] sm:$0xff]
      %v3713 = vld [vmem:[#allocation2 + $0x19] sm:$0xff]
      %v3714 = vld [vmem:[#allocation2 + $0x21] sm:$0xff]
      %v3715 = vld [vmem:[#allocation2 + $0x29] sm:$0xff]
      %v3716 = vld [vmem:[#allocation2 + $0x31] sm:$0xff]
      %v3717 = vld [vmem:[#allocation2 + $0x39] sm:$0xff]
      %v3718 = vld [vmem:[#allocation2 + $0x41] sm:$0xff]
      %v3719 = vld [vmem:[#allocation2 + $0x49] sm:$0xff]
      %v3720 = vld [vmem:[#allocation2 + $0x51] sm:$0xff]
      %v3721 = vld [vmem:[#allocation2 + $0x59] sm:$0xff]
      %v3722 = vld [vmem:[#allocation2 + $0x61] sm:$0xff]
      %v3723 = vld [vmem:[#allocation2 + $0x69] sm:$0xff]
      %v3724 = vld [vmem:[#allocation2 + $0x71] sm:$0xff]
      %v3725 = vld [vmem:[#allocation2 + $0x79] sm:$0xff]
      %v3726 = vld [vmem:[#allocation2 + $0x81] sm:$0xff]
      %v3727 = vld [vmem:[#allocation2 + $0x89] sm:$0xff]
      %v3728 = vld [vmem:[#allocation2 + $0x91] sm:$0xff]
      %v3729 = vld [vmem:[#allocation2 + $0x99] sm:$0xff]
      %v3730 = vld [vmem:[#allocation2 + $0xa1] sm:$0xff]
      %v3731 = vld [vmem:[#allocation2 + $0xa9] sm:$0xff]
      %v3732 = vld [vmem:[#allocation2 + $0xb1] sm:$0xff]
      %v3733 = vld [vmem:[#allocation2 + $0xb9] sm:$0xff]
      %v3734 = vld [vmem:[#allocation2 + $0xc1] sm:$0xff]
      %v3735 = vld [vmem:[#allocation2 + $0xc9] sm:$0xff]
      %v3736 = vld [vmem:[#allocation2 + $0xd1] sm:$0xff]
      %v3737 = vld [vmem:[#allocation2 + $0xd9] sm:$0xff]
      %v3738 = vld [vmem:[#allocation2 + $0xe1] sm:$0xff]
      %v3739 = vld [vmem:[#allocation2 + $0xe9] sm:$0xff]
      %v3740 = vld [vmem:[#allocation2 + $0xf1] sm:$0xff]
      %v3741 = vld [vmem:[#allocation2 + $0xf9] sm:$0xff]
      %v3742 = vld [vmem:[#allocation2 + $0x101] sm:$0xff]
      %v3743 = vld [vmem:[#allocation2 + $0x109] sm:$0xff]
      %v3744 = vld [vmem:[#allocation2 + $0x111] sm:$0xff]
      %v3745 = vld [vmem:[#allocation2 + $0x119] sm:$0xff]
      %v3746 = vpack.c.bf16 %v3711, %v3710
      %v3747 = vpack.c.bf16 %v3713, %v3712
      %v3748 = vpack.c.bf16 %v3715, %v3714
      %v3749 = vpack.c.bf16 %v3717, %v3716
      %v3750 = vpack.c.bf16 %v3719, %v3718
      %v3751 = vpack.c.bf16 %v3721, %v3720
      %v3752 = vpack.c.bf16 %v3723, %v3722
      %v3753 = vpack.c.bf16 %v3725, %v3724
      %v3754 = vpack.c.bf16 %v3727, %v3726
      %v3755 = vpack.c.bf16 %v3729, %v3728
      %v3756 = vpack.c.bf16 %v3731, %v3730
      %v3757 = vpack.c.bf16 %v3733, %v3732
      %v3758 = vpack.c.bf16 %v3735, %v3734
      %v3759 = vpack.c.bf16 %v3737, %v3736
      %v3760 = vpack.c.bf16 %v3739, %v3738
      %v3761 = vpack.c.bf16 %v3741, %v3740
      %v3762 = vpack.c.bf16 %v3743, %v3742
      %v3763 = vpack.c.bf16 %v3745, %v3744
      %s3764 = scalar_lea.vmem %s3, 16
      %v3765 = vld [vmem:[%s3764] sm:$0xf]
      %v3766 = vld [vmem:[%s3764 + $0x4] sm:$0xf]
      %v3767 = vld [vmem:[%s3764 + $0x8] sm:$0xf]
      %v3768 = vld [vmem:[%s3764 + $0xc] sm:$0xf]
      %v3773 = vunpack.c.l.b16 %v3765
      %v3774 = vunpack.c.l.b16 %v3766
      %v3775 = vunpack.c.l.b16 %v3767
      %v3776 = vunpack.c.l.b16 %v3768
      %v3777 = vpack.c.b16 %v3774, %v3773
      %v3778 = vpack.c.b16 %v3776, %v3775
      %v3782 = vsel %vm3355, %v3746, 0
      %v3785 = vsel %vm3355, %v3747, 0
      %v3788 = vsel %vm3355, %v3748, 0
      %v3791 = vsel %vm3355, %v3749, 0
      %v3794 = vsel %vm3355, %v3750, 0
      %v3797 = vsel %vm3355, %v3751, 0
      %v3800 = vsel %vm3355, %v3752, 0
      %v3803 = vsel %vm3355, %v3753, 0
      %v3806 = vsel %vm3355, %v3754, 0
      %v3809 = vsel %vm3355, %v3755, 0
      %v3812 = vsel %vm3355, %v3756, 0
      %v3815 = vsel %vm3355, %v3757, 0
      %v3818 = vsel %vm3355, %v3758, 0
      %v3821 = vsel %vm3355, %v3759, 0
      %v3824 = vsel %vm3355, %v3760, 0
      %v3827 = vsel %vm3355, %v3761, 0
      %v3830 = vsel %vm3355, %v3762, 0
      %v3833 = vsel %vm3355, %v3763, 0
      %3835 = vmatprep.subr.bf16.mxu0 0
      %3836 = vmatpush1.bf16.msra.mxu0 %v3777
      %3837 = vmatprep.subr.bf16.mxu0 0
      %3838 = vmatpush1.bf16.msra.mxu0 %v3778
      %3839 = vmatprep.subr.bf16.mxu0 0
      %3840 = vmatpush1.bf16.msra.mxu0 0
      %3841 = vmatprep.subr.bf16.mxu0 0
      %3842 = vmatpush1.bf16.msra.mxu0 0
      %3843 = vmatprep.subr.bf16.mxu0 0
      %3844 = vmatpush1.bf16.msra.mxu0 0
      %3845 = vmatprep.subr.bf16.mxu0 0
      %3846 = vmatpush1.bf16.msra.mxu0 0
      %3847 = vmatprep.subr.bf16.mxu0 0
      %3848 = vmatpush1.bf16.msra.mxu0 0
      %3849 = vmatprep.subr.bf16.mxu0 0
      %3850 = vmatpush1.bf16.msra.mxu0 0
      %3851 = vmatprep.subr.bf16.mxu0 0
      %3852 = vmatpush1.bf16.msra.mxu0 0
      %3853 = vmatprep.subr.bf16.mxu0 0
      %3854 = vmatpush1.bf16.msra.mxu0 0
      %3855 = vmatprep.subr.bf16.mxu0 0
      %3856 = vmatpush1.bf16.msra.mxu0 0
      %3857 = vmatprep.subr.bf16.mxu0 0
      %3858 = vmatpush1.bf16.msra.mxu0 0
      %3859 = vmatprep.subr.bf16.mxu0 0
      %3860 = vmatpush1.bf16.msra.mxu0 0
      %3861 = vmatprep.subr.bf16.mxu0 0
      %3862 = vmatpush1.bf16.msra.mxu0 0
      %3863 = vmatprep.subr.bf16.mxu0 0
      %3864 = vmatpush1.bf16.msra.mxu0 0
      %3865 = vmatprep.subr.bf16.mxu0 0
      %3866 = vmatpush1.bf16.msra.mxu0 0
      %3867 = vmatprep.mubr.bf16.mxu0 0
      %3868 = vmatmul.mubr.bf16.gmra.mrb[0].mxu0 %v3782
      %v3869 = vpop.f32.mrb[0].mxu0
      %v3870 = vadd.f32 0.0, %v3869
      %v3871 = vpop.f32.mrb[0].mxu0
      %v3872 = vpop.f32.mrb[0].mxu0
      %v3873 = vadd.f32 0.0, %v3872
      %v3874 = vpop.f32.mrb[0].mxu0
      %3875 = vmatprep.mubr.bf16.mxu0 0
      %3876 = vmatmul.mubr.bf16.gmra.mrb[0].mxu0 %v3785
      %v3877 = vpop.f32.mrb[0].mxu0
      %v3878 = vadd.f32 0.0, %v3877
      %v3879 = vpop.f32.mrb[0].mxu0
      %v3880 = vpop.f32.mrb[0].mxu0
      %v3881 = vadd.f32 0.0, %v3880
      %v3882 = vpop.f32.mrb[0].mxu0
      %3883 = vmatprep.mubr.bf16.mxu0 0
      %3884 = vmatmul.mubr.bf16.gmra.mrb[0].mxu0 %v3788
      %v3885 = vpop.f32.mrb[0].mxu0
      %v3886 = vadd.f32 0.0, %v3885
      %v3887 = vpop.f32.mrb[0].mxu0
      %v3888 = vpop.f32.mrb[0].mxu0
      %v3889 = vadd.f32 0.0, %v3888
      %v3890 = vpop.f32.mrb[0].mxu0
      %3891 = vmatprep.mubr.bf16.mxu0 0
      %3892 = vmatmul.mubr.bf16.gmra.mrb[0].mxu0 %v3791
      %v3893 = vpop.f32.mrb[0].mxu0
      %v3894 = vadd.f32 0.0, %v3893
      %v3895 = vpop.f32.mrb[0].mxu0
      %v3896 = vpop.f32.mrb[0].mxu0
      %v3897 = vadd.f32 0.0, %v3896
      %v3898 = vpop.f32.mrb[0].mxu0
      %3899 = vmatprep.mubr.bf16.mxu0 0
      %3900 = vmatmul.mubr.bf16.gmra.mrb[0].mxu0 %v3794
      %v3901 = vpop.f32.mrb[0].mxu0
      %v3902 = vadd.f32 0.0, %v3901
      %v3903 = vpop.f32.mrb[0].mxu0
      %v3904 = vpop.f32.mrb[0].mxu0
      %v3905 = vadd.f32 0.0, %v3904
      %v3906 = vpop.f32.mrb[0].mxu0
      %3907 = vmatprep.mubr.bf16.mxu0 0
      %3908 = vmatmul.mubr.bf16.gmra.mrb[0].mxu0 %v3797
      %v3909 = vpop.f32.mrb[0].mxu0
      %v3910 = vadd.f32 0.0, %v3909
      %v3911 = vpop.f32.mrb[0].mxu0
      %v3912 = vpop.f32.mrb[0].mxu0
      %v3913 = vadd.f32 0.0, %v3912
      %v3914 = vpop.f32.mrb[0].mxu0
      %3915 = vmatprep.mubr.bf16.mxu0 0
      %3916 = vmatmul.mubr.bf16.gmra.mrb[0].mxu0 %v3800
      %v3917 = vpop.f32.mrb[0].mxu0
      %v3918 = vadd.f32 0.0, %v3917
      %v3919 = vpop.f32.mrb[0].mxu0
      %v3920 = vpop.f32.mrb[0].mxu0
      %v3921 = vadd.f32 0.0, %v3920
      %v3922 = vpop.f32.mrb[0].mxu0
      %3923 = vmatprep.mubr.bf16.mxu0 0
      %3924 = vmatmul.mubr.bf16.gmra.mrb[0].mxu0 %v3803
      %v3925 = vpop.f32.mrb[0].mxu0
      %v3926 = vadd.f32 0.0, %v3925
      %v3927 = vpop.f32.mrb[0].mxu0
      %v3928 = vpop.f32.mrb[0].mxu0
      %v3929 = vadd.f32 0.0, %v3928
      %v3930 = vpop.f32.mrb[0].mxu0
      %3931 = vmatprep.mubr.bf16.mxu0 0
      %3932 = vmatmul.mubr.bf16.gmra.mrb[0].mxu0 %v3806
      %v3933 = vpop.f32.mrb[0].mxu0
      %v3934 = vadd.f32 0.0, %v3933
      %v3935 = vpop.f32.mrb[0].mxu0
      %v3936 = vpop.f32.mrb[0].mxu0
      %v3937 = vadd.f32 0.0, %v3936
      %v3938 = vpop.f32.mrb[0].mxu0
      %3939 = vmatprep.mubr.bf16.mxu0 0
      %3940 = vmatmul.mubr.bf16.gmra.mrb[0].mxu0 %v3809
      %v3941 = vpop.f32.mrb[0].mxu0
      %v3942 = vadd.f32 0.0, %v3941
      %v3943 = vpop.f32.mrb[0].mxu0
      %v3944 = vpop.f32.mrb[0].mxu0
      %v3945 = vadd.f32 0.0, %v3944
      %v3946 = vpop.f32.mrb[0].mxu0
      %3947 = vmatprep.mubr.bf16.mxu0 0
      %3948 = vmatmul.mubr.bf16.gmra.mrb[0].mxu0 %v3812
      %v3949 = vpop.f32.mrb[0].mxu0
      %v3950 = vadd.f32 0.0, %v3949
      %v3951 = vpop.f32.mrb[0].mxu0
      %v3952 = vpop.f32.mrb[0].mxu0
      %v3953 = vadd.f32 0.0, %v3952
      %v3954 = vpop.f32.mrb[0].mxu0
      %3955 = vmatprep.mubr.bf16.mxu0 0
      %3956 = vmatmul.mubr.bf16.gmra.mrb[0].mxu0 %v3815
      %v3957 = vpop.f32.mrb[0].mxu0
      %v3958 = vadd.f32 0.0, %v3957
      %v3959 = vpop.f32.mrb[0].mxu0
      %v3960 = vpop.f32.mrb[0].mxu0
      %v3961 = vadd.f32 0.0, %v3960
      %v3962 = vpop.f32.mrb[0].mxu0
      %3963 = vmatprep.mubr.bf16.mxu0 0
      %3964 = vmatmul.mubr.bf16.gmra.mrb[0].mxu0 %v3818
      %v3965 = vpop.f32.mrb[0].mxu0
      %v3966 = vadd.f32 0.0, %v3965
      %v3967 = vpop.f32.mrb[0].mxu0
      %v3968 = vpop.f32.mrb[0].mxu0
      %v3969 = vadd.f32 0.0, %v3968
      %v3970 = vpop.f32.mrb[0].mxu0
      %3971 = vmatprep.mubr.bf16.mxu0 0
      %3972 = vmatmul.mubr.bf16.gmra.mrb[0].mxu0 %v3821
      %v3973 = vpop.f32.mrb[0].mxu0
      %v3974 = vadd.f32 0.0, %v3973
      %v3975 = vpop.f32.mrb[0].mxu0
      %v3976 = vpop.f32.mrb[0].mxu0
      %v3977 = vadd.f32 0.0, %v3976
      %v3978 = vpop.f32.mrb[0].mxu0
      %3979 = vmatprep.mubr.bf16.mxu0 0
      %3980 = vmatmul.mubr.bf16.gmra.mrb[0].mxu0 %v3824
      %v3981 = vpop.f32.mrb[0].mxu0
      %v3982 = vadd.f32 0.0, %v3981
      %v3983 = vpop.f32.mrb[0].mxu0
      %v3984 = vpop.f32.mrb[0].mxu0
      %v3985 = vadd.f32 0.0, %v3984
      %v3986 = vpop.f32.mrb[0].mxu0
      %3987 = vmatprep.mubr.bf16.mxu0 0
      %3988 = vmatmul.mubr.bf16.gmra.mrb[0].mxu0 %v3827
      %v3989 = vpop.f32.mrb[0].mxu0
      %v3990 = vadd.f32 0.0, %v3989
      %v3991 = vpop.f32.mrb[0].mxu0
      %v3992 = vpop.f32.mrb[0].mxu0
      %v3993 = vadd.f32 0.0, %v3992
      %v3994 = vpop.f32.mrb[0].mxu0
      %3995 = vmatprep.mubr.bf16.mxu0 0
      %3996 = vmatmul.mubr.bf16.gmra.mrb[0].mxu0 %v3830
      %v3997 = vpop.f32.mrb[0].mxu0
      %v3998 = vadd.f32 0.0, %v3997
      %v3999 = vpop.f32.mrb[0].mxu0
      %v4000 = vpop.f32.mrb[0].mxu0
      %v4001 = vadd.f32 0.0, %v4000
      %v4002 = vpop.f32.mrb[0].mxu0
      %4003 = vmatprep.mubr.bf16.mxu0 0
      %4004 = vmatmul.mubr.bf16.gmra.mrb[0].mxu0 %v3833
      %v4005 = vpop.f32.mrb[0].mxu0
      %v4006 = vadd.f32 0.0, %v4005
      %v4007 = vpop.f32.mrb[0].mxu0
      %v4008 = vpop.f32.mrb[0].mxu0
      %v4009 = vadd.f32 0.0, %v4008
      %v4010 = vpop.f32.mrb[0].mxu0
      %4011 = vdwg.mxu0
      %v4016 = vunpack.c.l.b16 %v3706
      %v4017 = vunpack.c.l.b16 %v3707
      %v4018 = vunpack.c.l.b16 %v3708
      %v4019 = vunpack.c.l.b16 %v3709
      %v4020 = vpack.c.b16 %v4017, %v4016
      %v4021 = vpack.c.b16 %v4019, %v4018
      %v4025 = vsel %vm3355, %v3688, 0
      %v4028 = vsel %vm3355, %v3689, 0
      %v4031 = vsel %vm3355, %v3690, 0
      %v4034 = vsel %vm3355, %v3691, 0
      %v4037 = vsel %vm3355, %v3692, 0
      %v4040 = vsel %vm3355, %v3693, 0
      %v4043 = vsel %vm3355, %v3694, 0
      %v4046 = vsel %vm3355, %v3695, 0
      %v4049 = vsel %vm3355, %v3696, 0
      %v4052 = vsel %vm3355, %v3697, 0
      %v4055 = vsel %vm3355, %v3698, 0
      %v4058 = vsel %vm3355, %v3699, 0
      %v4061 = vsel %vm3355, %v3700, 0
      %v4064 = vsel %vm3355, %v3701, 0
      %v4067 = vsel %vm3355, %v3702, 0
      %v4070 = vsel %vm3355, %v3703, 0
      %v4073 = vsel %vm3355, %v3704, 0
      %v4076 = vsel %vm3355, %v3705, 0
      %4078 = vmatprep.subr.bf16.mxu0 0
      %4079 = vmatpush1.bf16.msra.mxu0 %v4020
      %4080 = vmatprep.subr.bf16.mxu0 0
      %4081 = vmatpush1.bf16.msra.mxu0 %v4021
      %4082 = vmatprep.subr.bf16.mxu0 0
      %4083 = vmatpush1.bf16.msra.mxu0 0
      %4084 = vmatprep.subr.bf16.mxu0 0
      %4085 = vmatpush1.bf16.msra.mxu0 0
      %4086 = vmatprep.subr.bf16.mxu0 0
      %4087 = vmatpush1.bf16.msra.mxu0 0
      %4088 = vmatprep.subr.bf16.mxu0 0
      %4089 = vmatpush1.bf16.msra.mxu0 0
      %4090 = vmatprep.subr.bf16.mxu0 0
      %4091 = vmatpush1.bf16.msra.mxu0 0
      %4092 = vmatprep.subr.bf16.mxu0 0
      %4093 = vmatpush1.bf16.msra.mxu0 0
      %4094 = vmatprep.subr.bf16.mxu0 0
      %4095 = vmatpush1.bf16.msra.mxu0 0
      %4096 = vmatprep.subr.bf16.mxu0 0
      %4097 = vmatpush1.bf16.msra.mxu0 0
      %4098 = vmatprep.subr.bf16.mxu0 0
      %4099 = vmatpush1.bf16.msra.mxu0 0
      %4100 = vmatprep.subr.bf16.mxu0 0
      %4101 = vmatpush1.bf16.msra.mxu0 0
      %4102 = vmatprep.subr.bf16.mxu0 0
      %4103 = vmatpush1.bf16.msra.mxu0 0
      %4104 = vmatprep.subr.bf16.mxu0 0
      %4105 = vmatpush1.bf16.msra.mxu0 0
      %4106 = vmatprep.subr.bf16.mxu0 0
      %4107 = vmatpush1.bf16.msra.mxu0 0
      %4108 = vmatprep.subr.bf16.mxu0 0
      %4109 = vmatpush1.bf16.msra.mxu0 0
      %4110 = vmatprep.mubr.bf16.mxu0 0
      %4111 = vmatmul.mubr.bf16.gmra.mrb[0].mxu0 %v4025
      %v4112 = vpop.f32.mrb[0].mxu0
      %v4113 = vadd.f32 %v3870, %v4112
      %v4114 = vpop.f32.mrb[0].mxu0
      %v4115 = vpop.f32.mrb[0].mxu0
      %v4116 = vadd.f32 %v3873, %v4115
      %v4117 = vpop.f32.mrb[0].mxu0
      %4118 = vmatprep.mubr.bf16.mxu0 0
      %4119 = vmatmul.mubr.bf16.gmra.mrb[0].mxu0 %v4028
      %v4120 = vpop.f32.mrb[0].mxu0
      %v4121 = vadd.f32 %v3878, %v4120
      %v4122 = vpop.f32.mrb[0].mxu0
      %v4123 = vpop.f32.mrb[0].mxu0
      %v4124 = vadd.f32 %v3881, %v4123
      %v4125 = vpop.f32.mrb[0].mxu0
      %4126 = vmatprep.mubr.bf16.mxu0 0
      %4127 = vmatmul.mubr.bf16.gmra.mrb[0].mxu0 %v4031
      %v4128 = vpop.f32.mrb[0].mxu0
      %v4129 = vadd.f32 %v3886, %v4128
      %v4130 = vpop.f32.mrb[0].mxu0
      %v4131 = vpop.f32.mrb[0].mxu0
      %v4132 = vadd.f32 %v3889, %v4131
      %v4133 = vpop.f32.mrb[0].mxu0
      %4134 = vmatprep.mubr.bf16.mxu0 0
      %4135 = vmatmul.mubr.bf16.gmra.mrb[0].mxu0 %v4034
      %v4136 = vpop.f32.mrb[0].mxu0
      %v4137 = vadd.f32 %v3894, %v4136
      %v4138 = vpop.f32.mrb[0].mxu0
      %v4139 = vpop.f32.mrb[0].mxu0
      %v4140 = vadd.f32 %v3897, %v4139
      %v4141 = vpop.f32.mrb[0].mxu0
      %4142 = vmatprep.mubr.bf16.mxu0 0
      %4143 = vmatmul.mubr.bf16.gmra.mrb[0].mxu0 %v4037
      %v4144 = vpop.f32.mrb[0].mxu0
      %v4145 = vadd.f32 %v3902, %v4144
      %v4146 = vpop.f32.mrb[0].mxu0
      %v4147 = vpop.f32.mrb[0].mxu0
      %v4148 = vadd.f32 %v3905, %v4147
      %v4149 = vpop.f32.mrb[0].mxu0
      %4150 = vmatprep.mubr.bf16.mxu0 0
      %4151 = vmatmul.mubr.bf16.gmra.mrb[0].mxu0 %v4040
      %v4152 = vpop.f32.mrb[0].mxu0
      %v4153 = vadd.f32 %v3910, %v4152
      %v4154 = vpop.f32.mrb[0].mxu0
      %v4155 = vpop.f32.mrb[0].mxu0
      %v4156 = vadd.f32 %v3913, %v4155
      %v4157 = vpop.f32.mrb[0].mxu0
      %4158 = vmatprep.mubr.bf16.mxu0 0
      %4159 = vmatmul.mubr.bf16.gmra.mrb[0].mxu0 %v4043
      %v4160 = vpop.f32.mrb[0].mxu0
      %v4161 = vadd.f32 %v3918, %v4160
      %v4162 = vpop.f32.mrb[0].mxu0
      %v4163 = vpop.f32.mrb[0].mxu0
      %v4164 = vadd.f32 %v3921, %v4163
      %v4165 = vpop.f32.mrb[0].mxu0
      %4166 = vmatprep.mubr.bf16.mxu0 0
      %4167 = vmatmul.mubr.bf16.gmra.mrb[0].mxu0 %v4046
      %v4168 = vpop.f32.mrb[0].mxu0
      %v4169 = vadd.f32 %v3926, %v4168
      %v4170 = vpop.f32.mrb[0].mxu0
      %v4171 = vpop.f32.mrb[0].mxu0
      %v4172 = vadd.f32 %v3929, %v4171
      %v4173 = vpop.f32.mrb[0].mxu0
      %4174 = vmatprep.mubr.bf16.mxu0 0
      %4175 = vmatmul.mubr.bf16.gmra.mrb[0].mxu0 %v4049
      %v4176 = vpop.f32.mrb[0].mxu0
      %v4177 = vadd.f32 %v3934, %v4176
      %v4178 = vpop.f32.mrb[0].mxu0
      %v4179 = vpop.f32.mrb[0].mxu0
      %v4180 = vadd.f32 %v3937, %v4179
      %v4181 = vpop.f32.mrb[0].mxu0
      %4182 = vmatprep.mubr.bf16.mxu0 0
      %4183 = vmatmul.mubr.bf16.gmra.mrb[0].mxu0 %v4052
      %v4184 = vpop.f32.mrb[0].mxu0
      %v4185 = vadd.f32 %v3942, %v4184
      %v4186 = vpop.f32.mrb[0].mxu0
      %v4187 = vpop.f32.mrb[0].mxu0
      %v4188 = vadd.f32 %v3945, %v4187
      %v4189 = vpop.f32.mrb[0].mxu0
      %4190 = vmatprep.mubr.bf16.mxu0 0
      %4191 = vmatmul.mubr.bf16.gmra.mrb[0].mxu0 %v4055
      %v4192 = vpop.f32.mrb[0].mxu0
      %v4193 = vadd.f32 %v3950, %v4192
      %v4194 = vpop.f32.mrb[0].mxu0
      %v4195 = vpop.f32.mrb[0].mxu0
      %v4196 = vadd.f32 %v3953, %v4195
      %v4197 = vpop.f32.mrb[0].mxu0
      %4198 = vmatprep.mubr.bf16.mxu0 0
      %4199 = vmatmul.mubr.bf16.gmra.mrb[0].mxu0 %v4058
      %v4200 = vpop.f32.mrb[0].mxu0
      %v4201 = vadd.f32 %v3958, %v4200
      %v4202 = vpop.f32.mrb[0].mxu0
      %v4203 = vpop.f32.mrb[0].mxu0
      %v4204 = vadd.f32 %v3961, %v4203
      %v4205 = vpop.f32.mrb[0].mxu0
      %4206 = vmatprep.mubr.bf16.mxu0 0
      %4207 = vmatmul.mubr.bf16.gmra.mrb[0].mxu0 %v4061
      %v4208 = vpop.f32.mrb[0].mxu0
      %v4209 = vadd.f32 %v3966, %v4208
      %v4210 = vpop.f32.mrb[0].mxu0
      %v4211 = vpop.f32.mrb[0].mxu0
      %v4212 = vadd.f32 %v3969, %v4211
      %v4213 = vpop.f32.mrb[0].mxu0
      %4214 = vmatprep.mubr.bf16.mxu0 0
      %4215 = vmatmul.mubr.bf16.gmra.mrb[0].mxu0 %v4064
      %v4216 = vpop.f32.mrb[0].mxu0
      %v4217 = vadd.f32 %v3974, %v4216
      %v4218 = vpop.f32.mrb[0].mxu0
      %v4219 = vpop.f32.mrb[0].mxu0
      %v4220 = vadd.f32 %v3977, %v4219
      %v4221 = vpop.f32.mrb[0].mxu0
      %4222 = vmatprep.mubr.bf16.mxu0 0
      %4223 = vmatmul.mubr.bf16.gmra.mrb[0].mxu0 %v4067
      %v4224 = vpop.f32.mrb[0].mxu0
      %v4225 = vadd.f32 %v3982, %v4224
      %v4226 = vpop.f32.mrb[0].mxu0
      %v4227 = vpop.f32.mrb[0].mxu0
      %v4228 = vadd.f32 %v3985, %v4227
      %v4229 = vpop.f32.mrb[0].mxu0
      %4230 = vmatprep.mubr.bf16.mxu0 0
      %4231 = vmatmul.mubr.bf16.gmra.mrb[0].mxu0 %v4070
      %v4232 = vpop.f32.mrb[0].mxu0
      %v4233 = vadd.f32 %v3990, %v4232
      %v4234 = vpop.f32.mrb[0].mxu0
      %v4235 = vpop.f32.mrb[0].mxu0
      %v4236 = vadd.f32 %v3993, %v4235
      %v4237 = vpop.f32.mrb[0].mxu0
      %4238 = vmatprep.mubr.bf16.mxu0 0
      %4239 = vmatmul.mubr.bf16.gmra.mrb[0].mxu0 %v4073
      %v4240 = vpop.f32.mrb[0].mxu0
      %v4241 = vadd.f32 %v3998, %v4240
      %v4242 = vpop.f32.mrb[0].mxu0
      %v4243 = vpop.f32.mrb[0].mxu0
      %v4244 = vadd.f32 %v4001, %v4243
      %v4245 = vpop.f32.mrb[0].mxu0
      %4246 = vmatprep.mubr.bf16.mxu0 0
      %4247 = vmatmul.mubr.bf16.gmra.mrb[0].mxu0 %v4076
      %v4248 = vpop.f32.mrb[0].mxu0
      %v4249 = vadd.f32 %v4006, %v4248
      %v4250 = vpop.f32.mrb[0].mxu0
      %v4251 = vpop.f32.mrb[0].mxu0
      %v4252 = vadd.f32 %v4009, %v4251
      %v4253 = vpop.f32.mrb[0].mxu0
      %4254 = vdwg.mxu0
      %v4255 = vld [vmem:[#allocation2 + $0x2] sm:$0xff]
      %v4256 = vld [vmem:[#allocation2 + $0xa] sm:$0xff]
      %v4257 = vld [vmem:[#allocation2 + $0x12] sm:$0xff]
      %v4258 = vld [vmem:[#allocation2 + $0x1a] sm:$0xff]
      %v4259 = vld [vmem:[#allocation2 + $0x22] sm:$0xff]
      %v4260 = vld [vmem:[#allocation2 + $0x2a] sm:$0xff]
      %v4261 = vld [vmem:[#allocation2 + $0x32] sm:$0xff]
      %v4262 = vld [vmem:[#allocation2 + $0x3a] sm:$0xff]
      %v4263 = vld [vmem:[#allocation2 + $0x42] sm:$0xff]
      %v4264 = vld [vmem:[#allocation2 + $0x4a] sm:$0xff]
      %v4265 = vld [vmem:[#allocation2 + $0x52] sm:$0xff]
      %v4266 = vld [vmem:[#allocation2 + $0x5a] sm:$0xff]
      %v4267 = vld [vmem:[#allocation2 + $0x62] sm:$0xff]
      %v4268 = vld [vmem:[#allocation2 + $0x6a] sm:$0xff]
      %v4269 = vld [vmem:[#allocation2 + $0x72] sm:$0xff]
      %v4270 = vld [vmem:[#allocation2 + $0x7a] sm:$0xff]
      %v4271 = vld [vmem:[#allocation2 + $0x82] sm:$0xff]
      %v4272 = vld [vmem:[#allocation2 + $0x8a] sm:$0xff]
      %v4273 = vld [vmem:[#allocation2 + $0x92] sm:$0xff]
      %v4274 = vld [vmem:[#allocation2 + $0x9a] sm:$0xff]
      %v4275 = vld [vmem:[#allocation2 + $0xa2] sm:$0xff]
      %v4276 = vld [vmem:[#allocation2 + $0xaa] sm:$0xff]
      %v4277 = vld [vmem:[#allocation2 + $0xb2] sm:$0xff]
      %v4278 = vld [vmem:[#allocation2 + $0xba] sm:$0xff]
      %v4279 = vld [vmem:[#allocation2 + $0xc2] sm:$0xff]
      %v4280 = vld [vmem:[#allocation2 + $0xca] sm:$0xff]
      %v4281 = vld [vmem:[#allocation2 + $0xd2] sm:$0xff]
      %v4282 = vld [vmem:[#allocation2 + $0xda] sm:$0xff]
      %v4283 = vld [vmem:[#allocation2 + $0xe2] sm:$0xff]
      %v4284 = vld [vmem:[#allocation2 + $0xea] sm:$0xff]
      %v4285 = vld [vmem:[#allocation2 + $0xf2] sm:$0xff]
      %v4286 = vld [vmem:[#allocation2 + $0xfa] sm:$0xff]
      %v4287 = vld [vmem:[#allocation2 + $0x102] sm:$0xff]
      %v4288 = vld [vmem:[#allocation2 + $0x10a] sm:$0xff]
      %v4289 = vld [vmem:[#allocation2 + $0x112] sm:$0xff]
      %v4290 = vld [vmem:[#allocation2 + $0x11a] sm:$0xff]
      %v4291 = vpack.c.bf16 %v4256, %v4255
      %v4292 = vpack.c.bf16 %v4258, %v4257
      %v4293 = vpack.c.bf16 %v4260, %v4259
      %v4294 = vpack.c.bf16 %v4262, %v4261
      %v4295 = vpack.c.bf16 %v4264, %v4263
      %v4296 = vpack.c.bf16 %v4266, %v4265
      %v4297 = vpack.c.bf16 %v4268, %v4267
      %v4298 = vpack.c.bf16 %v4270, %v4269
      %v4299 = vpack.c.bf16 %v4272, %v4271
      %v4300 = vpack.c.bf16 %v4274, %v4273
      %v4301 = vpack.c.bf16 %v4276, %v4275
      %v4302 = vpack.c.bf16 %v4278, %v4277
      %v4303 = vpack.c.bf16 %v4280, %v4279
      %v4304 = vpack.c.bf16 %v4282, %v4281
      %v4305 = vpack.c.bf16 %v4284, %v4283
      %v4306 = vpack.c.bf16 %v4286, %v4285
      %v4307 = vpack.c.bf16 %v4288, %v4287
      %v4308 = vpack.c.bf16 %v4290, %v4289
      %s4309 = scalar_lea.vmem %s3, 32
      %v4310 = vld [vmem:[%s4309] sm:$0xf]
      %v4311 = vld [vmem:[%s4309 + $0x4] sm:$0xf]
      %v4312 = vld [vmem:[%s4309 + $0x8] sm:$0xf]
      %v4313 = vld [vmem:[%s4309 + $0xc] sm:$0xf]
      %v4318 = vunpack.c.l.b16 %v4310
      %v4319 = vunpack.c.l.b16 %v4311
      %v4320 = vunpack.c.l.b16 %v4312
      %v4321 = vunpack.c.l.b16 %v4313
      %v4322 = vpack.c.b16 %v4319, %v4318
      %v4323 = vpack.c.b16 %v4321, %v4320
      %v4327 = vsel %vm3355, %v4291, 0
      %v4330 = vsel %vm3355, %v4292, 0
      %v4333 = vsel %vm3355, %v4293, 0
      %v4336 = vsel %vm3355, %v4294, 0
      %v4339 = vsel %vm3355, %v4295, 0
      %v4342 = vsel %vm3355, %v4296, 0
      %v4345 = vsel %vm3355, %v4297, 0
      %v4348 = vsel %vm3355, %v4298, 0
      %v4351 = vsel %vm3355, %v4299, 0
      %v4354 = vsel %vm3355, %v4300, 0
      %v4357 = vsel %vm3355, %v4301, 0
      %v4360 = vsel %vm3355, %v4302, 0
      %v4363 = vsel %vm3355, %v4303, 0
      %v4366 = vsel %vm3355, %v4304, 0
      %v4369 = vsel %vm3355, %v4305, 0
      %v4372 = vsel %vm3355, %v4306, 0
      %v4375 = vsel %vm3355, %v4307, 0
      %v4378 = vsel %vm3355, %v4308, 0
      %4380 = vmatprep.subr.bf16.mxu0 0
      %4381 = vmatpush1.bf16.msra.mxu0 %v4322
      %4382 = vmatprep.subr.bf16.mxu0 0
      %4383 = vmatpush1.bf16.msra.mxu0 %v4323
      %4384 = vmatprep.subr.bf16.mxu0 0
      %4385 = vmatpush1.bf16.msra.mxu0 0
      %4386 = vmatprep.subr.bf16.mxu0 0
      %4387 = vmatpush1.bf16.msra.mxu0 0
      %4388 = vmatprep.subr.bf16.mxu0 0
      %4389 = vmatpush1.bf16.msra.mxu0 0
      %4390 = vmatprep.subr.bf16.mxu0 0
      %4391 = vmatpush1.bf16.msra.mxu0 0
      %4392 = vmatprep.subr.bf16.mxu0 0
      %4393 = vmatpush1.bf16.msra.mxu0 0
      %4394 = vmatprep.subr.bf16.mxu0 0
      %4395 = vmatpush1.bf16.msra.mxu0 0
      %4396 = vmatprep.subr.bf16.mxu0 0
      %4397 = vmatpush1.bf16.msra.mxu0 0
      %4398 = vmatprep.subr.bf16.mxu0 0
      %4399 = vmatpush1.bf16.msra.mxu0 0
      %4400 = vmatprep.subr.bf16.mxu0 0
      %4401 = vmatpush1.bf16.msra.mxu0 0
      %4402 = vmatprep.subr.bf16.mxu0 0
      %4403 = vmatpush1.bf16.msra.mxu0 0
      %4404 = vmatprep.subr.bf16.mxu0 0
      %4405 = vmatpush1.bf16.msra.mxu0 0
      %4406 = vmatprep.subr.bf16.mxu0 0
      %4407 = vmatpush1.bf16.msra.mxu0 0
      %4408 = vmatprep.subr.bf16.mxu0 0
      %4409 = vmatpush1.bf16.msra.mxu0 0
      %4410 = vmatprep.subr.bf16.mxu0 0
      %4411 = vmatpush1.bf16.msra.mxu0 0
      %4412 = vmatprep.mubr.bf16.mxu0 0
      %4413 = vmatmul.mubr.bf16.gmra.mrb[0].mxu0 %v4327
      %v4414 = vpop.f32.mrb[0].mxu0
      %v4415 = vadd.f32 0.0, %v4414
      %v4416 = vpop.f32.mrb[0].mxu0
      %v4417 = vpop.f32.mrb[0].mxu0
      %v4418 = vadd.f32 0.0, %v4417
      %v4419 = vpop.f32.mrb[0].mxu0
      %4420 = vmatprep.mubr.bf16.mxu0 0
      %4421 = vmatmul.mubr.bf16.gmra.mrb[0].mxu0 %v4330
      %v4422 = vpop.f32.mrb[0].mxu0
      %v4423 = vadd.f32 0.0, %v4422
      %v4424 = vpop.f32.mrb[0].mxu0
      %v4425 = vpop.f32.mrb[0].mxu0
      %v4426 = vadd.f32 0.0, %v4425
      %v4427 = vpop.f32.mrb[0].mxu0
      %4428 = vmatprep.mubr.bf16.mxu0 0
      %4429 = vmatmul.mubr.bf16.gmra.mrb[0].mxu0 %v4333
      %v4430 = vpop.f32.mrb[0].mxu0
      %v4431 = vadd.f32 0.0, %v4430
      %v4432 = vpop.f32.mrb[0].mxu0
      %v4433 = vpop.f32.mrb[0].mxu0
      %v4434 = vadd.f32 0.0, %v4433
      %v4435 = vpop.f32.mrb[0].mxu0
      %4436 = vmatprep.mubr.bf16.mxu0 0
      %4437 = vmatmul.mubr.bf16.gmra.mrb[0].mxu0 %v4336
      %v4438 = vpop.f32.mrb[0].mxu0
      %v4439 = vadd.f32 0.0, %v4438
      %v4440 = vpop.f32.mrb[0].mxu0
      %v4441 = vpop.f32.mrb[0].mxu0
      %v4442 = vadd.f32 0.0, %v4441
      %v4443 = vpop.f32.mrb[0].mxu0
      %4444 = vmatprep.mubr.bf16.mxu0 0
      %4445 = vmatmul.mubr.bf16.gmra.mrb[0].mxu0 %v4339
      %v4446 = vpop.f32.mrb[0].mxu0
      %v4447 = vadd.f32 0.0, %v4446
      %v4448 = vpop.f32.mrb[0].mxu0
      %v4449 = vpop.f32.mrb[0].mxu0
      %v4450 = vadd.f32 0.0, %v4449
      %v4451 = vpop.f32.mrb[0].mxu0
      %4452 = vmatprep.mubr.bf16.mxu0 0
      %4453 = vmatmul.mubr.bf16.gmra.mrb[0].mxu0 %v4342
      %v4454 = vpop.f32.mrb[0].mxu0
      %v4455 = vadd.f32 0.0, %v4454
      %v4456 = vpop.f32.mrb[0].mxu0
      %v4457 = vpop.f32.mrb[0].mxu0
      %v4458 = vadd.f32 0.0, %v4457
      %v4459 = vpop.f32.mrb[0].mxu0
      %4460 = vmatprep.mubr.bf16.mxu0 0
      %4461 = vmatmul.mubr.bf16.gmra.mrb[0].mxu0 %v4345
      %v4462 = vpop.f32.mrb[0].mxu0
      %v4463 = vadd.f32 0.0, %v4462
      %v4464 = vpop.f32.mrb[0].mxu0
      %v4465 = vpop.f32.mrb[0].mxu0
      %v4466 = vadd.f32 0.0, %v4465
      %v4467 = vpop.f32.mrb[0].mxu0
      %4468 = vmatprep.mubr.bf16.mxu0 0
      %4469 = vmatmul.mubr.bf16.gmra.mrb[0].mxu0 %v4348
      %v4470 = vpop.f32.mrb[0].mxu0
      %v4471 = vadd.f32 0.0, %v4470
      %v4472 = vpop.f32.mrb[0].mxu0
      %v4473 = vpop.f32.mrb[0].mxu0
      %v4474 = vadd.f32 0.0, %v4473
      %v4475 = vpop.f32.mrb[0].mxu0
      %4476 = vmatprep.mubr.bf16.mxu0 0
      %4477 = vmatmul.mubr.bf16.gmra.mrb[0].mxu0 %v4351
      %v4478 = vpop.f32.mrb[0].mxu0
      %v4479 = vadd.f32 0.0, %v4478
      %v4480 = vpop.f32.mrb[0].mxu0
      %v4481 = vpop.f32.mrb[0].mxu0
      %v4482 = vadd.f32 0.0, %v4481
      %v4483 = vpop.f32.mrb[0].mxu0
      %4484 = vmatprep.mubr.bf16.mxu0 0
      %4485 = vmatmul.mubr.bf16.gmra.mrb[0].mxu0 %v4354
      %v4486 = vpop.f32.mrb[0].mxu0
      %v4487 = vadd.f32 0.0, %v4486
      %v4488 = vpop.f32.mrb[0].mxu0
      %v4489 = vpop.f32.mrb[0].mxu0
      %v4490 = vadd.f32 0.0, %v4489
      %v4491 = vpop.f32.mrb[0].mxu0
      %4492 = vmatprep.mubr.bf16.mxu0 0
      %4493 = vmatmul.mubr.bf16.gmra.mrb[0].mxu0 %v4357
      %v4494 = vpop.f32.mrb[0].mxu0
      %v4495 = vadd.f32 0.0, %v4494
      %v4496 = vpop.f32.mrb[0].mxu0
      %v4497 = vpop.f32.mrb[0].mxu0
      %v4498 = vadd.f32 0.0, %v4497
      %v4499 = vpop.f32.mrb[0].mxu0
      %4500 = vmatprep.mubr.bf16.mxu0 0
      %4501 = vmatmul.mubr.bf16.gmra.mrb[0].mxu0 %v4360
      %v4502 = vpop.f32.mrb[0].mxu0
      %v4503 = vadd.f32 0.0, %v4502
      %v4504 = vpop.f32.mrb[0].mxu0
      %v4505 = vpop.f32.mrb[0].mxu0
      %v4506 = vadd.f32 0.0, %v4505
      %v4507 = vpop.f32.mrb[0].mxu0
      %4508 = vmatprep.mubr.bf16.mxu0 0
      %4509 = vmatmul.mubr.bf16.gmra.mrb[0].mxu0 %v4363
      %v4510 = vpop.f32.mrb[0].mxu0
      %v4511 = vadd.f32 0.0, %v4510
      %v4512 = vpop.f32.mrb[0].mxu0
      %v4513 = vpop.f32.mrb[0].mxu0
      %v4514 = vadd.f32 0.0, %v4513
      %v4515 = vpop.f32.mrb[0].mxu0
      %4516 = vmatprep.mubr.bf16.mxu0 0
      %4517 = vmatmul.mubr.bf16.gmra.mrb[0].mxu0 %v4366
      %v4518 = vpop.f32.mrb[0].mxu0
      %v4519 = vadd.f32 0.0, %v4518
      %v4520 = vpop.f32.mrb[0].mxu0
      %v4521 = vpop.f32.mrb[0].mxu0
      %v4522 = vadd.f32 0.0, %v4521
      %v4523 = vpop.f32.mrb[0].mxu0
      %4524 = vmatprep.mubr.bf16.mxu0 0
      %4525 = vmatmul.mubr.bf16.gmra.mrb[0].mxu0 %v4369
      %v4526 = vpop.f32.mrb[0].mxu0
      %v4527 = vadd.f32 0.0, %v4526
      %v4528 = vpop.f32.mrb[0].mxu0
      %v4529 = vpop.f32.mrb[0].mxu0
      %v4530 = vadd.f32 0.0, %v4529
      %v4531 = vpop.f32.mrb[0].mxu0
      %4532 = vmatprep.mubr.bf16.mxu0 0
      %4533 = vmatmul.mubr.bf16.gmra.mrb[0].mxu0 %v4372
      %v4534 = vpop.f32.mrb[0].mxu0
      %v4535 = vadd.f32 0.0, %v4534
      %v4536 = vpop.f32.mrb[0].mxu0
      %v4537 = vpop.f32.mrb[0].mxu0
      %v4538 = vadd.f32 0.0, %v4537
      %v4539 = vpop.f32.mrb[0].mxu0
      %4540 = vmatprep.mubr.bf16.mxu0 0
      %4541 = vmatmul.mubr.bf16.gmra.mrb[0].mxu0 %v4375
      %v4542 = vpop.f32.mrb[0].mxu0
      %v4543 = vadd.f32 0.0, %v4542
      %v4544 = vpop.f32.mrb[0].mxu0
      %v4545 = vpop.f32.mrb[0].mxu0
      %v4546 = vadd.f32 0.0, %v4545
      %v4547 = vpop.f32.mrb[0].mxu0
      %4548 = vmatprep.mubr.bf16.mxu0 0
      %4549 = vmatmul.mubr.bf16.gmra.mrb[0].mxu0 %v4378
      %v4550 = vpop.f32.mrb[0].mxu0
      %v4551 = vadd.f32 0.0, %v4550
      %v4552 = vpop.f32.mrb[0].mxu0
      %v4553 = vpop.f32.mrb[0].mxu0
      %v4554 = vadd.f32 0.0, %v4553
      %v4555 = vpop.f32.mrb[0].mxu0
      %4556 = vdwg.mxu0
      %v4557 = vadd.f32 %v4113, %v4415
      %v4558 = vadd.f32 %v4116, %v4418
      %v4559 = vadd.f32 %v4121, %v4423
      %v4560 = vadd.f32 %v4124, %v4426
      %v4561 = vadd.f32 %v4129, %v4431
      %v4562 = vadd.f32 %v4132, %v4434
      %v4563 = vadd.f32 %v4137, %v4439
      %v4564 = vadd.f32 %v4140, %v4442
      %v4565 = vadd.f32 %v4145, %v4447
      %v4566 = vadd.f32 %v4148, %v4450
      %v4567 = vadd.f32 %v4153, %v4455
      %v4568 = vadd.f32 %v4156, %v4458
      %v4569 = vadd.f32 %v4161, %v4463
      %v4570 = vadd.f32 %v4164, %v4466
      %v4571 = vadd.f32 %v4169, %v4471
      %v4572 = vadd.f32 %v4172, %v4474
      %v4573 = vadd.f32 %v4177, %v4479
      %v4574 = vadd.f32 %v4180, %v4482
      %v4575 = vadd.f32 %v4185, %v4487
      %v4576 = vadd.f32 %v4188, %v4490
      %v4577 = vadd.f32 %v4193, %v4495
      %v4578 = vadd.f32 %v4196, %v4498
      %v4579 = vadd.f32 %v4201, %v4503
      %v4580 = vadd.f32 %v4204, %v4506
      %v4581 = vadd.f32 %v4209, %v4511
      %v4582 = vadd.f32 %v4212, %v4514
      %v4583 = vadd.f32 %v4217, %v4519
      %v4584 = vadd.f32 %v4220, %v4522
      %v4585 = vadd.f32 %v4225, %v4527
      %v4586 = vadd.f32 %v4228, %v4530
      %v4587 = vadd.f32 %v4233, %v4535
      %v4588 = vadd.f32 %v4236, %v4538
      %v4589 = vadd.f32 %v4241, %v4543
      %v4590 = vadd.f32 %v4244, %v4546
      %v4591 = vadd.f32 %v4249, %v4551
      %v4592 = vadd.f32 %v4252, %v4554
      %v4593 = vld [vmem:[#allocation2 + $0x12] sm:$0xff]
      %v4594 = vld [vmem:[#allocation2 + $0x1a] sm:$0xff]
      %v4595 = vld [vmem:[#allocation2 + $0x22] sm:$0xff]
      %v4596 = vld [vmem:[#allocation2 + $0x2a] sm:$0xff]
      %v4597 = vld [vmem:[#allocation2 + $0x32] sm:$0xff]
      %v4598 = vld [vmem:[#allocation2 + $0x3a] sm:$0xff]
      %v4599 = vld [vmem:[#allocation2 + $0x42] sm:$0xff]
      %v4600 = vld [vmem:[#allocation2 + $0x4a] sm:$0xff]
      %v4601 = vld [vmem:[#allocation2 + $0x52] sm:$0xff]
      %v4602 = vld [vmem:[#allocation2 + $0x5a] sm:$0xff]
      %v4603 = vld [vmem:[#allocation2 + $0x62] sm:$0xff]
      %v4604 = vld [vmem:[#allocation2 + $0x6a] sm:$0xff]
      %v4605 = vld [vmem:[#allocation2 + $0x72] sm:$0xff]
      %v4606 = vld [vmem:[#allocation2 + $0x7a] sm:$0xff]
      %v4607 = vld [vmem:[#allocation2 + $0x82] sm:$0xff]
      %v4608 = vld [vmem:[#allocation2 + $0x8a] sm:$0xff]
      %v4609 = vld [vmem:[#allocation2 + $0x92] sm:$0xff]
      %v4610 = vld [vmem:[#allocation2 + $0x9a] sm:$0xff]
      %v4611 = vld [vmem:[#allocation2 + $0xa2] sm:$0xff]
      %v4612 = vld [vmem:[#allocation2 + $0xaa] sm:$0xff]
      %v4613 = vld [vmem:[#allocation2 + $0xb2] sm:$0xff]
      %v4614 = vld [vmem:[#allocation2 + $0xba] sm:$0xff]
      %v4615 = vld [vmem:[#allocation2 + $0xc2] sm:$0xff]
      %v4616 = vld [vmem:[#allocation2 + $0xca] sm:$0xff]
      %v4617 = vld [vmem:[#allocation2 + $0xd2] sm:$0xff]
      %v4618 = vld [vmem:[#allocation2 + $0xda] sm:$0xff]
      %v4619 = vld [vmem:[#allocation2 + $0xe2] sm:$0xff]
      %v4620 = vld [vmem:[#allocation2 + $0xea] sm:$0xff]
      %v4621 = vld [vmem:[#allocation2 + $0xf2] sm:$0xff]
      %v4622 = vld [vmem:[#allocation2 + $0xfa] sm:$0xff]
      %v4623 = vld [vmem:[#allocation2 + $0x102] sm:$0xff]
      %v4624 = vld [vmem:[#allocation2 + $0x10a] sm:$0xff]
      %v4625 = vld [vmem:[#allocation2 + $0x112] sm:$0xff]
      %v4626 = vld [vmem:[#allocation2 + $0x11a] sm:$0xff]
      %v4627 = vld [vmem:[#allocation2 + $0x122] sm:$0xff]
      %v4628 = vld [vmem:[#allocation2 + $0x12a] sm:$0xff]
      %v4629 = vpack.c.bf16 %v4594, %v4593
      %v4630 = vpack.c.bf16 %v4596, %v4595
      %v4631 = vpack.c.bf16 %v4598, %v4597
      %v4632 = vpack.c.bf16 %v4600, %v4599
      %v4633 = vpack.c.bf16 %v4602, %v4601
      %v4634 = vpack.c.bf16 %v4604, %v4603
      %v4635 = vpack.c.bf16 %v4606, %v4605
      %v4636 = vpack.c.bf16 %v4608, %v4607
      %v4637 = vpack.c.bf16 %v4610, %v4609
      %v4638 = vpack.c.bf16 %v4612, %v4611
      %v4639 = vpack.c.bf16 %v4614, %v4613
      %v4640 = vpack.c.bf16 %v4616, %v4615
      %v4641 = vpack.c.bf16 %v4618, %v4617
      %v4642 = vpack.c.bf16 %v4620, %v4619
      %v4643 = vpack.c.bf16 %v4622, %v4621
      %v4644 = vpack.c.bf16 %v4624, %v4623
      %v4645 = vpack.c.bf16 %v4626, %v4625
      %v4646 = vpack.c.bf16 %v4628, %v4627
      %s4647 = scalar_lea.vmem %s3, 48
      %v4648 = vld [vmem:[%s4647] sm:$0xf]
      %v4649 = vld [vmem:[%s4647 + $0x4] sm:$0xf]
      %v4650 = vld [vmem:[%s4647 + $0x8] sm:$0xf]
      %v4651 = vld [vmem:[%s4647 + $0xc] sm:$0xf]
      %v4656 = vunpack.c.l.b16 %v4648
      %v4657 = vunpack.c.l.b16 %v4649
      %v4658 = vunpack.c.l.b16 %v4650
      %v4659 = vunpack.c.l.b16 %v4651
      %v4660 = vpack.c.b16 %v4657, %v4656
      %v4661 = vpack.c.b16 %v4659, %v4658
      %v4665 = vsel %vm3355, %v4629, 0
      %v4668 = vsel %vm3355, %v4630, 0
      %v4671 = vsel %vm3355, %v4631, 0
      %v4674 = vsel %vm3355, %v4632, 0
      %v4677 = vsel %vm3355, %v4633, 0
      %v4680 = vsel %vm3355, %v4634, 0
      %v4683 = vsel %vm3355, %v4635, 0
      %v4686 = vsel %vm3355, %v4636, 0
      %v4689 = vsel %vm3355, %v4637, 0
      %v4692 = vsel %vm3355, %v4638, 0
      %v4695 = vsel %vm3355, %v4639, 0
      %v4698 = vsel %vm3355, %v4640, 0
      %v4701 = vsel %vm3355, %v4641, 0
      %v4704 = vsel %vm3355, %v4642, 0
      %v4707 = vsel %vm3355, %v4643, 0
      %v4710 = vsel %vm3355, %v4644, 0
      %v4713 = vsel %vm3355, %v4645, 0
      %v4716 = vsel %vm3355, %v4646, 0
      %4718 = vmatprep.subr.bf16.mxu0 0
      %4719 = vmatpush1.bf16.msra.mxu0 %v4660
      %4720 = vmatprep.subr.bf16.mxu0 0
      %4721 = vmatpush1.bf16.msra.mxu0 %v4661
      %4722 = vmatprep.subr.bf16.mxu0 0
      %4723 = vmatpush1.bf16.msra.mxu0 0
      %4724 = vmatprep.subr.bf16.mxu0 0
      %4725 = vmatpush1.bf16.msra.mxu0 0
      %4726 = vmatprep.subr.bf16.mxu0 0
      %4727 = vmatpush1.bf16.msra.mxu0 0
      %4728 = vmatprep.subr.bf16.mxu0 0
      %4729 = vmatpush1.bf16.msra.mxu0 0
      %4730 = vmatprep.subr.bf16.mxu0 0
      %4731 = vmatpush1.bf16.msra.mxu0 0
      %4732 = vmatprep.subr.bf16.mxu0 0
      %4733 = vmatpush1.bf16.msra.mxu0 0
      %4734 = vmatprep.subr.bf16.mxu0 0
      %4735 = vmatpush1.bf16.msra.mxu0 0
      %4736 = vmatprep.subr.bf16.mxu0 0
      %4737 = vmatpush1.bf16.msra.mxu0 0
      %4738 = vmatprep.subr.bf16.mxu0 0
      %4739 = vmatpush1.bf16.msra.mxu0 0
      %4740 = vmatprep.subr.bf16.mxu0 0
      %4741 = vmatpush1.bf16.msra.mxu0 0
      %4742 = vmatprep.subr.bf16.mxu0 0
      %4743 = vmatpush1.bf16.msra.mxu0 0
      %4744 = vmatprep.subr.bf16.mxu0 0
      %4745 = vmatpush1.bf16.msra.mxu0 0
      %4746 = vmatprep.subr.bf16.mxu0 0
      %4747 = vmatpush1.bf16.msra.mxu0 0
      %4748 = vmatprep.subr.bf16.mxu0 0
      %4749 = vmatpush1.bf16.msra.mxu0 0
      %4750 = vmatprep.mubr.bf16.mxu0 0
      %4751 = vmatmul.mubr.bf16.gmra.mrb[0].mxu0 %v4665
      %v4752 = vpop.f32.mrb[0].mxu0
      %v4753 = vadd.f32 0.0, %v4752
      %v4754 = vpop.f32.mrb[0].mxu0
      %v4755 = vpop.f32.mrb[0].mxu0
      %v4756 = vadd.f32 0.0, %v4755
      %v4757 = vpop.f32.mrb[0].mxu0
      %4758 = vmatprep.mubr.bf16.mxu0 0
      %4759 = vmatmul.mubr.bf16.gmra.mrb[0].mxu0 %v4668
      %v4760 = vpop.f32.mrb[0].mxu0
      %v4761 = vadd.f32 0.0, %v4760
      %v4762 = vpop.f32.mrb[0].mxu0
      %v4763 = vpop.f32.mrb[0].mxu0
      %v4764 = vadd.f32 0.0, %v4763
      %v4765 = vpop.f32.mrb[0].mxu0
      %4766 = vmatprep.mubr.bf16.mxu0 0
      %4767 = vmatmul.mubr.bf16.gmra.mrb[0].mxu0 %v4671
      %v4768 = vpop.f32.mrb[0].mxu0
      %v4769 = vadd.f32 0.0, %v4768
      %v4770 = vpop.f32.mrb[0].mxu0
      %v4771 = vpop.f32.mrb[0].mxu0
      %v4772 = vadd.f32 0.0, %v4771
      %v4773 = vpop.f32.mrb[0].mxu0
      %4774 = vmatprep.mubr.bf16.mxu0 0
      %4775 = vmatmul.mubr.bf16.gmra.mrb[0].mxu0 %v4674
      %v4776 = vpop.f32.mrb[0].mxu0
      %v4777 = vadd.f32 0.0, %v4776
      %v4778 = vpop.f32.mrb[0].mxu0
      %v4779 = vpop.f32.mrb[0].mxu0
      %v4780 = vadd.f32 0.0, %v4779
      %v4781 = vpop.f32.mrb[0].mxu0
      %4782 = vmatprep.mubr.bf16.mxu0 0
      %4783 = vmatmul.mubr.bf16.gmra.mrb[0].mxu0 %v4677
      %v4784 = vpop.f32.mrb[0].mxu0
      %v4785 = vadd.f32 0.0, %v4784
      %v4786 = vpop.f32.mrb[0].mxu0
      %v4787 = vpop.f32.mrb[0].mxu0
      %v4788 = vadd.f32 0.0, %v4787
      %v4789 = vpop.f32.mrb[0].mxu0
      %4790 = vmatprep.mubr.bf16.mxu0 0
      %4791 = vmatmul.mubr.bf16.gmra.mrb[0].mxu0 %v4680
      %v4792 = vpop.f32.mrb[0].mxu0
      %v4793 = vadd.f32 0.0, %v4792
      %v4794 = vpop.f32.mrb[0].mxu0
      %v4795 = vpop.f32.mrb[0].mxu0
      %v4796 = vadd.f32 0.0, %v4795
      %v4797 = vpop.f32.mrb[0].mxu0
      %4798 = vmatprep.mubr.bf16.mxu0 0
      %4799 = vmatmul.mubr.bf16.gmra.mrb[0].mxu0 %v4683
      %v4800 = vpop.f32.mrb[0].mxu0
      %v4801 = vadd.f32 0.0, %v4800
      %v4802 = vpop.f32.mrb[0].mxu0
      %v4803 = vpop.f32.mrb[0].mxu0
      %v4804 = vadd.f32 0.0, %v4803
      %v4805 = vpop.f32.mrb[0].mxu0
      %4806 = vmatprep.mubr.bf16.mxu0 0
      %4807 = vmatmul.mubr.bf16.gmra.mrb[0].mxu0 %v4686
      %v4808 = vpop.f32.mrb[0].mxu0
      %v4809 = vadd.f32 0.0, %v4808
      %v4810 = vpop.f32.mrb[0].mxu0
      %v4811 = vpop.f32.mrb[0].mxu0
      %v4812 = vadd.f32 0.0, %v4811
      %v4813 = vpop.f32.mrb[0].mxu0
      %4814 = vmatprep.mubr.bf16.mxu0 0
      %4815 = vmatmul.mubr.bf16.gmra.mrb[0].mxu0 %v4689
      %v4816 = vpop.f32.mrb[0].mxu0
      %v4817 = vadd.f32 0.0, %v4816
      %v4818 = vpop.f32.mrb[0].mxu0
      %v4819 = vpop.f32.mrb[0].mxu0
      %v4820 = vadd.f32 0.0, %v4819
      %v4821 = vpop.f32.mrb[0].mxu0
      %4822 = vmatprep.mubr.bf16.mxu0 0
      %4823 = vmatmul.mubr.bf16.gmra.mrb[0].mxu0 %v4692
      %v4824 = vpop.f32.mrb[0].mxu0
      %v4825 = vadd.f32 0.0, %v4824
      %v4826 = vpop.f32.mrb[0].mxu0
      %v4827 = vpop.f32.mrb[0].mxu0
      %v4828 = vadd.f32 0.0, %v4827
      %v4829 = vpop.f32.mrb[0].mxu0
      %4830 = vmatprep.mubr.bf16.mxu0 0
      %4831 = vmatmul.mubr.bf16.gmra.mrb[0].mxu0 %v4695
      %v4832 = vpop.f32.mrb[0].mxu0
      %v4833 = vadd.f32 0.0, %v4832
      %v4834 = vpop.f32.mrb[0].mxu0
      %v4835 = vpop.f32.mrb[0].mxu0
      %v4836 = vadd.f32 0.0, %v4835
      %v4837 = vpop.f32.mrb[0].mxu0
      %4838 = vmatprep.mubr.bf16.mxu0 0
      %4839 = vmatmul.mubr.bf16.gmra.mrb[0].mxu0 %v4698
      %v4840 = vpop.f32.mrb[0].mxu0
      %v4841 = vadd.f32 0.0, %v4840
      %v4842 = vpop.f32.mrb[0].mxu0
      %v4843 = vpop.f32.mrb[0].mxu0
      %v4844 = vadd.f32 0.0, %v4843
      %v4845 = vpop.f32.mrb[0].mxu0
      %4846 = vmatprep.mubr.bf16.mxu0 0
      %4847 = vmatmul.mubr.bf16.gmra.mrb[0].mxu0 %v4701
      %v4848 = vpop.f32.mrb[0].mxu0
      %v4849 = vadd.f32 0.0, %v4848
      %v4850 = vpop.f32.mrb[0].mxu0
      %v4851 = vpop.f32.mrb[0].mxu0
      %v4852 = vadd.f32 0.0, %v4851
      %v4853 = vpop.f32.mrb[0].mxu0
      %4854 = vmatprep.mubr.bf16.mxu0 0
      %4855 = vmatmul.mubr.bf16.gmra.mrb[0].mxu0 %v4704
      %v4856 = vpop.f32.mrb[0].mxu0
      %v4857 = vadd.f32 0.0, %v4856
      %v4858 = vpop.f32.mrb[0].mxu0
      %v4859 = vpop.f32.mrb[0].mxu0
      %v4860 = vadd.f32 0.0, %v4859
      %v4861 = vpop.f32.mrb[0].mxu0
      %4862 = vmatprep.mubr.bf16.mxu0 0
      %4863 = vmatmul.mubr.bf16.gmra.mrb[0].mxu0 %v4707
      %v4864 = vpop.f32.mrb[0].mxu0
      %v4865 = vadd.f32 0.0, %v4864
      %v4866 = vpop.f32.mrb[0].mxu0
      %v4867 = vpop.f32.mrb[0].mxu0
      %v4868 = vadd.f32 0.0, %v4867
      %v4869 = vpop.f32.mrb[0].mxu0
      %4870 = vmatprep.mubr.bf16.mxu0 0
      %4871 = vmatmul.mubr.bf16.gmra.mrb[0].mxu0 %v4710
      %v4872 = vpop.f32.mrb[0].mxu0
      %v4873 = vadd.f32 0.0, %v4872
      %v4874 = vpop.f32.mrb[0].mxu0
      %v4875 = vpop.f32.mrb[0].mxu0
      %v4876 = vadd.f32 0.0, %v4875
      %v4877 = vpop.f32.mrb[0].mxu0
      %4878 = vmatprep.mubr.bf16.mxu0 0
      %4879 = vmatmul.mubr.bf16.gmra.mrb[0].mxu0 %v4713
      %v4880 = vpop.f32.mrb[0].mxu0
      %v4881 = vadd.f32 0.0, %v4880
      %v4882 = vpop.f32.mrb[0].mxu0
      %v4883 = vpop.f32.mrb[0].mxu0
      %v4884 = vadd.f32 0.0, %v4883
      %v4885 = vpop.f32.mrb[0].mxu0
      %4886 = vmatprep.mubr.bf16.mxu0 0
      %4887 = vmatmul.mubr.bf16.gmra.mrb[0].mxu0 %v4716
      %v4888 = vpop.f32.mrb[0].mxu0
      %v4889 = vadd.f32 0.0, %v4888
      %v4890 = vpop.f32.mrb[0].mxu0
      %v4891 = vpop.f32.mrb[0].mxu0
      %v4892 = vadd.f32 0.0, %v4891
      %v4893 = vpop.f32.mrb[0].mxu0
      %4894 = vdwg.mxu0
      %v4895 = vadd.f32 %v4557, %v4753
      %v4896 = vadd.f32 %v4558, %v4756
      %v4897 = vadd.f32 %v4559, %v4761
      %v4898 = vadd.f32 %v4560, %v4764
      %v4899 = vadd.f32 %v4561, %v4769
      %v4900 = vadd.f32 %v4562, %v4772
      %v4901 = vadd.f32 %v4563, %v4777
      %v4902 = vadd.f32 %v4564, %v4780
      %v4903 = vadd.f32 %v4565, %v4785
      %v4904 = vadd.f32 %v4566, %v4788
      %v4905 = vadd.f32 %v4567, %v4793
      %v4906 = vadd.f32 %v4568, %v4796
      %v4907 = vadd.f32 %v4569, %v4801
      %v4908 = vadd.f32 %v4570, %v4804
      %v4909 = vadd.f32 %v4571, %v4809
      %v4910 = vadd.f32 %v4572, %v4812
      %v4911 = vadd.f32 %v4573, %v4817
      %v4912 = vadd.f32 %v4574, %v4820
      %v4913 = vadd.f32 %v4575, %v4825
      %v4914 = vadd.f32 %v4576, %v4828
      %v4915 = vadd.f32 %v4577, %v4833
      %v4916 = vadd.f32 %v4578, %v4836
      %v4917 = vadd.f32 %v4579, %v4841
      %v4918 = vadd.f32 %v4580, %v4844
      %v4919 = vadd.f32 %v4581, %v4849
      %v4920 = vadd.f32 %v4582, %v4852
      %v4921 = vadd.f32 %v4583, %v4857
      %v4922 = vadd.f32 %v4584, %v4860
      %v4923 = vadd.f32 %v4585, %v4865
      %v4924 = vadd.f32 %v4586, %v4868
      %v4925 = vadd.f32 %v4587, %v4873
      %v4926 = vadd.f32 %v4588, %v4876
      %v4927 = vadd.f32 %v4589, %v4881
      %v4928 = vadd.f32 %v4590, %v4884
      %v4929 = vadd.f32 %v4591, %v4889
      %v4930 = vadd.f32 %v4592, %v4892
      %v4931 = vld [vmem:[#allocation2 + $0x13] sm:$0xff]
      %v4932 = vld [vmem:[#allocation2 + $0x1b] sm:$0xff]
      %v4933 = vld [vmem:[#allocation2 + $0x23] sm:$0xff]
      %v4934 = vld [vmem:[#allocation2 + $0x2b] sm:$0xff]
      %v4935 = vld [vmem:[#allocation2 + $0x33] sm:$0xff]
      %v4936 = vld [vmem:[#allocation2 + $0x3b] sm:$0xff]
      %v4937 = vld [vmem:[#allocation2 + $0x43] sm:$0xff]
      %v4938 = vld [vmem:[#allocation2 + $0x4b] sm:$0xff]
      %v4939 = vld [vmem:[#allocation2 + $0x53] sm:$0xff]
      %v4940 = vld [vmem:[#allocation2 + $0x5b] sm:$0xff]
      %v4941 = vld [vmem:[#allocation2 + $0x63] sm:$0xff]
      %v4942 = vld [vmem:[#allocation2 + $0x6b] sm:$0xff]
      %v4943 = vld [vmem:[#allocation2 + $0x73] sm:$0xff]
      %v4944 = vld [vmem:[#allocation2 + $0x7b] sm:$0xff]
      %v4945 = vld [vmem:[#allocation2 + $0x83] sm:$0xff]
      %v4946 = vld [vmem:[#allocation2 + $0x8b] sm:$0xff]
      %v4947 = vld [vmem:[#allocation2 + $0x93] sm:$0xff]
      %v4948 = vld [vmem:[#allocation2 + $0x9b] sm:$0xff]
      %v4949 = vld [vmem:[#allocation2 + $0xa3] sm:$0xff]
      %v4950 = vld [vmem:[#allocation2 + $0xab] sm:$0xff]
      %v4951 = vld [vmem:[#allocation2 + $0xb3] sm:$0xff]
      %v4952 = vld [vmem:[#allocation2 + $0xbb] sm:$0xff]
      %v4953 = vld [vmem:[#allocation2 + $0xc3] sm:$0xff]
      %v4954 = vld [vmem:[#allocation2 + $0xcb] sm:$0xff]
      %v4955 = vld [vmem:[#allocation2 + $0xd3] sm:$0xff]
      %v4956 = vld [vmem:[#allocation2 + $0xdb] sm:$0xff]
      %v4957 = vld [vmem:[#allocation2 + $0xe3] sm:$0xff]
      %v4958 = vld [vmem:[#allocation2 + $0xeb] sm:$0xff]
      %v4959 = vld [vmem:[#allocation2 + $0xf3] sm:$0xff]
      %v4960 = vld [vmem:[#allocation2 + $0xfb] sm:$0xff]
      %v4961 = vld [vmem:[#allocation2 + $0x103] sm:$0xff]
      %v4962 = vld [vmem:[#allocation2 + $0x10b] sm:$0xff]
      %v4963 = vld [vmem:[#allocation2 + $0x113] sm:$0xff]
      %v4964 = vld [vmem:[#allocation2 + $0x11b] sm:$0xff]
      %v4965 = vld [vmem:[#allocation2 + $0x123] sm:$0xff]
      %v4966 = vld [vmem:[#allocation2 + $0x12b] sm:$0xff]
      %v4967 = vpack.c.bf16 %v4932, %v4931
      %v4968 = vpack.c.bf16 %v4934, %v4933
      %v4969 = vpack.c.bf16 %v4936, %v4935
      %v4970 = vpack.c.bf16 %v4938, %v4937
      %v4971 = vpack.c.bf16 %v4940, %v4939
      %v4972 = vpack.c.bf16 %v4942, %v4941
      %v4973 = vpack.c.bf16 %v4944, %v4943
      %v4974 = vpack.c.bf16 %v4946, %v4945
      %v4975 = vpack.c.bf16 %v4948, %v4947
      %v4976 = vpack.c.bf16 %v4950, %v4949
      %v4977 = vpack.c.bf16 %v4952, %v4951
      %v4978 = vpack.c.bf16 %v4954, %v4953
      %v4979 = vpack.c.bf16 %v4956, %v4955
      %v4980 = vpack.c.bf16 %v4958, %v4957
      %v4981 = vpack.c.bf16 %v4960, %v4959
      %v4982 = vpack.c.bf16 %v4962, %v4961
      %v4983 = vpack.c.bf16 %v4964, %v4963
      %v4984 = vpack.c.bf16 %v4966, %v4965
      %s4985 = scalar_lea.vmem %s3, 64
      %v4986 = vld [vmem:[%s4985] sm:$0xf]
      %v4987 = vld [vmem:[%s4985 + $0x4] sm:$0xf]
      %v4988 = vld [vmem:[%s4985 + $0x8] sm:$0xf]
      %v4989 = vld [vmem:[%s4985 + $0xc] sm:$0xf]
      %v4994 = vunpack.c.l.b16 %v4986
      %v4995 = vunpack.c.l.b16 %v4987
      %v4996 = vunpack.c.l.b16 %v4988
      %v4997 = vunpack.c.l.b16 %v4989
      %v4998 = vpack.c.b16 %v4995, %v4994
      %v4999 = vpack.c.b16 %v4997, %v4996
      %v5003 = vsel %vm3355, %v4967, 0
      %v5006 = vsel %vm3355, %v4968, 0
      %v5009 = vsel %vm3355, %v4969, 0
      %v5012 = vsel %vm3355, %v4970, 0
      %v5015 = vsel %vm3355, %v4971, 0
      %v5018 = vsel %vm3355, %v4972, 0
      %v5021 = vsel %vm3355, %v4973, 0
      %v5024 = vsel %vm3355, %v4974, 0
      %v5027 = vsel %vm3355, %v4975, 0
      %v5030 = vsel %vm3355, %v4976, 0
      %v5033 = vsel %vm3355, %v4977, 0
      %v5036 = vsel %vm3355, %v4978, 0
      %v5039 = vsel %vm3355, %v4979, 0
      %v5042 = vsel %vm3355, %v4980, 0
      %v5045 = vsel %vm3355, %v4981, 0
      %v5048 = vsel %vm3355, %v4982, 0
      %v5051 = vsel %vm3355, %v4983, 0
      %v5054 = vsel %vm3355, %v4984, 0
      %5056 = vmatprep.subr.bf16.mxu0 0
      %5057 = vmatpush1.bf16.msra.mxu0 %v4998
      %5058 = vmatprep.subr.bf16.mxu0 0
      %5059 = vmatpush1.bf16.msra.mxu0 %v4999
      %5060 = vmatprep.subr.bf16.mxu0 0
      %5061 = vmatpush1.bf16.msra.mxu0 0
      %5062 = vmatprep.subr.bf16.mxu0 0
      %5063 = vmatpush1.bf16.msra.mxu0 0
      %5064 = vmatprep.subr.bf16.mxu0 0
      %5065 = vmatpush1.bf16.msra.mxu0 0
      %5066 = vmatprep.subr.bf16.mxu0 0
      %5067 = vmatpush1.bf16.msra.mxu0 0
      %5068 = vmatprep.subr.bf16.mxu0 0
      %5069 = vmatpush1.bf16.msra.mxu0 0
      %5070 = vmatprep.subr.bf16.mxu0 0
      %5071 = vmatpush1.bf16.msra.mxu0 0
      %5072 = vmatprep.subr.bf16.mxu0 0
      %5073 = vmatpush1.bf16.msra.mxu0 0
      %5074 = vmatprep.subr.bf16.mxu0 0
      %5075 = vmatpush1.bf16.msra.mxu0 0
      %5076 = vmatprep.subr.bf16.mxu0 0
      %5077 = vmatpush1.bf16.msra.mxu0 0
      %5078 = vmatprep.subr.bf16.mxu0 0
      %5079 = vmatpush1.bf16.msra.mxu0 0
      %5080 = vmatprep.subr.bf16.mxu0 0
      %5081 = vmatpush1.bf16.msra.mxu0 0
      %5082 = vmatprep.subr.bf16.mxu0 0
      %5083 = vmatpush1.bf16.msra.mxu0 0
      %5084 = vmatprep.subr.bf16.mxu0 0
      %5085 = vmatpush1.bf16.msra.mxu0 0
      %5086 = vmatprep.subr.bf16.mxu0 0
      %5087 = vmatpush1.bf16.msra.mxu0 0
      %5088 = vmatprep.mubr.bf16.mxu0 0
      %5089 = vmatmul.mubr.bf16.gmra.mrb[0].mxu0 %v5003
      %v5090 = vpop.f32.mrb[0].mxu0
      %v5091 = vadd.f32 0.0, %v5090
      %v5092 = vpop.f32.mrb[0].mxu0
      %v5093 = vpop.f32.mrb[0].mxu0
      %v5094 = vadd.f32 0.0, %v5093
      %v5095 = vpop.f32.mrb[0].mxu0
      %5096 = vmatprep.mubr.bf16.mxu0 0
      %5097 = vmatmul.mubr.bf16.gmra.mrb[0].mxu0 %v5006
      %v5098 = vpop.f32.mrb[0].mxu0
      %v5099 = vadd.f32 0.0, %v5098
      %v5100 = vpop.f32.mrb[0].mxu0
      %v5101 = vpop.f32.mrb[0].mxu0
      %v5102 = vadd.f32 0.0, %v5101
      %v5103 = vpop.f32.mrb[0].mxu0
      %5104 = vmatprep.mubr.bf16.mxu0 0
      %5105 = vmatmul.mubr.bf16.gmra.mrb[0].mxu0 %v5009
      %v5106 = vpop.f32.mrb[0].mxu0
      %v5107 = vadd.f32 0.0, %v5106
      %v5108 = vpop.f32.mrb[0].mxu0
      %v5109 = vpop.f32.mrb[0].mxu0
      %v5110 = vadd.f32 0.0, %v5109
      %v5111 = vpop.f32.mrb[0].mxu0
      %5112 = vmatprep.mubr.bf16.mxu0 0
      %5113 = vmatmul.mubr.bf16.gmra.mrb[0].mxu0 %v5012
      %v5114 = vpop.f32.mrb[0].mxu0
      %v5115 = vadd.f32 0.0, %v5114
      %v5116 = vpop.f32.mrb[0].mxu0
      %v5117 = vpop.f32.mrb[0].mxu0
      %v5118 = vadd.f32 0.0, %v5117
      %v5119 = vpop.f32.mrb[0].mxu0
      %5120 = vmatprep.mubr.bf16.mxu0 0
      %5121 = vmatmul.mubr.bf16.gmra.mrb[0].mxu0 %v5015
      %v5122 = vpop.f32.mrb[0].mxu0
      %v5123 = vadd.f32 0.0, %v5122
      %v5124 = vpop.f32.mrb[0].mxu0
      %v5125 = vpop.f32.mrb[0].mxu0
      %v5126 = vadd.f32 0.0, %v5125
      %v5127 = vpop.f32.mrb[0].mxu0
      %5128 = vmatprep.mubr.bf16.mxu0 0
      %5129 = vmatmul.mubr.bf16.gmra.mrb[0].mxu0 %v5018
      %v5130 = vpop.f32.mrb[0].mxu0
      %v5131 = vadd.f32 0.0, %v5130
      %v5132 = vpop.f32.mrb[0].mxu0
      %v5133 = vpop.f32.mrb[0].mxu0
      %v5134 = vadd.f32 0.0, %v5133
      %v5135 = vpop.f32.mrb[0].mxu0
      %5136 = vmatprep.mubr.bf16.mxu0 0
      %5137 = vmatmul.mubr.bf16.gmra.mrb[0].mxu0 %v5021
      %v5138 = vpop.f32.mrb[0].mxu0
      %v5139 = vadd.f32 0.0, %v5138
      %v5140 = vpop.f32.mrb[0].mxu0
      %v5141 = vpop.f32.mrb[0].mxu0
      %v5142 = vadd.f32 0.0, %v5141
      %v5143 = vpop.f32.mrb[0].mxu0
      %5144 = vmatprep.mubr.bf16.mxu0 0
      %5145 = vmatmul.mubr.bf16.gmra.mrb[0].mxu0 %v5024
      %v5146 = vpop.f32.mrb[0].mxu0
      %v5147 = vadd.f32 0.0, %v5146
      %v5148 = vpop.f32.mrb[0].mxu0
      %v5149 = vpop.f32.mrb[0].mxu0
      %v5150 = vadd.f32 0.0, %v5149
      %v5151 = vpop.f32.mrb[0].mxu0
      %5152 = vmatprep.mubr.bf16.mxu0 0
      %5153 = vmatmul.mubr.bf16.gmra.mrb[0].mxu0 %v5027
      %v5154 = vpop.f32.mrb[0].mxu0
      %v5155 = vadd.f32 0.0, %v5154
      %v5156 = vpop.f32.mrb[0].mxu0
      %v5157 = vpop.f32.mrb[0].mxu0
      %v5158 = vadd.f32 0.0, %v5157
      %v5159 = vpop.f32.mrb[0].mxu0
      %5160 = vmatprep.mubr.bf16.mxu0 0
      %5161 = vmatmul.mubr.bf16.gmra.mrb[0].mxu0 %v5030
      %v5162 = vpop.f32.mrb[0].mxu0
      %v5163 = vadd.f32 0.0, %v5162
      %v5164 = vpop.f32.mrb[0].mxu0
      %v5165 = vpop.f32.mrb[0].mxu0
      %v5166 = vadd.f32 0.0, %v5165
      %v5167 = vpop.f32.mrb[0].mxu0
      %5168 = vmatprep.mubr.bf16.mxu0 0
      %5169 = vmatmul.mubr.bf16.gmra.mrb[0].mxu0 %v5033
      %v5170 = vpop.f32.mrb[0].mxu0
      %v5171 = vadd.f32 0.0, %v5170
      %v5172 = vpop.f32.mrb[0].mxu0
      %v5173 = vpop.f32.mrb[0].mxu0
      %v5174 = vadd.f32 0.0, %v5173
      %v5175 = vpop.f32.mrb[0].mxu0
      %5176 = vmatprep.mubr.bf16.mxu0 0
      %5177 = vmatmul.mubr.bf16.gmra.mrb[0].mxu0 %v5036
      %v5178 = vpop.f32.mrb[0].mxu0
      %v5179 = vadd.f32 0.0, %v5178
      %v5180 = vpop.f32.mrb[0].mxu0
      %v5181 = vpop.f32.mrb[0].mxu0
      %v5182 = vadd.f32 0.0, %v5181
      %v5183 = vpop.f32.mrb[0].mxu0
      %5184 = vmatprep.mubr.bf16.mxu0 0
      %5185 = vmatmul.mubr.bf16.gmra.mrb[0].mxu0 %v5039
      %v5186 = vpop.f32.mrb[0].mxu0
      %v5187 = vadd.f32 0.0, %v5186
      %v5188 = vpop.f32.mrb[0].mxu0
      %v5189 = vpop.f32.mrb[0].mxu0
      %v5190 = vadd.f32 0.0, %v5189
      %v5191 = vpop.f32.mrb[0].mxu0
      %5192 = vmatprep.mubr.bf16.mxu0 0
      %5193 = vmatmul.mubr.bf16.gmra.mrb[0].mxu0 %v5042
      %v5194 = vpop.f32.mrb[0].mxu0
      %v5195 = vadd.f32 0.0, %v5194
      %v5196 = vpop.f32.mrb[0].mxu0
      %v5197 = vpop.f32.mrb[0].mxu0
      %v5198 = vadd.f32 0.0, %v5197
      %v5199 = vpop.f32.mrb[0].mxu0
      %5200 = vmatprep.mubr.bf16.mxu0 0
      %5201 = vmatmul.mubr.bf16.gmra.mrb[0].mxu0 %v5045
      %v5202 = vpop.f32.mrb[0].mxu0
      %v5203 = vadd.f32 0.0, %v5202
      %v5204 = vpop.f32.mrb[0].mxu0
      %v5205 = vpop.f32.mrb[0].mxu0
      %v5206 = vadd.f32 0.0, %v5205
      %v5207 = vpop.f32.mrb[0].mxu0
      %5208 = vmatprep.mubr.bf16.mxu0 0
      %5209 = vmatmul.mubr.bf16.gmra.mrb[0].mxu0 %v5048
      %v5210 = vpop.f32.mrb[0].mxu0
      %v5211 = vadd.f32 0.0, %v5210
      %v5212 = vpop.f32.mrb[0].mxu0
      %v5213 = vpop.f32.mrb[0].mxu0
      %v5214 = vadd.f32 0.0, %v5213
      %v5215 = vpop.f32.mrb[0].mxu0
      %5216 = vmatprep.mubr.bf16.mxu0 0
      %5217 = vmatmul.mubr.bf16.gmra.mrb[0].mxu0 %v5051
      %v5218 = vpop.f32.mrb[0].mxu0
      %v5219 = vadd.f32 0.0, %v5218
      %v5220 = vpop.f32.mrb[0].mxu0
      %v5221 = vpop.f32.mrb[0].mxu0
      %v5222 = vadd.f32 0.0, %v5221
      %v5223 = vpop.f32.mrb[0].mxu0
      %5224 = vmatprep.mubr.bf16.mxu0 0
      %5225 = vmatmul.mubr.bf16.gmra.mrb[0].mxu0 %v5054
      %v5226 = vpop.f32.mrb[0].mxu0
      %v5227 = vadd.f32 0.0, %v5226
      %v5228 = vpop.f32.mrb[0].mxu0
      %v5229 = vpop.f32.mrb[0].mxu0
      %v5230 = vadd.f32 0.0, %v5229
      %v5231 = vpop.f32.mrb[0].mxu0
      %5232 = vdwg.mxu0
      %v5233 = vadd.f32 %v4895, %v5091
      %v5234 = vadd.f32 %v4896, %v5094
      %v5235 = vadd.f32 %v4897, %v5099
      %v5236 = vadd.f32 %v4898, %v5102
      %v5237 = vadd.f32 %v4899, %v5107
      %v5238 = vadd.f32 %v4900, %v5110
      %v5239 = vadd.f32 %v4901, %v5115
      %v5240 = vadd.f32 %v4902, %v5118
      %v5241 = vadd.f32 %v4903, %v5123
      %v5242 = vadd.f32 %v4904, %v5126
      %v5243 = vadd.f32 %v4905, %v5131
      %v5244 = vadd.f32 %v4906, %v5134
      %v5245 = vadd.f32 %v4907, %v5139
      %v5246 = vadd.f32 %v4908, %v5142
      %v5247 = vadd.f32 %v4909, %v5147
      %v5248 = vadd.f32 %v4910, %v5150
      %v5249 = vadd.f32 %v4911, %v5155
      %v5250 = vadd.f32 %v4912, %v5158
      %v5251 = vadd.f32 %v4913, %v5163
      %v5252 = vadd.f32 %v4914, %v5166
      %v5253 = vadd.f32 %v4915, %v5171
      %v5254 = vadd.f32 %v4916, %v5174
      %v5255 = vadd.f32 %v4917, %v5179
      %v5256 = vadd.f32 %v4918, %v5182
      %v5257 = vadd.f32 %v4919, %v5187
      %v5258 = vadd.f32 %v4920, %v5190
      %v5259 = vadd.f32 %v4921, %v5195
      %v5260 = vadd.f32 %v4922, %v5198
      %v5261 = vadd.f32 %v4923, %v5203
      %v5262 = vadd.f32 %v4924, %v5206
      %v5263 = vadd.f32 %v4925, %v5211
      %v5264 = vadd.f32 %v4926, %v5214
      %v5265 = vadd.f32 %v4927, %v5219
      %v5266 = vadd.f32 %v4928, %v5222
      %v5267 = vadd.f32 %v4929, %v5227
      %v5268 = vadd.f32 %v4930, %v5230
      %v5269 = vld [vmem:[#allocation2 + $0x14] sm:$0xff]
      %v5270 = vld [vmem:[#allocation2 + $0x1c] sm:$0xff]
      %v5271 = vld [vmem:[#allocation2 + $0x24] sm:$0xff]
      %v5272 = vld [vmem:[#allocation2 + $0x2c] sm:$0xff]
      %v5273 = vld [vmem:[#allocation2 + $0x34] sm:$0xff]
      %v5274 = vld [vmem:[#allocation2 + $0x3c] sm:$0xff]
      %v5275 = vld [vmem:[#allocation2 + $0x44] sm:$0xff]
      %v5276 = vld [vmem:[#allocation2 + $0x4c] sm:$0xff]
      %v5277 = vld [vmem:[#allocation2 + $0x54] sm:$0xff]
      %v5278 = vld [vmem:[#allocation2 + $0x5c] sm:$0xff]
      %v5279 = vld [vmem:[#allocation2 + $0x64] sm:$0xff]
      %v5280 = vld [vmem:[#allocation2 + $0x6c] sm:$0xff]
      %v5281 = vld [vmem:[#allocation2 + $0x74] sm:$0xff]
      %v5282 = vld [vmem:[#allocation2 + $0x7c] sm:$0xff]
      %v5283 = vld [vmem:[#allocation2 + $0x84] sm:$0xff]
      %v5284 = vld [vmem:[#allocation2 + $0x8c] sm:$0xff]
      %v5285 = vld [vmem:[#allocation2 + $0x94] sm:$0xff]
      %v5286 = vld [vmem:[#allocation2 + $0x9c] sm:$0xff]
      %v5287 = vld [vmem:[#allocation2 + $0xa4] sm:$0xff]
      %v5288 = vld [vmem:[#allocation2 + $0xac] sm:$0xff]
      %v5289 = vld [vmem:[#allocation2 + $0xb4] sm:$0xff]
      %v5290 = vld [vmem:[#allocation2 + $0xbc] sm:$0xff]
      %v5291 = vld [vmem:[#allocation2 + $0xc4] sm:$0xff]
      %v5292 = vld [vmem:[#allocation2 + $0xcc] sm:$0xff]
      %v5293 = vld [vmem:[#allocation2 + $0xd4] sm:$0xff]
      %v5294 = vld [vmem:[#allocation2 + $0xdc] sm:$0xff]
      %v5295 = vld [vmem:[#allocation2 + $0xe4] sm:$0xff]
      %v5296 = vld [vmem:[#allocation2 + $0xec] sm:$0xff]
      %v5297 = vld [vmem:[#allocation2 + $0xf4] sm:$0xff]
      %v5298 = vld [vmem:[#allocation2 + $0xfc] sm:$0xff]
      %v5299 = vld [vmem:[#allocation2 + $0x104] sm:$0xff]
      %v5300 = vld [vmem:[#allocation2 + $0x10c] sm:$0xff]
      %v5301 = vld [vmem:[#allocation2 + $0x114] sm:$0xff]
      %v5302 = vld [vmem:[#allocation2 + $0x11c] sm:$0xff]
      %v5303 = vld [vmem:[#allocation2 + $0x124] sm:$0xff]
      %v5304 = vld [vmem:[#allocation2 + $0x12c] sm:$0xff]
      %v5305 = vpack.c.bf16 %v5270, %v5269
      %v5306 = vpack.c.bf16 %v5272, %v5271
      %v5307 = vpack.c.bf16 %v5274, %v5273
      %v5308 = vpack.c.bf16 %v5276, %v5275
      %v5309 = vpack.c.bf16 %v5278, %v5277
      %v5310 = vpack.c.bf16 %v5280, %v5279
      %v5311 = vpack.c.bf16 %v5282, %v5281
      %v5312 = vpack.c.bf16 %v5284, %v5283
      %v5313 = vpack.c.bf16 %v5286, %v5285
      %v5314 = vpack.c.bf16 %v5288, %v5287
      %v5315 = vpack.c.bf16 %v5290, %v5289
      %v5316 = vpack.c.bf16 %v5292, %v5291
      %v5317 = vpack.c.bf16 %v5294, %v5293
      %v5318 = vpack.c.bf16 %v5296, %v5295
      %v5319 = vpack.c.bf16 %v5298, %v5297
      %v5320 = vpack.c.bf16 %v5300, %v5299
      %v5321 = vpack.c.bf16 %v5302, %v5301
      %v5322 = vpack.c.bf16 %v5304, %v5303
      %s5323 = scalar_lea.vmem %s3, 80
      %v5324 = vld [vmem:[%s5323] sm:$0xf]
      %v5325 = vld [vmem:[%s5323 + $0x4] sm:$0xf]
      %v5326 = vld [vmem:[%s5323 + $0x8] sm:$0xf]
      %v5327 = vld [vmem:[%s5323 + $0xc] sm:$0xf]
      %v5332 = vunpack.c.l.b16 %v5324
      %v5333 = vunpack.c.l.b16 %v5325
      %v5334 = vunpack.c.l.b16 %v5326
      %v5335 = vunpack.c.l.b16 %v5327
      %v5336 = vpack.c.b16 %v5333, %v5332
      %v5337 = vpack.c.b16 %v5335, %v5334
      %v5341 = vsel %vm3355, %v5305, 0
      %v5344 = vsel %vm3355, %v5306, 0
      %v5347 = vsel %vm3355, %v5307, 0
      %v5350 = vsel %vm3355, %v5308, 0
      %v5353 = vsel %vm3355, %v5309, 0
      %v5356 = vsel %vm3355, %v5310, 0
      %v5359 = vsel %vm3355, %v5311, 0
      %v5362 = vsel %vm3355, %v5312, 0
      %v5365 = vsel %vm3355, %v5313, 0
      %v5368 = vsel %vm3355, %v5314, 0
      %v5371 = vsel %vm3355, %v5315, 0
      %v5374 = vsel %vm3355, %v5316, 0
      %v5377 = vsel %vm3355, %v5317, 0
      %v5380 = vsel %vm3355, %v5318, 0
      %v5383 = vsel %vm3355, %v5319, 0
      %v5386 = vsel %vm3355, %v5320, 0
      %v5389 = vsel %vm3355, %v5321, 0
      %v5392 = vsel %vm3355, %v5322, 0
      %5394 = vmatprep.subr.bf16.mxu0 0
      %5395 = vmatpush1.bf16.msra.mxu0 %v5336
      %5396 = vmatprep.subr.bf16.mxu0 0
      %5397 = vmatpush1.bf16.msra.mxu0 %v5337
      %5398 = vmatprep.subr.bf16.mxu0 0
      %5399 = vmatpush1.bf16.msra.mxu0 0
      %5400 = vmatprep.subr.bf16.mxu0 0
      %5401 = vmatpush1.bf16.msra.mxu0 0
      %5402 = vmatprep.subr.bf16.mxu0 0
      %5403 = vmatpush1.bf16.msra.mxu0 0
      %5404 = vmatprep.subr.bf16.mxu0 0
      %5405 = vmatpush1.bf16.msra.mxu0 0
      %5406 = vmatprep.subr.bf16.mxu0 0
      %5407 = vmatpush1.bf16.msra.mxu0 0
      %5408 = vmatprep.subr.bf16.mxu0 0
      %5409 = vmatpush1.bf16.msra.mxu0 0
      %5410 = vmatprep.subr.bf16.mxu0 0
      %5411 = vmatpush1.bf16.msra.mxu0 0
      %5412 = vmatprep.subr.bf16.mxu0 0
      %5413 = vmatpush1.bf16.msra.mxu0 0
      %5414 = vmatprep.subr.bf16.mxu0 0
      %5415 = vmatpush1.bf16.msra.mxu0 0
      %5416 = vmatprep.subr.bf16.mxu0 0
      %5417 = vmatpush1.bf16.msra.mxu0 0
      %5418 = vmatprep.subr.bf16.mxu0 0
      %5419 = vmatpush1.bf16.msra.mxu0 0
      %5420 = vmatprep.subr.bf16.mxu0 0
      %5421 = vmatpush1.bf16.msra.mxu0 0
      %5422 = vmatprep.subr.bf16.mxu0 0
      %5423 = vmatpush1.bf16.msra.mxu0 0
      %5424 = vmatprep.subr.bf16.mxu0 0
      %5425 = vmatpush1.bf16.msra.mxu0 0
      %5426 = vmatprep.mubr.bf16.mxu0 0
      %5427 = vmatmul.mubr.bf16.gmra.mrb[0].mxu0 %v5341
      %v5428 = vpop.f32.mrb[0].mxu0
      %v5429 = vadd.f32 0.0, %v5428
      %v5430 = vpop.f32.mrb[0].mxu0
      %v5431 = vpop.f32.mrb[0].mxu0
      %v5432 = vadd.f32 0.0, %v5431
      %v5433 = vpop.f32.mrb[0].mxu0
      %5434 = vmatprep.mubr.bf16.mxu0 0
      %5435 = vmatmul.mubr.bf16.gmra.mrb[0].mxu0 %v5344
      %v5436 = vpop.f32.mrb[0].mxu0
      %v5437 = vadd.f32 0.0, %v5436
      %v5438 = vpop.f32.mrb[0].mxu0
      %v5439 = vpop.f32.mrb[0].mxu0
      %v5440 = vadd.f32 0.0, %v5439
      %v5441 = vpop.f32.mrb[0].mxu0
      %5442 = vmatprep.mubr.bf16.mxu0 0
      %5443 = vmatmul.mubr.bf16.gmra.mrb[0].mxu0 %v5347
      %v5444 = vpop.f32.mrb[0].mxu0
      %v5445 = vadd.f32 0.0, %v5444
      %v5446 = vpop.f32.mrb[0].mxu0
      %v5447 = vpop.f32.mrb[0].mxu0
      %v5448 = vadd.f32 0.0, %v5447
      %v5449 = vpop.f32.mrb[0].mxu0
      %5450 = vmatprep.mubr.bf16.mxu0 0
      %5451 = vmatmul.mubr.bf16.gmra.mrb[0].mxu0 %v5350
      %v5452 = vpop.f32.mrb[0].mxu0
      %v5453 = vadd.f32 0.0, %v5452
      %v5454 = vpop.f32.mrb[0].mxu0
      %v5455 = vpop.f32.mrb[0].mxu0
      %v5456 = vadd.f32 0.0, %v5455
      %v5457 = vpop.f32.mrb[0].mxu0
      %5458 = vmatprep.mubr.bf16.mxu0 0
      %5459 = vmatmul.mubr.bf16.gmra.mrb[0].mxu0 %v5353
      %v5460 = vpop.f32.mrb[0].mxu0
      %v5461 = vadd.f32 0.0, %v5460
      %v5462 = vpop.f32.mrb[0].mxu0
      %v5463 = vpop.f32.mrb[0].mxu0
      %v5464 = vadd.f32 0.0, %v5463
      %v5465 = vpop.f32.mrb[0].mxu0
      %5466 = vmatprep.mubr.bf16.mxu0 0
      %5467 = vmatmul.mubr.bf16.gmra.mrb[0].mxu0 %v5356
      %v5468 = vpop.f32.mrb[0].mxu0
      %v5469 = vadd.f32 0.0, %v5468
      %v5470 = vpop.f32.mrb[0].mxu0
      %v5471 = vpop.f32.mrb[0].mxu0
      %v5472 = vadd.f32 0.0, %v5471
      %v5473 = vpop.f32.mrb[0].mxu0
      %5474 = vmatprep.mubr.bf16.mxu0 0
      %5475 = vmatmul.mubr.bf16.gmra.mrb[0].mxu0 %v5359
      %v5476 = vpop.f32.mrb[0].mxu0
      %v5477 = vadd.f32 0.0, %v5476
      %v5478 = vpop.f32.mrb[0].mxu0
      %v5479 = vpop.f32.mrb[0].mxu0
      %v5480 = vadd.f32 0.0, %v5479
      %v5481 = vpop.f32.mrb[0].mxu0
      %5482 = vmatprep.mubr.bf16.mxu0 0
      %5483 = vmatmul.mubr.bf16.gmra.mrb[0].mxu0 %v5362
      %v5484 = vpop.f32.mrb[0].mxu0
      %v5485 = vadd.f32 0.0, %v5484
      %v5486 = vpop.f32.mrb[0].mxu0
      %v5487 = vpop.f32.mrb[0].mxu0
      %v5488 = vadd.f32 0.0, %v5487
      %v5489 = vpop.f32.mrb[0].mxu0
      %5490 = vmatprep.mubr.bf16.mxu0 0
      %5491 = vmatmul.mubr.bf16.gmra.mrb[0].mxu0 %v5365
      %v5492 = vpop.f32.mrb[0].mxu0
      %v5493 = vadd.f32 0.0, %v5492
      %v5494 = vpop.f32.mrb[0].mxu0
      %v5495 = vpop.f32.mrb[0].mxu0
      %v5496 = vadd.f32 0.0, %v5495
      %v5497 = vpop.f32.mrb[0].mxu0
      %5498 = vmatprep.mubr.bf16.mxu0 0
      %5499 = vmatmul.mubr.bf16.gmra.mrb[0].mxu0 %v5368
      %v5500 = vpop.f32.mrb[0].mxu0
      %v5501 = vadd.f32 0.0, %v5500
      %v5502 = vpop.f32.mrb[0].mxu0
      %v5503 = vpop.f32.mrb[0].mxu0
      %v5504 = vadd.f32 0.0, %v5503
      %v5505 = vpop.f32.mrb[0].mxu0
      %5506 = vmatprep.mubr.bf16.mxu0 0
      %5507 = vmatmul.mubr.bf16.gmra.mrb[0].mxu0 %v5371
      %v5508 = vpop.f32.mrb[0].mxu0
      %v5509 = vadd.f32 0.0, %v5508
      %v5510 = vpop.f32.mrb[0].mxu0
      %v5511 = vpop.f32.mrb[0].mxu0
      %v5512 = vadd.f32 0.0, %v5511
      %v5513 = vpop.f32.mrb[0].mxu0
      %5514 = vmatprep.mubr.bf16.mxu0 0
      %5515 = vmatmul.mubr.bf16.gmra.mrb[0].mxu0 %v5374
      %v5516 = vpop.f32.mrb[0].mxu0
      %v5517 = vadd.f32 0.0, %v5516
      %v5518 = vpop.f32.mrb[0].mxu0
      %v5519 = vpop.f32.mrb[0].mxu0
      %v5520 = vadd.f32 0.0, %v5519
      %v5521 = vpop.f32.mrb[0].mxu0
      %5522 = vmatprep.mubr.bf16.mxu0 0
      %5523 = vmatmul.mubr.bf16.gmra.mrb[0].mxu0 %v5377
      %v5524 = vpop.f32.mrb[0].mxu0
      %v5525 = vadd.f32 0.0, %v5524
      %v5526 = vpop.f32.mrb[0].mxu0
      %v5527 = vpop.f32.mrb[0].mxu0
      %v5528 = vadd.f32 0.0, %v5527
      %v5529 = vpop.f32.mrb[0].mxu0
      %5530 = vmatprep.mubr.bf16.mxu0 0
      %5531 = vmatmul.mubr.bf16.gmra.mrb[0].mxu0 %v5380
      %v5532 = vpop.f32.mrb[0].mxu0
      %v5533 = vadd.f32 0.0, %v5532
      %v5534 = vpop.f32.mrb[0].mxu0
      %v5535 = vpop.f32.mrb[0].mxu0
      %v5536 = vadd.f32 0.0, %v5535
      %v5537 = vpop.f32.mrb[0].mxu0
      %5538 = vmatprep.mubr.bf16.mxu0 0
      %5539 = vmatmul.mubr.bf16.gmra.mrb[0].mxu0 %v5383
      %v5540 = vpop.f32.mrb[0].mxu0
      %v5541 = vadd.f32 0.0, %v5540
      %v5542 = vpop.f32.mrb[0].mxu0
      %v5543 = vpop.f32.mrb[0].mxu0
      %v5544 = vadd.f32 0.0, %v5543
      %v5545 = vpop.f32.mrb[0].mxu0
      %5546 = vmatprep.mubr.bf16.mxu0 0
      %5547 = vmatmul.mubr.bf16.gmra.mrb[0].mxu0 %v5386
      %v5548 = vpop.f32.mrb[0].mxu0
      %v5549 = vadd.f32 0.0, %v5548
      %v5550 = vpop.f32.mrb[0].mxu0
      %v5551 = vpop.f32.mrb[0].mxu0
      %v5552 = vadd.f32 0.0, %v5551
      %v5553 = vpop.f32.mrb[0].mxu0
      %5554 = vmatprep.mubr.bf16.mxu0 0
      %5555 = vmatmul.mubr.bf16.gmra.mrb[0].mxu0 %v5389
      %v5556 = vpop.f32.mrb[0].mxu0
      %v5557 = vadd.f32 0.0, %v5556
      %v5558 = vpop.f32.mrb[0].mxu0
      %v5559 = vpop.f32.mrb[0].mxu0
      %v5560 = vadd.f32 0.0, %v5559
      %v5561 = vpop.f32.mrb[0].mxu0
      %5562 = vmatprep.mubr.bf16.mxu0 0
      %5563 = vmatmul.mubr.bf16.gmra.mrb[0].mxu0 %v5392
      %v5564 = vpop.f32.mrb[0].mxu0
      %v5565 = vadd.f32 0.0, %v5564
      %v5566 = vpop.f32.mrb[0].mxu0
      %v5567 = vpop.f32.mrb[0].mxu0
      %v5568 = vadd.f32 0.0, %v5567
      %v5569 = vpop.f32.mrb[0].mxu0
      %5570 = vdwg.mxu0
      %v5571 = vadd.f32 %v5233, %v5429
      %v5572 = vadd.f32 %v5234, %v5432
      %v5573 = vadd.f32 %v5235, %v5437
      %v5574 = vadd.f32 %v5236, %v5440
      %v5575 = vadd.f32 %v5237, %v5445
      %v5576 = vadd.f32 %v5238, %v5448
      %v5577 = vadd.f32 %v5239, %v5453
      %v5578 = vadd.f32 %v5240, %v5456
      %v5579 = vadd.f32 %v5241, %v5461
      %v5580 = vadd.f32 %v5242, %v5464
      %v5581 = vadd.f32 %v5243, %v5469
      %v5582 = vadd.f32 %v5244, %v5472
      %v5583 = vadd.f32 %v5245, %v5477
      %v5584 = vadd.f32 %v5246, %v5480
      %v5585 = vadd.f32 %v5247, %v5485
      %v5586 = vadd.f32 %v5248, %v5488
      %v5587 = vadd.f32 %v5249, %v5493
      %v5588 = vadd.f32 %v5250, %v5496
      %v5589 = vadd.f32 %v5251, %v5501
      %v5590 = vadd.f32 %v5252, %v5504
      %v5591 = vadd.f32 %v5253, %v5509
      %v5592 = vadd.f32 %v5254, %v5512
      %v5593 = vadd.f32 %v5255, %v5517
      %v5594 = vadd.f32 %v5256, %v5520
      %v5595 = vadd.f32 %v5257, %v5525
      %v5596 = vadd.f32 %v5258, %v5528
      %v5597 = vadd.f32 %v5259, %v5533
      %v5598 = vadd.f32 %v5260, %v5536
      %v5599 = vadd.f32 %v5261, %v5541
      %v5600 = vadd.f32 %v5262, %v5544
      %v5601 = vadd.f32 %v5263, %v5549
      %v5602 = vadd.f32 %v5264, %v5552
      %v5603 = vadd.f32 %v5265, %v5557
      %v5604 = vadd.f32 %v5266, %v5560
      %v5605 = vadd.f32 %v5267, %v5565
      %v5606 = vadd.f32 %v5268, %v5568
      %v5607 = vld [vmem:[#allocation2 + $0x24] sm:$0xff]
      %v5608 = vld [vmem:[#allocation2 + $0x2c] sm:$0xff]
      %v5609 = vld [vmem:[#allocation2 + $0x34] sm:$0xff]
      %v5610 = vld [vmem:[#allocation2 + $0x3c] sm:$0xff]
      %v5611 = vld [vmem:[#allocation2 + $0x44] sm:$0xff]
      %v5612 = vld [vmem:[#allocation2 + $0x4c] sm:$0xff]
      %v5613 = vld [vmem:[#allocation2 + $0x54] sm:$0xff]
      %v5614 = vld [vmem:[#allocation2 + $0x5c] sm:$0xff]
      %v5615 = vld [vmem:[#allocation2 + $0x64] sm:$0xff]
      %v5616 = vld [vmem:[#allocation2 + $0x6c] sm:$0xff]
      %v5617 = vld [vmem:[#allocation2 + $0x74] sm:$0xff]
      %v5618 = vld [vmem:[#allocation2 + $0x7c] sm:$0xff]
      %v5619 = vld [vmem:[#allocation2 + $0x84] sm:$0xff]
      %v5620 = vld [vmem:[#allocation2 + $0x8c] sm:$0xff]
      %v5621 = vld [vmem:[#allocation2 + $0x94] sm:$0xff]
      %v5622 = vld [vmem:[#allocation2 + $0x9c] sm:$0xff]
      %v5623 = vld [vmem:[#allocation2 + $0xa4] sm:$0xff]
      %v5624 = vld [vmem:[#allocation2 + $0xac] sm:$0xff]
      %v5625 = vld [vmem:[#allocation2 + $0xb4] sm:$0xff]
      %v5626 = vld [vmem:[#allocation2 + $0xbc] sm:$0xff]
      %v5627 = vld [vmem:[#allocation2 + $0xc4] sm:$0xff]
      %v5628 = vld [vmem:[#allocation2 + $0xcc] sm:$0xff]
      %v5629 = vld [vmem:[#allocation2 + $0xd4] sm:$0xff]
      %v5630 = vld [vmem:[#allocation2 + $0xdc] sm:$0xff]
      %v5631 = vld [vmem:[#allocation2 + $0xe4] sm:$0xff]
      %v5632 = vld [vmem:[#allocation2 + $0xec] sm:$0xff]
      %v5633 = vld [vmem:[#allocation2 + $0xf4] sm:$0xff]
      %v5634 = vld [vmem:[#allocation2 + $0xfc] sm:$0xff]
      %v5635 = vld [vmem:[#allocation2 + $0x104] sm:$0xff]
      %v5636 = vld [vmem:[#allocation2 + $0x10c] sm:$0xff]
      %v5637 = vld [vmem:[#allocation2 + $0x114] sm:$0xff]
      %v5638 = vld [vmem:[#allocation2 + $0x11c] sm:$0xff]
      %v5639 = vld [vmem:[#allocation2 + $0x124] sm:$0xff]
      %v5640 = vld [vmem:[#allocation2 + $0x12c] sm:$0xff]
      %v5641 = vld [vmem:[#allocation2 + $0x134] sm:$0xff]
      %v5642 = vld [vmem:[#allocation2 + $0x13c] sm:$0xff]
      %v5643 = vpack.c.bf16 %v5608, %v5607
      %v5644 = vpack.c.bf16 %v5610, %v5609
      %v5645 = vpack.c.bf16 %v5612, %v5611
      %v5646 = vpack.c.bf16 %v5614, %v5613
      %v5647 = vpack.c.bf16 %v5616, %v5615
      %v5648 = vpack.c.bf16 %v5618, %v5617
      %v5649 = vpack.c.bf16 %v5620, %v5619
      %v5650 = vpack.c.bf16 %v5622, %v5621
      %v5651 = vpack.c.bf16 %v5624, %v5623
      %v5652 = vpack.c.bf16 %v5626, %v5625
      %v5653 = vpack.c.bf16 %v5628, %v5627
      %v5654 = vpack.c.bf16 %v5630, %v5629
      %v5655 = vpack.c.bf16 %v5632, %v5631
      %v5656 = vpack.c.bf16 %v5634, %v5633
      %v5657 = vpack.c.bf16 %v5636, %v5635
      %v5658 = vpack.c.bf16 %v5638, %v5637
      %v5659 = vpack.c.bf16 %v5640, %v5639
      %v5660 = vpack.c.bf16 %v5642, %v5641
      %s5661 = scalar_lea.vmem %s3, 96
      %v5662 = vld [vmem:[%s5661] sm:$0xf]
      %v5663 = vld [vmem:[%s5661 + $0x4] sm:$0xf]
      %v5664 = vld [vmem:[%s5661 + $0x8] sm:$0xf]
      %v5665 = vld [vmem:[%s5661 + $0xc] sm:$0xf]
      %v5670 = vunpack.c.l.b16 %v5662
      %v5671 = vunpack.c.l.b16 %v5663
      %v5672 = vunpack.c.l.b16 %v5664
      %v5673 = vunpack.c.l.b16 %v5665
      %v5674 = vpack.c.b16 %v5671, %v5670
      %v5675 = vpack.c.b16 %v5673, %v5672
      %v5679 = vsel %vm3355, %v5643, 0
      %v5682 = vsel %vm3355, %v5644, 0
      %v5685 = vsel %vm3355, %v5645, 0
      %v5688 = vsel %vm3355, %v5646, 0
      %v5691 = vsel %vm3355, %v5647, 0
      %v5694 = vsel %vm3355, %v5648, 0
      %v5697 = vsel %vm3355, %v5649, 0
      %v5700 = vsel %vm3355, %v5650, 0
      %v5703 = vsel %vm3355, %v5651, 0
      %v5706 = vsel %vm3355, %v5652, 0
      %v5709 = vsel %vm3355, %v5653, 0
      %v5712 = vsel %vm3355, %v5654, 0
      %v5715 = vsel %vm3355, %v5655, 0
      %v5718 = vsel %vm3355, %v5656, 0
      %v5721 = vsel %vm3355, %v5657, 0
      %v5724 = vsel %vm3355, %v5658, 0
      %v5727 = vsel %vm3355, %v5659, 0
      %v5730 = vsel %vm3355, %v5660, 0
      %5732 = vmatprep.subr.bf16.mxu0 0
      %5733 = vmatpush1.bf16.msra.mxu0 %v5674
      %5734 = vmatprep.subr.bf16.mxu0 0
      %5735 = vmatpush1.bf16.msra.mxu0 %v5675
      %5736 = vmatprep.subr.bf16.mxu0 0
      %5737 = vmatpush1.bf16.msra.mxu0 0
      %5738 = vmatprep.subr.bf16.mxu0 0
      %5739 = vmatpush1.bf16.msra.mxu0 0
      %5740 = vmatprep.subr.bf16.mxu0 0
      %5741 = vmatpush1.bf16.msra.mxu0 0
      %5742 = vmatprep.subr.bf16.mxu0 0
      %5743 = vmatpush1.bf16.msra.mxu0 0
      %5744 = vmatprep.subr.bf16.mxu0 0
      %5745 = vmatpush1.bf16.msra.mxu0 0
      %5746 = vmatprep.subr.bf16.mxu0 0
      %5747 = vmatpush1.bf16.msra.mxu0 0
      %5748 = vmatprep.subr.bf16.mxu0 0
      %5749 = vmatpush1.bf16.msra.mxu0 0
      %5750 = vmatprep.subr.bf16.mxu0 0
      %5751 = vmatpush1.bf16.msra.mxu0 0
      %5752 = vmatprep.subr.bf16.mxu0 0
      %5753 = vmatpush1.bf16.msra.mxu0 0
      %5754 = vmatprep.subr.bf16.mxu0 0
      %5755 = vmatpush1.bf16.msra.mxu0 0
      %5756 = vmatprep.subr.bf16.mxu0 0
      %5757 = vmatpush1.bf16.msra.mxu0 0
      %5758 = vmatprep.subr.bf16.mxu0 0
      %5759 = vmatpush1.bf16.msra.mxu0 0
      %5760 = vmatprep.subr.bf16.mxu0 0
      %5761 = vmatpush1.bf16.msra.mxu0 0
      %5762 = vmatprep.subr.bf16.mxu0 0
      %5763 = vmatpush1.bf16.msra.mxu0 0
      %5764 = vmatprep.mubr.bf16.mxu0 0
      %5765 = vmatmul.mubr.bf16.gmra.mrb[0].mxu0 %v5679
      %v5766 = vpop.f32.mrb[0].mxu0
      %v5767 = vadd.f32 0.0, %v5766
      %v5768 = vpop.f32.mrb[0].mxu0
      %v5769 = vpop.f32.mrb[0].mxu0
      %v5770 = vadd.f32 0.0, %v5769
      %v5771 = vpop.f32.mrb[0].mxu0
      %5772 = vmatprep.mubr.bf16.mxu0 0
      %5773 = vmatmul.mubr.bf16.gmra.mrb[0].mxu0 %v5682
      %v5774 = vpop.f32.mrb[0].mxu0
      %v5775 = vadd.f32 0.0, %v5774
      %v5776 = vpop.f32.mrb[0].mxu0
      %v5777 = vpop.f32.mrb[0].mxu0
      %v5778 = vadd.f32 0.0, %v5777
      %v5779 = vpop.f32.mrb[0].mxu0
      %5780 = vmatprep.mubr.bf16.mxu0 0
      %5781 = vmatmul.mubr.bf16.gmra.mrb[0].mxu0 %v5685
      %v5782 = vpop.f32.mrb[0].mxu0
      %v5783 = vadd.f32 0.0, %v5782
      %v5784 = vpop.f32.mrb[0].mxu0
      %v5785 = vpop.f32.mrb[0].mxu0
      %v5786 = vadd.f32 0.0, %v5785
      %v5787 = vpop.f32.mrb[0].mxu0
      %5788 = vmatprep.mubr.bf16.mxu0 0
      %5789 = vmatmul.mubr.bf16.gmra.mrb[0].mxu0 %v5688
      %v5790 = vpop.f32.mrb[0].mxu0
      %v5791 = vadd.f32 0.0, %v5790
      %v5792 = vpop.f32.mrb[0].mxu0
      %v5793 = vpop.f32.mrb[0].mxu0
      %v5794 = vadd.f32 0.0, %v5793
      %v5795 = vpop.f32.mrb[0].mxu0
      %5796 = vmatprep.mubr.bf16.mxu0 0
      %5797 = vmatmul.mubr.bf16.gmra.mrb[0].mxu0 %v5691
      %v5798 = vpop.f32.mrb[0].mxu0
      %v5799 = vadd.f32 0.0, %v5798
      %v5800 = vpop.f32.mrb[0].mxu0
      %v5801 = vpop.f32.mrb[0].mxu0
      %v5802 = vadd.f32 0.0, %v5801
      %v5803 = vpop.f32.mrb[0].mxu0
      %5804 = vmatprep.mubr.bf16.mxu0 0
      %5805 = vmatmul.mubr.bf16.gmra.mrb[0].mxu0 %v5694
      %v5806 = vpop.f32.mrb[0].mxu0
      %v5807 = vadd.f32 0.0, %v5806
      %v5808 = vpop.f32.mrb[0].mxu0
      %v5809 = vpop.f32.mrb[0].mxu0
      %v5810 = vadd.f32 0.0, %v5809
      %v5811 = vpop.f32.mrb[0].mxu0
      %5812 = vmatprep.mubr.bf16.mxu0 0
      %5813 = vmatmul.mubr.bf16.gmra.mrb[0].mxu0 %v5697
      %v5814 = vpop.f32.mrb[0].mxu0
      %v5815 = vadd.f32 0.0, %v5814
      %v5816 = vpop.f32.mrb[0].mxu0
      %v5817 = vpop.f32.mrb[0].mxu0
      %v5818 = vadd.f32 0.0, %v5817
      %v5819 = vpop.f32.mrb[0].mxu0
      %5820 = vmatprep.mubr.bf16.mxu0 0
      %5821 = vmatmul.mubr.bf16.gmra.mrb[0].mxu0 %v5700
      %v5822 = vpop.f32.mrb[0].mxu0
      %v5823 = vadd.f32 0.0, %v5822
      %v5824 = vpop.f32.mrb[0].mxu0
      %v5825 = vpop.f32.mrb[0].mxu0
      %v5826 = vadd.f32 0.0, %v5825
      %v5827 = vpop.f32.mrb[0].mxu0
      %5828 = vmatprep.mubr.bf16.mxu0 0
      %5829 = vmatmul.mubr.bf16.gmra.mrb[0].mxu0 %v5703
      %v5830 = vpop.f32.mrb[0].mxu0
      %v5831 = vadd.f32 0.0, %v5830
      %v5832 = vpop.f32.mrb[0].mxu0
      %v5833 = vpop.f32.mrb[0].mxu0
      %v5834 = vadd.f32 0.0, %v5833
      %v5835 = vpop.f32.mrb[0].mxu0
      %5836 = vmatprep.mubr.bf16.mxu0 0
      %5837 = vmatmul.mubr.bf16.gmra.mrb[0].mxu0 %v5706
      %v5838 = vpop.f32.mrb[0].mxu0
      %v5839 = vadd.f32 0.0, %v5838
      %v5840 = vpop.f32.mrb[0].mxu0
      %v5841 = vpop.f32.mrb[0].mxu0
      %v5842 = vadd.f32 0.0, %v5841
      %v5843 = vpop.f32.mrb[0].mxu0
      %5844 = vmatprep.mubr.bf16.mxu0 0
      %5845 = vmatmul.mubr.bf16.gmra.mrb[0].mxu0 %v5709
      %v5846 = vpop.f32.mrb[0].mxu0
      %v5847 = vadd.f32 0.0, %v5846
      %v5848 = vpop.f32.mrb[0].mxu0
      %v5849 = vpop.f32.mrb[0].mxu0
      %v5850 = vadd.f32 0.0, %v5849
      %v5851 = vpop.f32.mrb[0].mxu0
      %5852 = vmatprep.mubr.bf16.mxu0 0
      %5853 = vmatmul.mubr.bf16.gmra.mrb[0].mxu0 %v5712
      %v5854 = vpop.f32.mrb[0].mxu0
      %v5855 = vadd.f32 0.0, %v5854
      %v5856 = vpop.f32.mrb[0].mxu0
      %v5857 = vpop.f32.mrb[0].mxu0
      %v5858 = vadd.f32 0.0, %v5857
      %v5859 = vpop.f32.mrb[0].mxu0
      %5860 = vmatprep.mubr.bf16.mxu0 0
      %5861 = vmatmul.mubr.bf16.gmra.mrb[0].mxu0 %v5715
      %v5862 = vpop.f32.mrb[0].mxu0
      %v5863 = vadd.f32 0.0, %v5862
      %v5864 = vpop.f32.mrb[0].mxu0
      %v5865 = vpop.f32.mrb[0].mxu0
      %v5866 = vadd.f32 0.0, %v5865
      %v5867 = vpop.f32.mrb[0].mxu0
      %5868 = vmatprep.mubr.bf16.mxu0 0
      %5869 = vmatmul.mubr.bf16.gmra.mrb[0].mxu0 %v5718
      %v5870 = vpop.f32.mrb[0].mxu0
      %v5871 = vadd.f32 0.0, %v5870
      %v5872 = vpop.f32.mrb[0].mxu0
      %v5873 = vpop.f32.mrb[0].mxu0
      %v5874 = vadd.f32 0.0, %v5873
      %v5875 = vpop.f32.mrb[0].mxu0
      %5876 = vmatprep.mubr.bf16.mxu0 0
      %5877 = vmatmul.mubr.bf16.gmra.mrb[0].mxu0 %v5721
      %v5878 = vpop.f32.mrb[0].mxu0
      %v5879 = vadd.f32 0.0, %v5878
      %v5880 = vpop.f32.mrb[0].mxu0
      %v5881 = vpop.f32.mrb[0].mxu0
      %v5882 = vadd.f32 0.0, %v5881
      %v5883 = vpop.f32.mrb[0].mxu0
      %5884 = vmatprep.mubr.bf16.mxu0 0
      %5885 = vmatmul.mubr.bf16.gmra.mrb[0].mxu0 %v5724
      %v5886 = vpop.f32.mrb[0].mxu0
      %v5887 = vadd.f32 0.0, %v5886
      %v5888 = vpop.f32.mrb[0].mxu0
      %v5889 = vpop.f32.mrb[0].mxu0
      %v5890 = vadd.f32 0.0, %v5889
      %v5891 = vpop.f32.mrb[0].mxu0
      %5892 = vmatprep.mubr.bf16.mxu0 0
      %5893 = vmatmul.mubr.bf16.gmra.mrb[0].mxu0 %v5727
      %v5894 = vpop.f32.mrb[0].mxu0
      %v5895 = vadd.f32 0.0, %v5894
      %v5896 = vpop.f32.mrb[0].mxu0
      %v5897 = vpop.f32.mrb[0].mxu0
      %v5898 = vadd.f32 0.0, %v5897
      %v5899 = vpop.f32.mrb[0].mxu0
      %5900 = vmatprep.mubr.bf16.mxu0 0
      %5901 = vmatmul.mubr.bf16.gmra.mrb[0].mxu0 %v5730
      %v5902 = vpop.f32.mrb[0].mxu0
      %v5903 = vadd.f32 0.0, %v5902
      %v5904 = vpop.f32.mrb[0].mxu0
      %v5905 = vpop.f32.mrb[0].mxu0
      %v5906 = vadd.f32 0.0, %v5905
      %v5907 = vpop.f32.mrb[0].mxu0
      %5908 = vdwg.mxu0
      %v5909 = vadd.f32 %v5571, %v5767
      %v5910 = vadd.f32 %v5572, %v5770
      %v5911 = vadd.f32 %v5573, %v5775
      %v5912 = vadd.f32 %v5574, %v5778
      %v5913 = vadd.f32 %v5575, %v5783
      %v5914 = vadd.f32 %v5576, %v5786
      %v5915 = vadd.f32 %v5577, %v5791
      %v5916 = vadd.f32 %v5578, %v5794
      %v5917 = vadd.f32 %v5579, %v5799
      %v5918 = vadd.f32 %v5580, %v5802
      %v5919 = vadd.f32 %v5581, %v5807
      %v5920 = vadd.f32 %v5582, %v5810
      %v5921 = vadd.f32 %v5583, %v5815
      %v5922 = vadd.f32 %v5584, %v5818
      %v5923 = vadd.f32 %v5585, %v5823
      %v5924 = vadd.f32 %v5586, %v5826
      %v5925 = vadd.f32 %v5587, %v5831
      %v5926 = vadd.f32 %v5588, %v5834
      %v5927 = vadd.f32 %v5589, %v5839
      %v5928 = vadd.f32 %v5590, %v5842
      %v5929 = vadd.f32 %v5591, %v5847
      %v5930 = vadd.f32 %v5592, %v5850
      %v5931 = vadd.f32 %v5593, %v5855
      %v5932 = vadd.f32 %v5594, %v5858
      %v5933 = vadd.f32 %v5595, %v5863
      %v5934 = vadd.f32 %v5596, %v5866
      %v5935 = vadd.f32 %v5597, %v5871
      %v5936 = vadd.f32 %v5598, %v5874
      %v5937 = vadd.f32 %v5599, %v5879
      %v5938 = vadd.f32 %v5600, %v5882
      %v5939 = vadd.f32 %v5601, %v5887
      %v5940 = vadd.f32 %v5602, %v5890
      %v5941 = vadd.f32 %v5603, %v5895
      %v5942 = vadd.f32 %v5604, %v5898
      %v5943 = vadd.f32 %v5605, %v5903
      %v5944 = vadd.f32 %v5606, %v5906
      %v5945 = vld [vmem:[#allocation2 + $0x25] sm:$0xff]
      %v5946 = vld [vmem:[#allocation2 + $0x2d] sm:$0xff]
      %v5947 = vld [vmem:[#allocation2 + $0x35] sm:$0xff]
      %v5948 = vld [vmem:[#allocation2 + $0x3d] sm:$0xff]
      %v5949 = vld [vmem:[#allocation2 + $0x45] sm:$0xff]
      %v5950 = vld [vmem:[#allocation2 + $0x4d] sm:$0xff]
      %v5951 = vld [vmem:[#allocation2 + $0x55] sm:$0xff]
      %v5952 = vld [vmem:[#allocation2 + $0x5d] sm:$0xff]
      %v5953 = vld [vmem:[#allocation2 + $0x65] sm:$0xff]
      %v5954 = vld [vmem:[#allocation2 + $0x6d] sm:$0xff]
      %v5955 = vld [vmem:[#allocation2 + $0x75] sm:$0xff]
      %v5956 = vld [vmem:[#allocation2 + $0x7d] sm:$0xff]
      %v5957 = vld [vmem:[#allocation2 + $0x85] sm:$0xff]
      %v5958 = vld [vmem:[#allocation2 + $0x8d] sm:$0xff]
      %v5959 = vld [vmem:[#allocation2 + $0x95] sm:$0xff]
      %v5960 = vld [vmem:[#allocation2 + $0x9d] sm:$0xff]
      %v5961 = vld [vmem:[#allocation2 + $0xa5] sm:$0xff]
      %v5962 = vld [vmem:[#allocation2 + $0xad] sm:$0xff]
      %v5963 = vld [vmem:[#allocation2 + $0xb5] sm:$0xff]
      %v5964 = vld [vmem:[#allocation2 + $0xbd] sm:$0xff]
      %v5965 = vld [vmem:[#allocation2 + $0xc5] sm:$0xff]
      %v5966 = vld [vmem:[#allocation2 + $0xcd] sm:$0xff]
      %v5967 = vld [vmem:[#allocation2 + $0xd5] sm:$0xff]
      %v5968 = vld [vmem:[#allocation2 + $0xdd] sm:$0xff]
      %v5969 = vld [vmem:[#allocation2 + $0xe5] sm:$0xff]
      %v5970 = vld [vmem:[#allocation2 + $0xed] sm:$0xff]
      %v5971 = vld [vmem:[#allocation2 + $0xf5] sm:$0xff]
      %v5972 = vld [vmem:[#allocation2 + $0xfd] sm:$0xff]
      %v5973 = vld [vmem:[#allocation2 + $0x105] sm:$0xff]
      %v5974 = vld [vmem:[#allocation2 + $0x10d] sm:$0xff]
      %v5975 = vld [vmem:[#allocation2 + $0x115] sm:$0xff]
      %v5976 = vld [vmem:[#allocation2 + $0x11d] sm:$0xff]
      %v5977 = vld [vmem:[#allocation2 + $0x125] sm:$0xff]
      %v5978 = vld [vmem:[#allocation2 + $0x12d] sm:$0xff]
      %v5979 = vld [vmem:[#allocation2 + $0x135] sm:$0xff]
      %v5980 = vld [vmem:[#allocation2 + $0x13d] sm:$0xff]
      %v5981 = vpack.c.bf16 %v5946, %v5945
      %v5982 = vpack.c.bf16 %v5948, %v5947
      %v5983 = vpack.c.bf16 %v5950, %v5949
      %v5984 = vpack.c.bf16 %v5952, %v5951
      %v5985 = vpack.c.bf16 %v5954, %v5953
      %v5986 = vpack.c.bf16 %v5956, %v5955
      %v5987 = vpack.c.bf16 %v5958, %v5957
      %v5988 = vpack.c.bf16 %v5960, %v5959
      %v5989 = vpack.c.bf16 %v5962, %v5961
      %v5990 = vpack.c.bf16 %v5964, %v5963
      %v5991 = vpack.c.bf16 %v5966, %v5965
      %v5992 = vpack.c.bf16 %v5968, %v5967
      %v5993 = vpack.c.bf16 %v5970, %v5969
      %v5994 = vpack.c.bf16 %v5972, %v5971
      %v5995 = vpack.c.bf16 %v5974, %v5973
      %v5996 = vpack.c.bf16 %v5976, %v5975
      %v5997 = vpack.c.bf16 %v5978, %v5977
      %v5998 = vpack.c.bf16 %v5980, %v5979
      %s5999 = scalar_lea.vmem %s3, 112
      %v6000 = vld [vmem:[%s5999] sm:$0xf]
      %v6001 = vld [vmem:[%s5999 + $0x4] sm:$0xf]
      %v6002 = vld [vmem:[%s5999 + $0x8] sm:$0xf]
      %v6003 = vld [vmem:[%s5999 + $0xc] sm:$0xf]
      %v6008 = vunpack.c.l.b16 %v6000
      %v6009 = vunpack.c.l.b16 %v6001
      %v6010 = vunpack.c.l.b16 %v6002
      %v6011 = vunpack.c.l.b16 %v6003
      %v6012 = vpack.c.b16 %v6009, %v6008
      %v6013 = vpack.c.b16 %v6011, %v6010
      %v6017 = vsel %vm3355, %v5981, 0
      %v6020 = vsel %vm3355, %v5982, 0
      %v6023 = vsel %vm3355, %v5983, 0
      %v6026 = vsel %vm3355, %v5984, 0
      %v6029 = vsel %vm3355, %v5985, 0
      %v6032 = vsel %vm3355, %v5986, 0
      %v6035 = vsel %vm3355, %v5987, 0
      %v6038 = vsel %vm3355, %v5988, 0
      %v6041 = vsel %vm3355, %v5989, 0
      %v6044 = vsel %vm3355, %v5990, 0
      %v6047 = vsel %vm3355, %v5991, 0
      %v6050 = vsel %vm3355, %v5992, 0
      %v6053 = vsel %vm3355, %v5993, 0
      %v6056 = vsel %vm3355, %v5994, 0
      %v6059 = vsel %vm3355, %v5995, 0
      %v6062 = vsel %vm3355, %v5996, 0
      %v6065 = vsel %vm3355, %v5997, 0
      %v6068 = vsel %vm3355, %v5998, 0
      %6070 = vmatprep.subr.bf16.mxu0 0
      %6071 = vmatpush1.bf16.msra.mxu0 %v6012
      %6072 = vmatprep.subr.bf16.mxu0 0
      %6073 = vmatpush1.bf16.msra.mxu0 %v6013
      %6074 = vmatprep.subr.bf16.mxu0 0
      %6075 = vmatpush1.bf16.msra.mxu0 0
      %6076 = vmatprep.subr.bf16.mxu0 0
      %6077 = vmatpush1.bf16.msra.mxu0 0
      %6078 = vmatprep.subr.bf16.mxu0 0
      %6079 = vmatpush1.bf16.msra.mxu0 0
      %6080 = vmatprep.subr.bf16.mxu0 0
      %6081 = vmatpush1.bf16.msra.mxu0 0
      %6082 = vmatprep.subr.bf16.mxu0 0
      %6083 = vmatpush1.bf16.msra.mxu0 0
      %6084 = vmatprep.subr.bf16.mxu0 0
      %6085 = vmatpush1.bf16.msra.mxu0 0
      %6086 = vmatprep.subr.bf16.mxu0 0
      %6087 = vmatpush1.bf16.msra.mxu0 0
      %6088 = vmatprep.subr.bf16.mxu0 0
      %6089 = vmatpush1.bf16.msra.mxu0 0
      %6090 = vmatprep.subr.bf16.mxu0 0
      %6091 = vmatpush1.bf16.msra.mxu0 0
      %6092 = vmatprep.subr.bf16.mxu0 0
      %6093 = vmatpush1.bf16.msra.mxu0 0
      %6094 = vmatprep.subr.bf16.mxu0 0
      %6095 = vmatpush1.bf16.msra.mxu0 0
      %6096 = vmatprep.subr.bf16.mxu0 0
      %6097 = vmatpush1.bf16.msra.mxu0 0
      %6098 = vmatprep.subr.bf16.mxu0 0
      %6099 = vmatpush1.bf16.msra.mxu0 0
      %6100 = vmatprep.subr.bf16.mxu0 0
      %6101 = vmatpush1.bf16.msra.mxu0 0
      %6102 = vmatprep.mubr.bf16.mxu0 0
      %6103 = vmatmul.mubr.bf16.gmra.mrb[0].mxu0 %v6017
      %v6104 = vpop.f32.mrb[0].mxu0
      %v6105 = vadd.f32 0.0, %v6104
      %v6106 = vpop.f32.mrb[0].mxu0
      %v6107 = vpop.f32.mrb[0].mxu0
      %v6108 = vadd.f32 0.0, %v6107
      %v6109 = vpop.f32.mrb[0].mxu0
      %6110 = vmatprep.mubr.bf16.mxu0 0
      %6111 = vmatmul.mubr.bf16.gmra.mrb[0].mxu0 %v6020
      %v6112 = vpop.f32.mrb[0].mxu0
      %v6113 = vadd.f32 0.0, %v6112
      %v6114 = vpop.f32.mrb[0].mxu0
      %v6115 = vpop.f32.mrb[0].mxu0
      %v6116 = vadd.f32 0.0, %v6115
      %v6117 = vpop.f32.mrb[0].mxu0
      %6118 = vmatprep.mubr.bf16.mxu0 0
      %6119 = vmatmul.mubr.bf16.gmra.mrb[0].mxu0 %v6023
      %v6120 = vpop.f32.mrb[0].mxu0
      %v6121 = vadd.f32 0.0, %v6120
      %v6122 = vpop.f32.mrb[0].mxu0
      %v6123 = vpop.f32.mrb[0].mxu0
      %v6124 = vadd.f32 0.0, %v6123
      %v6125 = vpop.f32.mrb[0].mxu0
      %6126 = vmatprep.mubr.bf16.mxu0 0
      %6127 = vmatmul.mubr.bf16.gmra.mrb[0].mxu0 %v6026
      %v6128 = vpop.f32.mrb[0].mxu0
      %v6129 = vadd.f32 0.0, %v6128
      %v6130 = vpop.f32.mrb[0].mxu0
      %v6131 = vpop.f32.mrb[0].mxu0
      %v6132 = vadd.f32 0.0, %v6131
      %v6133 = vpop.f32.mrb[0].mxu0
      %6134 = vmatprep.mubr.bf16.mxu0 0
      %6135 = vmatmul.mubr.bf16.gmra.mrb[0].mxu0 %v6029
      %v6136 = vpop.f32.mrb[0].mxu0
      %v6137 = vadd.f32 0.0, %v6136
      %v6138 = vpop.f32.mrb[0].mxu0
      %v6139 = vpop.f32.mrb[0].mxu0
      %v6140 = vadd.f32 0.0, %v6139
      %v6141 = vpop.f32.mrb[0].mxu0
      %6142 = vmatprep.mubr.bf16.mxu0 0
      %6143 = vmatmul.mubr.bf16.gmra.mrb[0].mxu0 %v6032
      %v6144 = vpop.f32.mrb[0].mxu0
      %v6145 = vadd.f32 0.0, %v6144
      %v6146 = vpop.f32.mrb[0].mxu0
      %v6147 = vpop.f32.mrb[0].mxu0
      %v6148 = vadd.f32 0.0, %v6147
      %v6149 = vpop.f32.mrb[0].mxu0
      %6150 = vmatprep.mubr.bf16.mxu0 0
      %6151 = vmatmul.mubr.bf16.gmra.mrb[0].mxu0 %v6035
      %v6152 = vpop.f32.mrb[0].mxu0
      %v6153 = vadd.f32 0.0, %v6152
      %v6154 = vpop.f32.mrb[0].mxu0
      %v6155 = vpop.f32.mrb[0].mxu0
      %v6156 = vadd.f32 0.0, %v6155
      %v6157 = vpop.f32.mrb[0].mxu0
      %6158 = vmatprep.mubr.bf16.mxu0 0
      %6159 = vmatmul.mubr.bf16.gmra.mrb[0].mxu0 %v6038
      %v6160 = vpop.f32.mrb[0].mxu0
      %v6161 = vadd.f32 0.0, %v6160
      %v6162 = vpop.f32.mrb[0].mxu0
      %v6163 = vpop.f32.mrb[0].mxu0
      %v6164 = vadd.f32 0.0, %v6163
      %v6165 = vpop.f32.mrb[0].mxu0
      %6166 = vmatprep.mubr.bf16.mxu0 0
      %6167 = vmatmul.mubr.bf16.gmra.mrb[0].mxu0 %v6041
      %v6168 = vpop.f32.mrb[0].mxu0
      %v6169 = vadd.f32 0.0, %v6168
      %v6170 = vpop.f32.mrb[0].mxu0
      %v6171 = vpop.f32.mrb[0].mxu0
      %v6172 = vadd.f32 0.0, %v6171
      %v6173 = vpop.f32.mrb[0].mxu0
      %6174 = vmatprep.mubr.bf16.mxu0 0
      %6175 = vmatmul.mubr.bf16.gmra.mrb[0].mxu0 %v6044
      %v6176 = vpop.f32.mrb[0].mxu0
      %v6177 = vadd.f32 0.0, %v6176
      %v6178 = vpop.f32.mrb[0].mxu0
      %v6179 = vpop.f32.mrb[0].mxu0
      %v6180 = vadd.f32 0.0, %v6179
      %v6181 = vpop.f32.mrb[0].mxu0
      %6182 = vmatprep.mubr.bf16.mxu0 0
      %6183 = vmatmul.mubr.bf16.gmra.mrb[0].mxu0 %v6047
      %v6184 = vpop.f32.mrb[0].mxu0
      %v6185 = vadd.f32 0.0, %v6184
      %v6186 = vpop.f32.mrb[0].mxu0
      %v6187 = vpop.f32.mrb[0].mxu0
      %v6188 = vadd.f32 0.0, %v6187
      %v6189 = vpop.f32.mrb[0].mxu0
      %6190 = vmatprep.mubr.bf16.mxu0 0
      %6191 = vmatmul.mubr.bf16.gmra.mrb[0].mxu0 %v6050
      %v6192 = vpop.f32.mrb[0].mxu0
      %v6193 = vadd.f32 0.0, %v6192
      %v6194 = vpop.f32.mrb[0].mxu0
      %v6195 = vpop.f32.mrb[0].mxu0
      %v6196 = vadd.f32 0.0, %v6195
      %v6197 = vpop.f32.mrb[0].mxu0
      %6198 = vmatprep.mubr.bf16.mxu0 0
      %6199 = vmatmul.mubr.bf16.gmra.mrb[0].mxu0 %v6053
      %v6200 = vpop.f32.mrb[0].mxu0
      %v6201 = vadd.f32 0.0, %v6200
      %v6202 = vpop.f32.mrb[0].mxu0
      %v6203 = vpop.f32.mrb[0].mxu0
      %v6204 = vadd.f32 0.0, %v6203
      %v6205 = vpop.f32.mrb[0].mxu0
      %6206 = vmatprep.mubr.bf16.mxu0 0
      %6207 = vmatmul.mubr.bf16.gmra.mrb[0].mxu0 %v6056
      %v6208 = vpop.f32.mrb[0].mxu0
      %v6209 = vadd.f32 0.0, %v6208
      %v6210 = vpop.f32.mrb[0].mxu0
      %v6211 = vpop.f32.mrb[0].mxu0
      %v6212 = vadd.f32 0.0, %v6211
      %v6213 = vpop.f32.mrb[0].mxu0
      %6214 = vmatprep.mubr.bf16.mxu0 0
      %6215 = vmatmul.mubr.bf16.gmra.mrb[0].mxu0 %v6059
      %v6216 = vpop.f32.mrb[0].mxu0
      %v6217 = vadd.f32 0.0, %v6216
      %v6218 = vpop.f32.mrb[0].mxu0
      %v6219 = vpop.f32.mrb[0].mxu0
      %v6220 = vadd.f32 0.0, %v6219
      %v6221 = vpop.f32.mrb[0].mxu0
      %6222 = vmatprep.mubr.bf16.mxu0 0
      %6223 = vmatmul.mubr.bf16.gmra.mrb[0].mxu0 %v6062
      %v6224 = vpop.f32.mrb[0].mxu0
      %v6225 = vadd.f32 0.0, %v6224
      %v6226 = vpop.f32.mrb[0].mxu0
      %v6227 = vpop.f32.mrb[0].mxu0
      %v6228 = vadd.f32 0.0, %v6227
      %v6229 = vpop.f32.mrb[0].mxu0
      %6230 = vmatprep.mubr.bf16.mxu0 0
      %6231 = vmatmul.mubr.bf16.gmra.mrb[0].mxu0 %v6065
      %v6232 = vpop.f32.mrb[0].mxu0
      %v6233 = vadd.f32 0.0, %v6232
      %v6234 = vpop.f32.mrb[0].mxu0
      %v6235 = vpop.f32.mrb[0].mxu0
      %v6236 = vadd.f32 0.0, %v6235
      %v6237 = vpop.f32.mrb[0].mxu0
      %6238 = vmatprep.mubr.bf16.mxu0 0
      %6239 = vmatmul.mubr.bf16.gmra.mrb[0].mxu0 %v6068
      %v6240 = vpop.f32.mrb[0].mxu0
      %v6241 = vadd.f32 0.0, %v6240
      %v6242 = vpop.f32.mrb[0].mxu0
      %v6243 = vpop.f32.mrb[0].mxu0
      %v6244 = vadd.f32 0.0, %v6243
      %v6245 = vpop.f32.mrb[0].mxu0
      %6246 = vdwg.mxu0
      %v6247 = vadd.f32 %v5909, %v6105
      %v6248 = vadd.f32 %v5910, %v6108
      %v6249 = vadd.f32 %v5911, %v6113
      %v6250 = vadd.f32 %v5912, %v6116
      %v6251 = vadd.f32 %v5913, %v6121
      %v6252 = vadd.f32 %v5914, %v6124
      %v6253 = vadd.f32 %v5915, %v6129
      %v6254 = vadd.f32 %v5916, %v6132
      %v6255 = vadd.f32 %v5917, %v6137
      %v6256 = vadd.f32 %v5918, %v6140
      %v6257 = vadd.f32 %v5919, %v6145
      %v6258 = vadd.f32 %v5920, %v6148
      %v6259 = vadd.f32 %v5921, %v6153
      %v6260 = vadd.f32 %v5922, %v6156
      %v6261 = vadd.f32 %v5923, %v6161
      %v6262 = vadd.f32 %v5924, %v6164
      %v6263 = vadd.f32 %v5925, %v6169
      %v6264 = vadd.f32 %v5926, %v6172
      %v6265 = vadd.f32 %v5927, %v6177
      %v6266 = vadd.f32 %v5928, %v6180
      %v6267 = vadd.f32 %v5929, %v6185
      %v6268 = vadd.f32 %v5930, %v6188
      %v6269 = vadd.f32 %v5931, %v6193
      %v6270 = vadd.f32 %v5932, %v6196
      %v6271 = vadd.f32 %v5933, %v6201
      %v6272 = vadd.f32 %v5934, %v6204
      %v6273 = vadd.f32 %v5935, %v6209
      %v6274 = vadd.f32 %v5936, %v6212
      %v6275 = vadd.f32 %v5937, %v6217
      %v6276 = vadd.f32 %v5938, %v6220
      %v6277 = vadd.f32 %v5939, %v6225
      %v6278 = vadd.f32 %v5940, %v6228
      %v6279 = vadd.f32 %v5941, %v6233
      %v6280 = vadd.f32 %v5942, %v6236
      %v6281 = vadd.f32 %v5943, %v6241
      %v6282 = vadd.f32 %v5944, %v6244
      %v6283 = vld [vmem:[#allocation2 + $0x26] sm:$0xff]
      %v6284 = vld [vmem:[#allocation2 + $0x2e] sm:$0xff]
      %v6285 = vld [vmem:[#allocation2 + $0x36] sm:$0xff]
      %v6286 = vld [vmem:[#allocation2 + $0x3e] sm:$0xff]
      %v6287 = vld [vmem:[#allocation2 + $0x46] sm:$0xff]
      %v6288 = vld [vmem:[#allocation2 + $0x4e] sm:$0xff]
      %v6289 = vld [vmem:[#allocation2 + $0x56] sm:$0xff]
      %v6290 = vld [vmem:[#allocation2 + $0x5e] sm:$0xff]
      %v6291 = vld [vmem:[#allocation2 + $0x66] sm:$0xff]
      %v6292 = vld [vmem:[#allocation2 + $0x6e] sm:$0xff]
      %v6293 = vld [vmem:[#allocation2 + $0x76] sm:$0xff]
      %v6294 = vld [vmem:[#allocation2 + $0x7e] sm:$0xff]
      %v6295 = vld [vmem:[#allocation2 + $0x86] sm:$0xff]
      %v6296 = vld [vmem:[#allocation2 + $0x8e] sm:$0xff]
      %v6297 = vld [vmem:[#allocation2 + $0x96] sm:$0xff]
      %v6298 = vld [vmem:[#allocation2 + $0x9e] sm:$0xff]
      %v6299 = vld [vmem:[#allocation2 + $0xa6] sm:$0xff]
      %v6300 = vld [vmem:[#allocation2 + $0xae] sm:$0xff]
      %v6301 = vld [vmem:[#allocation2 + $0xb6] sm:$0xff]
      %v6302 = vld [vmem:[#allocation2 + $0xbe] sm:$0xff]
      %v6303 = vld [vmem:[#allocation2 + $0xc6] sm:$0xff]
      %v6304 = vld [vmem:[#allocation2 + $0xce] sm:$0xff]
      %v6305 = vld [vmem:[#allocation2 + $0xd6] sm:$0xff]
      %v6306 = vld [vmem:[#allocation2 + $0xde] sm:$0xff]
      %v6307 = vld [vmem:[#allocation2 + $0xe6] sm:$0xff]
      %v6308 = vld [vmem:[#allocation2 + $0xee] sm:$0xff]
      %v6309 = vld [vmem:[#allocation2 + $0xf6] sm:$0xff]
      %v6310 = vld [vmem:[#allocation2 + $0xfe] sm:$0xff]
      %v6311 = vld [vmem:[#allocation2 + $0x106] sm:$0xff]
      %v6312 = vld [vmem:[#allocation2 + $0x10e] sm:$0xff]
      %v6313 = vld [vmem:[#allocation2 + $0x116] sm:$0xff]
      %v6314 = vld [vmem:[#allocation2 + $0x11e] sm:$0xff]
      %v6315 = vld [vmem:[#allocation2 + $0x126] sm:$0xff]
      %v6316 = vld [vmem:[#allocation2 + $0x12e] sm:$0xff]
      %v6317 = vld [vmem:[#allocation2 + $0x136] sm:$0xff]
      %v6318 = vld [vmem:[#allocation2 + $0x13e] sm:$0xff]
      %v6319 = vpack.c.bf16 %v6284, %v6283
      %v6320 = vpack.c.bf16 %v6286, %v6285
      %v6321 = vpack.c.bf16 %v6288, %v6287
      %v6322 = vpack.c.bf16 %v6290, %v6289
      %v6323 = vpack.c.bf16 %v6292, %v6291
      %v6324 = vpack.c.bf16 %v6294, %v6293
      %v6325 = vpack.c.bf16 %v6296, %v6295
      %v6326 = vpack.c.bf16 %v6298, %v6297
      %v6327 = vpack.c.bf16 %v6300, %v6299
      %v6328 = vpack.c.bf16 %v6302, %v6301
      %v6329 = vpack.c.bf16 %v6304, %v6303
      %v6330 = vpack.c.bf16 %v6306, %v6305
      %v6331 = vpack.c.bf16 %v6308, %v6307
      %v6332 = vpack.c.bf16 %v6310, %v6309
      %v6333 = vpack.c.bf16 %v6312, %v6311
      %v6334 = vpack.c.bf16 %v6314, %v6313
      %v6335 = vpack.c.bf16 %v6316, %v6315
      %v6336 = vpack.c.bf16 %v6318, %v6317
      %s6337 = scalar_lea.vmem %s3, 128
      %v6338 = vld [vmem:[%s6337] sm:$0xf]
      %v6339 = vld [vmem:[%s6337 + $0x4] sm:$0xf]
      %v6340 = vld [vmem:[%s6337 + $0x8] sm:$0xf]
      %v6341 = vld [vmem:[%s6337 + $0xc] sm:$0xf]
      %v6346 = vunpack.c.l.b16 %v6338
      %v6347 = vunpack.c.l.b16 %v6339
      %v6348 = vunpack.c.l.b16 %v6340
      %v6349 = vunpack.c.l.b16 %v6341
      %v6350 = vpack.c.b16 %v6347, %v6346
      %v6351 = vpack.c.b16 %v6349, %v6348
      %v6355 = vsel %vm3355, %v6319, 0
      %v6358 = vsel %vm3355, %v6320, 0
      %v6361 = vsel %vm3355, %v6321, 0
      %v6364 = vsel %vm3355, %v6322, 0
      %v6367 = vsel %vm3355, %v6323, 0
      %v6370 = vsel %vm3355, %v6324, 0
      %v6373 = vsel %vm3355, %v6325, 0
      %v6376 = vsel %vm3355, %v6326, 0
      %v6379 = vsel %vm3355, %v6327, 0
      %v6382 = vsel %vm3355, %v6328, 0
      %v6385 = vsel %vm3355, %v6329, 0
      %v6388 = vsel %vm3355, %v6330, 0
      %v6391 = vsel %vm3355, %v6331, 0
      %v6394 = vsel %vm3355, %v6332, 0
      %v6397 = vsel %vm3355, %v6333, 0
      %v6400 = vsel %vm3355, %v6334, 0
      %v6403 = vsel %vm3355, %v6335, 0
      %v6406 = vsel %vm3355, %v6336, 0
      %6408 = vmatprep.subr.bf16.mxu0 0
      %6409 = vmatpush1.bf16.msra.mxu0 %v6350
      %6410 = vmatprep.subr.bf16.mxu0 0
      %6411 = vmatpush1.bf16.msra.mxu0 %v6351
      %6412 = vmatprep.subr.bf16.mxu0 0
      %6413 = vmatpush1.bf16.msra.mxu0 0
      %6414 = vmatprep.subr.bf16.mxu0 0
      %6415 = vmatpush1.bf16.msra.mxu0 0
      %6416 = vmatprep.subr.bf16.mxu0 0
      %6417 = vmatpush1.bf16.msra.mxu0 0
      %6418 = vmatprep.subr.bf16.mxu0 0
      %6419 = vmatpush1.bf16.msra.mxu0 0
      %6420 = vmatprep.subr.bf16.mxu0 0
      %6421 = vmatpush1.bf16.msra.mxu0 0
      %6422 = vmatprep.subr.bf16.mxu0 0
      %6423 = vmatpush1.bf16.msra.mxu0 0
      %6424 = vmatprep.subr.bf16.mxu0 0
      %6425 = vmatpush1.bf16.msra.mxu0 0
      %6426 = vmatprep.subr.bf16.mxu0 0
      %6427 = vmatpush1.bf16.msra.mxu0 0
      %6428 = vmatprep.subr.bf16.mxu0 0
      %6429 = vmatpush1.bf16.msra.mxu0 0
      %6430 = vmatprep.subr.bf16.mxu0 0
      %6431 = vmatpush1.bf16.msra.mxu0 0
      %6432 = vmatprep.subr.bf16.mxu0 0
      %6433 = vmatpush1.bf16.msra.mxu0 0
      %6434 = vmatprep.subr.bf16.mxu0 0
      %6435 = vmatpush1.bf16.msra.mxu0 0
      %6436 = vmatprep.subr.bf16.mxu0 0
      %6437 = vmatpush1.bf16.msra.mxu0 0
      %6438 = vmatprep.subr.bf16.mxu0 0
      %6439 = vmatpush1.bf16.msra.mxu0 0
      %6440 = vmatprep.mubr.bf16.mxu0 0
      %6441 = vmatmul.mubr.bf16.gmra.mrb[0].mxu0 %v6355
      %v6442 = vpop.f32.mrb[0].mxu0
      %v6443 = vadd.f32 0.0, %v6442
      %v6444 = vpop.f32.mrb[0].mxu0
      %v6445 = vpop.f32.mrb[0].mxu0
      %v6446 = vadd.f32 0.0, %v6445
      %v6447 = vpop.f32.mrb[0].mxu0
      %6448 = vmatprep.mubr.bf16.mxu0 0
      %6449 = vmatmul.mubr.bf16.gmra.mrb[0].mxu0 %v6358
      %v6450 = vpop.f32.mrb[0].mxu0
      %v6451 = vadd.f32 0.0, %v6450
      %v6452 = vpop.f32.mrb[0].mxu0
      %v6453 = vpop.f32.mrb[0].mxu0
      %v6454 = vadd.f32 0.0, %v6453
      %v6455 = vpop.f32.mrb[0].mxu0
      %6456 = vmatprep.mubr.bf16.mxu0 0
      %6457 = vmatmul.mubr.bf16.gmra.mrb[0].mxu0 %v6361
      %v6458 = vpop.f32.mrb[0].mxu0
      %v6459 = vadd.f32 0.0, %v6458
      %v6460 = vpop.f32.mrb[0].mxu0
      %v6461 = vpop.f32.mrb[0].mxu0
      %v6462 = vadd.f32 0.0, %v6461
      %v6463 = vpop.f32.mrb[0].mxu0
      %6464 = vmatprep.mubr.bf16.mxu0 0
      %6465 = vmatmul.mubr.bf16.gmra.mrb[0].mxu0 %v6364
      %v6466 = vpop.f32.mrb[0].mxu0
      %v6467 = vadd.f32 0.0, %v6466
      %v6468 = vpop.f32.mrb[0].mxu0
      %v6469 = vpop.f32.mrb[0].mxu0
      %v6470 = vadd.f32 0.0, %v6469
      %v6471 = vpop.f32.mrb[0].mxu0
      %6472 = vmatprep.mubr.bf16.mxu0 0
      %6473 = vmatmul.mubr.bf16.gmra.mrb[0].mxu0 %v6367
      %v6474 = vpop.f32.mrb[0].mxu0
      %v6475 = vadd.f32 0.0, %v6474
      %v6476 = vpop.f32.mrb[0].mxu0
      %v6477 = vpop.f32.mrb[0].mxu0
      %v6478 = vadd.f32 0.0, %v6477
      %v6479 = vpop.f32.mrb[0].mxu0
      %6480 = vmatprep.mubr.bf16.mxu0 0
      %6481 = vmatmul.mubr.bf16.gmra.mrb[0].mxu0 %v6370
      %v6482 = vpop.f32.mrb[0].mxu0
      %v6483 = vadd.f32 0.0, %v6482
      %v6484 = vpop.f32.mrb[0].mxu0
      %v6485 = vpop.f32.mrb[0].mxu0
      %v6486 = vadd.f32 0.0, %v6485
      %v6487 = vpop.f32.mrb[0].mxu0
      %6488 = vmatprep.mubr.bf16.mxu0 0
      %6489 = vmatmul.mubr.bf16.gmra.mrb[0].mxu0 %v6373
      %v6490 = vpop.f32.mrb[0].mxu0
      %v6491 = vadd.f32 0.0, %v6490
      %v6492 = vpop.f32.mrb[0].mxu0
      %v6493 = vpop.f32.mrb[0].mxu0
      %v6494 = vadd.f32 0.0, %v6493
      %v6495 = vpop.f32.mrb[0].mxu0
      %6496 = vmatprep.mubr.bf16.mxu0 0
      %6497 = vmatmul.mubr.bf16.gmra.mrb[0].mxu0 %v6376
      %v6498 = vpop.f32.mrb[0].mxu0
      %v6499 = vadd.f32 0.0, %v6498
      %v6500 = vpop.f32.mrb[0].mxu0
      %v6501 = vpop.f32.mrb[0].mxu0
      %v6502 = vadd.f32 0.0, %v6501
      %v6503 = vpop.f32.mrb[0].mxu0
      %6504 = vmatprep.mubr.bf16.mxu0 0
      %6505 = vmatmul.mubr.bf16.gmra.mrb[0].mxu0 %v6379
      %v6506 = vpop.f32.mrb[0].mxu0
      %v6507 = vadd.f32 0.0, %v6506
      %v6508 = vpop.f32.mrb[0].mxu0
      %v6509 = vpop.f32.mrb[0].mxu0
      %v6510 = vadd.f32 0.0, %v6509
      %v6511 = vpop.f32.mrb[0].mxu0
      %6512 = vmatprep.mubr.bf16.mxu0 0
      %6513 = vmatmul.mubr.bf16.gmra.mrb[0].mxu0 %v6382
      %v6514 = vpop.f32.mrb[0].mxu0
      %v6515 = vadd.f32 0.0, %v6514
      %v6516 = vpop.f32.mrb[0].mxu0
      %v6517 = vpop.f32.mrb[0].mxu0
      %v6518 = vadd.f32 0.0, %v6517
      %v6519 = vpop.f32.mrb[0].mxu0
      %6520 = vmatprep.mubr.bf16.mxu0 0
      %6521 = vmatmul.mubr.bf16.gmra.mrb[0].mxu0 %v6385
      %v6522 = vpop.f32.mrb[0].mxu0
      %v6523 = vadd.f32 0.0, %v6522
      %v6524 = vpop.f32.mrb[0].mxu0
      %v6525 = vpop.f32.mrb[0].mxu0
      %v6526 = vadd.f32 0.0, %v6525
      %v6527 = vpop.f32.mrb[0].mxu0
      %6528 = vmatprep.mubr.bf16.mxu0 0
      %6529 = vmatmul.mubr.bf16.gmra.mrb[0].mxu0 %v6388
      %v6530 = vpop.f32.mrb[0].mxu0
      %v6531 = vadd.f32 0.0, %v6530
      %v6532 = vpop.f32.mrb[0].mxu0
      %v6533 = vpop.f32.mrb[0].mxu0
      %v6534 = vadd.f32 0.0, %v6533
      %v6535 = vpop.f32.mrb[0].mxu0
      %6536 = vmatprep.mubr.bf16.mxu0 0
      %6537 = vmatmul.mubr.bf16.gmra.mrb[0].mxu0 %v6391
      %v6538 = vpop.f32.mrb[0].mxu0
      %v6539 = vadd.f32 0.0, %v6538
      %v6540 = vpop.f32.mrb[0].mxu0
      %v6541 = vpop.f32.mrb[0].mxu0
      %v6542 = vadd.f32 0.0, %v6541
      %v6543 = vpop.f32.mrb[0].mxu0
      %6544 = vmatprep.mubr.bf16.mxu0 0
      %6545 = vmatmul.mubr.bf16.gmra.mrb[0].mxu0 %v6394
      %v6546 = vpop.f32.mrb[0].mxu0
      %v6547 = vadd.f32 0.0, %v6546
      %v6548 = vpop.f32.mrb[0].mxu0
      %v6549 = vpop.f32.mrb[0].mxu0
      %v6550 = vadd.f32 0.0, %v6549
      %v6551 = vpop.f32.mrb[0].mxu0
      %6552 = vmatprep.mubr.bf16.mxu0 0
      %6553 = vmatmul.mubr.bf16.gmra.mrb[0].mxu0 %v6397
      %v6554 = vpop.f32.mrb[0].mxu0
      %v6555 = vadd.f32 0.0, %v6554
      %v6556 = vpop.f32.mrb[0].mxu0
      %v6557 = vpop.f32.mrb[0].mxu0
      %v6558 = vadd.f32 0.0, %v6557
      %v6559 = vpop.f32.mrb[0].mxu0
      %6560 = vmatprep.mubr.bf16.mxu0 0
      %6561 = vmatmul.mubr.bf16.gmra.mrb[0].mxu0 %v6400
      %v6562 = vpop.f32.mrb[0].mxu0
      %v6563 = vadd.f32 0.0, %v6562
      %v6564 = vpop.f32.mrb[0].mxu0
      %v6565 = vpop.f32.mrb[0].mxu0
      %v6566 = vadd.f32 0.0, %v6565
      %v6567 = vpop.f32.mrb[0].mxu0
      %6568 = vmatprep.mubr.bf16.mxu0 0
      %6569 = vmatmul.mubr.bf16.gmra.mrb[0].mxu0 %v6403
      %v6570 = vpop.f32.mrb[0].mxu0
      %v6571 = vadd.f32 0.0, %v6570
      %v6572 = vpop.f32.mrb[0].mxu0
      %v6573 = vpop.f32.mrb[0].mxu0
      %v6574 = vadd.f32 0.0, %v6573
      %v6575 = vpop.f32.mrb[0].mxu0
      %6576 = vmatprep.mubr.bf16.mxu0 0
      %6577 = vmatmul.mubr.bf16.gmra.mrb[0].mxu0 %v6406
      %v6578 = vpop.f32.mrb[0].mxu0
      %v6579 = vadd.f32 0.0, %v6578
      %v6580 = vpop.f32.mrb[0].mxu0
      %v6581 = vpop.f32.mrb[0].mxu0
      %v6582 = vadd.f32 0.0, %v6581
      %v6583 = vpop.f32.mrb[0].mxu0
      %6584 = vdwg.mxu0
      %v6585 = vadd.f32 %v6247, %v6443
      %v6586 = vadd.f32 %v6248, %v6446
      %v6587 = vadd.f32 %v6249, %v6451
      %v6588 = vadd.f32 %v6250, %v6454
      %v6589 = vadd.f32 %v6251, %v6459
      %v6590 = vadd.f32 %v6252, %v6462
      %v6591 = vadd.f32 %v6253, %v6467
      %v6592 = vadd.f32 %v6254, %v6470
      %v6593 = vadd.f32 %v6255, %v6475
      %v6594 = vadd.f32 %v6256, %v6478
      %v6595 = vadd.f32 %v6257, %v6483
      %v6596 = vadd.f32 %v6258, %v6486
      %v6597 = vadd.f32 %v6259, %v6491
      %v6598 = vadd.f32 %v6260, %v6494
      %v6599 = vadd.f32 %v6261, %v6499
      %v6600 = vadd.f32 %v6262, %v6502
      %v6601 = vadd.f32 %v6263, %v6507
      %v6602 = vadd.f32 %v6264, %v6510
      %v6603 = vadd.f32 %v6265, %v6515
      %v6604 = vadd.f32 %v6266, %v6518
      %v6605 = vadd.f32 %v6267, %v6523
      %v6606 = vadd.f32 %v6268, %v6526
      %v6607 = vadd.f32 %v6269, %v6531
      %v6608 = vadd.f32 %v6270, %v6534
      %v6609 = vadd.f32 %v6271, %v6539
      %v6610 = vadd.f32 %v6272, %v6542
      %v6611 = vadd.f32 %v6273, %v6547
      %v6612 = vadd.f32 %v6274, %v6550
      %v6613 = vadd.f32 %v6275, %v6555
      %v6614 = vadd.f32 %v6276, %v6558
      %v6615 = vadd.f32 %v6277, %v6563
      %v6616 = vadd.f32 %v6278, %v6566
      %v6617 = vadd.f32 %v6279, %v6571
      %v6618 = vadd.f32 %v6280, %v6574
      %v6619 = vadd.f32 %v6281, %v6579
      %v6620 = vadd.f32 %v6282, %v6582
      %v6621 = vld [vmem:[%s4] sm:$0x1]
      %v6623 = vlaneseq
      %v6624 = vshrl.u32 %v6623, 7
      %v6625 = vsub.s32 0, %v6624
      %v6626 = vrot.slane %v6621, %v6625
      %v6628 = vadd.f32 %v6585, %v6626
      %v6629 = vadd.f32 %v6586, %v6626
      %v6630 = vadd.f32 %v6587, %v6626
      %v6631 = vadd.f32 %v6588, %v6626
      %v6632 = vadd.f32 %v6589, %v6626
      %v6633 = vadd.f32 %v6590, %v6626
      %v6634 = vadd.f32 %v6591, %v6626
      %v6635 = vadd.f32 %v6592, %v6626
      %v6636 = vadd.f32 %v6593, %v6626
      %v6637 = vadd.f32 %v6594, %v6626
      %v6638 = vadd.f32 %v6595, %v6626
      %v6639 = vadd.f32 %v6596, %v6626
      %v6640 = vadd.f32 %v6597, %v6626
      %v6641 = vadd.f32 %v6598, %v6626
      %v6642 = vadd.f32 %v6599, %v6626
      %v6643 = vadd.f32 %v6600, %v6626
      %v6644 = vadd.f32 %v6601, %v6626
      %v6645 = vadd.f32 %v6602, %v6626
      %v6646 = vadd.f32 %v6603, %v6626
      %v6647 = vadd.f32 %v6604, %v6626
      %v6648 = vadd.f32 %v6605, %v6626
      %v6649 = vadd.f32 %v6606, %v6626
      %v6650 = vadd.f32 %v6607, %v6626
      %v6651 = vadd.f32 %v6608, %v6626
      %v6652 = vadd.f32 %v6609, %v6626
      %v6653 = vadd.f32 %v6610, %v6626
      %v6654 = vadd.f32 %v6611, %v6626
      %v6655 = vadd.f32 %v6612, %v6626
      %v6656 = vadd.f32 %v6613, %v6626
      %v6657 = vadd.f32 %v6614, %v6626
      %v6658 = vadd.f32 %v6615, %v6626
      %v6659 = vadd.f32 %v6616, %v6626
      %v6660 = vadd.f32 %v6617, %v6626
      %v6661 = vadd.f32 %v6618, %v6626
      %v6662 = vadd.f32 %v6619, %v6626
      %v6663 = vadd.f32 %v6620, %v6626
      %v6664 = vmax.f32 %v6628, 0.0
      %v6665 = vmax.f32 %v6629, 0.0
      %v6666 = vmax.f32 %v6630, 0.0
      %v6667 = vmax.f32 %v6631, 0.0
      %v6668 = vmax.f32 %v6632, 0.0
      %v6669 = vmax.f32 %v6633, 0.0
      %v6670 = vmax.f32 %v6634, 0.0
      %v6671 = vmax.f32 %v6635, 0.0
      %v6672 = vmax.f32 %v6636, 0.0
      %v6673 = vmax.f32 %v6637, 0.0
      %v6674 = vmax.f32 %v6638, 0.0
      %v6675 = vmax.f32 %v6639, 0.0
      %v6676 = vmax.f32 %v6640, 0.0
      %v6677 = vmax.f32 %v6641, 0.0
      %v6678 = vmax.f32 %v6642, 0.0
      %v6679 = vmax.f32 %v6643, 0.0
      %v6680 = vmax.f32 %v6644, 0.0
      %v6681 = vmax.f32 %v6645, 0.0
      %v6682 = vmax.f32 %v6646, 0.0
      %v6683 = vmax.f32 %v6647, 0.0
      %v6684 = vmax.f32 %v6648, 0.0
      %v6685 = vmax.f32 %v6649, 0.0
      %v6686 = vmax.f32 %v6650, 0.0
      %v6687 = vmax.f32 %v6651, 0.0
      %v6688 = vmax.f32 %v6652, 0.0
      %v6689 = vmax.f32 %v6653, 0.0
      %v6690 = vmax.f32 %v6654, 0.0
      %v6691 = vmax.f32 %v6655, 0.0
      %v6692 = vmax.f32 %v6656, 0.0
      %v6693 = vmax.f32 %v6657, 0.0
      %v6694 = vmax.f32 %v6658, 0.0
      %v6695 = vmax.f32 %v6659, 0.0
      %v6696 = vmax.f32 %v6660, 0.0
      %v6697 = vmax.f32 %v6661, 0.0
      %v6698 = vmax.f32 %v6662, 0.0
      %v6699 = vmax.f32 %v6663, 0.0
      %v6700 = vpack.c.bf16 %v6665, %v6664
      %v6701 = vpack.c.bf16 %v6667, %v6666
      %v6702 = vpack.c.bf16 %v6669, %v6668
      %v6703 = vpack.c.bf16 %v6671, %v6670
      %v6704 = vpack.c.bf16 %v6673, %v6672
      %v6705 = vpack.c.bf16 %v6675, %v6674
      %v6706 = vpack.c.bf16 %v6677, %v6676
      %v6707 = vpack.c.bf16 %v6679, %v6678
      %v6708 = vpack.c.bf16 %v6681, %v6680
      %v6709 = vpack.c.bf16 %v6683, %v6682
      %v6710 = vpack.c.bf16 %v6685, %v6684
      %v6711 = vpack.c.bf16 %v6687, %v6686
      %v6712 = vpack.c.bf16 %v6689, %v6688
      %v6713 = vpack.c.bf16 %v6691, %v6690
      %v6714 = vpack.c.bf16 %v6693, %v6692
      %v6715 = vpack.c.bf16 %v6695, %v6694
      %v6716 = vpack.c.bf16 %v6697, %v6696
      %v6717 = vpack.c.bf16 %v6699, %v6698
      %v6718 = vld [vmem:[%s5] sm:$0xf]
      %v6719 = vld [vmem:[%s5 + $0x4] sm:$0xf]
      %v6720 = vld [vmem:[%s5 + $0x8] sm:$0xf]
      %v6721 = vld [vmem:[%s5 + $0xc] sm:$0xf]
      %v6722 = vld [vmem:[%s6] sm:$0x1]
      %v6724 = vlaneseq
      %v6725 = vshrl.u32 %v6724, 7
      %v6726 = vsub.s32 0, %v6725
      %v6727 = vrot.slane %v6722, %v6726
      %v6733 = vunpack.c.l.b16 %v6718
      %v6734 = vunpack.c.l.b16 %v6719
      %v6735 = vunpack.c.l.b16 %v6720
      %v6736 = vunpack.c.l.b16 %v6721
      %v6737 = vpack.c.b16 %v6734, %v6733
      %v6738 = vpack.c.b16 %v6736, %v6735
      %v6742 = vsel %vm3355, %v6700, 0
      %v6745 = vsel %vm3355, %v6701, 0
      %v6748 = vsel %vm3355, %v6702, 0
      %v6751 = vsel %vm3355, %v6703, 0
      %v6754 = vsel %vm3355, %v6704, 0
      %v6757 = vsel %vm3355, %v6705, 0
      %v6760 = vsel %vm3355, %v6706, 0
      %v6763 = vsel %vm3355, %v6707, 0
      %v6766 = vsel %vm3355, %v6708, 0
      %v6769 = vsel %vm3355, %v6709, 0
      %v6772 = vsel %vm3355, %v6710, 0
      %v6775 = vsel %vm3355, %v6711, 0
      %v6778 = vsel %vm3355, %v6712, 0
      %v6781 = vsel %vm3355, %v6713, 0
      %v6784 = vsel %vm3355, %v6714, 0
      %v6787 = vsel %vm3355, %v6715, 0
      %v6790 = vsel %vm3355, %v6716, 0
      %v6793 = vsel %vm3355, %v6717, 0
      %6795 = vmatprep.subr.bf16.mxu0 0
      %6796 = vmatpush1.bf16.msra.mxu0 %v6737
      %6797 = vmatprep.subr.bf16.mxu0 0
      %6798 = vmatpush1.bf16.msra.mxu0 %v6738
      %6799 = vmatprep.subr.bf16.mxu0 0
      %6800 = vmatpush1.bf16.msra.mxu0 0
      %6801 = vmatprep.subr.bf16.mxu0 0
      %6802 = vmatpush1.bf16.msra.mxu0 0
      %6803 = vmatprep.subr.bf16.mxu0 0
      %6804 = vmatpush1.bf16.msra.mxu0 0
      %6805 = vmatprep.subr.bf16.mxu0 0
      %6806 = vmatpush1.bf16.msra.mxu0 0
      %6807 = vmatprep.subr.bf16.mxu0 0
      %6808 = vmatpush1.bf16.msra.mxu0 0
      %6809 = vmatprep.subr.bf16.mxu0 0
      %6810 = vmatpush1.bf16.msra.mxu0 0
      %6811 = vmatprep.subr.bf16.mxu0 0
      %6812 = vmatpush1.bf16.msra.mxu0 0
      %6813 = vmatprep.subr.bf16.mxu0 0
      %6814 = vmatpush1.bf16.msra.mxu0 0
      %6815 = vmatprep.subr.bf16.mxu0 0
      %6816 = vmatpush1.bf16.msra.mxu0 0
      %6817 = vmatprep.subr.bf16.mxu0 0
      %6818 = vmatpush1.bf16.msra.mxu0 0
      %6819 = vmatprep.subr.bf16.mxu0 0
      %6820 = vmatpush1.bf16.msra.mxu0 0
      %6821 = vmatprep.subr.bf16.mxu0 0
      %6822 = vmatpush1.bf16.msra.mxu0 0
      %6823 = vmatprep.subr.bf16.mxu0 0
      %6824 = vmatpush1.bf16.msra.mxu0 0
      %6825 = vmatprep.subr.bf16.mxu0 0
      %6826 = vmatpush1.bf16.msra.mxu0 0
      %6827 = vmatprep.mubr.bf16.mxu0 0
      %6828 = vmatmul.mubr.bf16.gmra.mrb[0].mxu0 %v6742
      %v6829 = vpop.f32.mrb[0].mxu0
      %v6830 = vadd.f32 %v6727, %v6829
      %v6831 = vpop.f32.mrb[0].mxu0
      %v6832 = vpop.f32.mrb[0].mxu0
      %v6833 = vadd.f32 %v6727, %v6832
      %v6834 = vpop.f32.mrb[0].mxu0
      %6835 = vmatprep.mubr.bf16.mxu0 0
      %6836 = vmatmul.mubr.bf16.gmra.mrb[0].mxu0 %v6745
      %v6837 = vpop.f32.mrb[0].mxu0
      %v6838 = vadd.f32 %v6727, %v6837
      %v6839 = vpop.f32.mrb[0].mxu0
      %v6840 = vpop.f32.mrb[0].mxu0
      %v6841 = vadd.f32 %v6727, %v6840
      %v6842 = vpop.f32.mrb[0].mxu0
      %6843 = vmatprep.mubr.bf16.mxu0 0
      %6844 = vmatmul.mubr.bf16.gmra.mrb[0].mxu0 %v6748
      %v6845 = vpop.f32.mrb[0].mxu0
      %v6846 = vadd.f32 %v6727, %v6845
      %v6847 = vpop.f32.mrb[0].mxu0
      %v6848 = vpop.f32.mrb[0].mxu0
      %v6849 = vadd.f32 %v6727, %v6848
      %v6850 = vpop.f32.mrb[0].mxu0
      %6851 = vmatprep.mubr.bf16.mxu0 0
      %6852 = vmatmul.mubr.bf16.gmra.mrb[0].mxu0 %v6751
      %v6853 = vpop.f32.mrb[0].mxu0
      %v6854 = vadd.f32 %v6727, %v6853
      %v6855 = vpop.f32.mrb[0].mxu0
      %v6856 = vpop.f32.mrb[0].mxu0
      %v6857 = vadd.f32 %v6727, %v6856
      %v6858 = vpop.f32.mrb[0].mxu0
      %6859 = vmatprep.mubr.bf16.mxu0 0
      %6860 = vmatmul.mubr.bf16.gmra.mrb[0].mxu0 %v6754
      %v6861 = vpop.f32.mrb[0].mxu0
      %v6862 = vadd.f32 %v6727, %v6861
      %v6863 = vpop.f32.mrb[0].mxu0
      %v6864 = vpop.f32.mrb[0].mxu0
      %v6865 = vadd.f32 %v6727, %v6864
      %v6866 = vpop.f32.mrb[0].mxu0
      %6867 = vmatprep.mubr.bf16.mxu0 0
      %6868 = vmatmul.mubr.bf16.gmra.mrb[0].mxu0 %v6757
      %v6869 = vpop.f32.mrb[0].mxu0
      %v6870 = vadd.f32 %v6727, %v6869
      %v6871 = vpop.f32.mrb[0].mxu0
      %v6872 = vpop.f32.mrb[0].mxu0
      %v6873 = vadd.f32 %v6727, %v6872
      %v6874 = vpop.f32.mrb[0].mxu0
      %6875 = vmatprep.mubr.bf16.mxu0 0
      %6876 = vmatmul.mubr.bf16.gmra.mrb[0].mxu0 %v6760
      %v6877 = vpop.f32.mrb[0].mxu0
      %v6878 = vadd.f32 %v6727, %v6877
      %v6879 = vpop.f32.mrb[0].mxu0
      %v6880 = vpop.f32.mrb[0].mxu0
      %v6881 = vadd.f32 %v6727, %v6880
      %v6882 = vpop.f32.mrb[0].mxu0
      %6883 = vmatprep.mubr.bf16.mxu0 0
      %6884 = vmatmul.mubr.bf16.gmra.mrb[0].mxu0 %v6763
      %v6885 = vpop.f32.mrb[0].mxu0
      %v6886 = vadd.f32 %v6727, %v6885
      %v6887 = vpop.f32.mrb[0].mxu0
      %v6888 = vpop.f32.mrb[0].mxu0
      %v6889 = vadd.f32 %v6727, %v6888
      %v6890 = vpop.f32.mrb[0].mxu0
      %6891 = vmatprep.mubr.bf16.mxu0 0
      %6892 = vmatmul.mubr.bf16.gmra.mrb[0].mxu0 %v6766
      %v6893 = vpop.f32.mrb[0].mxu0
      %v6894 = vadd.f32 %v6727, %v6893
      %v6895 = vpop.f32.mrb[0].mxu0
      %v6896 = vpop.f32.mrb[0].mxu0
      %v6897 = vadd.f32 %v6727, %v6896
      %v6898 = vpop.f32.mrb[0].mxu0
      %6899 = vmatprep.mubr.bf16.mxu0 0
      %6900 = vmatmul.mubr.bf16.gmra.mrb[0].mxu0 %v6769
      %v6901 = vpop.f32.mrb[0].mxu0
      %v6902 = vadd.f32 %v6727, %v6901
      %v6903 = vpop.f32.mrb[0].mxu0
      %v6904 = vpop.f32.mrb[0].mxu0
      %v6905 = vadd.f32 %v6727, %v6904
      %v6906 = vpop.f32.mrb[0].mxu0
      %6907 = vmatprep.mubr.bf16.mxu0 0
      %6908 = vmatmul.mubr.bf16.gmra.mrb[0].mxu0 %v6772
      %v6909 = vpop.f32.mrb[0].mxu0
      %v6910 = vadd.f32 %v6727, %v6909
      %v6911 = vpop.f32.mrb[0].mxu0
      %v6912 = vpop.f32.mrb[0].mxu0
      %v6913 = vadd.f32 %v6727, %v6912
      %v6914 = vpop.f32.mrb[0].mxu0
      %6915 = vmatprep.mubr.bf16.mxu0 0
      %6916 = vmatmul.mubr.bf16.gmra.mrb[0].mxu0 %v6775
      %v6917 = vpop.f32.mrb[0].mxu0
      %v6918 = vadd.f32 %v6727, %v6917
      %v6919 = vpop.f32.mrb[0].mxu0
      %v6920 = vpop.f32.mrb[0].mxu0
      %v6921 = vadd.f32 %v6727, %v6920
      %v6922 = vpop.f32.mrb[0].mxu0
      %6923 = vmatprep.mubr.bf16.mxu0 0
      %6924 = vmatmul.mubr.bf16.gmra.mrb[0].mxu0 %v6778
      %v6925 = vpop.f32.mrb[0].mxu0
      %v6926 = vadd.f32 %v6727, %v6925
      %v6927 = vpop.f32.mrb[0].mxu0
      %v6928 = vpop.f32.mrb[0].mxu0
      %v6929 = vadd.f32 %v6727, %v6928
      %v6930 = vpop.f32.mrb[0].mxu0
      %6931 = vmatprep.mubr.bf16.mxu0 0
      %6932 = vmatmul.mubr.bf16.gmra.mrb[0].mxu0 %v6781
      %v6933 = vpop.f32.mrb[0].mxu0
      %v6934 = vadd.f32 %v6727, %v6933
      %v6935 = vpop.f32.mrb[0].mxu0
      %v6936 = vpop.f32.mrb[0].mxu0
      %v6937 = vadd.f32 %v6727, %v6936
      %v6938 = vpop.f32.mrb[0].mxu0
      %6939 = vmatprep.mubr.bf16.mxu0 0
      %6940 = vmatmul.mubr.bf16.gmra.mrb[0].mxu0 %v6784
      %v6941 = vpop.f32.mrb[0].mxu0
      %v6942 = vadd.f32 %v6727, %v6941
      %v6943 = vpop.f32.mrb[0].mxu0
      %v6944 = vpop.f32.mrb[0].mxu0
      %v6945 = vadd.f32 %v6727, %v6944
      %v6946 = vpop.f32.mrb[0].mxu0
      %6947 = vmatprep.mubr.bf16.mxu0 0
      %6948 = vmatmul.mubr.bf16.gmra.mrb[0].mxu0 %v6787
      %v6949 = vpop.f32.mrb[0].mxu0
      %v6950 = vadd.f32 %v6727, %v6949
      %v6951 = vpop.f32.mrb[0].mxu0
      %v6952 = vpop.f32.mrb[0].mxu0
      %v6953 = vadd.f32 %v6727, %v6952
      %v6954 = vpop.f32.mrb[0].mxu0
      %6955 = vmatprep.mubr.bf16.mxu0 0
      %6956 = vmatmul.mubr.bf16.gmra.mrb[0].mxu0 %v6790
      %v6957 = vpop.f32.mrb[0].mxu0
      %v6958 = vadd.f32 %v6727, %v6957
      %v6959 = vpop.f32.mrb[0].mxu0
      %v6960 = vpop.f32.mrb[0].mxu0
      %v6961 = vadd.f32 %v6727, %v6960
      %v6962 = vpop.f32.mrb[0].mxu0
      %6963 = vmatprep.mubr.bf16.mxu0 0
      %6964 = vmatmul.mubr.bf16.gmra.mrb[0].mxu0 %v6793
      %v6965 = vpop.f32.mrb[0].mxu0
      %v6966 = vadd.f32 %v6727, %v6965
      %v6967 = vpop.f32.mrb[0].mxu0
      %v6968 = vpop.f32.mrb[0].mxu0
      %v6969 = vadd.f32 %v6727, %v6968
      %v6970 = vpop.f32.mrb[0].mxu0
      %6971 = vdwg.mxu0
      %v6972 = vmin.f32 %v6830, 4.1351666
      %v6973 = vmin.f32 %v6833, 4.1351666
      %v6974 = vmin.f32 %v6838, 4.1351666
      %v6975 = vmin.f32 %v6841, 4.1351666
      %v6976 = vmin.f32 %v6846, 4.1351666
      %v6977 = vmin.f32 %v6849, 4.1351666
      %v6978 = vmin.f32 %v6854, 4.1351666
      %v6979 = vmin.f32 %v6857, 4.1351666
      %v6980 = vmin.f32 %v6862, 4.1351666
      %v6981 = vmin.f32 %v6865, 4.1351666
      %v6982 = vmin.f32 %v6870, 4.1351666
      %v6983 = vmin.f32 %v6873, 4.1351666
      %v6984 = vmin.f32 %v6878, 4.1351666
      %v6985 = vmin.f32 %v6881, 4.1351666
      %v6986 = vmin.f32 %v6886, 4.1351666
      %v6987 = vmin.f32 %v6889, 4.1351666
      %v6988 = vmin.f32 %v6894, 4.1351666
      %v6989 = vmin.f32 %v6897, 4.1351666
      %v6990 = vmin.f32 %v6902, 4.1351666
      %v6991 = vmin.f32 %v6905, 4.1351666
      %v6992 = vmin.f32 %v6910, 4.1351666
      %v6993 = vmin.f32 %v6913, 4.1351666
      %v6994 = vmin.f32 %v6918, 4.1351666
      %v6995 = vmin.f32 %v6921, 4.1351666
      %v6996 = vmin.f32 %v6926, 4.1351666
      %v6997 = vmin.f32 %v6929, 4.1351666
      %v6998 = vmin.f32 %v6934, 4.1351666
      %v6999 = vmin.f32 %v6937, 4.1351666
      %v7000 = vmin.f32 %v6942, 4.1351666
      %v7001 = vmin.f32 %v6945, 4.1351666
      %v7002 = vmin.f32 %v6950, 4.1351666
      %v7003 = vmin.f32 %v6953, 4.1351666
      %v7004 = vmin.f32 %v6958, 4.1351666
      %v7005 = vmin.f32 %v6961, 4.1351666
      %v7006 = vmin.f32 %v6966, 4.1351666
      %v7007 = vmin.f32 %v6969, 4.1351666
      %v7008 = vld [vmem:[%s7] sm:$0xff]
      %v7009 = vld [vmem:[%s7 + $0x8] sm:$0xff]
      %v7010 = vld [vmem:[%s7 + $0x10] sm:$0xff]
      %v7011 = vld [vmem:[%s7 + $0x18] sm:$0xff]
      %v7012 = vld [vmem:[%s7 + $0x20] sm:$0xff]
      %v7013 = vld [vmem:[%s7 + $0x28] sm:$0xff]
      %v7014 = vld [vmem:[%s7 + $0x30] sm:$0xff]
      %v7015 = vld [vmem:[%s7 + $0x38] sm:$0xff]
      %v7016 = vld [vmem:[%s7 + $0x40] sm:$0xff]
      %v7017 = vld [vmem:[%s7 + $0x48] sm:$0xff]
      %v7018 = vld [vmem:[%s7 + $0x50] sm:$0xff]
      %v7019 = vld [vmem:[%s7 + $0x58] sm:$0xff]
      %v7020 = vld [vmem:[%s7 + $0x60] sm:$0xff]
      %v7021 = vld [vmem:[%s7 + $0x68] sm:$0xff]
      %v7022 = vld [vmem:[%s7 + $0x70] sm:$0xff]
      %v7023 = vld [vmem:[%s7 + $0x78] sm:$0xff]
      %v7024 = vld [vmem:[%s7 + $0x80] sm:$0xff]
      %v7025 = vld [vmem:[%s7 + $0x88] sm:$0xff]
      %v7026 = vld [vmem:[%s7 + $0x90] sm:$0xff]
      %v7027 = vld [vmem:[%s7 + $0x98] sm:$0xff]
      %v7028 = vld [vmem:[%s7 + $0xa0] sm:$0xff]
      %v7029 = vld [vmem:[%s7 + $0xa8] sm:$0xff]
      %v7030 = vld [vmem:[%s7 + $0xb0] sm:$0xff]
      %v7031 = vld [vmem:[%s7 + $0xb8] sm:$0xff]
      %v7032 = vld [vmem:[%s7 + $0xc0] sm:$0xff]
      %v7033 = vld [vmem:[%s7 + $0xc8] sm:$0xff]
      %v7034 = vld [vmem:[%s7 + $0xd0] sm:$0xff]
      %v7035 = vld [vmem:[%s7 + $0xd8] sm:$0xff]
      %v7036 = vld [vmem:[%s7 + $0xe0] sm:$0xff]
      %v7037 = vld [vmem:[%s7 + $0xe8] sm:$0xff]
      %v7038 = vld [vmem:[%s7 + $0xf0] sm:$0xff]
      %v7039 = vld [vmem:[%s7 + $0xf8] sm:$0xff]
      %v7040 = vld [vmem:[%s7 + $0x100] sm:$0xff]
      %v7041 = vld [vmem:[%s7 + $0x108] sm:$0xff]
      %v7042 = vld [vmem:[%s7 + $0x110] sm:$0xff]
      %v7043 = vld [vmem:[%s7 + $0x118] sm:$0xff]
      %s7044 = scalar_lea.vmem %s7, 288
      %v7045 = vld [vmem:[%s7044] sm:$0xff]
      %v7046 = vld [vmem:[%s7044 + $0x8] sm:$0xff]
      %v7047 = vld [vmem:[%s7044 + $0x10] sm:$0xff]
      %v7048 = vld [vmem:[%s7044 + $0x18] sm:$0xff]
      %v7049 = vld [vmem:[%s7044 + $0x20] sm:$0xff]
      %v7050 = vld [vmem:[%s7044 + $0x28] sm:$0xff]
      %v7051 = vld [vmem:[%s7044 + $0x30] sm:$0xff]
      %v7052 = vld [vmem:[%s7044 + $0x38] sm:$0xff]
      %v7053 = vld [vmem:[%s7044 + $0x40] sm:$0xff]
      %v7054 = vld [vmem:[%s7044 + $0x48] sm:$0xff]
      %v7055 = vld [vmem:[%s7044 + $0x50] sm:$0xff]
      %v7056 = vld [vmem:[%s7044 + $0x58] sm:$0xff]
      %v7057 = vld [vmem:[%s7044 + $0x60] sm:$0xff]
      %v7058 = vld [vmem:[%s7044 + $0x68] sm:$0xff]
      %v7059 = vld [vmem:[%s7044 + $0x70] sm:$0xff]
      %v7060 = vld [vmem:[%s7044 + $0x78] sm:$0xff]
      %v7061 = vld [vmem:[%s7044 + $0x80] sm:$0xff]
      %v7062 = vld [vmem:[%s7044 + $0x88] sm:$0xff]
      %v7063 = vld [vmem:[%s7044 + $0x90] sm:$0xff]
      %v7064 = vld [vmem:[%s7044 + $0x98] sm:$0xff]
      %v7065 = vld [vmem:[%s7044 + $0xa0] sm:$0xff]
      %v7066 = vld [vmem:[%s7044 + $0xa8] sm:$0xff]
      %v7067 = vld [vmem:[%s7044 + $0xb0] sm:$0xff]
      %v7068 = vld [vmem:[%s7044 + $0xb8] sm:$0xff]
      %v7069 = vld [vmem:[%s7044 + $0xc0] sm:$0xff]
      %v7070 = vld [vmem:[%s7044 + $0xc8] sm:$0xff]
      %v7071 = vld [vmem:[%s7044 + $0xd0] sm:$0xff]
      %v7072 = vld [vmem:[%s7044 + $0xd8] sm:$0xff]
      %v7073 = vld [vmem:[%s7044 + $0xe0] sm:$0xff]
      %v7074 = vld [vmem:[%s7044 + $0xe8] sm:$0xff]
      %v7075 = vld [vmem:[%s7044 + $0xf0] sm:$0xff]
      %v7076 = vld [vmem:[%s7044 + $0xf8] sm:$0xff]
      %v7077 = vld [vmem:[%s7044 + $0x100] sm:$0xff]
      %v7078 = vld [vmem:[%s7044 + $0x108] sm:$0xff]
      %v7079 = vld [vmem:[%s7044 + $0x110] sm:$0xff]
      %v7080 = vld [vmem:[%s7044 + $0x118] sm:$0xff]
      %s7081 = scalar_lea.vmem %s7, 576
      %v7082 = vld [vmem:[%s7081] sm:$0xff]
      %v7083 = vld [vmem:[%s7081 + $0x8] sm:$0xff]
      %v7084 = vld [vmem:[%s7081 + $0x10] sm:$0xff]
      %v7085 = vld [vmem:[%s7081 + $0x18] sm:$0xff]
      %v7086 = vld [vmem:[%s7081 + $0x20] sm:$0xff]
      %v7087 = vld [vmem:[%s7081 + $0x28] sm:$0xff]
      %v7088 = vld [vmem:[%s7081 + $0x30] sm:$0xff]
      %v7089 = vld [vmem:[%s7081 + $0x38] sm:$0xff]
      %v7090 = vld [vmem:[%s7081 + $0x40] sm:$0xff]
      %v7091 = vld [vmem:[%s7081 + $0x48] sm:$0xff]
      %v7092 = vld [vmem:[%s7081 + $0x50] sm:$0xff]
      %v7093 = vld [vmem:[%s7081 + $0x58] sm:$0xff]
      %v7094 = vld [vmem:[%s7081 + $0x60] sm:$0xff]
      %v7095 = vld [vmem:[%s7081 + $0x68] sm:$0xff]
      %v7096 = vld [vmem:[%s7081 + $0x70] sm:$0xff]
      %v7097 = vld [vmem:[%s7081 + $0x78] sm:$0xff]
      %v7098 = vld [vmem:[%s7081 + $0x80] sm:$0xff]
      %v7099 = vld [vmem:[%s7081 + $0x88] sm:$0xff]
      %v7100 = vld [vmem:[%s7081 + $0x90] sm:$0xff]
      %v7101 = vld [vmem:[%s7081 + $0x98] sm:$0xff]
      %v7102 = vld [vmem:[%s7081 + $0xa0] sm:$0xff]
      %v7103 = vld [vmem:[%s7081 + $0xa8] sm:$0xff]
      %v7104 = vld [vmem:[%s7081 + $0xb0] sm:$0xff]
      %v7105 = vld [vmem:[%s7081 + $0xb8] sm:$0xff]
      %v7106 = vld [vmem:[%s7081 + $0xc0] sm:$0xff]
      %v7107 = vld [vmem:[%s7081 + $0xc8] sm:$0xff]
      %v7108 = vld [vmem:[%s7081 + $0xd0] sm:$0xff]
      %v7109 = vld [vmem:[%s7081 + $0xd8] sm:$0xff]
      %v7110 = vld [vmem:[%s7081 + $0xe0] sm:$0xff]
      %v7111 = vld [vmem:[%s7081 + $0xe8] sm:$0xff]
      %v7112 = vld [vmem:[%s7081 + $0xf0] sm:$0xff]
      %v7113 = vld [vmem:[%s7081 + $0xf8] sm:$0xff]
      %v7114 = vld [vmem:[%s7081 + $0x100] sm:$0xff]
      %v7115 = vld [vmem:[%s7081 + $0x108] sm:$0xff]
      %v7116 = vld [vmem:[%s7081 + $0x110] sm:$0xff]
      %v7117 = vld [vmem:[%s7081 + $0x118] sm:$0xff]
      %s7118 = scalar_lea.vmem %s7, 864
      %v7119 = vld [vmem:[%s7118] sm:$0xff]
      %v7120 = vld [vmem:[%s7118 + $0x8] sm:$0xff]
      %v7121 = vld [vmem:[%s7118 + $0x10] sm:$0xff]
      %v7122 = vld [vmem:[%s7118 + $0x18] sm:$0xff]
      %v7123 = vld [vmem:[%s7118 + $0x20] sm:$0xff]
      %v7124 = vld [vmem:[%s7118 + $0x28] sm:$0xff]
      %v7125 = vld [vmem:[%s7118 + $0x30] sm:$0xff]
      %v7126 = vld [vmem:[%s7118 + $0x38] sm:$0xff]
      %v7127 = vld [vmem:[%s7118 + $0x40] sm:$0xff]
      %v7128 = vld [vmem:[%s7118 + $0x48] sm:$0xff]
      %v7129 = vld [vmem:[%s7118 + $0x50] sm:$0xff]
      %v7130 = vld [vmem:[%s7118 + $0x58] sm:$0xff]
      %v7131 = vld [vmem:[%s7118 + $0x60] sm:$0xff]
      %v7132 = vld [vmem:[%s7118 + $0x68] sm:$0xff]
      %v7133 = vld [vmem:[%s7118 + $0x70] sm:$0xff]
      %v7134 = vld [vmem:[%s7118 + $0x78] sm:$0xff]
      %v7135 = vld [vmem:[%s7118 + $0x80] sm:$0xff]
      %v7136 = vld [vmem:[%s7118 + $0x88] sm:$0xff]
      %v7137 = vld [vmem:[%s7118 + $0x90] sm:$0xff]
      %v7138 = vld [vmem:[%s7118 + $0x98] sm:$0xff]
      %v7139 = vld [vmem:[%s7118 + $0xa0] sm:$0xff]
      %v7140 = vld [vmem:[%s7118 + $0xa8] sm:$0xff]
      %v7141 = vld [vmem:[%s7118 + $0xb0] sm:$0xff]
      %v7142 = vld [vmem:[%s7118 + $0xb8] sm:$0xff]
      %v7143 = vld [vmem:[%s7118 + $0xc0] sm:$0xff]
      %v7144 = vld [vmem:[%s7118 + $0xc8] sm:$0xff]
      %v7145 = vld [vmem:[%s7118 + $0xd0] sm:$0xff]
      %v7146 = vld [vmem:[%s7118 + $0xd8] sm:$0xff]
      %v7147 = vld [vmem:[%s7118 + $0xe0] sm:$0xff]
      %v7148 = vld [vmem:[%s7118 + $0xe8] sm:$0xff]
      %v7149 = vld [vmem:[%s7118 + $0xf0] sm:$0xff]
      %v7150 = vld [vmem:[%s7118 + $0xf8] sm:$0xff]
      %v7151 = vld [vmem:[%s7118 + $0x100] sm:$0xff]
      %v7152 = vld [vmem:[%s7118 + $0x108] sm:$0xff]
      %v7153 = vld [vmem:[%s7118 + $0x110] sm:$0xff]
      %v7154 = vld [vmem:[%s7118 + $0x118] sm:$0xff]
      %v7155 = vsub.f32 %v7082, %v7008
      %v7156 = vsub.f32 %v7083, %v7009
      %v7157 = vsub.f32 %v7084, %v7010
      %v7158 = vsub.f32 %v7085, %v7011
      %v7159 = vsub.f32 %v7086, %v7012
      %v7160 = vsub.f32 %v7087, %v7013
      %v7161 = vsub.f32 %v7088, %v7014
      %v7162 = vsub.f32 %v7089, %v7015
      %v7163 = vsub.f32 %v7090, %v7016
      %v7164 = vsub.f32 %v7091, %v7017
      %v7165 = vsub.f32 %v7092, %v7018
      %v7166 = vsub.f32 %v7093, %v7019
      %v7167 = vsub.f32 %v7094, %v7020
      %v7168 = vsub.f32 %v7095, %v7021
      %v7169 = vsub.f32 %v7096, %v7022
      %v7170 = vsub.f32 %v7097, %v7023
      %v7171 = vsub.f32 %v7098, %v7024
      %v7172 = vsub.f32 %v7099, %v7025
      %v7173 = vsub.f32 %v7100, %v7026
      %v7174 = vsub.f32 %v7101, %v7027
      %v7175 = vsub.f32 %v7102, %v7028
      %v7176 = vsub.f32 %v7103, %v7029
      %v7177 = vsub.f32 %v7104, %v7030
      %v7178 = vsub.f32 %v7105, %v7031
      %v7179 = vsub.f32 %v7106, %v7032
      %v7180 = vsub.f32 %v7107, %v7033
      %v7181 = vsub.f32 %v7108, %v7034
      %v7182 = vsub.f32 %v7109, %v7035
      %v7183 = vsub.f32 %v7110, %v7036
      %v7184 = vsub.f32 %v7111, %v7037
      %v7185 = vsub.f32 %v7112, %v7038
      %v7186 = vsub.f32 %v7113, %v7039
      %v7187 = vsub.f32 %v7114, %v7040
      %v7188 = vsub.f32 %v7115, %v7041
      %v7189 = vsub.f32 %v7116, %v7042
      %v7190 = vsub.f32 %v7117, %v7043
      %v7191 = vsub.f32 %v7119, %v7045
      %v7192 = vsub.f32 %v7120, %v7046
      %v7193 = vsub.f32 %v7121, %v7047
      %v7194 = vsub.f32 %v7122, %v7048
      %v7195 = vsub.f32 %v7123, %v7049
      %v7196 = vsub.f32 %v7124, %v7050
      %v7197 = vsub.f32 %v7125, %v7051
      %v7198 = vsub.f32 %v7126, %v7052
      %v7199 = vsub.f32 %v7127, %v7053
      %v7200 = vsub.f32 %v7128, %v7054
      %v7201 = vsub.f32 %v7129, %v7055
      %v7202 = vsub.f32 %v7130, %v7056
      %v7203 = vsub.f32 %v7131, %v7057
      %v7204 = vsub.f32 %v7132, %v7058
      %v7205 = vsub.f32 %v7133, %v7059
      %v7206 = vsub.f32 %v7134, %v7060
      %v7207 = vsub.f32 %v7135, %v7061
      %v7208 = vsub.f32 %v7136, %v7062
      %v7209 = vsub.f32 %v7137, %v7063
      %v7210 = vsub.f32 %v7138, %v7064
      %v7211 = vsub.f32 %v7139, %v7065
      %v7212 = vsub.f32 %v7140, %v7066
      %v7213 = vsub.f32 %v7141, %v7067
      %v7214 = vsub.f32 %v7142, %v7068
      %v7215 = vsub.f32 %v7143, %v7069
      %v7216 = vsub.f32 %v7144, %v7070
      %v7217 = vsub.f32 %v7145, %v7071
      %v7218 = vsub.f32 %v7146, %v7072
      %v7219 = vsub.f32 %v7147, %v7073
      %v7220 = vsub.f32 %v7148, %v7074
      %v7221 = vsub.f32 %v7149, %v7075
      %v7222 = vsub.f32 %v7150, %v7076
      %v7223 = vsub.f32 %v7151, %v7077
      %v7224 = vsub.f32 %v7152, %v7078
      %v7225 = vsub.f32 %v7153, %v7079
      %v7226 = vsub.f32 %v7154, %v7080
      %v7227 = vmul.f32 %v7155, 0.5
      %v7228 = vmul.f32 %v7156, 0.5
      %v7229 = vmul.f32 %v7157, 0.5
      %v7230 = vmul.f32 %v7158, 0.5
      %v7231 = vmul.f32 %v7159, 0.5
      %v7232 = vmul.f32 %v7160, 0.5
      %v7233 = vmul.f32 %v7161, 0.5
      %v7234 = vmul.f32 %v7162, 0.5
      %v7235 = vmul.f32 %v7163, 0.5
      %v7236 = vmul.f32 %v7164, 0.5
      %v7237 = vmul.f32 %v7165, 0.5
      %v7238 = vmul.f32 %v7166, 0.5
      %v7239 = vmul.f32 %v7167, 0.5
      %v7240 = vmul.f32 %v7168, 0.5
      %v7241 = vmul.f32 %v7169, 0.5
      %v7242 = vmul.f32 %v7170, 0.5
      %v7243 = vmul.f32 %v7171, 0.5
      %v7244 = vmul.f32 %v7172, 0.5
      %v7245 = vmul.f32 %v7173, 0.5
      %v7246 = vmul.f32 %v7174, 0.5
      %v7247 = vmul.f32 %v7175, 0.5
      %v7248 = vmul.f32 %v7176, 0.5
      %v7249 = vmul.f32 %v7177, 0.5
      %v7250 = vmul.f32 %v7178, 0.5
      %v7251 = vmul.f32 %v7179, 0.5
      %v7252 = vmul.f32 %v7180, 0.5
      %v7253 = vmul.f32 %v7181, 0.5
      %v7254 = vmul.f32 %v7182, 0.5
      %v7255 = vmul.f32 %v7183, 0.5
      %v7256 = vmul.f32 %v7184, 0.5
      %v7257 = vmul.f32 %v7185, 0.5
      %v7258 = vmul.f32 %v7186, 0.5
      %v7259 = vmul.f32 %v7187, 0.5
      %v7260 = vmul.f32 %v7188, 0.5
      %v7261 = vmul.f32 %v7189, 0.5
      %v7262 = vmul.f32 %v7190, 0.5
      %v7263 = vadd.f32 %v7008, %v7227
      %v7264 = vadd.f32 %v7009, %v7228
      %v7265 = vadd.f32 %v7010, %v7229
      %v7266 = vadd.f32 %v7011, %v7230
      %v7267 = vadd.f32 %v7012, %v7231
      %v7268 = vadd.f32 %v7013, %v7232
      %v7269 = vadd.f32 %v7014, %v7233
      %v7270 = vadd.f32 %v7015, %v7234
      %v7271 = vadd.f32 %v7016, %v7235
      %v7272 = vadd.f32 %v7017, %v7236
      %v7273 = vadd.f32 %v7018, %v7237
      %v7274 = vadd.f32 %v7019, %v7238
      %v7275 = vadd.f32 %v7020, %v7239
      %v7276 = vadd.f32 %v7021, %v7240
      %v7277 = vadd.f32 %v7022, %v7241
      %v7278 = vadd.f32 %v7023, %v7242
      %v7279 = vadd.f32 %v7024, %v7243
      %v7280 = vadd.f32 %v7025, %v7244
      %v7281 = vadd.f32 %v7026, %v7245
      %v7282 = vadd.f32 %v7027, %v7246
      %v7283 = vadd.f32 %v7028, %v7247
      %v7284 = vadd.f32 %v7029, %v7248
      %v7285 = vadd.f32 %v7030, %v7249
      %v7286 = vadd.f32 %v7031, %v7250
      %v7287 = vadd.f32 %v7032, %v7251
      %v7288 = vadd.f32 %v7033, %v7252
      %v7289 = vadd.f32 %v7034, %v7253
      %v7290 = vadd.f32 %v7035, %v7254
      %v7291 = vadd.f32 %v7036, %v7255
      %v7292 = vadd.f32 %v7037, %v7256
      %v7293 = vadd.f32 %v7038, %v7257
      %v7294 = vadd.f32 %v7039, %v7258
      %v7295 = vadd.f32 %v7040, %v7259
      %v7296 = vadd.f32 %v7041, %v7260
      %v7297 = vadd.f32 %v7042, %v7261
      %v7298 = vadd.f32 %v7043, %v7262
      %v7299 = vmul.f32 %v7191, 0.5
      %v7300 = vmul.f32 %v7192, 0.5
      %v7301 = vmul.f32 %v7193, 0.5
      %v7302 = vmul.f32 %v7194, 0.5
      %v7303 = vmul.f32 %v7195, 0.5
      %v7304 = vmul.f32 %v7196, 0.5
      %v7305 = vmul.f32 %v7197, 0.5
      %v7306 = vmul.f32 %v7198, 0.5
      %v7307 = vmul.f32 %v7199, 0.5
      %v7308 = vmul.f32 %v7200, 0.5
      %v7309 = vmul.f32 %v7201, 0.5
      %v7310 = vmul.f32 %v7202, 0.5
      %v7311 = vmul.f32 %v7203, 0.5
      %v7312 = vmul.f32 %v7204, 0.5
      %v7313 = vmul.f32 %v7205, 0.5
      %v7314 = vmul.f32 %v7206, 0.5
      %v7315 = vmul.f32 %v7207, 0.5
      %v7316 = vmul.f32 %v7208, 0.5
      %v7317 = vmul.f32 %v7209, 0.5
      %v7318 = vmul.f32 %v7210, 0.5
      %v7319 = vmul.f32 %v7211, 0.5
      %v7320 = vmul.f32 %v7212, 0.5
      %v7321 = vmul.f32 %v7213, 0.5
      %v7322 = vmul.f32 %v7214, 0.5
      %v7323 = vmul.f32 %v7215, 0.5
      %v7324 = vmul.f32 %v7216, 0.5
      %v7325 = vmul.f32 %v7217, 0.5
      %v7326 = vmul.f32 %v7218, 0.5
      %v7327 = vmul.f32 %v7219, 0.5
      %v7328 = vmul.f32 %v7220, 0.5
      %v7329 = vmul.f32 %v7221, 0.5
      %v7330 = vmul.f32 %v7222, 0.5
      %v7331 = vmul.f32 %v7223, 0.5
      %v7332 = vmul.f32 %v7224, 0.5
      %v7333 = vmul.f32 %v7225, 0.5
      %v7334 = vmul.f32 %v7226, 0.5
      %v7335 = vadd.f32 %v7045, %v7299
      %v7336 = vadd.f32 %v7046, %v7300
      %v7337 = vadd.f32 %v7047, %v7301
      %v7338 = vadd.f32 %v7048, %v7302
      %v7339 = vadd.f32 %v7049, %v7303
      %v7340 = vadd.f32 %v7050, %v7304
      %v7341 = vadd.f32 %v7051, %v7305
      %v7342 = vadd.f32 %v7052, %v7306
      %v7343 = vadd.f32 %v7053, %v7307
      %v7344 = vadd.f32 %v7054, %v7308
      %v7345 = vadd.f32 %v7055, %v7309
      %v7346 = vadd.f32 %v7056, %v7310
      %v7347 = vadd.f32 %v7057, %v7311
      %v7348 = vadd.f32 %v7058, %v7312
      %v7349 = vadd.f32 %v7059, %v7313
      %v7350 = vadd.f32 %v7060, %v7314
      %v7351 = vadd.f32 %v7061, %v7315
      %v7352 = vadd.f32 %v7062, %v7316
      %v7353 = vadd.f32 %v7063, %v7317
      %v7354 = vadd.f32 %v7064, %v7318
      %v7355 = vadd.f32 %v7065, %v7319
      %v7356 = vadd.f32 %v7066, %v7320
      %v7357 = vadd.f32 %v7067, %v7321
      %v7358 = vadd.f32 %v7068, %v7322
      %v7359 = vadd.f32 %v7069, %v7323
      %v7360 = vadd.f32 %v7070, %v7324
      %v7361 = vadd.f32 %v7071, %v7325
      %v7362 = vadd.f32 %v7072, %v7326
      %v7363 = vadd.f32 %v7073, %v7327
      %v7364 = vadd.f32 %v7074, %v7328
      %v7365 = vadd.f32 %v7075, %v7329
      %v7366 = vadd.f32 %v7076, %v7330
      %v7367 = vadd.f32 %v7077, %v7331
      %v7368 = vadd.f32 %v7078, %v7332
      %v7369 = vadd.f32 %v7079, %v7333
      %v7370 = vadd.f32 %v7080, %v7334
      %7407 = vrot.lane.b32.xlu0 %v7155, 3
      %v7408 = vpop.permute.xlu0 %7407
      %7409 = vrot.lane.b32.xlu0 %v7156, 3
      %v7410 = vpop.permute.xlu0 %7409
      %7411 = vrot.lane.b32.xlu0 %v7157, 3
      %v7412 = vpop.permute.xlu0 %7411
      %7413 = vrot.lane.b32.xlu0 %v7158, 3
      %v7414 = vpop.permute.xlu0 %7413
      %7415 = vrot.lane.b32.xlu0 %v7159, 3
      %v7416 = vpop.permute.xlu0 %7415
      %7417 = vrot.lane.b32.xlu0 %v7160, 3
      %v7418 = vpop.permute.xlu0 %7417
      %7419 = vrot.lane.b32.xlu0 %v7161, 3
      %v7420 = vpop.permute.xlu0 %7419
      %7421 = vrot.lane.b32.xlu0 %v7162, 3
      %v7422 = vpop.permute.xlu0 %7421
      %7423 = vrot.lane.b32.xlu0 %v7163, 3
      %v7424 = vpop.permute.xlu0 %7423
      %7425 = vrot.lane.b32.xlu0 %v7164, 3
      %v7426 = vpop.permute.xlu0 %7425
      %7427 = vrot.lane.b32.xlu0 %v7165, 3
      %v7428 = vpop.permute.xlu0 %7427
      %7429 = vrot.lane.b32.xlu0 %v7166, 3
      %v7430 = vpop.permute.xlu0 %7429
      %7431 = vrot.lane.b32.xlu0 %v7167, 3
      %v7432 = vpop.permute.xlu0 %7431
      %7433 = vrot.lane.b32.xlu0 %v7168, 3
      %v7434 = vpop.permute.xlu0 %7433
      %7435 = vrot.lane.b32.xlu0 %v7169, 3
      %v7436 = vpop.permute.xlu0 %7435
      %7437 = vrot.lane.b32.xlu0 %v7170, 3
      %v7438 = vpop.permute.xlu0 %7437
      %7439 = vrot.lane.b32.xlu0 %v7171, 3
      %v7440 = vpop.permute.xlu0 %7439
      %7441 = vrot.lane.b32.xlu0 %v7172, 3
      %v7442 = vpop.permute.xlu0 %7441
      %7443 = vrot.lane.b32.xlu0 %v7173, 3
      %v7444 = vpop.permute.xlu0 %7443
      %7445 = vrot.lane.b32.xlu0 %v7174, 3
      %v7446 = vpop.permute.xlu0 %7445
      %7447 = vrot.lane.b32.xlu0 %v7175, 3
      %v7448 = vpop.permute.xlu0 %7447
      %7449 = vrot.lane.b32.xlu0 %v7176, 3
      %v7450 = vpop.permute.xlu0 %7449
      %7451 = vrot.lane.b32.xlu0 %v7177, 3
      %v7452 = vpop.permute.xlu0 %7451
      %7453 = vrot.lane.b32.xlu0 %v7178, 3
      %v7454 = vpop.permute.xlu0 %7453
      %7455 = vrot.lane.b32.xlu0 %v7179, 3
      %v7456 = vpop.permute.xlu0 %7455
      %7457 = vrot.lane.b32.xlu0 %v7180, 3
      %v7458 = vpop.permute.xlu0 %7457
      %7459 = vrot.lane.b32.xlu0 %v7181, 3
      %v7460 = vpop.permute.xlu0 %7459
      %7461 = vrot.lane.b32.xlu0 %v7182, 3
      %v7462 = vpop.permute.xlu0 %7461
      %7463 = vrot.lane.b32.xlu0 %v7183, 3
      %v7464 = vpop.permute.xlu0 %7463
      %7465 = vrot.lane.b32.xlu0 %v7184, 3
      %v7466 = vpop.permute.xlu0 %7465
      %7467 = vrot.lane.b32.xlu0 %v7185, 3
      %v7468 = vpop.permute.xlu0 %7467
      %7469 = vrot.lane.b32.xlu0 %v7186, 3
      %v7470 = vpop.permute.xlu0 %7469
      %7471 = vrot.lane.b32.xlu0 %v7187, 3
      %v7472 = vpop.permute.xlu0 %7471
      %7473 = vrot.lane.b32.xlu0 %v7188, 3
      %v7474 = vpop.permute.xlu0 %7473
      %7475 = vrot.lane.b32.xlu0 %v7189, 3
      %v7476 = vpop.permute.xlu0 %7475
      %7477 = vrot.lane.b32.xlu0 %v7190, 3
      %v7478 = vpop.permute.xlu0 %7477
      %v7515 = vmul.f32 %v6830, %v7408
      %v7516 = vmul.f32 %v6833, %v7410
      %v7517 = vmul.f32 %v6838, %v7412
      %v7518 = vmul.f32 %v6841, %v7414
      %v7519 = vmul.f32 %v6846, %v7416
      %v7520 = vmul.f32 %v6849, %v7418
      %v7521 = vmul.f32 %v6854, %v7420
      %v7522 = vmul.f32 %v6857, %v7422
      %v7523 = vmul.f32 %v6862, %v7424
      %v7524 = vmul.f32 %v6865, %v7426
      %v7525 = vmul.f32 %v6870, %v7428
      %v7526 = vmul.f32 %v6873, %v7430
      %v7527 = vmul.f32 %v6878, %v7432
      %v7528 = vmul.f32 %v6881, %v7434
      %v7529 = vmul.f32 %v6886, %v7436
      %v7530 = vmul.f32 %v6889, %v7438
      %v7531 = vmul.f32 %v6894, %v7440
      %v7532 = vmul.f32 %v6897, %v7442
      %v7533 = vmul.f32 %v6902, %v7444
      %v7534 = vmul.f32 %v6905, %v7446
      %v7535 = vmul.f32 %v6910, %v7448
      %v7536 = vmul.f32 %v6913, %v7450
      %v7537 = vmul.f32 %v6918, %v7452
      %v7538 = vmul.f32 %v6921, %v7454
      %v7539 = vmul.f32 %v6926, %v7456
      %v7540 = vmul.f32 %v6929, %v7458
      %v7541 = vmul.f32 %v6934, %v7460
      %v7542 = vmul.f32 %v6937, %v7462
      %v7543 = vmul.f32 %v6942, %v7464
      %v7544 = vmul.f32 %v6945, %v7466
      %v7545 = vmul.f32 %v6950, %v7468
      %v7546 = vmul.f32 %v6953, %v7470
      %v7547 = vmul.f32 %v6958, %v7472
      %v7548 = vmul.f32 %v6961, %v7474
      %v7549 = vmul.f32 %v6966, %v7476
      %v7550 = vmul.f32 %v6969, %v7478
      %7587 = vrot.lane.b32.xlu0 %v7263, 3
      %v7588 = vpop.permute.xlu0 %7587
      %7589 = vrot.lane.b32.xlu0 %v7264, 3
      %v7590 = vpop.permute.xlu0 %7589
      %7591 = vrot.lane.b32.xlu0 %v7265, 3
      %v7592 = vpop.permute.xlu0 %7591
      %7593 = vrot.lane.b32.xlu0 %v7266, 3
      %v7594 = vpop.permute.xlu0 %7593
      %7595 = vrot.lane.b32.xlu0 %v7267, 3
      %v7596 = vpop.permute.xlu0 %7595
      %7597 = vrot.lane.b32.xlu0 %v7268, 3
      %v7598 = vpop.permute.xlu0 %7597
      %7599 = vrot.lane.b32.xlu0 %v7269, 3
      %v7600 = vpop.permute.xlu0 %7599
      %7601 = vrot.lane.b32.xlu0 %v7270, 3
      %v7602 = vpop.permute.xlu0 %7601
      %7603 = vrot.lane.b32.xlu0 %v7271, 3
      %v7604 = vpop.permute.xlu0 %7603
      %7605 = vrot.lane.b32.xlu0 %v7272, 3
      %v7606 = vpop.permute.xlu0 %7605
      %7607 = vrot.lane.b32.xlu0 %v7273, 3
      %v7608 = vpop.permute.xlu0 %7607
      %7609 = vrot.lane.b32.xlu0 %v7274, 3
      %v7610 = vpop.permute.xlu0 %7609
      %7611 = vrot.lane.b32.xlu0 %v7275, 3
      %v7612 = vpop.permute.xlu0 %7611
      %7613 = vrot.lane.b32.xlu0 %v7276, 3
      %v7614 = vpop.permute.xlu0 %7613
      %7615 = vrot.lane.b32.xlu0 %v7277, 3
      %v7616 = vpop.permute.xlu0 %7615
      %7617 = vrot.lane.b32.xlu0 %v7278, 3
      %v7618 = vpop.permute.xlu0 %7617
      %7619 = vrot.lane.b32.xlu0 %v7279, 3
      %v7620 = vpop.permute.xlu0 %7619
      %7621 = vrot.lane.b32.xlu0 %v7280, 3
      %v7622 = vpop.permute.xlu0 %7621
      %7623 = vrot.lane.b32.xlu0 %v7281, 3
      %v7624 = vpop.permute.xlu0 %7623
      %7625 = vrot.lane.b32.xlu0 %v7282, 3
      %v7626 = vpop.permute.xlu0 %7625
      %7627 = vrot.lane.b32.xlu0 %v7283, 3
      %v7628 = vpop.permute.xlu0 %7627
      %7629 = vrot.lane.b32.xlu0 %v7284, 3
      %v7630 = vpop.permute.xlu0 %7629
      %7631 = vrot.lane.b32.xlu0 %v7285, 3
      %v7632 = vpop.permute.xlu0 %7631
      %7633 = vrot.lane.b32.xlu0 %v7286, 3
      %v7634 = vpop.permute.xlu0 %7633
      %7635 = vrot.lane.b32.xlu0 %v7287, 3
      %v7636 = vpop.permute.xlu0 %7635
      %7637 = vrot.lane.b32.xlu0 %v7288, 3
      %v7638 = vpop.permute.xlu0 %7637
      %7639 = vrot.lane.b32.xlu0 %v7289, 3
      %v7640 = vpop.permute.xlu0 %7639
      %7641 = vrot.lane.b32.xlu0 %v7290, 3
      %v7642 = vpop.permute.xlu0 %7641
      %7643 = vrot.lane.b32.xlu0 %v7291, 3
      %v7644 = vpop.permute.xlu0 %7643
      %7645 = vrot.lane.b32.xlu0 %v7292, 3
      %v7646 = vpop.permute.xlu0 %7645
      %7647 = vrot.lane.b32.xlu0 %v7293, 3
      %v7648 = vpop.permute.xlu0 %7647
      %7649 = vrot.lane.b32.xlu0 %v7294, 3
      %v7650 = vpop.permute.xlu0 %7649
      %7651 = vrot.lane.b32.xlu0 %v7295, 3
      %v7652 = vpop.permute.xlu0 %7651
      %7653 = vrot.lane.b32.xlu0 %v7296, 3
      %v7654 = vpop.permute.xlu0 %7653
      %7655 = vrot.lane.b32.xlu0 %v7297, 3
      %v7656 = vpop.permute.xlu0 %7655
      %7657 = vrot.lane.b32.xlu0 %v7298, 3
      %v7658 = vpop.permute.xlu0 %7657
      %v7695 = vadd.f32 %v7515, %v7588
      %v7696 = vadd.f32 %v7516, %v7590
      %v7697 = vadd.f32 %v7517, %v7592
      %v7698 = vadd.f32 %v7518, %v7594
      %v7699 = vadd.f32 %v7519, %v7596
      %v7700 = vadd.f32 %v7520, %v7598
      %v7701 = vadd.f32 %v7521, %v7600
      %v7702 = vadd.f32 %v7522, %v7602
      %v7703 = vadd.f32 %v7523, %v7604
      %v7704 = vadd.f32 %v7524, %v7606
      %v7705 = vadd.f32 %v7525, %v7608
      %v7706 = vadd.f32 %v7526, %v7610
      %v7707 = vadd.f32 %v7527, %v7612
      %v7708 = vadd.f32 %v7528, %v7614
      %v7709 = vadd.f32 %v7529, %v7616
      %v7710 = vadd.f32 %v7530, %v7618
      %v7711 = vadd.f32 %v7531, %v7620
      %v7712 = vadd.f32 %v7532, %v7622
      %v7713 = vadd.f32 %v7533, %v7624
      %v7714 = vadd.f32 %v7534, %v7626
      %v7715 = vadd.f32 %v7535, %v7628
      %v7716 = vadd.f32 %v7536, %v7630
      %v7717 = vadd.f32 %v7537, %v7632
      %v7718 = vadd.f32 %v7538, %v7634
      %v7719 = vadd.f32 %v7539, %v7636
      %v7720 = vadd.f32 %v7540, %v7638
      %v7721 = vadd.f32 %v7541, %v7640
      %v7722 = vadd.f32 %v7542, %v7642
      %v7723 = vadd.f32 %v7543, %v7644
      %v7724 = vadd.f32 %v7544, %v7646
      %v7725 = vadd.f32 %v7545, %v7648
      %v7726 = vadd.f32 %v7546, %v7650
      %v7727 = vadd.f32 %v7547, %v7652
      %v7728 = vadd.f32 %v7548, %v7654
      %v7729 = vadd.f32 %v7549, %v7656
      %v7730 = vadd.f32 %v7550, %v7658
      %7767 = vrot.lane.b32.xlu0 %v7191, 6
      %v7768 = vpop.permute.xlu0 %7767
      %7769 = vrot.lane.b32.xlu0 %v7192, 6
      %v7770 = vpop.permute.xlu0 %7769
      %7771 = vrot.lane.b32.xlu0 %v7193, 6
      %v7772 = vpop.permute.xlu0 %7771
      %7773 = vrot.lane.b32.xlu0 %v7194, 6
      %v7774 = vpop.permute.xlu0 %7773
      %7775 = vrot.lane.b32.xlu0 %v7195, 6
      %v7776 = vpop.permute.xlu0 %7775
      %7777 = vrot.lane.b32.xlu0 %v7196, 6
      %v7778 = vpop.permute.xlu0 %7777
      %7779 = vrot.lane.b32.xlu0 %v7197, 6
      %v7780 = vpop.permute.xlu0 %7779
      %7781 = vrot.lane.b32.xlu0 %v7198, 6
      %v7782 = vpop.permute.xlu0 %7781
      %7783 = vrot.lane.b32.xlu0 %v7199, 6
      %v7784 = vpop.permute.xlu0 %7783
      %7785 = vrot.lane.b32.xlu0 %v7200, 6
      %v7786 = vpop.permute.xlu0 %7785
      %7787 = vrot.lane.b32.xlu0 %v7201, 6
      %v7788 = vpop.permute.xlu0 %7787
      %7789 = vrot.lane.b32.xlu0 %v7202, 6
      %v7790 = vpop.permute.xlu0 %7789
      %7791 = vrot.lane.b32.xlu0 %v7203, 6
      %v7792 = vpop.permute.xlu0 %7791
      %7793 = vrot.lane.b32.xlu0 %v7204, 6
      %v7794 = vpop.permute.xlu0 %7793
      %7795 = vrot.lane.b32.xlu0 %v7205, 6
      %v7796 = vpop.permute.xlu0 %7795
      %7797 = vrot.lane.b32.xlu0 %v7206, 6
      %v7798 = vpop.permute.xlu0 %7797
      %7799 = vrot.lane.b32.xlu0 %v7207, 6
      %v7800 = vpop.permute.xlu0 %7799
      %7801 = vrot.lane.b32.xlu0 %v7208, 6
      %v7802 = vpop.permute.xlu0 %7801
      %7803 = vrot.lane.b32.xlu0 %v7209, 6
      %v7804 = vpop.permute.xlu0 %7803
      %7805 = vrot.lane.b32.xlu0 %v7210, 6
      %v7806 = vpop.permute.xlu0 %7805
      %7807 = vrot.lane.b32.xlu0 %v7211, 6
      %v7808 = vpop.permute.xlu0 %7807
      %7809 = vrot.lane.b32.xlu0 %v7212, 6
      %v7810 = vpop.permute.xlu0 %7809
      %7811 = vrot.lane.b32.xlu0 %v7213, 6
      %v7812 = vpop.permute.xlu0 %7811
      %7813 = vrot.lane.b32.xlu0 %v7214, 6
      %v7814 = vpop.permute.xlu0 %7813
      %7815 = vrot.lane.b32.xlu0 %v7215, 6
      %v7816 = vpop.permute.xlu0 %7815
      %7817 = vrot.lane.b32.xlu0 %v7216, 6
      %v7818 = vpop.permute.xlu0 %7817
      %7819 = vrot.lane.b32.xlu0 %v7217, 6
      %v7820 = vpop.permute.xlu0 %7819
      %7821 = vrot.lane.b32.xlu0 %v7218, 6
      %v7822 = vpop.permute.xlu0 %7821
      %7823 = vrot.lane.b32.xlu0 %v7219, 6
      %v7824 = vpop.permute.xlu0 %7823
      %7825 = vrot.lane.b32.xlu0 %v7220, 6
      %v7826 = vpop.permute.xlu0 %7825
      %7827 = vrot.lane.b32.xlu0 %v7221, 6
      %v7828 = vpop.permute.xlu0 %7827
      %7829 = vrot.lane.b32.xlu0 %v7222, 6
      %v7830 = vpop.permute.xlu0 %7829
      %7831 = vrot.lane.b32.xlu0 %v7223, 6
      %v7832 = vpop.permute.xlu0 %7831
      %7833 = vrot.lane.b32.xlu0 %v7224, 6
      %v7834 = vpop.permute.xlu0 %7833
      %7835 = vrot.lane.b32.xlu0 %v7225, 6
      %v7836 = vpop.permute.xlu0 %7835
      %7837 = vrot.lane.b32.xlu0 %v7226, 6
      %v7838 = vpop.permute.xlu0 %7837
      %v7875 = vmul.f32 %v6830, %v7768
      %v7876 = vmul.f32 %v6833, %v7770
      %v7877 = vmul.f32 %v6838, %v7772
      %v7878 = vmul.f32 %v6841, %v7774
      %v7879 = vmul.f32 %v6846, %v7776
      %v7880 = vmul.f32 %v6849, %v7778
      %v7881 = vmul.f32 %v6854, %v7780
      %v7882 = vmul.f32 %v6857, %v7782
      %v7883 = vmul.f32 %v6862, %v7784
      %v7884 = vmul.f32 %v6865, %v7786
      %v7885 = vmul.f32 %v6870, %v7788
      %v7886 = vmul.f32 %v6873, %v7790
      %v7887 = vmul.f32 %v6878, %v7792
      %v7888 = vmul.f32 %v6881, %v7794
      %v7889 = vmul.f32 %v6886, %v7796
      %v7890 = vmul.f32 %v6889, %v7798
      %v7891 = vmul.f32 %v6894, %v7800
      %v7892 = vmul.f32 %v6897, %v7802
      %v7893 = vmul.f32 %v6902, %v7804
      %v7894 = vmul.f32 %v6905, %v7806
      %v7895 = vmul.f32 %v6910, %v7808
      %v7896 = vmul.f32 %v6913, %v7810
      %v7897 = vmul.f32 %v6918, %v7812
      %v7898 = vmul.f32 %v6921, %v7814
      %v7899 = vmul.f32 %v6926, %v7816
      %v7900 = vmul.f32 %v6929, %v7818
      %v7901 = vmul.f32 %v6934, %v7820
      %v7902 = vmul.f32 %v6937, %v7822
      %v7903 = vmul.f32 %v6942, %v7824
      %v7904 = vmul.f32 %v6945, %v7826
      %v7905 = vmul.f32 %v6950, %v7828
      %v7906 = vmul.f32 %v6953, %v7830
      %v7907 = vmul.f32 %v6958, %v7832
      %v7908 = vmul.f32 %v6961, %v7834
      %v7909 = vmul.f32 %v6966, %v7836
      %v7910 = vmul.f32 %v6969, %v7838
      %7947 = vrot.lane.b32.xlu0 %v7335, 6
      %v7948 = vpop.permute.xlu0 %7947
      %7949 = vrot.lane.b32.xlu0 %v7336, 6
      %v7950 = vpop.permute.xlu0 %7949
      %7951 = vrot.lane.b32.xlu0 %v7337, 6
      %v7952 = vpop.permute.xlu0 %7951
      %7953 = vrot.lane.b32.xlu0 %v7338, 6
      %v7954 = vpop.permute.xlu0 %7953
      %7955 = vrot.lane.b32.xlu0 %v7339, 6
      %v7956 = vpop.permute.xlu0 %7955
      %7957 = vrot.lane.b32.xlu0 %v7340, 6
      %v7958 = vpop.permute.xlu0 %7957
      %7959 = vrot.lane.b32.xlu0 %v7341, 6
      %v7960 = vpop.permute.xlu0 %7959
      %7961 = vrot.lane.b32.xlu0 %v7342, 6
      %v7962 = vpop.permute.xlu0 %7961
      %7963 = vrot.lane.b32.xlu0 %v7343, 6
      %v7964 = vpop.permute.xlu0 %7963
      %7965 = vrot.lane.b32.xlu0 %v7344, 6
      %v7966 = vpop.permute.xlu0 %7965
      %7967 = vrot.lane.b32.xlu0 %v7345, 6
      %v7968 = vpop.permute.xlu0 %7967
      %7969 = vrot.lane.b32.xlu0 %v7346, 6
      %v7970 = vpop.permute.xlu0 %7969
      %7971 = vrot.lane.b32.xlu0 %v7347, 6
      %v7972 = vpop.permute.xlu0 %7971
      %7973 = vrot.lane.b32.xlu0 %v7348, 6
      %v7974 = vpop.permute.xlu0 %7973
      %7975 = vrot.lane.b32.xlu0 %v7349, 6
      %v7976 = vpop.permute.xlu0 %7975
      %7977 = vrot.lane.b32.xlu0 %v7350, 6
      %v7978 = vpop.permute.xlu0 %7977
      %7979 = vrot.lane.b32.xlu0 %v7351, 6
      %v7980 = vpop.permute.xlu0 %7979
      %7981 = vrot.lane.b32.xlu0 %v7352, 6
      %v7982 = vpop.permute.xlu0 %7981
      %7983 = vrot.lane.b32.xlu0 %v7353, 6
      %v7984 = vpop.permute.xlu0 %7983
      %7985 = vrot.lane.b32.xlu0 %v7354, 6
      %v7986 = vpop.permute.xlu0 %7985
      %7987 = vrot.lane.b32.xlu0 %v7355, 6
      %v7988 = vpop.permute.xlu0 %7987
      %7989 = vrot.lane.b32.xlu0 %v7356, 6
      %v7990 = vpop.permute.xlu0 %7989
      %7991 = vrot.lane.b32.xlu0 %v7357, 6
      %v7992 = vpop.permute.xlu0 %7991
      %7993 = vrot.lane.b32.xlu0 %v7358, 6
      %v7994 = vpop.permute.xlu0 %7993
      %7995 = vrot.lane.b32.xlu0 %v7359, 6
      %v7996 = vpop.permute.xlu0 %7995
      %7997 = vrot.lane.b32.xlu0 %v7360, 6
      %v7998 = vpop.permute.xlu0 %7997
      %7999 = vrot.lane.b32.xlu0 %v7361, 6
      %v8000 = vpop.permute.xlu0 %7999
      %8001 = vrot.lane.b32.xlu0 %v7362, 6
      %v8002 = vpop.permute.xlu0 %8001
      %8003 = vrot.lane.b32.xlu0 %v7363, 6
      %v8004 = vpop.permute.xlu0 %8003
      %8005 = vrot.lane.b32.xlu0 %v7364, 6
      %v8006 = vpop.permute.xlu0 %8005
      %8007 = vrot.lane.b32.xlu0 %v7365, 6
      %v8008 = vpop.permute.xlu0 %8007
      %8009 = vrot.lane.b32.xlu0 %v7366, 6
      %v8010 = vpop.permute.xlu0 %8009
      %8011 = vrot.lane.b32.xlu0 %v7367, 6
      %v8012 = vpop.permute.xlu0 %8011
      %8013 = vrot.lane.b32.xlu0 %v7368, 6
      %v8014 = vpop.permute.xlu0 %8013
      %8015 = vrot.lane.b32.xlu0 %v7369, 6
      %v8016 = vpop.permute.xlu0 %8015
      %8017 = vrot.lane.b32.xlu0 %v7370, 6
      %v8018 = vpop.permute.xlu0 %8017
      %v8055 = vadd.f32 %v7875, %v7948
      %v8056 = vadd.f32 %v7876, %v7950
      %v8057 = vadd.f32 %v7877, %v7952
      %v8058 = vadd.f32 %v7878, %v7954
      %v8059 = vadd.f32 %v7879, %v7956
      %v8060 = vadd.f32 %v7880, %v7958
      %v8061 = vadd.f32 %v7881, %v7960
      %v8062 = vadd.f32 %v7882, %v7962
      %v8063 = vadd.f32 %v7883, %v7964
      %v8064 = vadd.f32 %v7884, %v7966
      %v8065 = vadd.f32 %v7885, %v7968
      %v8066 = vadd.f32 %v7886, %v7970
      %v8067 = vadd.f32 %v7887, %v7972
      %v8068 = vadd.f32 %v7888, %v7974
      %v8069 = vadd.f32 %v7889, %v7976
      %v8070 = vadd.f32 %v7890, %v7978
      %v8071 = vadd.f32 %v7891, %v7980
      %v8072 = vadd.f32 %v7892, %v7982
      %v8073 = vadd.f32 %v7893, %v7984
      %v8074 = vadd.f32 %v7894, %v7986
      %v8075 = vadd.f32 %v7895, %v7988
      %v8076 = vadd.f32 %v7896, %v7990
      %v8077 = vadd.f32 %v7897, %v7992
      %v8078 = vadd.f32 %v7898, %v7994
      %v8079 = vadd.f32 %v7899, %v7996
      %v8080 = vadd.f32 %v7900, %v7998
      %v8081 = vadd.f32 %v7901, %v8000
      %v8082 = vadd.f32 %v7902, %v8002
      %v8083 = vadd.f32 %v7903, %v8004
      %v8084 = vadd.f32 %v7904, %v8006
      %v8085 = vadd.f32 %v7905, %v8008
      %v8086 = vadd.f32 %v7906, %v8010
      %v8087 = vadd.f32 %v7907, %v8012
      %v8088 = vadd.f32 %v7908, %v8014
      %v8089 = vadd.f32 %v7909, %v8016
      %v8090 = vadd.f32 %v7910, %v8018
      %v8091 = vmul.f32 %v6972, 1.442695
      %v8092 = vpow.pop %v8091
      %v8093 = vmul.f32 %v6973, 1.442695
      %v8094 = vpow.pop %v8093
      %v8095 = vmul.f32 %v6974, 1.442695
      %v8096 = vpow.pop %v8095
      %v8097 = vmul.f32 %v6975, 1.442695
      %v8098 = vpow.pop %v8097
      %v8099 = vmul.f32 %v6976, 1.442695
      %v8100 = vpow.pop %v8099
      %v8101 = vmul.f32 %v6977, 1.442695
      %v8102 = vpow.pop %v8101
      %v8103 = vmul.f32 %v6978, 1.442695
      %v8104 = vpow.pop %v8103
      %v8105 = vmul.f32 %v6979, 1.442695
      %v8106 = vpow.pop %v8105
      %v8107 = vmul.f32 %v6980, 1.442695
      %v8108 = vpow.pop %v8107
      %v8109 = vmul.f32 %v6981, 1.442695
      %v8110 = vpow.pop %v8109
      %v8111 = vmul.f32 %v6982, 1.442695
      %v8112 = vpow.pop %v8111
      %v8113 = vmul.f32 %v6983, 1.442695
      %v8114 = vpow.pop %v8113
      %v8115 = vmul.f32 %v6984, 1.442695
      %v8116 = vpow.pop %v8115
      %v8117 = vmul.f32 %v6985, 1.442695
      %v8118 = vpow.pop %v8117
      %v8119 = vmul.f32 %v6986, 1.442695
      %v8120 = vpow.pop %v8119
      %v8121 = vmul.f32 %v6987, 1.442695
      %v8122 = vpow.pop %v8121
      %v8123 = vmul.f32 %v6988, 1.442695
      %v8124 = vpow.pop %v8123
      %v8125 = vmul.f32 %v6989, 1.442695
      %v8126 = vpow.pop %v8125
      %v8127 = vmul.f32 %v6990, 1.442695
      %v8128 = vpow.pop %v8127
      %v8129 = vmul.f32 %v6991, 1.442695
      %v8130 = vpow.pop %v8129
      %v8131 = vmul.f32 %v6992, 1.442695
      %v8132 = vpow.pop %v8131
      %v8133 = vmul.f32 %v6993, 1.442695
      %v8134 = vpow.pop %v8133
      %v8135 = vmul.f32 %v6994, 1.442695
      %v8136 = vpow.pop %v8135
      %v8137 = vmul.f32 %v6995, 1.442695
      %v8138 = vpow.pop %v8137
      %v8139 = vmul.f32 %v6996, 1.442695
      %v8140 = vpow.pop %v8139
      %v8141 = vmul.f32 %v6997, 1.442695
      %v8142 = vpow.pop %v8141
      %v8143 = vmul.f32 %v6998, 1.442695
      %v8144 = vpow.pop %v8143
      %v8145 = vmul.f32 %v6999, 1.442695
      %v8146 = vpow.pop %v8145
      %v8147 = vmul.f32 %v7000, 1.442695
      %v8148 = vpow.pop %v8147
      %v8149 = vmul.f32 %v7001, 1.442695
      %v8150 = vpow.pop %v8149
      %v8151 = vmul.f32 %v7002, 1.442695
      %v8152 = vpow.pop %v8151
      %v8153 = vmul.f32 %v7003, 1.442695
      %v8154 = vpow.pop %v8153
      %v8155 = vmul.f32 %v7004, 1.442695
      %v8156 = vpow.pop %v8155
      %v8157 = vmul.f32 %v7005, 1.442695
      %v8158 = vpow.pop %v8157
      %v8159 = vmul.f32 %v7006, 1.442695
      %v8160 = vpow.pop %v8159
      %v8161 = vmul.f32 %v7007, 1.442695
      %v8162 = vpow.pop %v8161
      %8163 = vrot.lane.b32.xlu0 %v7155, 9
      %v8164 = vpop.permute.xlu0 %8163
      %8165 = vrot.lane.b32.xlu0 %v7156, 9
      %v8166 = vpop.permute.xlu0 %8165
      %8167 = vrot.lane.b32.xlu0 %v7157, 9
      %v8168 = vpop.permute.xlu0 %8167
      %8169 = vrot.lane.b32.xlu0 %v7158, 9
      %v8170 = vpop.permute.xlu0 %8169
      %8171 = vrot.lane.b32.xlu0 %v7159, 9
      %v8172 = vpop.permute.xlu0 %8171
      %8173 = vrot.lane.b32.xlu0 %v7160, 9
      %v8174 = vpop.permute.xlu0 %8173
      %8175 = vrot.lane.b32.xlu0 %v7161, 9
      %v8176 = vpop.permute.xlu0 %8175
      %8177 = vrot.lane.b32.xlu0 %v7162, 9
      %v8178 = vpop.permute.xlu0 %8177
      %8179 = vrot.lane.b32.xlu0 %v7163, 9
      %v8180 = vpop.permute.xlu0 %8179
      %8181 = vrot.lane.b32.xlu0 %v7164, 9
      %v8182 = vpop.permute.xlu0 %8181
      %8183 = vrot.lane.b32.xlu0 %v7165, 9
      %v8184 = vpop.permute.xlu0 %8183
      %8185 = vrot.lane.b32.xlu0 %v7166, 9
      %v8186 = vpop.permute.xlu0 %8185
      %8187 = vrot.lane.b32.xlu0 %v7167, 9
      %v8188 = vpop.permute.xlu0 %8187
      %8189 = vrot.lane.b32.xlu0 %v7168, 9
      %v8190 = vpop.permute.xlu0 %8189
      %8191 = vrot.lane.b32.xlu0 %v7169, 9
      %v8192 = vpop.permute.xlu0 %8191
      %8193 = vrot.lane.b32.xlu0 %v7170, 9
      %v8194 = vpop.permute.xlu0 %8193
      %8195 = vrot.lane.b32.xlu0 %v7171, 9
      %v8196 = vpop.permute.xlu0 %8195
      %8197 = vrot.lane.b32.xlu0 %v7172, 9
      %v8198 = vpop.permute.xlu0 %8197
      %8199 = vrot.lane.b32.xlu0 %v7173, 9
      %v8200 = vpop.permute.xlu0 %8199
      %8201 = vrot.lane.b32.xlu0 %v7174, 9
      %v8202 = vpop.permute.xlu0 %8201
      %8203 = vrot.lane.b32.xlu0 %v7175, 9
      %v8204 = vpop.permute.xlu0 %8203
      %8205 = vrot.lane.b32.xlu0 %v7176, 9
      %v8206 = vpop.permute.xlu0 %8205
      %8207 = vrot.lane.b32.xlu0 %v7177, 9
      %v8208 = vpop.permute.xlu0 %8207
      %8209 = vrot.lane.b32.xlu0 %v7178, 9
      %v8210 = vpop.permute.xlu0 %8209
      %8211 = vrot.lane.b32.xlu0 %v7179, 9
      %v8212 = vpop.permute.xlu0 %8211
      %8213 = vrot.lane.b32.xlu0 %v7180, 9
      %v8214 = vpop.permute.xlu0 %8213
      %8215 = vrot.lane.b32.xlu0 %v7181, 9
      %v8216 = vpop.permute.xlu0 %8215
      %8217 = vrot.lane.b32.xlu0 %v7182, 9
      %v8218 = vpop.permute.xlu0 %8217
      %8219 = vrot.lane.b32.xlu0 %v7183, 9
      %v8220 = vpop.permute.xlu0 %8219
      %8221 = vrot.lane.b32.xlu0 %v7184, 9
      %v8222 = vpop.permute.xlu0 %8221
      %8223 = vrot.lane.b32.xlu0 %v7185, 9
      %v8224 = vpop.permute.xlu0 %8223
      %8225 = vrot.lane.b32.xlu0 %v7186, 9
      %v8226 = vpop.permute.xlu0 %8225
      %8227 = vrot.lane.b32.xlu0 %v7187, 9
      %v8228 = vpop.permute.xlu0 %8227
      %8229 = vrot.lane.b32.xlu0 %v7188, 9
      %v8230 = vpop.permute.xlu0 %8229
      %8231 = vrot.lane.b32.xlu0 %v7189, 9
      %v8232 = vpop.permute.xlu0 %8231
      %8233 = vrot.lane.b32.xlu0 %v7190, 9
      %v8234 = vpop.permute.xlu0 %8233
      %v8271 = vmul.f32 %v8092, %v8164
      %v8272 = vmul.f32 %v8094, %v8166
      %v8273 = vmul.f32 %v8096, %v8168
      %v8274 = vmul.f32 %v8098, %v8170
      %v8275 = vmul.f32 %v8100, %v8172
      %v8276 = vmul.f32 %v8102, %v8174
      %v8277 = vmul.f32 %v8104, %v8176
      %v8278 = vmul.f32 %v8106, %v8178
      %v8279 = vmul.f32 %v8108, %v8180
      %v8280 = vmul.f32 %v8110, %v8182
      %v8281 = vmul.f32 %v8112, %v8184
      %v8282 = vmul.f32 %v8114, %v8186
      %v8283 = vmul.f32 %v8116, %v8188
      %v8284 = vmul.f32 %v8118, %v8190
      %v8285 = vmul.f32 %v8120, %v8192
      %v8286 = vmul.f32 %v8122, %v8194
      %v8287 = vmul.f32 %v8124, %v8196
      %v8288 = vmul.f32 %v8126, %v8198
      %v8289 = vmul.f32 %v8128, %v8200
      %v8290 = vmul.f32 %v8130, %v8202
      %v8291 = vmul.f32 %v8132, %v8204
      %v8292 = vmul.f32 %v8134, %v8206
      %v8293 = vmul.f32 %v8136, %v8208
      %v8294 = vmul.f32 %v8138, %v8210
      %v8295 = vmul.f32 %v8140, %v8212
      %v8296 = vmul.f32 %v8142, %v8214
      %v8297 = vmul.f32 %v8144, %v8216
      %v8298 = vmul.f32 %v8146, %v8218
      %v8299 = vmul.f32 %v8148, %v8220
      %v8300 = vmul.f32 %v8150, %v8222
      %v8301 = vmul.f32 %v8152, %v8224
      %v8302 = vmul.f32 %v8154, %v8226
      %v8303 = vmul.f32 %v8156, %v8228
      %v8304 = vmul.f32 %v8158, %v8230
      %v8305 = vmul.f32 %v8160, %v8232
      %v8306 = vmul.f32 %v8162, %v8234
      %8307 = vrot.lane.b32.xlu0 %v7191, 12
      %v8308 = vpop.permute.xlu0 %8307
      %8309 = vrot.lane.b32.xlu0 %v7192, 12
      %v8310 = vpop.permute.xlu0 %8309
      %8311 = vrot.lane.b32.xlu0 %v7193, 12
      %v8312 = vpop.permute.xlu0 %8311
      %8313 = vrot.lane.b32.xlu0 %v7194, 12
      %v8314 = vpop.permute.xlu0 %8313
      %8315 = vrot.lane.b32.xlu0 %v7195, 12
      %v8316 = vpop.permute.xlu0 %8315
      %8317 = vrot.lane.b32.xlu0 %v7196, 12
      %v8318 = vpop.permute.xlu0 %8317
      %8319 = vrot.lane.b32.xlu0 %v7197, 12
      %v8320 = vpop.permute.xlu0 %8319
      %8321 = vrot.lane.b32.xlu0 %v7198, 12
      %v8322 = vpop.permute.xlu0 %8321
      %8323 = vrot.lane.b32.xlu0 %v7199, 12
      %v8324 = vpop.permute.xlu0 %8323
      %8325 = vrot.lane.b32.xlu0 %v7200, 12
      %v8326 = vpop.permute.xlu0 %8325
      %8327 = vrot.lane.b32.xlu0 %v7201, 12
      %v8328 = vpop.permute.xlu0 %8327
      %8329 = vrot.lane.b32.xlu0 %v7202, 12
      %v8330 = vpop.permute.xlu0 %8329
      %8331 = vrot.lane.b32.xlu0 %v7203, 12
      %v8332 = vpop.permute.xlu0 %8331
      %8333 = vrot.lane.b32.xlu0 %v7204, 12
      %v8334 = vpop.permute.xlu0 %8333
      %8335 = vrot.lane.b32.xlu0 %v7205, 12
      %v8336 = vpop.permute.xlu0 %8335
      %8337 = vrot.lane.b32.xlu0 %v7206, 12
      %v8338 = vpop.permute.xlu0 %8337
      %8339 = vrot.lane.b32.xlu0 %v7207, 12
      %v8340 = vpop.permute.xlu0 %8339
      %8341 = vrot.lane.b32.xlu0 %v7208, 12
      %v8342 = vpop.permute.xlu0 %8341
      %8343 = vrot.lane.b32.xlu0 %v7209, 12
      %v8344 = vpop.permute.xlu0 %8343
      %8345 = vrot.lane.b32.xlu0 %v7210, 12
      %v8346 = vpop.permute.xlu0 %8345
      %8347 = vrot.lane.b32.xlu0 %v7211, 12
      %v8348 = vpop.permute.xlu0 %8347
      %8349 = vrot.lane.b32.xlu0 %v7212, 12
      %v8350 = vpop.permute.xlu0 %8349
      %8351 = vrot.lane.b32.xlu0 %v7213, 12
      %v8352 = vpop.permute.xlu0 %8351
      %8353 = vrot.lane.b32.xlu0 %v7214, 12
      %v8354 = vpop.permute.xlu0 %8353
      %8355 = vrot.lane.b32.xlu0 %v7215, 12
      %v8356 = vpop.permute.xlu0 %8355
      %8357 = vrot.lane.b32.xlu0 %v7216, 12
      %v8358 = vpop.permute.xlu0 %8357
      %8359 = vrot.lane.b32.xlu0 %v7217, 12
      %v8360 = vpop.permute.xlu0 %8359
      %8361 = vrot.lane.b32.xlu0 %v7218, 12
      %v8362 = vpop.permute.xlu0 %8361
      %8363 = vrot.lane.b32.xlu0 %v7219, 12
      %v8364 = vpop.permute.xlu0 %8363
      %8365 = vrot.lane.b32.xlu0 %v7220, 12
      %v8366 = vpop.permute.xlu0 %8365
      %8367 = vrot.lane.b32.xlu0 %v7221, 12
      %v8368 = vpop.permute.xlu0 %8367
      %8369 = vrot.lane.b32.xlu0 %v7222, 12
      %v8370 = vpop.permute.xlu0 %8369
      %8371 = vrot.lane.b32.xlu0 %v7223, 12
      %v8372 = vpop.permute.xlu0 %8371
      %8373 = vrot.lane.b32.xlu0 %v7224, 12
      %v8374 = vpop.permute.xlu0 %8373
      %8375 = vrot.lane.b32.xlu0 %v7225, 12
      %v8376 = vpop.permute.xlu0 %8375
      %8377 = vrot.lane.b32.xlu0 %v7226, 12
      %v8378 = vpop.permute.xlu0 %8377
      %v8415 = vmul.f32 %v8092, %v8308
      %v8416 = vmul.f32 %v8094, %v8310
      %v8417 = vmul.f32 %v8096, %v8312
      %v8418 = vmul.f32 %v8098, %v8314
      %v8419 = vmul.f32 %v8100, %v8316
      %v8420 = vmul.f32 %v8102, %v8318
      %v8421 = vmul.f32 %v8104, %v8320
      %v8422 = vmul.f32 %v8106, %v8322
      %v8423 = vmul.f32 %v8108, %v8324
      %v8424 = vmul.f32 %v8110, %v8326
      %v8425 = vmul.f32 %v8112, %v8328
      %v8426 = vmul.f32 %v8114, %v8330
      %v8427 = vmul.f32 %v8116, %v8332
      %v8428 = vmul.f32 %v8118, %v8334
      %v8429 = vmul.f32 %v8120, %v8336
      %v8430 = vmul.f32 %v8122, %v8338
      %v8431 = vmul.f32 %v8124, %v8340
      %v8432 = vmul.f32 %v8126, %v8342
      %v8433 = vmul.f32 %v8128, %v8344
      %v8434 = vmul.f32 %v8130, %v8346
      %v8435 = vmul.f32 %v8132, %v8348
      %v8436 = vmul.f32 %v8134, %v8350
      %v8437 = vmul.f32 %v8136, %v8352
      %v8438 = vmul.f32 %v8138, %v8354
      %v8439 = vmul.f32 %v8140, %v8356
      %v8440 = vmul.f32 %v8142, %v8358
      %v8441 = vmul.f32 %v8144, %v8360
      %v8442 = vmul.f32 %v8146, %v8362
      %v8443 = vmul.f32 %v8148, %v8364
      %v8444 = vmul.f32 %v8150, %v8366
      %v8445 = vmul.f32 %v8152, %v8368
      %v8446 = vmul.f32 %v8154, %v8370
      %v8447 = vmul.f32 %v8156, %v8372
      %v8448 = vmul.f32 %v8158, %v8374
      %v8449 = vmul.f32 %v8160, %v8376
      %v8450 = vmul.f32 %v8162, %v8378
      %v8451 = vmul.f32 %v8271, 0.5
      %v8452 = vmul.f32 %v8272, 0.5
      %v8453 = vmul.f32 %v8273, 0.5
      %v8454 = vmul.f32 %v8274, 0.5
      %v8455 = vmul.f32 %v8275, 0.5
      %v8456 = vmul.f32 %v8276, 0.5
      %v8457 = vmul.f32 %v8277, 0.5
      %v8458 = vmul.f32 %v8278, 0.5
      %v8459 = vmul.f32 %v8279, 0.5
      %v8460 = vmul.f32 %v8280, 0.5
      %v8461 = vmul.f32 %v8281, 0.5
      %v8462 = vmul.f32 %v8282, 0.5
      %v8463 = vmul.f32 %v8283, 0.5
      %v8464 = vmul.f32 %v8284, 0.5
      %v8465 = vmul.f32 %v8285, 0.5
      %v8466 = vmul.f32 %v8286, 0.5
      %v8467 = vmul.f32 %v8287, 0.5
      %v8468 = vmul.f32 %v8288, 0.5
      %v8469 = vmul.f32 %v8289, 0.5
      %v8470 = vmul.f32 %v8290, 0.5
      %v8471 = vmul.f32 %v8291, 0.5
      %v8472 = vmul.f32 %v8292, 0.5
      %v8473 = vmul.f32 %v8293, 0.5
      %v8474 = vmul.f32 %v8294, 0.5
      %v8475 = vmul.f32 %v8295, 0.5
      %v8476 = vmul.f32 %v8296, 0.5
      %v8477 = vmul.f32 %v8297, 0.5
      %v8478 = vmul.f32 %v8298, 0.5
      %v8479 = vmul.f32 %v8299, 0.5
      %v8480 = vmul.f32 %v8300, 0.5
      %v8481 = vmul.f32 %v8301, 0.5
      %v8482 = vmul.f32 %v8302, 0.5
      %v8483 = vmul.f32 %v8303, 0.5
      %v8484 = vmul.f32 %v8304, 0.5
      %v8485 = vmul.f32 %v8305, 0.5
      %v8486 = vmul.f32 %v8306, 0.5
      %8523 = vrot.lane.b32.xlu0 %v8451, 122
      %v8524 = vpop.permute.xlu0 %8523
      %8525 = vrot.lane.b32.xlu0 %v8452, 122
      %v8526 = vpop.permute.xlu0 %8525
      %8527 = vrot.lane.b32.xlu0 %v8453, 122
      %v8528 = vpop.permute.xlu0 %8527
      %8529 = vrot.lane.b32.xlu0 %v8454, 122
      %v8530 = vpop.permute.xlu0 %8529
      %8531 = vrot.lane.b32.xlu0 %v8455, 122
      %v8532 = vpop.permute.xlu0 %8531
      %8533 = vrot.lane.b32.xlu0 %v8456, 122
      %v8534 = vpop.permute.xlu0 %8533
      %8535 = vrot.lane.b32.xlu0 %v8457, 122
      %v8536 = vpop.permute.xlu0 %8535
      %8537 = vrot.lane.b32.xlu0 %v8458, 122
      %v8538 = vpop.permute.xlu0 %8537
      %8539 = vrot.lane.b32.xlu0 %v8459, 122
      %v8540 = vpop.permute.xlu0 %8539
      %8541 = vrot.lane.b32.xlu0 %v8460, 122
      %v8542 = vpop.permute.xlu0 %8541
      %8543 = vrot.lane.b32.xlu0 %v8461, 122
      %v8544 = vpop.permute.xlu0 %8543
      %8545 = vrot.lane.b32.xlu0 %v8462, 122
      %v8546 = vpop.permute.xlu0 %8545
      %8547 = vrot.lane.b32.xlu0 %v8463, 122
      %v8548 = vpop.permute.xlu0 %8547
      %8549 = vrot.lane.b32.xlu0 %v8464, 122
      %v8550 = vpop.permute.xlu0 %8549
      %8551 = vrot.lane.b32.xlu0 %v8465, 122
      %v8552 = vpop.permute.xlu0 %8551
      %8553 = vrot.lane.b32.xlu0 %v8466, 122
      %v8554 = vpop.permute.xlu0 %8553
      %8555 = vrot.lane.b32.xlu0 %v8467, 122
      %v8556 = vpop.permute.xlu0 %8555
      %8557 = vrot.lane.b32.xlu0 %v8468, 122
      %v8558 = vpop.permute.xlu0 %8557
      %8559 = vrot.lane.b32.xlu0 %v8469, 122
      %v8560 = vpop.permute.xlu0 %8559
      %8561 = vrot.lane.b32.xlu0 %v8470, 122
      %v8562 = vpop.permute.xlu0 %8561
      %8563 = vrot.lane.b32.xlu0 %v8471, 122
      %v8564 = vpop.permute.xlu0 %8563
      %8565 = vrot.lane.b32.xlu0 %v8472, 122
      %v8566 = vpop.permute.xlu0 %8565
      %8567 = vrot.lane.b32.xlu0 %v8473, 122
      %v8568 = vpop.permute.xlu0 %8567
      %8569 = vrot.lane.b32.xlu0 %v8474, 122
      %v8570 = vpop.permute.xlu0 %8569
      %8571 = vrot.lane.b32.xlu0 %v8475, 122
      %v8572 = vpop.permute.xlu0 %8571
      %8573 = vrot.lane.b32.xlu0 %v8476, 122
      %v8574 = vpop.permute.xlu0 %8573
      %8575 = vrot.lane.b32.xlu0 %v8477, 122
      %v8576 = vpop.permute.xlu0 %8575
      %8577 = vrot.lane.b32.xlu0 %v8478, 122
      %v8578 = vpop.permute.xlu0 %8577
      %8579 = vrot.lane.b32.xlu0 %v8479, 122
      %v8580 = vpop.permute.xlu0 %8579
      %8581 = vrot.lane.b32.xlu0 %v8480, 122
      %v8582 = vpop.permute.xlu0 %8581
      %8583 = vrot.lane.b32.xlu0 %v8481, 122
      %v8584 = vpop.permute.xlu0 %8583
      %8585 = vrot.lane.b32.xlu0 %v8482, 122
      %v8586 = vpop.permute.xlu0 %8585
      %8587 = vrot.lane.b32.xlu0 %v8483, 122
      %v8588 = vpop.permute.xlu0 %8587
      %8589 = vrot.lane.b32.xlu0 %v8484, 122
      %v8590 = vpop.permute.xlu0 %8589
      %8591 = vrot.lane.b32.xlu0 %v8485, 122
      %v8592 = vpop.permute.xlu0 %8591
      %8593 = vrot.lane.b32.xlu0 %v8486, 122
      %v8594 = vpop.permute.xlu0 %8593
      %v8631 = vsub.f32 %v7695, %v8524
      %v8632 = vsub.f32 %v7696, %v8526
      %v8633 = vsub.f32 %v7697, %v8528
      %v8634 = vsub.f32 %v7698, %v8530
      %v8635 = vsub.f32 %v7699, %v8532
      %v8636 = vsub.f32 %v7700, %v8534
      %v8637 = vsub.f32 %v7701, %v8536
      %v8638 = vsub.f32 %v7702, %v8538
      %v8639 = vsub.f32 %v7703, %v8540
      %v8640 = vsub.f32 %v7704, %v8542
      %v8641 = vsub.f32 %v7705, %v8544
      %v8642 = vsub.f32 %v7706, %v8546
      %v8643 = vsub.f32 %v7707, %v8548
      %v8644 = vsub.f32 %v7708, %v8550
      %v8645 = vsub.f32 %v7709, %v8552
      %v8646 = vsub.f32 %v7710, %v8554
      %v8647 = vsub.f32 %v7711, %v8556
      %v8648 = vsub.f32 %v7712, %v8558
      %v8649 = vsub.f32 %v7713, %v8560
      %v8650 = vsub.f32 %v7714, %v8562
      %v8651 = vsub.f32 %v7715, %v8564
      %v8652 = vsub.f32 %v7716, %v8566
      %v8653 = vsub.f32 %v7717, %v8568
      %v8654 = vsub.f32 %v7718, %v8570
      %v8655 = vsub.f32 %v7719, %v8572
      %v8656 = vsub.f32 %v7720, %v8574
      %v8657 = vsub.f32 %v7721, %v8576
      %v8658 = vsub.f32 %v7722, %v8578
      %v8659 = vsub.f32 %v7723, %v8580
      %v8660 = vsub.f32 %v7724, %v8582
      %v8661 = vsub.f32 %v7725, %v8584
      %v8662 = vsub.f32 %v7726, %v8586
      %v8663 = vsub.f32 %v7727, %v8588
      %v8664 = vsub.f32 %v7728, %v8590
      %v8665 = vsub.f32 %v7729, %v8592
      %v8666 = vsub.f32 %v7730, %v8594
      %v8667 = vmax.f32 %v8631, 0.0
      %v8668 = vmax.f32 %v8632, 0.0
      %v8669 = vmax.f32 %v8633, 0.0
      %v8670 = vmax.f32 %v8634, 0.0
      %v8671 = vmax.f32 %v8635, 0.0
      %v8672 = vmax.f32 %v8636, 0.0
      %v8673 = vmax.f32 %v8637, 0.0
      %v8674 = vmax.f32 %v8638, 0.0
      %v8675 = vmax.f32 %v8639, 0.0
      %v8676 = vmax.f32 %v8640, 0.0
      %v8677 = vmax.f32 %v8641, 0.0
      %v8678 = vmax.f32 %v8642, 0.0
      %v8679 = vmax.f32 %v8643, 0.0
      %v8680 = vmax.f32 %v8644, 0.0
      %v8681 = vmax.f32 %v8645, 0.0
      %v8682 = vmax.f32 %v8646, 0.0
      %v8683 = vmax.f32 %v8647, 0.0
      %v8684 = vmax.f32 %v8648, 0.0
      %v8685 = vmax.f32 %v8649, 0.0
      %v8686 = vmax.f32 %v8650, 0.0
      %v8687 = vmax.f32 %v8651, 0.0
      %v8688 = vmax.f32 %v8652, 0.0
      %v8689 = vmax.f32 %v8653, 0.0
      %v8690 = vmax.f32 %v8654, 0.0
      %v8691 = vmax.f32 %v8655, 0.0
      %v8692 = vmax.f32 %v8656, 0.0
      %v8693 = vmax.f32 %v8657, 0.0
      %v8694 = vmax.f32 %v8658, 0.0
      %v8695 = vmax.f32 %v8659, 0.0
      %v8696 = vmax.f32 %v8660, 0.0
      %v8697 = vmax.f32 %v8661, 0.0
      %v8698 = vmax.f32 %v8662, 0.0
      %v8699 = vmax.f32 %v8663, 0.0
      %v8700 = vmax.f32 %v8664, 0.0
      %v8701 = vmax.f32 %v8665, 0.0
      %v8702 = vmax.f32 %v8666, 0.0
      %v8703 = vmin.f32 %v8667, 16.0
      %v8704 = vmin.f32 %v8668, 16.0
      %v8705 = vmin.f32 %v8669, 16.0
      %v8706 = vmin.f32 %v8670, 16.0
      %v8707 = vmin.f32 %v8671, 16.0
      %v8708 = vmin.f32 %v8672, 16.0
      %v8709 = vmin.f32 %v8673, 16.0
      %v8710 = vmin.f32 %v8674, 16.0
      %v8711 = vmin.f32 %v8675, 16.0
      %v8712 = vmin.f32 %v8676, 16.0
      %v8713 = vmin.f32 %v8677, 16.0
      %v8714 = vmin.f32 %v8678, 16.0
      %v8715 = vmin.f32 %v8679, 16.0
      %v8716 = vmin.f32 %v8680, 16.0
      %v8717 = vmin.f32 %v8681, 16.0
      %v8718 = vmin.f32 %v8682, 16.0
      %v8719 = vmin.f32 %v8683, 16.0
      %v8720 = vmin.f32 %v8684, 16.0
      %v8721 = vmin.f32 %v8685, 16.0
      %v8722 = vmin.f32 %v8686, 16.0
      %v8723 = vmin.f32 %v8687, 16.0
      %v8724 = vmin.f32 %v8688, 16.0
      %v8725 = vmin.f32 %v8689, 16.0
      %v8726 = vmin.f32 %v8690, 16.0
      %v8727 = vmin.f32 %v8691, 16.0
      %v8728 = vmin.f32 %v8692, 16.0
      %v8729 = vmin.f32 %v8693, 16.0
      %v8730 = vmin.f32 %v8694, 16.0
      %v8731 = vmin.f32 %v8695, 16.0
      %v8732 = vmin.f32 %v8696, 16.0
      %v8733 = vmin.f32 %v8697, 16.0
      %v8734 = vmin.f32 %v8698, 16.0
      %v8735 = vmin.f32 %v8699, 16.0
      %v8736 = vmin.f32 %v8700, 16.0
      %v8737 = vmin.f32 %v8701, 16.0
      %v8738 = vmin.f32 %v8702, 16.0
      %8775 = vrot.lane.b32.xlu0 %v8703, 125
      %v8776 = vpop.permute.xlu0 %8775
      %8777 = vrot.lane.b32.xlu0 %v8704, 125
      %v8778 = vpop.permute.xlu0 %8777
      %8779 = vrot.lane.b32.xlu0 %v8705, 125
      %v8780 = vpop.permute.xlu0 %8779
      %8781 = vrot.lane.b32.xlu0 %v8706, 125
      %v8782 = vpop.permute.xlu0 %8781
      %8783 = vrot.lane.b32.xlu0 %v8707, 125
      %v8784 = vpop.permute.xlu0 %8783
      %8785 = vrot.lane.b32.xlu0 %v8708, 125
      %v8786 = vpop.permute.xlu0 %8785
      %8787 = vrot.lane.b32.xlu0 %v8709, 125
      %v8788 = vpop.permute.xlu0 %8787
      %8789 = vrot.lane.b32.xlu0 %v8710, 125
      %v8790 = vpop.permute.xlu0 %8789
      %8791 = vrot.lane.b32.xlu0 %v8711, 125
      %v8792 = vpop.permute.xlu0 %8791
      %8793 = vrot.lane.b32.xlu0 %v8712, 125
      %v8794 = vpop.permute.xlu0 %8793
      %8795 = vrot.lane.b32.xlu0 %v8713, 125
      %v8796 = vpop.permute.xlu0 %8795
      %8797 = vrot.lane.b32.xlu0 %v8714, 125
      %v8798 = vpop.permute.xlu0 %8797
      %8799 = vrot.lane.b32.xlu0 %v8715, 125
      %v8800 = vpop.permute.xlu0 %8799
      %8801 = vrot.lane.b32.xlu0 %v8716, 125
      %v8802 = vpop.permute.xlu0 %8801
      %8803 = vrot.lane.b32.xlu0 %v8717, 125
      %v8804 = vpop.permute.xlu0 %8803
      %8805 = vrot.lane.b32.xlu0 %v8718, 125
      %v8806 = vpop.permute.xlu0 %8805
      %8807 = vrot.lane.b32.xlu0 %v8719, 125
      %v8808 = vpop.permute.xlu0 %8807
      %8809 = vrot.lane.b32.xlu0 %v8720, 125
      %v8810 = vpop.permute.xlu0 %8809
      %8811 = vrot.lane.b32.xlu0 %v8721, 125
      %v8812 = vpop.permute.xlu0 %8811
      %8813 = vrot.lane.b32.xlu0 %v8722, 125
      %v8814 = vpop.permute.xlu0 %8813
      %8815 = vrot.lane.b32.xlu0 %v8723, 125
      %v8816 = vpop.permute.xlu0 %8815
      %8817 = vrot.lane.b32.xlu0 %v8724, 125
      %v8818 = vpop.permute.xlu0 %8817
      %8819 = vrot.lane.b32.xlu0 %v8725, 125
      %v8820 = vpop.permute.xlu0 %8819
      %8821 = vrot.lane.b32.xlu0 %v8726, 125
      %v8822 = vpop.permute.xlu0 %8821
      %8823 = vrot.lane.b32.xlu0 %v8727, 125
      %v8824 = vpop.permute.xlu0 %8823
      %8825 = vrot.lane.b32.xlu0 %v8728, 125
      %v8826 = vpop.permute.xlu0 %8825
      %8827 = vrot.lane.b32.xlu0 %v8729, 125
      %v8828 = vpop.permute.xlu0 %8827
      %8829 = vrot.lane.b32.xlu0 %v8730, 125
      %v8830 = vpop.permute.xlu0 %8829
      %8831 = vrot.lane.b32.xlu0 %v8731, 125
      %v8832 = vpop.permute.xlu0 %8831
      %8833 = vrot.lane.b32.xlu0 %v8732, 125
      %v8834 = vpop.permute.xlu0 %8833
      %8835 = vrot.lane.b32.xlu0 %v8733, 125
      %v8836 = vpop.permute.xlu0 %8835
      %8837 = vrot.lane.b32.xlu0 %v8734, 125
      %v8838 = vpop.permute.xlu0 %8837
      %8839 = vrot.lane.b32.xlu0 %v8735, 125
      %v8840 = vpop.permute.xlu0 %8839
      %8841 = vrot.lane.b32.xlu0 %v8736, 125
      %v8842 = vpop.permute.xlu0 %8841
      %8843 = vrot.lane.b32.xlu0 %v8737, 125
      %v8844 = vpop.permute.xlu0 %8843
      %8845 = vrot.lane.b32.xlu0 %v8738, 125
      %v8846 = vpop.permute.xlu0 %8845
      %8883 = vst.msk [vmem:[%s372] sm:$0xff] %vm521, %v8776
      %8884 = vst.msk [vmem:[%s372 + $0x8] sm:$0xff] %vm521, %v8778
      %8885 = vst.msk [vmem:[%s372 + $0x10] sm:$0xff] %vm521, %v8780
      %8886 = vst.msk [vmem:[%s372 + $0x18] sm:$0xff] %vm521, %v8782
      %8887 = vst.msk [vmem:[%s372 + $0x20] sm:$0xff] %vm521, %v8784
      %8888 = vst.msk [vmem:[%s372 + $0x28] sm:$0xff] %vm521, %v8786
      %8889 = vst.msk [vmem:[%s372 + $0x30] sm:$0xff] %vm521, %v8788
      %8890 = vst.msk [vmem:[%s372 + $0x38] sm:$0xff] %vm521, %v8790
      %8891 = vst.msk [vmem:[%s372 + $0x40] sm:$0xff] %vm521, %v8792
      %8892 = vst.msk [vmem:[%s372 + $0x48] sm:$0xff] %vm521, %v8794
      %8893 = vst.msk [vmem:[%s372 + $0x50] sm:$0xff] %vm521, %v8796
      %8894 = vst.msk [vmem:[%s372 + $0x58] sm:$0xff] %vm521, %v8798
      %8895 = vst.msk [vmem:[%s372 + $0x60] sm:$0xff] %vm521, %v8800
      %8896 = vst.msk [vmem:[%s372 + $0x68] sm:$0xff] %vm521, %v8802
      %8897 = vst.msk [vmem:[%s372 + $0x70] sm:$0xff] %vm521, %v8804
      %8898 = vst.msk [vmem:[%s372 + $0x78] sm:$0xff] %vm521, %v8806
      %8899 = vst.msk [vmem:[%s372 + $0x80] sm:$0xff] %vm521, %v8808
      %8900 = vst.msk [vmem:[%s372 + $0x88] sm:$0xff] %vm521, %v8810
      %8901 = vst.msk [vmem:[%s372 + $0x90] sm:$0xff] %vm521, %v8812
      %8902 = vst.msk [vmem:[%s372 + $0x98] sm:$0xff] %vm521, %v8814
      %8903 = vst.msk [vmem:[%s372 + $0xa0] sm:$0xff] %vm521, %v8816
      %8904 = vst.msk [vmem:[%s372 + $0xa8] sm:$0xff] %vm521, %v8818
      %8905 = vst.msk [vmem:[%s372 + $0xb0] sm:$0xff] %vm521, %v8820
      %8906 = vst.msk [vmem:[%s372 + $0xb8] sm:$0xff] %vm521, %v8822
      %8907 = vst.msk [vmem:[%s372 + $0xc0] sm:$0xff] %vm521, %v8824
      %8908 = vst.msk [vmem:[%s372 + $0xc8] sm:$0xff] %vm521, %v8826
      %8909 = vst.msk [vmem:[%s372 + $0xd0] sm:$0xff] %vm521, %v8828
      %8910 = vst.msk [vmem:[%s372 + $0xd8] sm:$0xff] %vm521, %v8830
      %8911 = vst.msk [vmem:[%s372 + $0xe0] sm:$0xff] %vm521, %v8832
      %8912 = vst.msk [vmem:[%s372 + $0xe8] sm:$0xff] %vm521, %v8834
      %8913 = vst.msk [vmem:[%s372 + $0xf0] sm:$0xff] %vm521, %v8836
      %8914 = vst.msk [vmem:[%s372 + $0xf8] sm:$0xff] %vm521, %v8838
      %8915 = vst.msk [vmem:[%s372 + $0x100] sm:$0xff] %vm521, %v8840
      %8916 = vst.msk [vmem:[%s372 + $0x108] sm:$0xff] %vm521, %v8842
      %8917 = vst.msk [vmem:[%s372 + $0x110] sm:$0xff] %vm521, %v8844
      %8918 = vst.msk [vmem:[%s372 + $0x118] sm:$0xff] %vm521, %v8846
      %v8919 = vmul.f32 %v8415, 0.5
      %v8920 = vmul.f32 %v8416, 0.5
      %v8921 = vmul.f32 %v8417, 0.5
      %v8922 = vmul.f32 %v8418, 0.5
      %v8923 = vmul.f32 %v8419, 0.5
      %v8924 = vmul.f32 %v8420, 0.5
      %v8925 = vmul.f32 %v8421, 0.5
      %v8926 = vmul.f32 %v8422, 0.5
      %v8927 = vmul.f32 %v8423, 0.5
      %v8928 = vmul.f32 %v8424, 0.5
      %v8929 = vmul.f32 %v8425, 0.5
      %v8930 = vmul.f32 %v8426, 0.5
      %v8931 = vmul.f32 %v8427, 0.5
      %v8932 = vmul.f32 %v8428, 0.5
      %v8933 = vmul.f32 %v8429, 0.5
      %v8934 = vmul.f32 %v8430, 0.5
      %v8935 = vmul.f32 %v8431, 0.5
      %v8936 = vmul.f32 %v8432, 0.5
      %v8937 = vmul.f32 %v8433, 0.5
      %v8938 = vmul.f32 %v8434, 0.5
      %v8939 = vmul.f32 %v8435, 0.5
      %v8940 = vmul.f32 %v8436, 0.5
      %v8941 = vmul.f32 %v8437, 0.5
      %v8942 = vmul.f32 %v8438, 0.5
      %v8943 = vmul.f32 %v8439, 0.5
      %v8944 = vmul.f32 %v8440, 0.5
      %v8945 = vmul.f32 %v8441, 0.5
      %v8946 = vmul.f32 %v8442, 0.5
      %v8947 = vmul.f32 %v8443, 0.5
      %v8948 = vmul.f32 %v8444, 0.5
      %v8949 = vmul.f32 %v8445, 0.5
      %v8950 = vmul.f32 %v8446, 0.5
      %v8951 = vmul.f32 %v8447, 0.5
      %v8952 = vmul.f32 %v8448, 0.5
      %v8953 = vmul.f32 %v8449, 0.5
      %v8954 = vmul.f32 %v8450, 0.5
      %8991 = vrot.lane.b32.xlu0 %v8919, 122
      %v8992 = vpop.permute.xlu0 %8991
      %8993 = vrot.lane.b32.xlu0 %v8920, 122
      %v8994 = vpop.permute.xlu0 %8993
      %8995 = vrot.lane.b32.xlu0 %v8921, 122
      %v8996 = vpop.permute.xlu0 %8995
      %8997 = vrot.lane.b32.xlu0 %v8922, 122
      %v8998 = vpop.permute.xlu0 %8997
      %8999 = vrot.lane.b32.xlu0 %v8923, 122
      %v9000 = vpop.permute.xlu0 %8999
      %9001 = vrot.lane.b32.xlu0 %v8924, 122
      %v9002 = vpop.permute.xlu0 %9001
      %9003 = vrot.lane.b32.xlu0 %v8925, 122
      %v9004 = vpop.permute.xlu0 %9003
      %9005 = vrot.lane.b32.xlu0 %v8926, 122
      %v9006 = vpop.permute.xlu0 %9005
      %9007 = vrot.lane.b32.xlu0 %v8927, 122
      %v9008 = vpop.permute.xlu0 %9007
      %9009 = vrot.lane.b32.xlu0 %v8928, 122
      %v9010 = vpop.permute.xlu0 %9009
      %9011 = vrot.lane.b32.xlu0 %v8929, 122
      %v9012 = vpop.permute.xlu0 %9011
      %9013 = vrot.lane.b32.xlu0 %v8930, 122
      %v9014 = vpop.permute.xlu0 %9013
      %9015 = vrot.lane.b32.xlu0 %v8931, 122
      %v9016 = vpop.permute.xlu0 %9015
      %9017 = vrot.lane.b32.xlu0 %v8932, 122
      %v9018 = vpop.permute.xlu0 %9017
      %9019 = vrot.lane.b32.xlu0 %v8933, 122
      %v9020 = vpop.permute.xlu0 %9019
      %9021 = vrot.lane.b32.xlu0 %v8934, 122
      %v9022 = vpop.permute.xlu0 %9021
      %9023 = vrot.lane.b32.xlu0 %v8935, 122
      %v9024 = vpop.permute.xlu0 %9023
      %9025 = vrot.lane.b32.xlu0 %v8936, 122
      %v9026 = vpop.permute.xlu0 %9025
      %9027 = vrot.lane.b32.xlu0 %v8937, 122
      %v9028 = vpop.permute.xlu0 %9027
      %9029 = vrot.lane.b32.xlu0 %v8938, 122
      %v9030 = vpop.permute.xlu0 %9029
      %9031 = vrot.lane.b32.xlu0 %v8939, 122
      %v9032 = vpop.permute.xlu0 %9031
      %9033 = vrot.lane.b32.xlu0 %v8940, 122
      %v9034 = vpop.permute.xlu0 %9033
      %9035 = vrot.lane.b32.xlu0 %v8941, 122
      %v9036 = vpop.permute.xlu0 %9035
      %9037 = vrot.lane.b32.xlu0 %v8942, 122
      %v9038 = vpop.permute.xlu0 %9037
      %9039 = vrot.lane.b32.xlu0 %v8943, 122
      %v9040 = vpop.permute.xlu0 %9039
      %9041 = vrot.lane.b32.xlu0 %v8944, 122
      %v9042 = vpop.permute.xlu0 %9041
      %9043 = vrot.lane.b32.xlu0 %v8945, 122
      %v9044 = vpop.permute.xlu0 %9043
      %9045 = vrot.lane.b32.xlu0 %v8946, 122
      %v9046 = vpop.permute.xlu0 %9045
      %9047 = vrot.lane.b32.xlu0 %v8947, 122
      %v9048 = vpop.permute.xlu0 %9047
      %9049 = vrot.lane.b32.xlu0 %v8948, 122
      %v9050 = vpop.permute.xlu0 %9049
      %9051 = vrot.lane.b32.xlu0 %v8949, 122
      %v9052 = vpop.permute.xlu0 %9051
      %9053 = vrot.lane.b32.xlu0 %v8950, 122
      %v9054 = vpop.permute.xlu0 %9053
      %9055 = vrot.lane.b32.xlu0 %v8951, 122
      %v9056 = vpop.permute.xlu0 %9055
      %9057 = vrot.lane.b32.xlu0 %v8952, 122
      %v9058 = vpop.permute.xlu0 %9057
      %9059 = vrot.lane.b32.xlu0 %v8953, 122
      %v9060 = vpop.permute.xlu0 %9059
      %9061 = vrot.lane.b32.xlu0 %v8954, 122
      %v9062 = vpop.permute.xlu0 %9061
      %v9099 = vsub.f32 %v8055, %v8992
      %v9100 = vsub.f32 %v8056, %v8994
      %v9101 = vsub.f32 %v8057, %v8996
      %v9102 = vsub.f32 %v8058, %v8998
      %v9103 = vsub.f32 %v8059, %v9000
      %v9104 = vsub.f32 %v8060, %v9002
      %v9105 = vsub.f32 %v8061, %v9004
      %v9106 = vsub.f32 %v8062, %v9006
      %v9107 = vsub.f32 %v8063, %v9008
      %v9108 = vsub.f32 %v8064, %v9010
      %v9109 = vsub.f32 %v8065, %v9012
      %v9110 = vsub.f32 %v8066, %v9014
      %v9111 = vsub.f32 %v8067, %v9016
      %v9112 = vsub.f32 %v8068, %v9018
      %v9113 = vsub.f32 %v8069, %v9020
      %v9114 = vsub.f32 %v8070, %v9022
      %v9115 = vsub.f32 %v8071, %v9024
      %v9116 = vsub.f32 %v8072, %v9026
      %v9117 = vsub.f32 %v8073, %v9028
      %v9118 = vsub.f32 %v8074, %v9030
      %v9119 = vsub.f32 %v8075, %v9032
      %v9120 = vsub.f32 %v8076, %v9034
      %v9121 = vsub.f32 %v8077, %v9036
      %v9122 = vsub.f32 %v8078, %v9038
      %v9123 = vsub.f32 %v8079, %v9040
      %v9124 = vsub.f32 %v8080, %v9042
      %v9125 = vsub.f32 %v8081, %v9044
      %v9126 = vsub.f32 %v8082, %v9046
      %v9127 = vsub.f32 %v8083, %v9048
      %v9128 = vsub.f32 %v8084, %v9050
      %v9129 = vsub.f32 %v8085, %v9052
      %v9130 = vsub.f32 %v8086, %v9054
      %v9131 = vsub.f32 %v8087, %v9056
      %v9132 = vsub.f32 %v8088, %v9058
      %v9133 = vsub.f32 %v8089, %v9060
      %v9134 = vsub.f32 %v8090, %v9062
      %v9135 = vmax.f32 %v9099, 0.0
      %v9136 = vmax.f32 %v9100, 0.0
      %v9137 = vmax.f32 %v9101, 0.0
      %v9138 = vmax.f32 %v9102, 0.0
      %v9139 = vmax.f32 %v9103, 0.0
      %v9140 = vmax.f32 %v9104, 0.0
      %v9141 = vmax.f32 %v9105, 0.0
      %v9142 = vmax.f32 %v9106, 0.0
      %v9143 = vmax.f32 %v9107, 0.0
      %v9144 = vmax.f32 %v9108, 0.0
      %v9145 = vmax.f32 %v9109, 0.0
      %v9146 = vmax.f32 %v9110, 0.0
      %v9147 = vmax.f32 %v9111, 0.0
      %v9148 = vmax.f32 %v9112, 0.0
      %v9149 = vmax.f32 %v9113, 0.0
      %v9150 = vmax.f32 %v9114, 0.0
      %v9151 = vmax.f32 %v9115, 0.0
      %v9152 = vmax.f32 %v9116, 0.0
      %v9153 = vmax.f32 %v9117, 0.0
      %v9154 = vmax.f32 %v9118, 0.0
      %v9155 = vmax.f32 %v9119, 0.0
      %v9156 = vmax.f32 %v9120, 0.0
      %v9157 = vmax.f32 %v9121, 0.0
      %v9158 = vmax.f32 %v9122, 0.0
      %v9159 = vmax.f32 %v9123, 0.0
      %v9160 = vmax.f32 %v9124, 0.0
      %v9161 = vmax.f32 %v9125, 0.0
      %v9162 = vmax.f32 %v9126, 0.0
      %v9163 = vmax.f32 %v9127, 0.0
      %v9164 = vmax.f32 %v9128, 0.0
      %v9165 = vmax.f32 %v9129, 0.0
      %v9166 = vmax.f32 %v9130, 0.0
      %v9167 = vmax.f32 %v9131, 0.0
      %v9168 = vmax.f32 %v9132, 0.0
      %v9169 = vmax.f32 %v9133, 0.0
      %v9170 = vmax.f32 %v9134, 0.0
      %v9171 = vmin.f32 %v9135, 16.0
      %v9172 = vmin.f32 %v9136, 16.0
      %v9173 = vmin.f32 %v9137, 16.0
      %v9174 = vmin.f32 %v9138, 16.0
      %v9175 = vmin.f32 %v9139, 16.0
      %v9176 = vmin.f32 %v9140, 16.0
      %v9177 = vmin.f32 %v9141, 16.0
      %v9178 = vmin.f32 %v9142, 16.0
      %v9179 = vmin.f32 %v9143, 16.0
      %v9180 = vmin.f32 %v9144, 16.0
      %v9181 = vmin.f32 %v9145, 16.0
      %v9182 = vmin.f32 %v9146, 16.0
      %v9183 = vmin.f32 %v9147, 16.0
      %v9184 = vmin.f32 %v9148, 16.0
      %v9185 = vmin.f32 %v9149, 16.0
      %v9186 = vmin.f32 %v9150, 16.0
      %v9187 = vmin.f32 %v9151, 16.0
      %v9188 = vmin.f32 %v9152, 16.0
      %v9189 = vmin.f32 %v9153, 16.0
      %v9190 = vmin.f32 %v9154, 16.0
      %v9191 = vmin.f32 %v9155, 16.0
      %v9192 = vmin.f32 %v9156, 16.0
      %v9193 = vmin.f32 %v9157, 16.0
      %v9194 = vmin.f32 %v9158, 16.0
      %v9195 = vmin.f32 %v9159, 16.0
      %v9196 = vmin.f32 %v9160, 16.0
      %v9197 = vmin.f32 %v9161, 16.0
      %v9198 = vmin.f32 %v9162, 16.0
      %v9199 = vmin.f32 %v9163, 16.0
      %v9200 = vmin.f32 %v9164, 16.0
      %v9201 = vmin.f32 %v9165, 16.0
      %v9202 = vmin.f32 %v9166, 16.0
      %v9203 = vmin.f32 %v9167, 16.0
      %v9204 = vmin.f32 %v9168, 16.0
      %v9205 = vmin.f32 %v9169, 16.0
      %v9206 = vmin.f32 %v9170, 16.0
      %9243 = vrot.lane.b32.xlu0 %v9171, 122
      %v9244 = vpop.permute.xlu0 %9243
      %9245 = vrot.lane.b32.xlu0 %v9172, 122
      %v9246 = vpop.permute.xlu0 %9245
      %9247 = vrot.lane.b32.xlu0 %v9173, 122
      %v9248 = vpop.permute.xlu0 %9247
      %9249 = vrot.lane.b32.xlu0 %v9174, 122
      %v9250 = vpop.permute.xlu0 %9249
      %9251 = vrot.lane.b32.xlu0 %v9175, 122
      %v9252 = vpop.permute.xlu0 %9251
      %9253 = vrot.lane.b32.xlu0 %v9176, 122
      %v9254 = vpop.permute.xlu0 %9253
      %9255 = vrot.lane.b32.xlu0 %v9177, 122
      %v9256 = vpop.permute.xlu0 %9255
      %9257 = vrot.lane.b32.xlu0 %v9178, 122
      %v9258 = vpop.permute.xlu0 %9257
      %9259 = vrot.lane.b32.xlu0 %v9179, 122
      %v9260 = vpop.permute.xlu0 %9259
      %9261 = vrot.lane.b32.xlu0 %v9180, 122
      %v9262 = vpop.permute.xlu0 %9261
      %9263 = vrot.lane.b32.xlu0 %v9181, 122
      %v9264 = vpop.permute.xlu0 %9263
      %9265 = vrot.lane.b32.xlu0 %v9182, 122
      %v9266 = vpop.permute.xlu0 %9265
      %9267 = vrot.lane.b32.xlu0 %v9183, 122
      %v9268 = vpop.permute.xlu0 %9267
      %9269 = vrot.lane.b32.xlu0 %v9184, 122
      %v9270 = vpop.permute.xlu0 %9269
      %9271 = vrot.lane.b32.xlu0 %v9185, 122
      %v9272 = vpop.permute.xlu0 %9271
      %9273 = vrot.lane.b32.xlu0 %v9186, 122
      %v9274 = vpop.permute.xlu0 %9273
      %9275 = vrot.lane.b32.xlu0 %v9187, 122
      %v9276 = vpop.permute.xlu0 %9275
      %9277 = vrot.lane.b32.xlu0 %v9188, 122
      %v9278 = vpop.permute.xlu0 %9277
      %9279 = vrot.lane.b32.xlu0 %v9189, 122
      %v9280 = vpop.permute.xlu0 %9279
      %9281 = vrot.lane.b32.xlu0 %v9190, 122
      %v9282 = vpop.permute.xlu0 %9281
      %9283 = vrot.lane.b32.xlu0 %v9191, 122
      %v9284 = vpop.permute.xlu0 %9283
      %9285 = vrot.lane.b32.xlu0 %v9192, 122
      %v9286 = vpop.permute.xlu0 %9285
      %9287 = vrot.lane.b32.xlu0 %v9193, 122
      %v9288 = vpop.permute.xlu0 %9287
      %9289 = vrot.lane.b32.xlu0 %v9194, 122
      %v9290 = vpop.permute.xlu0 %9289
      %9291 = vrot.lane.b32.xlu0 %v9195, 122
      %v9292 = vpop.permute.xlu0 %9291
      %9293 = vrot.lane.b32.xlu0 %v9196, 122
      %v9294 = vpop.permute.xlu0 %9293
      %9295 = vrot.lane.b32.xlu0 %v9197, 122
      %v9296 = vpop.permute.xlu0 %9295
      %9297 = vrot.lane.b32.xlu0 %v9198, 122
      %v9298 = vpop.permute.xlu0 %9297
      %9299 = vrot.lane.b32.xlu0 %v9199, 122
      %v9300 = vpop.permute.xlu0 %9299
      %9301 = vrot.lane.b32.xlu0 %v9200, 122
      %v9302 = vpop.permute.xlu0 %9301
      %9303 = vrot.lane.b32.xlu0 %v9201, 122
      %v9304 = vpop.permute.xlu0 %9303
      %9305 = vrot.lane.b32.xlu0 %v9202, 122
      %v9306 = vpop.permute.xlu0 %9305
      %9307 = vrot.lane.b32.xlu0 %v9203, 122
      %v9308 = vpop.permute.xlu0 %9307
      %9309 = vrot.lane.b32.xlu0 %v9204, 122
      %v9310 = vpop.permute.xlu0 %9309
      %9311 = vrot.lane.b32.xlu0 %v9205, 122
      %v9312 = vpop.permute.xlu0 %9311
      %9313 = vrot.lane.b32.xlu0 %v9206, 122
      %v9314 = vpop.permute.xlu0 %9313
      %s9351 = scalar_lea.vmem %s372, 288
      %9352 = vst.msk [vmem:[%s9351] sm:$0xff] %vm521, %v9244
      %9353 = vst.msk [vmem:[%s9351 + $0x8] sm:$0xff] %vm521, %v9246
      %9354 = vst.msk [vmem:[%s9351 + $0x10] sm:$0xff] %vm521, %v9248
      %9355 = vst.msk [vmem:[%s9351 + $0x18] sm:$0xff] %vm521, %v9250
      %9356 = vst.msk [vmem:[%s9351 + $0x20] sm:$0xff] %vm521, %v9252
      %9357 = vst.msk [vmem:[%s9351 + $0x28] sm:$0xff] %vm521, %v9254
      %9358 = vst.msk [vmem:[%s9351 + $0x30] sm:$0xff] %vm521, %v9256
      %9359 = vst.msk [vmem:[%s9351 + $0x38] sm:$0xff] %vm521, %v9258
      %9360 = vst.msk [vmem:[%s9351 + $0x40] sm:$0xff] %vm521, %v9260
      %9361 = vst.msk [vmem:[%s9351 + $0x48] sm:$0xff] %vm521, %v9262
      %9362 = vst.msk [vmem:[%s9351 + $0x50] sm:$0xff] %vm521, %v9264
      %9363 = vst.msk [vmem:[%s9351 + $0x58] sm:$0xff] %vm521, %v9266
      %9364 = vst.msk [vmem:[%s9351 + $0x60] sm:$0xff] %vm521, %v9268
      %9365 = vst.msk [vmem:[%s9351 + $0x68] sm:$0xff] %vm521, %v9270
      %9366 = vst.msk [vmem:[%s9351 + $0x70] sm:$0xff] %vm521, %v9272
      %9367 = vst.msk [vmem:[%s9351 + $0x78] sm:$0xff] %vm521, %v9274
      %9368 = vst.msk [vmem:[%s9351 + $0x80] sm:$0xff] %vm521, %v9276
      %9369 = vst.msk [vmem:[%s9351 + $0x88] sm:$0xff] %vm521, %v9278
      %9370 = vst.msk [vmem:[%s9351 + $0x90] sm:$0xff] %vm521, %v9280
      %9371 = vst.msk [vmem:[%s9351 + $0x98] sm:$0xff] %vm521, %v9282
      %9372 = vst.msk [vmem:[%s9351 + $0xa0] sm:$0xff] %vm521, %v9284
      %9373 = vst.msk [vmem:[%s9351 + $0xa8] sm:$0xff] %vm521, %v9286
      %9374 = vst.msk [vmem:[%s9351 + $0xb0] sm:$0xff] %vm521, %v9288
      %9375 = vst.msk [vmem:[%s9351 + $0xb8] sm:$0xff] %vm521, %v9290
      %9376 = vst.msk [vmem:[%s9351 + $0xc0] sm:$0xff] %vm521, %v9292
      %9377 = vst.msk [vmem:[%s9351 + $0xc8] sm:$0xff] %vm521, %v9294
      %9378 = vst.msk [vmem:[%s9351 + $0xd0] sm:$0xff] %vm521, %v9296
      %9379 = vst.msk [vmem:[%s9351 + $0xd8] sm:$0xff] %vm521, %v9298
      %9380 = vst.msk [vmem:[%s9351 + $0xe0] sm:$0xff] %vm521, %v9300
      %9381 = vst.msk [vmem:[%s9351 + $0xe8] sm:$0xff] %vm521, %v9302
      %9382 = vst.msk [vmem:[%s9351 + $0xf0] sm:$0xff] %vm521, %v9304
      %9383 = vst.msk [vmem:[%s9351 + $0xf8] sm:$0xff] %vm521, %v9306
      %9384 = vst.msk [vmem:[%s9351 + $0x100] sm:$0xff] %vm521, %v9308
      %9385 = vst.msk [vmem:[%s9351 + $0x108] sm:$0xff] %vm521, %v9310
      %9386 = vst.msk [vmem:[%s9351 + $0x110] sm:$0xff] %vm521, %v9312
      %9387 = vst.msk [vmem:[%s9351 + $0x118] sm:$0xff] %vm521, %v9314
      %v9388 = vadd.f32 %v7695, %v8524
      %v9389 = vadd.f32 %v7696, %v8526
      %v9390 = vadd.f32 %v7697, %v8528
      %v9391 = vadd.f32 %v7698, %v8530
      %v9392 = vadd.f32 %v7699, %v8532
      %v9393 = vadd.f32 %v7700, %v8534
      %v9394 = vadd.f32 %v7701, %v8536
      %v9395 = vadd.f32 %v7702, %v8538
      %v9396 = vadd.f32 %v7703, %v8540
      %v9397 = vadd.f32 %v7704, %v8542
      %v9398 = vadd.f32 %v7705, %v8544
      %v9399 = vadd.f32 %v7706, %v8546
      %v9400 = vadd.f32 %v7707, %v8548
      %v9401 = vadd.f32 %v7708, %v8550
      %v9402 = vadd.f32 %v7709, %v8552
      %v9403 = vadd.f32 %v7710, %v8554
      %v9404 = vadd.f32 %v7711, %v8556
      %v9405 = vadd.f32 %v7712, %v8558
      %v9406 = vadd.f32 %v7713, %v8560
      %v9407 = vadd.f32 %v7714, %v8562
      %v9408 = vadd.f32 %v7715, %v8564
      %v9409 = vadd.f32 %v7716, %v8566
      %v9410 = vadd.f32 %v7717, %v8568
      %v9411 = vadd.f32 %v7718, %v8570
      %v9412 = vadd.f32 %v7719, %v8572
      %v9413 = vadd.f32 %v7720, %v8574
      %v9414 = vadd.f32 %v7721, %v8576
      %v9415 = vadd.f32 %v7722, %v8578
      %v9416 = vadd.f32 %v7723, %v8580
      %v9417 = vadd.f32 %v7724, %v8582
      %v9418 = vadd.f32 %v7725, %v8584
      %v9419 = vadd.f32 %v7726, %v8586
      %v9420 = vadd.f32 %v7727, %v8588
      %v9421 = vadd.f32 %v7728, %v8590
      %v9422 = vadd.f32 %v7729, %v8592
      %v9423 = vadd.f32 %v7730, %v8594
      %v9424 = vmax.f32 %v9388, 0.0
      %v9425 = vmax.f32 %v9389, 0.0
      %v9426 = vmax.f32 %v9390, 0.0
      %v9427 = vmax.f32 %v9391, 0.0
      %v9428 = vmax.f32 %v9392, 0.0
      %v9429 = vmax.f32 %v9393, 0.0
      %v9430 = vmax.f32 %v9394, 0.0
      %v9431 = vmax.f32 %v9395, 0.0
      %v9432 = vmax.f32 %v9396, 0.0
      %v9433 = vmax.f32 %v9397, 0.0
      %v9434 = vmax.f32 %v9398, 0.0
      %v9435 = vmax.f32 %v9399, 0.0
      %v9436 = vmax.f32 %v9400, 0.0
      %v9437 = vmax.f32 %v9401, 0.0
      %v9438 = vmax.f32 %v9402, 0.0
      %v9439 = vmax.f32 %v9403, 0.0
      %v9440 = vmax.f32 %v9404, 0.0
      %v9441 = vmax.f32 %v9405, 0.0
      %v9442 = vmax.f32 %v9406, 0.0
      %v9443 = vmax.f32 %v9407, 0.0
      %v9444 = vmax.f32 %v9408, 0.0
      %v9445 = vmax.f32 %v9409, 0.0
      %v9446 = vmax.f32 %v9410, 0.0
      %v9447 = vmax.f32 %v9411, 0.0
      %v9448 = vmax.f32 %v9412, 0.0
      %v9449 = vmax.f32 %v9413, 0.0
      %v9450 = vmax.f32 %v9414, 0.0
      %v9451 = vmax.f32 %v9415, 0.0
      %v9452 = vmax.f32 %v9416, 0.0
      %v9453 = vmax.f32 %v9417, 0.0
      %v9454 = vmax.f32 %v9418, 0.0
      %v9455 = vmax.f32 %v9419, 0.0
      %v9456 = vmax.f32 %v9420, 0.0
      %v9457 = vmax.f32 %v9421, 0.0
      %v9458 = vmax.f32 %v9422, 0.0
      %v9459 = vmax.f32 %v9423, 0.0
      %v9460 = vmin.f32 %v9424, 16.0
      %v9461 = vmin.f32 %v9425, 16.0
      %v9462 = vmin.f32 %v9426, 16.0
      %v9463 = vmin.f32 %v9427, 16.0
      %v9464 = vmin.f32 %v9428, 16.0
      %v9465 = vmin.f32 %v9429, 16.0
      %v9466 = vmin.f32 %v9430, 16.0
      %v9467 = vmin.f32 %v9431, 16.0
      %v9468 = vmin.f32 %v9432, 16.0
      %v9469 = vmin.f32 %v9433, 16.0
      %v9470 = vmin.f32 %v9434, 16.0
      %v9471 = vmin.f32 %v9435, 16.0
      %v9472 = vmin.f32 %v9436, 16.0
      %v9473 = vmin.f32 %v9437, 16.0
      %v9474 = vmin.f32 %v9438, 16.0
      %v9475 = vmin.f32 %v9439, 16.0
      %v9476 = vmin.f32 %v9440, 16.0
      %v9477 = vmin.f32 %v9441, 16.0
      %v9478 = vmin.f32 %v9442, 16.0
      %v9479 = vmin.f32 %v9443, 16.0
      %v9480 = vmin.f32 %v9444, 16.0
      %v9481 = vmin.f32 %v9445, 16.0
      %v9482 = vmin.f32 %v9446, 16.0
      %v9483 = vmin.f32 %v9447, 16.0
      %v9484 = vmin.f32 %v9448, 16.0
      %v9485 = vmin.f32 %v9449, 16.0
      %v9486 = vmin.f32 %v9450, 16.0
      %v9487 = vmin.f32 %v9451, 16.0
      %v9488 = vmin.f32 %v9452, 16.0
      %v9489 = vmin.f32 %v9453, 16.0
      %v9490 = vmin.f32 %v9454, 16.0
      %v9491 = vmin.f32 %v9455, 16.0
      %v9492 = vmin.f32 %v9456, 16.0
      %v9493 = vmin.f32 %v9457, 16.0
      %v9494 = vmin.f32 %v9458, 16.0
      %v9495 = vmin.f32 %v9459, 16.0
      %9532 = vrot.lane.b32.xlu0 %v9460, 125
      %v9533 = vpop.permute.xlu0 %9532
      %9534 = vrot.lane.b32.xlu0 %v9461, 125
      %v9535 = vpop.permute.xlu0 %9534
      %9536 = vrot.lane.b32.xlu0 %v9462, 125
      %v9537 = vpop.permute.xlu0 %9536
      %9538 = vrot.lane.b32.xlu0 %v9463, 125
      %v9539 = vpop.permute.xlu0 %9538
      %9540 = vrot.lane.b32.xlu0 %v9464, 125
      %v9541 = vpop.permute.xlu0 %9540
      %9542 = vrot.lane.b32.xlu0 %v9465, 125
      %v9543 = vpop.permute.xlu0 %9542
      %9544 = vrot.lane.b32.xlu0 %v9466, 125
      %v9545 = vpop.permute.xlu0 %9544
      %9546 = vrot.lane.b32.xlu0 %v9467, 125
      %v9547 = vpop.permute.xlu0 %9546
      %9548 = vrot.lane.b32.xlu0 %v9468, 125
      %v9549 = vpop.permute.xlu0 %9548
      %9550 = vrot.lane.b32.xlu0 %v9469, 125
      %v9551 = vpop.permute.xlu0 %9550
      %9552 = vrot.lane.b32.xlu0 %v9470, 125
      %v9553 = vpop.permute.xlu0 %9552
      %9554 = vrot.lane.b32.xlu0 %v9471, 125
      %v9555 = vpop.permute.xlu0 %9554
      %9556 = vrot.lane.b32.xlu0 %v9472, 125
      %v9557 = vpop.permute.xlu0 %9556
      %9558 = vrot.lane.b32.xlu0 %v9473, 125
      %v9559 = vpop.permute.xlu0 %9558
      %9560 = vrot.lane.b32.xlu0 %v9474, 125
      %v9561 = vpop.permute.xlu0 %9560
      %9562 = vrot.lane.b32.xlu0 %v9475, 125
      %v9563 = vpop.permute.xlu0 %9562
      %9564 = vrot.lane.b32.xlu0 %v9476, 125
      %v9565 = vpop.permute.xlu0 %9564
      %9566 = vrot.lane.b32.xlu0 %v9477, 125
      %v9567 = vpop.permute.xlu0 %9566
      %9568 = vrot.lane.b32.xlu0 %v9478, 125
      %v9569 = vpop.permute.xlu0 %9568
      %9570 = vrot.lane.b32.xlu0 %v9479, 125
      %v9571 = vpop.permute.xlu0 %9570
      %9572 = vrot.lane.b32.xlu0 %v9480, 125
      %v9573 = vpop.permute.xlu0 %9572
      %9574 = vrot.lane.b32.xlu0 %v9481, 125
      %v9575 = vpop.permute.xlu0 %9574
      %9576 = vrot.lane.b32.xlu0 %v9482, 125
      %v9577 = vpop.permute.xlu0 %9576
      %9578 = vrot.lane.b32.xlu0 %v9483, 125
      %v9579 = vpop.permute.xlu0 %9578
      %9580 = vrot.lane.b32.xlu0 %v9484, 125
      %v9581 = vpop.permute.xlu0 %9580
      %9582 = vrot.lane.b32.xlu0 %v9485, 125
      %v9583 = vpop.permute.xlu0 %9582
      %9584 = vrot.lane.b32.xlu0 %v9486, 125
      %v9585 = vpop.permute.xlu0 %9584
      %9586 = vrot.lane.b32.xlu0 %v9487, 125
      %v9587 = vpop.permute.xlu0 %9586
      %9588 = vrot.lane.b32.xlu0 %v9488, 125
      %v9589 = vpop.permute.xlu0 %9588
      %9590 = vrot.lane.b32.xlu0 %v9489, 125
      %v9591 = vpop.permute.xlu0 %9590
      %9592 = vrot.lane.b32.xlu0 %v9490, 125
      %v9593 = vpop.permute.xlu0 %9592
      %9594 = vrot.lane.b32.xlu0 %v9491, 125
      %v9595 = vpop.permute.xlu0 %9594
      %9596 = vrot.lane.b32.xlu0 %v9492, 125
      %v9597 = vpop.permute.xlu0 %9596
      %9598 = vrot.lane.b32.xlu0 %v9493, 125
      %v9599 = vpop.permute.xlu0 %9598
      %9600 = vrot.lane.b32.xlu0 %v9494, 125
      %v9601 = vpop.permute.xlu0 %9600
      %9602 = vrot.lane.b32.xlu0 %v9495, 125
      %v9603 = vpop.permute.xlu0 %9602
      %s9640 = scalar_lea.vmem %s372, 576
      %9641 = vst.msk [vmem:[%s9640] sm:$0xff] %vm521, %v9533
      %9642 = vst.msk [vmem:[%s9640 + $0x8] sm:$0xff] %vm521, %v9535
      %9643 = vst.msk [vmem:[%s9640 + $0x10] sm:$0xff] %vm521, %v9537
      %9644 = vst.msk [vmem:[%s9640 + $0x18] sm:$0xff] %vm521, %v9539
      %9645 = vst.msk [vmem:[%s9640 + $0x20] sm:$0xff] %vm521, %v9541
      %9646 = vst.msk [vmem:[%s9640 + $0x28] sm:$0xff] %vm521, %v9543
      %9647 = vst.msk [vmem:[%s9640 + $0x30] sm:$0xff] %vm521, %v9545
      %9648 = vst.msk [vmem:[%s9640 + $0x38] sm:$0xff] %vm521, %v9547
      %9649 = vst.msk [vmem:[%s9640 + $0x40] sm:$0xff] %vm521, %v9549
      %9650 = vst.msk [vmem:[%s9640 + $0x48] sm:$0xff] %vm521, %v9551
      %9651 = vst.msk [vmem:[%s9640 + $0x50] sm:$0xff] %vm521, %v9553
      %9652 = vst.msk [vmem:[%s9640 + $0x58] sm:$0xff] %vm521, %v9555
      %9653 = vst.msk [vmem:[%s9640 + $0x60] sm:$0xff] %vm521, %v9557
      %9654 = vst.msk [vmem:[%s9640 + $0x68] sm:$0xff] %vm521, %v9559
      %9655 = vst.msk [vmem:[%s9640 + $0x70] sm:$0xff] %vm521, %v9561
      %9656 = vst.msk [vmem:[%s9640 + $0x78] sm:$0xff] %vm521, %v9563
      %9657 = vst.msk [vmem:[%s9640 + $0x80] sm:$0xff] %vm521, %v9565
      %9658 = vst.msk [vmem:[%s9640 + $0x88] sm:$0xff] %vm521, %v9567
      %9659 = vst.msk [vmem:[%s9640 + $0x90] sm:$0xff] %vm521, %v9569
      %9660 = vst.msk [vmem:[%s9640 + $0x98] sm:$0xff] %vm521, %v9571
      %9661 = vst.msk [vmem:[%s9640 + $0xa0] sm:$0xff] %vm521, %v9573
      %9662 = vst.msk [vmem:[%s9640 + $0xa8] sm:$0xff] %vm521, %v9575
      %9663 = vst.msk [vmem:[%s9640 + $0xb0] sm:$0xff] %vm521, %v9577
      %9664 = vst.msk [vmem:[%s9640 + $0xb8] sm:$0xff] %vm521, %v9579
      %9665 = vst.msk [vmem:[%s9640 + $0xc0] sm:$0xff] %vm521, %v9581
      %9666 = vst.msk [vmem:[%s9640 + $0xc8] sm:$0xff] %vm521, %v9583
      %9667 = vst.msk [vmem:[%s9640 + $0xd0] sm:$0xff] %vm521, %v9585
      %9668 = vst.msk [vmem:[%s9640 + $0xd8] sm:$0xff] %vm521, %v9587
      %9669 = vst.msk [vmem:[%s9640 + $0xe0] sm:$0xff] %vm521, %v9589
      %9670 = vst.msk [vmem:[%s9640 + $0xe8] sm:$0xff] %vm521, %v9591
      %9671 = vst.msk [vmem:[%s9640 + $0xf0] sm:$0xff] %vm521, %v9593
      %9672 = vst.msk [vmem:[%s9640 + $0xf8] sm:$0xff] %vm521, %v9595
      %9673 = vst.msk [vmem:[%s9640 + $0x100] sm:$0xff] %vm521, %v9597
      %9674 = vst.msk [vmem:[%s9640 + $0x108] sm:$0xff] %vm521, %v9599
      %9675 = vst.msk [vmem:[%s9640 + $0x110] sm:$0xff] %vm521, %v9601
      %9676 = vst.msk [vmem:[%s9640 + $0x118] sm:$0xff] %vm521, %v9603
      %v9677 = vadd.f32 %v8055, %v8992
      %v9678 = vadd.f32 %v8056, %v8994
      %v9679 = vadd.f32 %v8057, %v8996
      %v9680 = vadd.f32 %v8058, %v8998
      %v9681 = vadd.f32 %v8059, %v9000
      %v9682 = vadd.f32 %v8060, %v9002
      %v9683 = vadd.f32 %v8061, %v9004
      %v9684 = vadd.f32 %v8062, %v9006
      %v9685 = vadd.f32 %v8063, %v9008
      %v9686 = vadd.f32 %v8064, %v9010
      %v9687 = vadd.f32 %v8065, %v9012
      %v9688 = vadd.f32 %v8066, %v9014
      %v9689 = vadd.f32 %v8067, %v9016
      %v9690 = vadd.f32 %v8068, %v9018
      %v9691 = vadd.f32 %v8069, %v9020
      %v9692 = vadd.f32 %v8070, %v9022
      %v9693 = vadd.f32 %v8071, %v9024
      %v9694 = vadd.f32 %v8072, %v9026
      %v9695 = vadd.f32 %v8073, %v9028
      %v9696 = vadd.f32 %v8074, %v9030
      %v9697 = vadd.f32 %v8075, %v9032
      %v9698 = vadd.f32 %v8076, %v9034
      %v9699 = vadd.f32 %v8077, %v9036
      %v9700 = vadd.f32 %v8078, %v9038
      %v9701 = vadd.f32 %v8079, %v9040
      %v9702 = vadd.f32 %v8080, %v9042
      %v9703 = vadd.f32 %v8081, %v9044
      %v9704 = vadd.f32 %v8082, %v9046
      %v9705 = vadd.f32 %v8083, %v9048
      %v9706 = vadd.f32 %v8084, %v9050
      %v9707 = vadd.f32 %v8085, %v9052
      %v9708 = vadd.f32 %v8086, %v9054
      %v9709 = vadd.f32 %v8087, %v9056
      %v9710 = vadd.f32 %v8088, %v9058
      %v9711 = vadd.f32 %v8089, %v9060
      %v9712 = vadd.f32 %v8090, %v9062
      %v9713 = vmax.f32 %v9677, 0.0
      %v9714 = vmax.f32 %v9678, 0.0
      %v9715 = vmax.f32 %v9679, 0.0
      %v9716 = vmax.f32 %v9680, 0.0
      %v9717 = vmax.f32 %v9681, 0.0
      %v9718 = vmax.f32 %v9682, 0.0
      %v9719 = vmax.f32 %v9683, 0.0
      %v9720 = vmax.f32 %v9684, 0.0
      %v9721 = vmax.f32 %v9685, 0.0
      %v9722 = vmax.f32 %v9686, 0.0
      %v9723 = vmax.f32 %v9687, 0.0
      %v9724 = vmax.f32 %v9688, 0.0
      %v9725 = vmax.f32 %v9689, 0.0
      %v9726 = vmax.f32 %v9690, 0.0
      %v9727 = vmax.f32 %v9691, 0.0
      %v9728 = vmax.f32 %v9692, 0.0
      %v9729 = vmax.f32 %v9693, 0.0
      %v9730 = vmax.f32 %v9694, 0.0
      %v9731 = vmax.f32 %v9695, 0.0
      %v9732 = vmax.f32 %v9696, 0.0
      %v9733 = vmax.f32 %v9697, 0.0
      %v9734 = vmax.f32 %v9698, 0.0
      %v9735 = vmax.f32 %v9699, 0.0
      %v9736 = vmax.f32 %v9700, 0.0
      %v9737 = vmax.f32 %v9701, 0.0
      %v9738 = vmax.f32 %v9702, 0.0
      %v9739 = vmax.f32 %v9703, 0.0
      %v9740 = vmax.f32 %v9704, 0.0
      %v9741 = vmax.f32 %v9705, 0.0
      %v9742 = vmax.f32 %v9706, 0.0
      %v9743 = vmax.f32 %v9707, 0.0
      %v9744 = vmax.f32 %v9708, 0.0
      %v9745 = vmax.f32 %v9709, 0.0
      %v9746 = vmax.f32 %v9710, 0.0
      %v9747 = vmax.f32 %v9711, 0.0
      %v9748 = vmax.f32 %v9712, 0.0
      %v9749 = vmin.f32 %v9713, 16.0
      %v9750 = vmin.f32 %v9714, 16.0
      %v9751 = vmin.f32 %v9715, 16.0
      %v9752 = vmin.f32 %v9716, 16.0
      %v9753 = vmin.f32 %v9717, 16.0
      %v9754 = vmin.f32 %v9718, 16.0
      %v9755 = vmin.f32 %v9719, 16.0
      %v9756 = vmin.f32 %v9720, 16.0
      %v9757 = vmin.f32 %v9721, 16.0
      %v9758 = vmin.f32 %v9722, 16.0
      %v9759 = vmin.f32 %v9723, 16.0
      %v9760 = vmin.f32 %v9724, 16.0
      %v9761 = vmin.f32 %v9725, 16.0
      %v9762 = vmin.f32 %v9726, 16.0
      %v9763 = vmin.f32 %v9727, 16.0
      %v9764 = vmin.f32 %v9728, 16.0
      %v9765 = vmin.f32 %v9729, 16.0
      %v9766 = vmin.f32 %v9730, 16.0
      %v9767 = vmin.f32 %v9731, 16.0
      %v9768 = vmin.f32 %v9732, 16.0
      %v9769 = vmin.f32 %v9733, 16.0
      %v9770 = vmin.f32 %v9734, 16.0
      %v9771 = vmin.f32 %v9735, 16.0
      %v9772 = vmin.f32 %v9736, 16.0
      %v9773 = vmin.f32 %v9737, 16.0
      %v9774 = vmin.f32 %v9738, 16.0
      %v9775 = vmin.f32 %v9739, 16.0
      %v9776 = vmin.f32 %v9740, 16.0
      %v9777 = vmin.f32 %v9741, 16.0
      %v9778 = vmin.f32 %v9742, 16.0
      %v9779 = vmin.f32 %v9743, 16.0
      %v9780 = vmin.f32 %v9744, 16.0
      %v9781 = vmin.f32 %v9745, 16.0
      %v9782 = vmin.f32 %v9746, 16.0
      %v9783 = vmin.f32 %v9747, 16.0
      %v9784 = vmin.f32 %v9748, 16.0
      %9821 = vrot.lane.b32.xlu0 %v9749, 122
      %v9822 = vpop.permute.xlu0 %9821
      %9823 = vrot.lane.b32.xlu0 %v9750, 122
      %v9824 = vpop.permute.xlu0 %9823
      %9825 = vrot.lane.b32.xlu0 %v9751, 122
      %v9826 = vpop.permute.xlu0 %9825
      %9827 = vrot.lane.b32.xlu0 %v9752, 122
      %v9828 = vpop.permute.xlu0 %9827
      %9829 = vrot.lane.b32.xlu0 %v9753, 122
      %v9830 = vpop.permute.xlu0 %9829
      %9831 = vrot.lane.b32.xlu0 %v9754, 122
      %v9832 = vpop.permute.xlu0 %9831
      %9833 = vrot.lane.b32.xlu0 %v9755, 122
      %v9834 = vpop.permute.xlu0 %9833
      %9835 = vrot.lane.b32.xlu0 %v9756, 122
      %v9836 = vpop.permute.xlu0 %9835
      %9837 = vrot.lane.b32.xlu0 %v9757, 122
      %v9838 = vpop.permute.xlu0 %9837
      %9839 = vrot.lane.b32.xlu0 %v9758, 122
      %v9840 = vpop.permute.xlu0 %9839
      %9841 = vrot.lane.b32.xlu0 %v9759, 122
      %v9842 = vpop.permute.xlu0 %9841
      %9843 = vrot.lane.b32.xlu0 %v9760, 122
      %v9844 = vpop.permute.xlu0 %9843
      %9845 = vrot.lane.b32.xlu0 %v9761, 122
      %v9846 = vpop.permute.xlu0 %9845
      %9847 = vrot.lane.b32.xlu0 %v9762, 122
      %v9848 = vpop.permute.xlu0 %9847
      %9849 = vrot.lane.b32.xlu0 %v9763, 122
      %v9850 = vpop.permute.xlu0 %9849
      %9851 = vrot.lane.b32.xlu0 %v9764, 122
      %v9852 = vpop.permute.xlu0 %9851
      %9853 = vrot.lane.b32.xlu0 %v9765, 122
      %v9854 = vpop.permute.xlu0 %9853
      %9855 = vrot.lane.b32.xlu0 %v9766, 122
      %v9856 = vpop.permute.xlu0 %9855
      %9857 = vrot.lane.b32.xlu0 %v9767, 122
      %v9858 = vpop.permute.xlu0 %9857
      %9859 = vrot.lane.b32.xlu0 %v9768, 122
      %v9860 = vpop.permute.xlu0 %9859
      %9861 = vrot.lane.b32.xlu0 %v9769, 122
      %v9862 = vpop.permute.xlu0 %9861
      %9863 = vrot.lane.b32.xlu0 %v9770, 122
      %v9864 = vpop.permute.xlu0 %9863
      %9865 = vrot.lane.b32.xlu0 %v9771, 122
      %v9866 = vpop.permute.xlu0 %9865
      %9867 = vrot.lane.b32.xlu0 %v9772, 122
      %v9868 = vpop.permute.xlu0 %9867
      %9869 = vrot.lane.b32.xlu0 %v9773, 122
      %v9870 = vpop.permute.xlu0 %9869
      %9871 = vrot.lane.b32.xlu0 %v9774, 122
      %v9872 = vpop.permute.xlu0 %9871
      %9873 = vrot.lane.b32.xlu0 %v9775, 122
      %v9874 = vpop.permute.xlu0 %9873
      %9875 = vrot.lane.b32.xlu0 %v9776, 122
      %v9876 = vpop.permute.xlu0 %9875
      %9877 = vrot.lane.b32.xlu0 %v9777, 122
      %v9878 = vpop.permute.xlu0 %9877
      %9879 = vrot.lane.b32.xlu0 %v9778, 122
      %v9880 = vpop.permute.xlu0 %9879
      %9881 = vrot.lane.b32.xlu0 %v9779, 122
      %v9882 = vpop.permute.xlu0 %9881
      %9883 = vrot.lane.b32.xlu0 %v9780, 122
      %v9884 = vpop.permute.xlu0 %9883
      %9885 = vrot.lane.b32.xlu0 %v9781, 122
      %v9886 = vpop.permute.xlu0 %9885
      %9887 = vrot.lane.b32.xlu0 %v9782, 122
      %v9888 = vpop.permute.xlu0 %9887
      %9889 = vrot.lane.b32.xlu0 %v9783, 122
      %v9890 = vpop.permute.xlu0 %9889
      %9891 = vrot.lane.b32.xlu0 %v9784, 122
      %v9892 = vpop.permute.xlu0 %9891
      %s9929 = scalar_lea.vmem %s372, 864
      %9930 = vst.msk [vmem:[%s9929] sm:$0xff] %vm521, %v9822
      %9931 = vst.msk [vmem:[%s9929 + $0x8] sm:$0xff] %vm521, %v9824
      %9932 = vst.msk [vmem:[%s9929 + $0x10] sm:$0xff] %vm521, %v9826
      %9933 = vst.msk [vmem:[%s9929 + $0x18] sm:$0xff] %vm521, %v9828
      %9934 = vst.msk [vmem:[%s9929 + $0x20] sm:$0xff] %vm521, %v9830
      %9935 = vst.msk [vmem:[%s9929 + $0x28] sm:$0xff] %vm521, %v9832
      %9936 = vst.msk [vmem:[%s9929 + $0x30] sm:$0xff] %vm521, %v9834
      %9937 = vst.msk [vmem:[%s9929 + $0x38] sm:$0xff] %vm521, %v9836
      %9938 = vst.msk [vmem:[%s9929 + $0x40] sm:$0xff] %vm521, %v9838
      %9939 = vst.msk [vmem:[%s9929 + $0x48] sm:$0xff] %vm521, %v9840
      %9940 = vst.msk [vmem:[%s9929 + $0x50] sm:$0xff] %vm521, %v9842
      %9941 = vst.msk [vmem:[%s9929 + $0x58] sm:$0xff] %vm521, %v9844
      %9942 = vst.msk [vmem:[%s9929 + $0x60] sm:$0xff] %vm521, %v9846
      %9943 = vst.msk [vmem:[%s9929 + $0x68] sm:$0xff] %vm521, %v9848
      %9944 = vst.msk [vmem:[%s9929 + $0x70] sm:$0xff] %vm521, %v9850
      %9945 = vst.msk [vmem:[%s9929 + $0x78] sm:$0xff] %vm521, %v9852
      %9946 = vst.msk [vmem:[%s9929 + $0x80] sm:$0xff] %vm521, %v9854
      %9947 = vst.msk [vmem:[%s9929 + $0x88] sm:$0xff] %vm521, %v9856
      %9948 = vst.msk [vmem:[%s9929 + $0x90] sm:$0xff] %vm521, %v9858
      %9949 = vst.msk [vmem:[%s9929 + $0x98] sm:$0xff] %vm521, %v9860
      %9950 = vst.msk [vmem:[%s9929 + $0xa0] sm:$0xff] %vm521, %v9862
      %9951 = vst.msk [vmem:[%s9929 + $0xa8] sm:$0xff] %vm521, %v9864
      %9952 = vst.msk [vmem:[%s9929 + $0xb0] sm:$0xff] %vm521, %v9866
      %9953 = vst.msk [vmem:[%s9929 + $0xb8] sm:$0xff] %vm521, %v9868
      %9954 = vst.msk [vmem:[%s9929 + $0xc0] sm:$0xff] %vm521, %v9870
      %9955 = vst.msk [vmem:[%s9929 + $0xc8] sm:$0xff] %vm521, %v9872
      %9956 = vst.msk [vmem:[%s9929 + $0xd0] sm:$0xff] %vm521, %v9874
      %9957 = vst.msk [vmem:[%s9929 + $0xd8] sm:$0xff] %vm521, %v9876
      %9958 = vst.msk [vmem:[%s9929 + $0xe0] sm:$0xff] %vm521, %v9878
      %9959 = vst.msk [vmem:[%s9929 + $0xe8] sm:$0xff] %vm521, %v9880
      %9960 = vst.msk [vmem:[%s9929 + $0xf0] sm:$0xff] %vm521, %v9882
      %9961 = vst.msk [vmem:[%s9929 + $0xf8] sm:$0xff] %vm521, %v9884
      %9962 = vst.msk [vmem:[%s9929 + $0x100] sm:$0xff] %vm521, %v9886
      %9963 = vst.msk [vmem:[%s9929 + $0x108] sm:$0xff] %vm521, %v9888
      %9964 = vst.msk [vmem:[%s9929 + $0x110] sm:$0xff] %vm521, %v9890
      %9965 = vst.msk [vmem:[%s9929 + $0x118] sm:$0xff] %vm521, %v9892
      %vm9966 = vcmp.gt.f32.partialorder %v374, 0.0
      %vm9967 = vcmp.gt.f32.partialorder %v375, 0.0
      %vm9968 = vcmp.gt.f32.partialorder %v376, 0.0
      %vm9969 = vcmp.gt.f32.partialorder %v377, 0.0
      %vm9970 = vcmp.gt.f32.partialorder %v378, 0.0
      %vm9971 = vcmp.gt.f32.partialorder %v379, 0.0
      %vm9972 = vcmp.gt.f32.partialorder %v380, 0.0
      %vm9973 = vcmp.gt.f32.partialorder %v381, 0.0
      %vm9974 = vcmp.gt.f32.partialorder %v382, 0.0
      %vm9975 = vcmp.gt.f32.partialorder %v383, 0.0
      %vm9976 = vcmp.gt.f32.partialorder %v384, 0.0
      %vm9977 = vcmp.gt.f32.partialorder %v385, 0.0
      %vm9978 = vcmp.gt.f32.partialorder %v386, 0.0
      %vm9979 = vcmp.gt.f32.partialorder %v387, 0.0
      %vm9980 = vcmp.gt.f32.partialorder %v388, 0.0
      %vm9981 = vcmp.gt.f32.partialorder %v389, 0.0
      %vm9982 = vcmp.gt.f32.partialorder %v390, 0.0
      %vm9983 = vcmp.gt.f32.partialorder %v391, 0.0
      %vm9984 = vcmp.gt.f32.partialorder %v392, 0.0
      %vm9985 = vcmp.gt.f32.partialorder %v393, 0.0
      %vm9986 = vcmp.gt.f32.partialorder %v394, 0.0
      %vm9987 = vcmp.gt.f32.partialorder %v395, 0.0
      %vm9988 = vcmp.gt.f32.partialorder %v396, 0.0
      %vm9989 = vcmp.gt.f32.partialorder %v397, 0.0
      %vm9990 = vcmp.gt.f32.partialorder %v398, 0.0
      %vm9991 = vcmp.gt.f32.partialorder %v399, 0.0
      %vm9992 = vcmp.gt.f32.partialorder %v400, 0.0
      %vm9993 = vcmp.gt.f32.partialorder %v401, 0.0
      %vm9994 = vcmp.gt.f32.partialorder %v402, 0.0
      %vm9995 = vcmp.gt.f32.partialorder %v403, 0.0
      %vm9996 = vcmp.gt.f32.partialorder %v404, 0.0
      %vm9997 = vcmp.gt.f32.partialorder %v405, 0.0
      %vm9998 = vcmp.gt.f32.partialorder %v406, 0.0
      %vm9999 = vcmp.gt.f32.partialorder %v407, 0.0
      %vm10000 = vcmp.gt.f32.partialorder %v408, 0.0
      %vm10001 = vcmp.gt.f32.partialorder %v409, 0.0
      %v10002 = vsel %vm9966, 1, 0
      %v10003 = vsel %vm9967, 1, 0
      %v10004 = vsel %vm9968, 1, 0
      %v10005 = vsel %vm9969, 1, 0
      %v10006 = vsel %vm9970, 1, 0
      %v10007 = vsel %vm9971, 1, 0
      %v10008 = vsel %vm9972, 1, 0
      %v10009 = vsel %vm9973, 1, 0
      %v10010 = vsel %vm9974, 1, 0
      %v10011 = vsel %vm9975, 1, 0
      %v10012 = vsel %vm9976, 1, 0
      %v10013 = vsel %vm9977, 1, 0
      %v10014 = vsel %vm9978, 1, 0
      %v10015 = vsel %vm9979, 1, 0
      %v10016 = vsel %vm9980, 1, 0
      %v10017 = vsel %vm9981, 1, 0
      %v10018 = vsel %vm9982, 1, 0
      %v10019 = vsel %vm9983, 1, 0
      %v10020 = vsel %vm9984, 1, 0
      %v10021 = vsel %vm9985, 1, 0
      %v10022 = vsel %vm9986, 1, 0
      %v10023 = vsel %vm9987, 1, 0
      %v10024 = vsel %vm9988, 1, 0
      %v10025 = vsel %vm9989, 1, 0
      %v10026 = vsel %vm9990, 1, 0
      %v10027 = vsel %vm9991, 1, 0
      %v10028 = vsel %vm9992, 1, 0
      %v10029 = vsel %vm9993, 1, 0
      %v10030 = vsel %vm9994, 1, 0
      %v10031 = vsel %vm9995, 1, 0
      %v10032 = vsel %vm9996, 1, 0
      %v10033 = vsel %vm9997, 1, 0
      %v10034 = vsel %vm9998, 1, 0
      %v10035 = vsel %vm9999, 1, 0
      %v10036 = vsel %vm10000, 1, 0
      %v10037 = vsel %vm10001, 1, 0
      %10038 = vset.pattern.permute.xlu0 0
      %10039 = vperm.xlu0 %10038, %v10002
      %v10040 = vpop.permute.xlu0 %10039
      %10041 = vset.pattern.permute.xlu0 0
      %10042 = vperm.xlu0 %10041, %v10003
      %v10043 = vpop.permute.xlu0 %10042
      %10044 = vset.pattern.permute.xlu0 0
      %10045 = vperm.xlu0 %10044, %v10004
      %v10046 = vpop.permute.xlu0 %10045
      %10047 = vset.pattern.permute.xlu0 0
      %10048 = vperm.xlu0 %10047, %v10005
      %v10049 = vpop.permute.xlu0 %10048
      %10050 = vset.pattern.permute.xlu0 0
      %10051 = vperm.xlu0 %10050, %v10006
      %v10052 = vpop.permute.xlu0 %10051
      %10053 = vset.pattern.permute.xlu0 0
      %10054 = vperm.xlu0 %10053, %v10007
      %v10055 = vpop.permute.xlu0 %10054
      %10056 = vset.pattern.permute.xlu0 0
      %10057 = vperm.xlu0 %10056, %v10008
      %v10058 = vpop.permute.xlu0 %10057
      %10059 = vset.pattern.permute.xlu0 0
      %10060 = vperm.xlu0 %10059, %v10009
      %v10061 = vpop.permute.xlu0 %10060
      %10062 = vset.pattern.permute.xlu0 0
      %10063 = vperm.xlu0 %10062, %v10010
      %v10064 = vpop.permute.xlu0 %10063
      %10065 = vset.pattern.permute.xlu0 0
      %10066 = vperm.xlu0 %10065, %v10011
      %v10067 = vpop.permute.xlu0 %10066
      %10068 = vset.pattern.permute.xlu0 0
      %10069 = vperm.xlu0 %10068, %v10012
      %v10070 = vpop.permute.xlu0 %10069
      %10071 = vset.pattern.permute.xlu0 0
      %10072 = vperm.xlu0 %10071, %v10013
      %v10073 = vpop.permute.xlu0 %10072
      %10074 = vset.pattern.permute.xlu0 0
      %10075 = vperm.xlu0 %10074, %v10014
      %v10076 = vpop.permute.xlu0 %10075
      %10077 = vset.pattern.permute.xlu0 0
      %10078 = vperm.xlu0 %10077, %v10015
      %v10079 = vpop.permute.xlu0 %10078
      %10080 = vset.pattern.permute.xlu0 0
      %10081 = vperm.xlu0 %10080, %v10016
      %v10082 = vpop.permute.xlu0 %10081
      %10083 = vset.pattern.permute.xlu0 0
      %10084 = vperm.xlu0 %10083, %v10017
      %v10085 = vpop.permute.xlu0 %10084
      %10086 = vset.pattern.permute.xlu0 0
      %10087 = vperm.xlu0 %10086, %v10018
      %v10088 = vpop.permute.xlu0 %10087
      %10089 = vset.pattern.permute.xlu0 0
      %10090 = vperm.xlu0 %10089, %v10019
      %v10091 = vpop.permute.xlu0 %10090
      %10092 = vset.pattern.permute.xlu0 0
      %10093 = vperm.xlu0 %10092, %v10020
      %v10094 = vpop.permute.xlu0 %10093
      %10095 = vset.pattern.permute.xlu0 0
      %10096 = vperm.xlu0 %10095, %v10021
      %v10097 = vpop.permute.xlu0 %10096
      %10098 = vset.pattern.permute.xlu0 0
      %10099 = vperm.xlu0 %10098, %v10022
      %v10100 = vpop.permute.xlu0 %10099
      %10101 = vset.pattern.permute.xlu0 0
      %10102 = vperm.xlu0 %10101, %v10023
      %v10103 = vpop.permute.xlu0 %10102
      %10104 = vset.pattern.permute.xlu0 0
      %10105 = vperm.xlu0 %10104, %v10024
      %v10106 = vpop.permute.xlu0 %10105
      %10107 = vset.pattern.permute.xlu0 0
      %10108 = vperm.xlu0 %10107, %v10025
      %v10109 = vpop.permute.xlu0 %10108
      %10110 = vset.pattern.permute.xlu0 0
      %10111 = vperm.xlu0 %10110, %v10026
      %v10112 = vpop.permute.xlu0 %10111
      %10113 = vset.pattern.permute.xlu0 0
      %10114 = vperm.xlu0 %10113, %v10027
      %v10115 = vpop.permute.xlu0 %10114
      %10116 = vset.pattern.permute.xlu0 0
      %10117 = vperm.xlu0 %10116, %v10028
      %v10118 = vpop.permute.xlu0 %10117
      %10119 = vset.pattern.permute.xlu0 0
      %10120 = vperm.xlu0 %10119, %v10029
      %v10121 = vpop.permute.xlu0 %10120
      %10122 = vset.pattern.permute.xlu0 0
      %10123 = vperm.xlu0 %10122, %v10030
      %v10124 = vpop.permute.xlu0 %10123
      %10125 = vset.pattern.permute.xlu0 0
      %10126 = vperm.xlu0 %10125, %v10031
      %v10127 = vpop.permute.xlu0 %10126
      %10128 = vset.pattern.permute.xlu0 0
      %10129 = vperm.xlu0 %10128, %v10032
      %v10130 = vpop.permute.xlu0 %10129
      %10131 = vset.pattern.permute.xlu0 0
      %10132 = vperm.xlu0 %10131, %v10033
      %v10133 = vpop.permute.xlu0 %10132
      %10134 = vset.pattern.permute.xlu0 0
      %10135 = vperm.xlu0 %10134, %v10034
      %v10136 = vpop.permute.xlu0 %10135
      %10137 = vset.pattern.permute.xlu0 0
      %10138 = vperm.xlu0 %10137, %v10035
      %v10139 = vpop.permute.xlu0 %10138
      %10140 = vset.pattern.permute.xlu0 0
      %10141 = vperm.xlu0 %10140, %v10036
      %v10142 = vpop.permute.xlu0 %10141
      %10143 = vset.pattern.permute.xlu0 0
      %10144 = vperm.xlu0 %10143, %v10037
      %v10145 = vpop.permute.xlu0 %10144
      %vm10146 = vcmp.eq.s32.totalorder %v10040, 1
      %vm10147 = vcmp.eq.s32.totalorder %v10043, 1
      %vm10148 = vcmp.eq.s32.totalorder %v10046, 1
      %vm10149 = vcmp.eq.s32.totalorder %v10049, 1
      %vm10150 = vcmp.eq.s32.totalorder %v10052, 1
      %vm10151 = vcmp.eq.s32.totalorder %v10055, 1
      %vm10152 = vcmp.eq.s32.totalorder %v10058, 1
      %vm10153 = vcmp.eq.s32.totalorder %v10061, 1
      %vm10154 = vcmp.eq.s32.totalorder %v10064, 1
      %vm10155 = vcmp.eq.s32.totalorder %v10067, 1
      %vm10156 = vcmp.eq.s32.totalorder %v10070, 1
      %vm10157 = vcmp.eq.s32.totalorder %v10073, 1
      %vm10158 = vcmp.eq.s32.totalorder %v10076, 1
      %vm10159 = vcmp.eq.s32.totalorder %v10079, 1
      %vm10160 = vcmp.eq.s32.totalorder %v10082, 1
      %vm10161 = vcmp.eq.s32.totalorder %v10085, 1
      %vm10162 = vcmp.eq.s32.totalorder %v10088, 1
      %vm10163 = vcmp.eq.s32.totalorder %v10091, 1
      %vm10164 = vcmp.eq.s32.totalorder %v10094, 1
      %vm10165 = vcmp.eq.s32.totalorder %v10097, 1
      %vm10166 = vcmp.eq.s32.totalorder %v10100, 1
      %vm10167 = vcmp.eq.s32.totalorder %v10103, 1
      %vm10168 = vcmp.eq.s32.totalorder %v10106, 1
      %vm10169 = vcmp.eq.s32.totalorder %v10109, 1
      %vm10170 = vcmp.eq.s32.totalorder %v10112, 1
      %vm10171 = vcmp.eq.s32.totalorder %v10115, 1
      %vm10172 = vcmp.eq.s32.totalorder %v10118, 1
      %vm10173 = vcmp.eq.s32.totalorder %v10121, 1
      %vm10174 = vcmp.eq.s32.totalorder %v10124, 1
      %vm10175 = vcmp.eq.s32.totalorder %v10127, 1
      %vm10176 = vcmp.eq.s32.totalorder %v10130, 1
      %vm10177 = vcmp.eq.s32.totalorder %v10133, 1
      %vm10178 = vcmp.eq.s32.totalorder %v10136, 1
      %vm10179 = vcmp.eq.s32.totalorder %v10139, 1
      %vm10180 = vcmp.eq.s32.totalorder %v10142, 1
      %vm10181 = vcmp.eq.s32.totalorder %v10145, 1
      %v10182 = vsel %vm10146, %v6830, -1e+30
      %v10183 = vsel %vm10147, %v6833, -1e+30
      %v10184 = vsel %vm10148, %v6838, -1e+30
      %v10185 = vsel %vm10149, %v6841, -1e+30
      %v10186 = vsel %vm10150, %v6846, -1e+30
      %v10187 = vsel %vm10151, %v6849, -1e+30
      %v10188 = vsel %vm10152, %v6854, -1e+30
      %v10189 = vsel %vm10153, %v6857, -1e+30
      %v10190 = vsel %vm10154, %v6862, -1e+30
      %v10191 = vsel %vm10155, %v6865, -1e+30
      %v10192 = vsel %vm10156, %v6870, -1e+30
      %v10193 = vsel %vm10157, %v6873, -1e+30
      %v10194 = vsel %vm10158, %v6878, -1e+30
      %v10195 = vsel %vm10159, %v6881, -1e+30
      %v10196 = vsel %vm10160, %v6886, -1e+30
      %v10197 = vsel %vm10161, %v6889, -1e+30
      %v10198 = vsel %vm10162, %v6894, -1e+30
      %v10199 = vsel %vm10163, %v6897, -1e+30
      %v10200 = vsel %vm10164, %v6902, -1e+30
      %v10201 = vsel %vm10165, %v6905, -1e+30
      %v10202 = vsel %vm10166, %v6910, -1e+30
      %v10203 = vsel %vm10167, %v6913, -1e+30
      %v10204 = vsel %vm10168, %v6918, -1e+30
      %v10205 = vsel %vm10169, %v6921, -1e+30
      %v10206 = vsel %vm10170, %v6926, -1e+30
      %v10207 = vsel %vm10171, %v6929, -1e+30
      %v10208 = vsel %vm10172, %v6934, -1e+30
      %v10209 = vsel %vm10173, %v6937, -1e+30
      %v10210 = vsel %vm10174, %v6942, -1e+30
      %v10211 = vsel %vm10175, %v6945, -1e+30
      %v10212 = vsel %vm10176, %v6950, -1e+30
      %v10213 = vsel %vm10177, %v6953, -1e+30
      %v10214 = vsel %vm10178, %v6958, -1e+30
      %v10215 = vsel %vm10179, %v6961, -1e+30
      %v10216 = vsel %vm10180, %v6966, -1e+30
      %v10217 = vsel %vm10181, %v6969, -1e+30
      %10218 = vst.msk [vmem:[%s367] sm:$0xff] %vm521, %v10182
      %10219 = vst.msk [vmem:[%s367 + $0x8] sm:$0xff] %vm521, %v10183
      %10220 = vst.msk [vmem:[%s367 + $0x10] sm:$0xff] %vm521, %v10184
      %10221 = vst.msk [vmem:[%s367 + $0x18] sm:$0xff] %vm521, %v10185
      %10222 = vst.msk [vmem:[%s367 + $0x20] sm:$0xff] %vm521, %v10186
      %10223 = vst.msk [vmem:[%s367 + $0x28] sm:$0xff] %vm521, %v10187
      %10224 = vst.msk [vmem:[%s367 + $0x30] sm:$0xff] %vm521, %v10188
      %10225 = vst.msk [vmem:[%s367 + $0x38] sm:$0xff] %vm521, %v10189
      %10226 = vst.msk [vmem:[%s367 + $0x40] sm:$0xff] %vm521, %v10190
      %10227 = vst.msk [vmem:[%s367 + $0x48] sm:$0xff] %vm521, %v10191
      %10228 = vst.msk [vmem:[%s367 + $0x50] sm:$0xff] %vm521, %v10192
      %10229 = vst.msk [vmem:[%s367 + $0x58] sm:$0xff] %vm521, %v10193
      %10230 = vst.msk [vmem:[%s367 + $0x60] sm:$0xff] %vm521, %v10194
      %10231 = vst.msk [vmem:[%s367 + $0x68] sm:$0xff] %vm521, %v10195
      %10232 = vst.msk [vmem:[%s367 + $0x70] sm:$0xff] %vm521, %v10196
      %10233 = vst.msk [vmem:[%s367 + $0x78] sm:$0xff] %vm521, %v10197
      %10234 = vst.msk [vmem:[%s367 + $0x80] sm:$0xff] %vm521, %v10198
      %10235 = vst.msk [vmem:[%s367 + $0x88] sm:$0xff] %vm521, %v10199
      %10236 = vst.msk [vmem:[%s367 + $0x90] sm:$0xff] %vm521, %v10200
      %10237 = vst.msk [vmem:[%s367 + $0x98] sm:$0xff] %vm521, %v10201
      %10238 = vst.msk [vmem:[%s367 + $0xa0] sm:$0xff] %vm521, %v10202
      %10239 = vst.msk [vmem:[%s367 + $0xa8] sm:$0xff] %vm521, %v10203
      %10240 = vst.msk [vmem:[%s367 + $0xb0] sm:$0xff] %vm521, %v10204
      %10241 = vst.msk [vmem:[%s367 + $0xb8] sm:$0xff] %vm521, %v10205
      %10242 = vst.msk [vmem:[%s367 + $0xc0] sm:$0xff] %vm521, %v10206
      %10243 = vst.msk [vmem:[%s367 + $0xc8] sm:$0xff] %vm521, %v10207
      %10244 = vst.msk [vmem:[%s367 + $0xd0] sm:$0xff] %vm521, %v10208
      %10245 = vst.msk [vmem:[%s367 + $0xd8] sm:$0xff] %vm521, %v10209
      %10246 = vst.msk [vmem:[%s367 + $0xe0] sm:$0xff] %vm521, %v10210
      %10247 = vst.msk [vmem:[%s367 + $0xe8] sm:$0xff] %vm521, %v10211
      %10248 = vst.msk [vmem:[%s367 + $0xf0] sm:$0xff] %vm521, %v10212
      %10249 = vst.msk [vmem:[%s367 + $0xf8] sm:$0xff] %vm521, %v10213
      %10250 = vst.msk [vmem:[%s367 + $0x100] sm:$0xff] %vm521, %v10214
      %10251 = vst.msk [vmem:[%s367 + $0x108] sm:$0xff] %vm521, %v10215
      %10252 = vst.msk [vmem:[%s367 + $0x110] sm:$0xff] %vm521, %v10216
      %10253 = vst.msk [vmem:[%s367 + $0x118] sm:$0xff] %vm521, %v10217
      %p10254 = scmp.lt.s32.totalorder %s22, 1
      %s10255 = scalar_select %p10254, %s22, 1
      %s10256 = smul.addr %s10255, 36
      %s10257 = smul.addr %s10256, 8
      %s10258 = scalar_lea.vmem %s9, %s10257
      %p10259 = scmp.lt.s32.totalorder %s22, 1
      %s10260 = scalar_select %p10259, %s22, 1
      %s10261 = smul.addr %s10260, 144
      %s10262 = smul.addr %s10261, 8
      %s10263 = scalar_lea.vmem %s10, %s10262
      // Predicated region
      $region57: #{_proposal_arrays.1} parent=55 // pred_check
        %p10264 = pneg %p234
      $region58: #{_proposal_arrays.1} parent=55 // pred_check_branch
        %10266 = sbr.rel (%p10264) target = $region60
      $region59: #{_proposal_arrays.1} parent=55 // pred_region
        _
      $region60: #{_proposal_arrays.1} parent=55 // pred_fallthru
        _
      // Predicated region
      $region61: #{_proposal_arrays.1} parent=55 // pred_check
        %p10267 = pneg %p260
      $region62: #{_proposal_arrays.1} parent=55 // pred_check_branch
        %10269 = sbr.rel (%p10267) target = $region64
      $region63: #{_proposal_arrays.1} parent=55 // pred_region
        _
      $region64: #{_proposal_arrays.1} parent=55 // pred_fallthru
        _
    $region56: #{_proposal_arrays.1} parent=5 // pred_fallthru
      _
    %p10270 = scmp.le.s32.totalorder 2, %s17
    // Predicated region
    $region65: #{_proposal_arrays.1} parent=5 // pred_check
      %p10271 = pneg %p10270
    $region66: #{_proposal_arrays.1} parent=5 // pred_check_branch
      %10273 = sbr.rel (%p10271) target = $region68
    $region67: #{_proposal_arrays.1} parent=5 // pred_region
      %s10274 = ssub.s32 %s17, 2
      // Predicated region
      $region69: #{_proposal_arrays.1} parent=67 // pred_check
        %p10275 = pneg %p240
      $region70: #{_proposal_arrays.1} parent=67 // pred_check_branch
        %10277 = sbr.rel (%p10275) target = $region72
      $region71: #{_proposal_arrays.1} parent=67 // pred_region
        %p10278 = scmp.lt.s32.totalorder %s23, 1
        %s10279 = scalar_select %p10278, %s23, 1
        %s10280 = smul.addr %s10279, 36
        %s10281 = smul.addr %s10280, 8
        %s10282 = scalar_lea.vmem %s9, %s10281
      $region72: #{_proposal_arrays.1} parent=67 // pred_fallthru
        _
      // Predicated region
      $region73: #{_proposal_arrays.1} parent=67 // pred_check
        %p10283 = pneg %p266
      $region74: #{_proposal_arrays.1} parent=67 // pred_check_branch
        %10285 = sbr.rel (%p10283) target = $region76
      $region75: #{_proposal_arrays.1} parent=67 // pred_region
        %p10286 = scmp.lt.s32.totalorder %s23, 1
        %s10287 = scalar_select %p10286, %s23, 1
        %s10288 = smul.addr %s10287, 144
        %s10289 = smul.addr %s10288, 8
        %s10290 = scalar_lea.vmem %s10, %s10289
      $region76: #{_proposal_arrays.1} parent=67 // pred_fallthru
        _
    $region68: #{_proposal_arrays.1} parent=5 // pred_fallthru
      _
  $region6: #{_proposal_arrays.1} parent=0 // loop_footer
    %s21 = sadd.s32 1, %s17
  $region7: #{_proposal_arrays.1} parent=0 // loop_footer_branch
    %16 = sbr.rel target = $region3
  $region8: #{_proposal_arrays.1} parent=0 // loop_exit
    _

</llo_original>
